<compile_context>
chip_gen: v7x
topology: tpu7x:2x2x1
jax: 0.10.0
libtpu: 0.0.40
codegen_flags: <defaults>
</compile_context>

<pallas_src>
import functools

import jax
import jax.numpy as jnp
from jax import lax
from jax.experimental import pallas as pl
from jax.experimental.pallas import tpu as pltpu


def _round_up(x, m):
    return (x + m - 1) // m * m


def _make_kernel(shifts, cin, cout, nimg, s_img, mr, hw):
    """shifts: static per-tap lane offsets into the flattened padded image."""
    ntaps = len(shifts)

    def kernel(x_ref, w_ref, b_ref, o_ref):
        # x_ref: (Cin, Nimg * S)     channels-first, row-major flattened, zero-padded images
        # w_ref: (Cout, NT * Cin)    lane-dense weight slab, tap-major along lanes
        # b_ref: (Cout, 1)           bias summed over branches
        # o_ref: (Nimg*Cout, Hout*Wpp) lane-dense output slab
        # Bias folded into the accumulator init (hoisted broadcast, no epilogue add).
        acc = jnp.zeros((cout, mr), dtype=jnp.float32) + b_ref[...]
        for t in range(ntaps):
            w_tap = w_ref[:, t * cin:(t + 1) * cin]            # (Cout, Cin)
            rhs = x_ref[:, shifts[t]: shifts[t] + mr]          # (Cin, Mr) static shifted view
            acc = acc + jnp.dot(w_tap, rhs, preferred_element_type=jnp.float32)
        # Per-image valid window starts at i*S (128-aligned) and spans Hout*Wpp lanes.
        for i in range(nimg):
            o_ref[i * cout:(i + 1) * cout, :] = (
                acc[:, i * s_img: i * s_img + hw].astype(o_ref.dtype)
            )

    return kernel


def classifier_module_forward(x_nchw, weights, biases, dilations, paddings):
    """x_nchw: (N, 32, H, W).  weights: (B, Cout, Cin, 3, 3) (PyTorch layout).
    biases: (B, Cout).  Returns (N, Cout, Hout, Wout) matching the PyTorch module."""
    dilations = tuple(int(d) for d in dilations)
    paddings = tuple(int(p) for p in paddings)
    n, cin, h, w = x_nchw.shape
    nb, cout = biases.shape
    assert weights.shape == (nb, cout, cin, 3, 3)

    # All branches must produce the same output spatial size for the sum to be valid.
    hout = h + 2 * paddings[0] - 2 * dilations[0]
    wout = w + 2 * paddings[0] - 2 * dilations[0]
    for d, p in zip(dilations, paddings):
        assert h + 2 * p - 2 * d == hout and w + 2 * p - 2 * d == wout

    pmax = max(paddings)
    hp = h + 2 * pmax
    wp = w + 2 * pmax
    wpp = wp + (-wp) % 8                   # small extra right zero-pad (e.g. 22 -> 24)
    s_img = _round_up(hp * wpp, 128)       # per-image lane stride, 128-aligned
    hw = hout * wpp                        # flattened output row span (lane axis)
    mr = (n - 1) * s_img + hw              # matmul M: all images at once

    # Static tap lane-shifts into the flattened row-major padded image.
    shifts = []
    for d, p in zip(dilations, paddings):
        base = pmax - p
        for ky in range(3):
            for kx in range(3):
                shifts.append((base + ky * d) * wpp + (base + kx * d))
    # Every valid read stays inside its own image's block, and slices stay in-bounds.
    assert max(shifts) + (hout - 1) * wpp + wout <= hp * wpp
    assert max(shifts) + mr <= n * s_img

    # --- glue (plain JAX, not the hot path): channels-first, pad, flatten ---
    xc = jnp.transpose(x_nchw, (1, 0, 2, 3)).astype(jnp.float32)          # (Cin, N, H, W)
    xc = jnp.pad(xc, ((0, 0), (0, 0), (pmax, pmax), (pmax, wpp - w - pmax)))
    xc = xc.reshape(cin, n, hp * wpp)
    xc = jnp.pad(xc, ((0, 0), (0, 0), (0, s_img - hp * wpp)))
    x_flat = xc.reshape(cin, n * s_img)                                    # (Cin, N*S)

    # (B, Cout, Cin, 3, 3) -> (Cout, B*3*3*Cin): one lane-dense slab, tap-major, Cin innermost.
    w_flat = jnp.transpose(weights.astype(jnp.float32), (1, 0, 3, 4, 2))
    w_flat = w_flat.reshape(cout, nb * 9 * cin)
    bias_sum = jnp.sum(biases.astype(jnp.float32), axis=0).reshape(cout, 1)

    kernel = _make_kernel(tuple(shifts), cin, cout, n, s_img, mr, hw)

    # TODO(synk): at real ASPP resolutions (e.g. 129x129, Cin in the hundreds) add a grid
    # axis over output rows (block height a multiple of 8) and set vmem_limit_bytes so the
    # full-image block stays within v7x's smaller (64 MiB) VMEM.
    out_flat = pl.pallas_call(
        kernel,
        out_shape=jax.ShapeDtypeStruct((n * cout, hw), jnp.float32),
        grid_spec=pltpu.PrefetchScalarGridSpec(
            num_scalar_prefetch=0,
            grid=(1,),
            in_specs=[
                pl.BlockSpec((cin, n * s_img), lambda i: (0, 0)),
                pl.BlockSpec((cout, nb * 9 * cin), lambda i: (0, 0)),
                pl.BlockSpec((cout, 1), lambda i: (0, 0)),
            ],
            out_specs=pl.BlockSpec((n * cout, hw), lambda i: (0, 0)),
        ),
        compiler_params=pltpu.CompilerParams(
            dimension_semantics=("arbitrary",),
        ),
    )(x_flat, w_flat, bias_sum)

    # (N*Cout, Hout*Wpp) -> (N, Cout, Hout, Wout): reshape + right-crop only, no transpose.
    return out_flat.reshape(n, cout, hout, wpp)[:, :, :, :wout]


def _reference_forward(x_nchw, weights, biases, dilations, paddings):
    """Pure-JAX reference using lax.conv_general_dilated (NCHW, like PyTorch)."""
    out = None
    for bi, (d, p) in enumerate(zip(dilations, paddings)):
        y = lax.conv_general_dilated(
            x_nchw.astype(jnp.float32),
            weights[bi].astype(jnp.float32),
            window_strides=(1, 1),
            padding=((p, p), (p, p)),
            rhs_dilation=(d, d),
            dimension_numbers=("NCHW", "OIHW", "NCHW"),
        ) + biases[bi].astype(jnp.float32)[None, :, None, None]
        out = y if out is None else out + y
    return out


if __name__ == "__main__":
    # Module config (ASPP-style); small spatial input.
    dilation_series = [1, 2, 3]
    padding_series = [1, 2, 3]

    N, CIN, H, W = 2, 32, 16, 16
    COUT = 4
    NB = len(dilation_series)

    key = jax.random.PRNGKey(0)
    kx, kw, kb = jax.random.split(key, 3)

    x = jax.random.normal(kx, (N, CIN, H, W), dtype=jnp.float32)
    # weight.data.normal_(0, 0.01) per branch
    weights = 0.01 * jax.random.normal(kw, (NB, COUT, CIN, 3, 3), dtype=jnp.float32)
    # PyTorch Conv2d default bias init: U(-1/sqrt(fan_in), 1/sqrt(fan_in)), fan_in = 32*3*3
    bound = 1.0 / jnp.sqrt(jnp.float32(CIN * 3 * 3))
    biases = jax.random.uniform(
        kb, (NB, COUT), dtype=jnp.float32, minval=-bound, maxval=bound
    )

    run = jax.jit(
        functools.partial(
            classifier_module_forward,
            dilations=dilation_series,
            paddings=padding_series,
        )
    )
    out = run(x, weights, biases)
    jax.block_until_ready(out)

    ref = _reference_forward(x, weights, biases, dilation_series, padding_series)
    if not jnp.allclose(out, ref, rtol=2e-4, atol=2e-4):
        raise AssertionError("Pallas kernel output mismatch vs. reference conv")

    print("KERNEL_OK")
</pallas_src>

<mosaic_0001>
module attributes {stable_mosaic.version = 11 : i64} {
  func.func @kernel(%arg0: i32, %arg1: memref<32x1280xf32, #tpu.memory_space<vmem>>, %arg2: memref<4x864xf32, #tpu.memory_space<vmem>>, %arg3: memref<4x1xf32, #tpu.memory_space<vmem>>, %arg4: memref<8x384xf32, #tpu.memory_space<vmem>>) attributes {dimension_semantics = [#tpu.dimension_semantics<arbitrary>], iteration_bounds = array<i64: 1>, scalar_prefetch = 0 : i64, scratch_operands = 0 : i64, tpu.core_type = #tpu.core_type<tc>, window_params = [{pipeline_mode = #tpu.pipeline_mode<synchronous>, transform_indices = @transform_0, window_bounds = array<i64: 32, 1280>}, {pipeline_mode = #tpu.pipeline_mode<synchronous>, transform_indices = @transform_1, window_bounds = array<i64: 4, 864>}, {pipeline_mode = #tpu.pipeline_mode<synchronous>, transform_indices = @transform_2, window_bounds = array<i64: 4, 1>}, {pipeline_mode = #tpu.pipeline_mode<synchronous>, transform_indices = @transform_3, window_bounds = array<i64: 8, 384>}]} {
    %cst = arith.constant 0.000000e+00 : f32
    %0 = vector.broadcast %cst : f32 to vector<4x1024xf32>
    %c0 = arith.constant 0 : index
    %c0_0 = arith.constant 0 : index
    %1 = vector.load %arg3[%c0, %c0_0] : memref<4x1xf32, #tpu.memory_space<vmem>>, vector<4x1xf32>
    %2 = vector.broadcast %1 : vector<4x1xf32> to vector<4x1024xf32>
    %3 = arith.addf %0, %2 : vector<4x1024xf32>
    %c0_1 = arith.constant 0 : index
    %c0_2 = arith.constant 0 : index
    %4 = vector.load %arg2[%c0_1, %c0_2] : memref<4x864xf32, #tpu.memory_space<vmem>>, vector<4x32xf32>
    %c0_3 = arith.constant 0 : index
    %c50 = arith.constant 50 : index
    %5 = vector.load %arg1[%c0_3, %c50] : memref<32x1280xf32, #tpu.memory_space<vmem>>, vector<32x1024xf32>
    %cst_4 = arith.constant dense<0.000000e+00> : vector<4x1024xf32>
    %6 = tpu.matmul %4, %5, %cst_4 {dimension_numbers = #tpu.dot_dimension_numbers<[1], [0], [0], [1], [0, 0, 1, 1], [], []>} : vector<4x32xf32>, vector<32x1024xf32>, vector<4x1024xf32> -> vector<4x1024xf32>
    %7 = arith.addf %3, %6 : vector<4x1024xf32>
    %c0_5 = arith.constant 0 : index
    %c32 = arith.constant 32 : index
    %8 = vector.load %arg2[%c0_5, %c32] : memref<4x864xf32, #tpu.memory_space<vmem>>, vector<4x32xf32>
    %c0_6 = arith.constant 0 : index
    %c51 = arith.constant 51 : index
    %9 = vector.load %arg1[%c0_6, %c51] : memref<32x1280xf32, #tpu.memory_space<vmem>>, vector<32x1024xf32>
    %cst_7 = arith.constant dense<0.000000e+00> : vector<4x1024xf32>
    %10 = tpu.matmul %8, %9, %cst_7 {dimension_numbers = #tpu.dot_dimension_numbers<[1], [0], [0], [1], [0, 0, 1, 1], [], []>} : vector<4x32xf32>, vector<32x1024xf32>, vector<4x1024xf32> -> vector<4x1024xf32>
    %11 = arith.addf %7, %10 : vector<4x1024xf32>
    %c0_8 = arith.constant 0 : index
    %c64 = arith.constant 64 : index
    %12 = vector.load %arg2[%c0_8, %c64] : memref<4x864xf32, #tpu.memory_space<vmem>>, vector<4x32xf32>
    %c0_9 = arith.constant 0 : index
    %c52 = arith.constant 52 : index
    %13 = vector.load %arg1[%c0_9, %c52] : memref<32x1280xf32, #tpu.memory_space<vmem>>, vector<32x1024xf32>
    %cst_10 = arith.constant dense<0.000000e+00> : vector<4x1024xf32>
    %14 = tpu.matmul %12, %13, %cst_10 {dimension_numbers = #tpu.dot_dimension_numbers<[1], [0], [0], [1], [0, 0, 1, 1], [], []>} : vector<4x32xf32>, vector<32x1024xf32>, vector<4x1024xf32> -> vector<4x1024xf32>
    %15 = arith.addf %11, %14 : vector<4x1024xf32>
    %c0_11 = arith.constant 0 : index
    %c96 = arith.constant 96 : index
    %16 = vector.load %arg2[%c0_11, %c96] : memref<4x864xf32, #tpu.memory_space<vmem>>, vector<4x32xf32>
    %c0_12 = arith.constant 0 : index
    %c74 = arith.constant 74 : index
    %17 = vector.load %arg1[%c0_12, %c74] : memref<32x1280xf32, #tpu.memory_space<vmem>>, vector<32x1024xf32>
    %cst_13 = arith.constant dense<0.000000e+00> : vector<4x1024xf32>
    %18 = tpu.matmul %16, %17, %cst_13 {dimension_numbers = #tpu.dot_dimension_numbers<[1], [0], [0], [1], [0, 0, 1, 1], [], []>} : vector<4x32xf32>, vector<32x1024xf32>, vector<4x1024xf32> -> vector<4x1024xf32>
    %19 = arith.addf %15, %18 : vector<4x1024xf32>
    %c0_14 = arith.constant 0 : index
    %c128 = arith.constant 128 : index
    %20 = vector.load %arg2[%c0_14, %c128] : memref<4x864xf32, #tpu.memory_space<vmem>>, vector<4x32xf32>
    %c0_15 = arith.constant 0 : index
    %c75 = arith.constant 75 : index
    %21 = vector.load %arg1[%c0_15, %c75] : memref<32x1280xf32, #tpu.memory_space<vmem>>, vector<32x1024xf32>
    %cst_16 = arith.constant dense<0.000000e+00> : vector<4x1024xf32>
    %22 = tpu.matmul %20, %21, %cst_16 {dimension_numbers = #tpu.dot_dimension_numbers<[1], [0], [0], [1], [0, 0, 1, 1], [], []>} : vector<4x32xf32>, vector<32x1024xf32>, vector<4x1024xf32> -> vector<4x1024xf32>
    %23 = arith.addf %19, %22 : vector<4x1024xf32>
    %c0_17 = arith.constant 0 : index
    %c160 = arith.constant 160 : index
    %24 = vector.load %arg2[%c0_17, %c160] : memref<4x864xf32, #tpu.memory_space<vmem>>, vector<4x32xf32>
    %c0_18 = arith.constant 0 : index
    %c76 = arith.constant 76 : index
    %25 = vector.load %arg1[%c0_18, %c76] : memref<32x1280xf32, #tpu.memory_space<vmem>>, vector<32x1024xf32>
    %cst_19 = arith.constant dense<0.000000e+00> : vector<4x1024xf32>
    %26 = tpu.matmul %24, %25, %cst_19 {dimension_numbers = #tpu.dot_dimension_numbers<[1], [0], [0], [1], [0, 0, 1, 1], [], []>} : vector<4x32xf32>, vector<32x1024xf32>, vector<4x1024xf32> -> vector<4x1024xf32>
    %27 = arith.addf %23, %26 : vector<4x1024xf32>
    %c0_20 = arith.constant 0 : index
    %c192 = arith.constant 192 : index
    %28 = vector.load %arg2[%c0_20, %c192] : memref<4x864xf32, #tpu.memory_space<vmem>>, vector<4x32xf32>
    %c0_21 = arith.constant 0 : index
    %c98 = arith.constant 98 : index
    %29 = vector.load %arg1[%c0_21, %c98] : memref<32x1280xf32, #tpu.memory_space<vmem>>, vector<32x1024xf32>
    %cst_22 = arith.constant dense<0.000000e+00> : vector<4x1024xf32>
    %30 = tpu.matmul %28, %29, %cst_22 {dimension_numbers = #tpu.dot_dimension_numbers<[1], [0], [0], [1], [0, 0, 1, 1], [], []>} : vector<4x32xf32>, vector<32x1024xf32>, vector<4x1024xf32> -> vector<4x1024xf32>
    %31 = arith.addf %27, %30 : vector<4x1024xf32>
    %c0_23 = arith.constant 0 : index
    %c224 = arith.constant 224 : index
    %32 = vector.load %arg2[%c0_23, %c224] : memref<4x864xf32, #tpu.memory_space<vmem>>, vector<4x32xf32>
    %c0_24 = arith.constant 0 : index
    %c99 = arith.constant 99 : index
    %33 = vector.load %arg1[%c0_24, %c99] : memref<32x1280xf32, #tpu.memory_space<vmem>>, vector<32x1024xf32>
    %cst_25 = arith.constant dense<0.000000e+00> : vector<4x1024xf32>
    %34 = tpu.matmul %32, %33, %cst_25 {dimension_numbers = #tpu.dot_dimension_numbers<[1], [0], [0], [1], [0, 0, 1, 1], [], []>} : vector<4x32xf32>, vector<32x1024xf32>, vector<4x1024xf32> -> vector<4x1024xf32>
    %35 = arith.addf %31, %34 : vector<4x1024xf32>
    %c0_26 = arith.constant 0 : index
    %c256 = arith.constant 256 : index
    %36 = vector.load %arg2[%c0_26, %c256] : memref<4x864xf32, #tpu.memory_space<vmem>>, vector<4x32xf32>
    %c0_27 = arith.constant 0 : index
    %c100 = arith.constant 100 : index
    %37 = vector.load %arg1[%c0_27, %c100] : memref<32x1280xf32, #tpu.memory_space<vmem>>, vector<32x1024xf32>
    %cst_28 = arith.constant dense<0.000000e+00> : vector<4x1024xf32>
    %38 = tpu.matmul %36, %37, %cst_28 {dimension_numbers = #tpu.dot_dimension_numbers<[1], [0], [0], [1], [0, 0, 1, 1], [], []>} : vector<4x32xf32>, vector<32x1024xf32>, vector<4x1024xf32> -> vector<4x1024xf32>
    %39 = arith.addf %35, %38 : vector<4x1024xf32>
    %c0_29 = arith.constant 0 : index
    %c288 = arith.constant 288 : index
    %40 = vector.load %arg2[%c0_29, %c288] : memref<4x864xf32, #tpu.memory_space<vmem>>, vector<4x32xf32>
    %c0_30 = arith.constant 0 : index
    %c25 = arith.constant 25 : index
    %41 = vector.load %arg1[%c0_30, %c25] : memref<32x1280xf32, #tpu.memory_space<vmem>>, vector<32x1024xf32>
    %cst_31 = arith.constant dense<0.000000e+00> : vector<4x1024xf32>
    %42 = tpu.matmul %40, %41, %cst_31 {dimension_numbers = #tpu.dot_dimension_numbers<[1], [0], [0], [1], [0, 0, 1, 1], [], []>} : vector<4x32xf32>, vector<32x1024xf32>, vector<4x1024xf32> -> vector<4x1024xf32>
    %43 = arith.addf %39, %42 : vector<4x1024xf32>
    %c0_32 = arith.constant 0 : index
    %c320 = arith.constant 320 : index
    %44 = vector.load %arg2[%c0_32, %c320] : memref<4x864xf32, #tpu.memory_space<vmem>>, vector<4x32xf32>
    %c0_33 = arith.constant 0 : index
    %c27 = arith.constant 27 : index
    %45 = vector.load %arg1[%c0_33, %c27] : memref<32x1280xf32, #tpu.memory_space<vmem>>, vector<32x1024xf32>
    %cst_34 = arith.constant dense<0.000000e+00> : vector<4x1024xf32>
    %46 = tpu.matmul %44, %45, %cst_34 {dimension_numbers = #tpu.dot_dimension_numbers<[1], [0], [0], [1], [0, 0, 1, 1], [], []>} : vector<4x32xf32>, vector<32x1024xf32>, vector<4x1024xf32> -> vector<4x1024xf32>
    %47 = arith.addf %43, %46 : vector<4x1024xf32>
    %c0_35 = arith.constant 0 : index
    %c352 = arith.constant 352 : index
    %48 = vector.load %arg2[%c0_35, %c352] : memref<4x864xf32, #tpu.memory_space<vmem>>, vector<4x32xf32>
    %c0_36 = arith.constant 0 : index
    %c29 = arith.constant 29 : index
    %49 = vector.load %arg1[%c0_36, %c29] : memref<32x1280xf32, #tpu.memory_space<vmem>>, vector<32x1024xf32>
    %cst_37 = arith.constant dense<0.000000e+00> : vector<4x1024xf32>
    %50 = tpu.matmul %48, %49, %cst_37 {dimension_numbers = #tpu.dot_dimension_numbers<[1], [0], [0], [1], [0, 0, 1, 1], [], []>} : vector<4x32xf32>, vector<32x1024xf32>, vector<4x1024xf32> -> vector<4x1024xf32>
    %51 = arith.addf %47, %50 : vector<4x1024xf32>
    %c0_38 = arith.constant 0 : index
    %c384 = arith.constant 384 : index
    %52 = vector.load %arg2[%c0_38, %c384] : memref<4x864xf32, #tpu.memory_space<vmem>>, vector<4x32xf32>
    %c0_39 = arith.constant 0 : index
    %c73 = arith.constant 73 : index
    %53 = vector.load %arg1[%c0_39, %c73] : memref<32x1280xf32, #tpu.memory_space<vmem>>, vector<32x1024xf32>
    %cst_40 = arith.constant dense<0.000000e+00> : vector<4x1024xf32>
    %54 = tpu.matmul %52, %53, %cst_40 {dimension_numbers = #tpu.dot_dimension_numbers<[1], [0], [0], [1], [0, 0, 1, 1], [], []>} : vector<4x32xf32>, vector<32x1024xf32>, vector<4x1024xf32> -> vector<4x1024xf32>
    %55 = arith.addf %51, %54 : vector<4x1024xf32>
    %c0_41 = arith.constant 0 : index
    %c416 = arith.constant 416 : index
    %56 = vector.load %arg2[%c0_41, %c416] : memref<4x864xf32, #tpu.memory_space<vmem>>, vector<4x32xf32>
    %c0_42 = arith.constant 0 : index
    %c75_43 = arith.constant 75 : index
    %57 = vector.load %arg1[%c0_42, %c75_43] : memref<32x1280xf32, #tpu.memory_space<vmem>>, vector<32x1024xf32>
    %cst_44 = arith.constant dense<0.000000e+00> : vector<4x1024xf32>
    %58 = tpu.matmul %56, %57, %cst_44 {dimension_numbers = #tpu.dot_dimension_numbers<[1], [0], [0], [1], [0, 0, 1, 1], [], []>} : vector<4x32xf32>, vector<32x1024xf32>, vector<4x1024xf32> -> vector<4x1024xf32>
    %59 = arith.addf %55, %58 : vector<4x1024xf32>
    %c0_45 = arith.constant 0 : index
    %c448 = arith.constant 448 : index
    %60 = vector.load %arg2[%c0_45, %c448] : memref<4x864xf32, #tpu.memory_space<vmem>>, vector<4x32xf32>
    %c0_46 = arith.constant 0 : index
    %c77 = arith.constant 77 : index
    %61 = vector.load %arg1[%c0_46, %c77] : memref<32x1280xf32, #tpu.memory_space<vmem>>, vector<32x1024xf32>
    %cst_47 = arith.constant dense<0.000000e+00> : vector<4x1024xf32>
    %62 = tpu.matmul %60, %61, %cst_47 {dimension_numbers = #tpu.dot_dimension_numbers<[1], [0], [0], [1], [0, 0, 1, 1], [], []>} : vector<4x32xf32>, vector<32x1024xf32>, vector<4x1024xf32> -> vector<4x1024xf32>
    %63 = arith.addf %59, %62 : vector<4x1024xf32>
    %c0_48 = arith.constant 0 : index
    %c480 = arith.constant 480 : index
    %64 = vector.load %arg2[%c0_48, %c480] : memref<4x864xf32, #tpu.memory_space<vmem>>, vector<4x32xf32>
    %c0_49 = arith.constant 0 : index
    %c121 = arith.constant 121 : index
    %65 = vector.load %arg1[%c0_49, %c121] : memref<32x1280xf32, #tpu.memory_space<vmem>>, vector<32x1024xf32>
    %cst_50 = arith.constant dense<0.000000e+00> : vector<4x1024xf32>
    %66 = tpu.matmul %64, %65, %cst_50 {dimension_numbers = #tpu.dot_dimension_numbers<[1], [0], [0], [1], [0, 0, 1, 1], [], []>} : vector<4x32xf32>, vector<32x1024xf32>, vector<4x1024xf32> -> vector<4x1024xf32>
    %67 = arith.addf %63, %66 : vector<4x1024xf32>
    %c0_51 = arith.constant 0 : index
    %c512 = arith.constant 512 : index
    %68 = vector.load %arg2[%c0_51, %c512] : memref<4x864xf32, #tpu.memory_space<vmem>>, vector<4x32xf32>
    %c0_52 = arith.constant 0 : index
    %c123 = arith.constant 123 : index
    %69 = vector.load %arg1[%c0_52, %c123] : memref<32x1280xf32, #tpu.memory_space<vmem>>, vector<32x1024xf32>
    %cst_53 = arith.constant dense<0.000000e+00> : vector<4x1024xf32>
    %70 = tpu.matmul %68, %69, %cst_53 {dimension_numbers = #tpu.dot_dimension_numbers<[1], [0], [0], [1], [0, 0, 1, 1], [], []>} : vector<4x32xf32>, vector<32x1024xf32>, vector<4x1024xf32> -> vector<4x1024xf32>
    %71 = arith.addf %67, %70 : vector<4x1024xf32>
    %c0_54 = arith.constant 0 : index
    %c544 = arith.constant 544 : index
    %72 = vector.load %arg2[%c0_54, %c544] : memref<4x864xf32, #tpu.memory_space<vmem>>, vector<4x32xf32>
    %c0_55 = arith.constant 0 : index
    %c125 = arith.constant 125 : index
    %73 = vector.load %arg1[%c0_55, %c125] : memref<32x1280xf32, #tpu.memory_space<vmem>>, vector<32x1024xf32>
    %cst_56 = arith.constant dense<0.000000e+00> : vector<4x1024xf32>
    %74 = tpu.matmul %72, %73, %cst_56 {dimension_numbers = #tpu.dot_dimension_numbers<[1], [0], [0], [1], [0, 0, 1, 1], [], []>} : vector<4x32xf32>, vector<32x1024xf32>, vector<4x1024xf32> -> vector<4x1024xf32>
    %75 = arith.addf %71, %74 : vector<4x1024xf32>
    %c0_57 = arith.constant 0 : index
    %c576 = arith.constant 576 : index
    %76 = vector.load %arg2[%c0_57, %c576] : memref<4x864xf32, #tpu.memory_space<vmem>>, vector<4x32xf32>
    %c0_58 = arith.constant 0 : index
    %c0_59 = arith.constant 0 : index
    %77 = vector.load %arg1[%c0_58, %c0_59] : memref<32x1280xf32, #tpu.memory_space<vmem>>, vector<32x1024xf32>
    %cst_60 = arith.constant dense<0.000000e+00> : vector<4x1024xf32>
    %78 = tpu.matmul %76, %77, %cst_60 {dimension_numbers = #tpu.dot_dimension_numbers<[1], [0], [0], [1], [0, 0, 1, 1], [], []>} : vector<4x32xf32>, vector<32x1024xf32>, vector<4x1024xf32> -> vector<4x1024xf32>
    %79 = arith.addf %75, %78 : vector<4x1024xf32>
    %c0_61 = arith.constant 0 : index
    %c608 = arith.constant 608 : index
    %80 = vector.load %arg2[%c0_61, %c608] : memref<4x864xf32, #tpu.memory_space<vmem>>, vector<4x32xf32>
    %c0_62 = arith.constant 0 : index
    %c3 = arith.constant 3 : index
    %81 = vector.load %arg1[%c0_62, %c3] : memref<32x1280xf32, #tpu.memory_space<vmem>>, vector<32x1024xf32>
    %cst_63 = arith.constant dense<0.000000e+00> : vector<4x1024xf32>
    %82 = tpu.matmul %80, %81, %cst_63 {dimension_numbers = #tpu.dot_dimension_numbers<[1], [0], [0], [1], [0, 0, 1, 1], [], []>} : vector<4x32xf32>, vector<32x1024xf32>, vector<4x1024xf32> -> vector<4x1024xf32>
    %83 = arith.addf %79, %82 : vector<4x1024xf32>
    %c0_64 = arith.constant 0 : index
    %c640 = arith.constant 640 : index
    %84 = vector.load %arg2[%c0_64, %c640] : memref<4x864xf32, #tpu.memory_space<vmem>>, vector<4x32xf32>
    %c0_65 = arith.constant 0 : index
    %c6 = arith.constant 6 : index
    %85 = vector.load %arg1[%c0_65, %c6] : memref<32x1280xf32, #tpu.memory_space<vmem>>, vector<32x1024xf32>
    %cst_66 = arith.constant dense<0.000000e+00> : vector<4x1024xf32>
    %86 = tpu.matmul %84, %85, %cst_66 {dimension_numbers = #tpu.dot_dimension_numbers<[1], [0], [0], [1], [0, 0, 1, 1], [], []>} : vector<4x32xf32>, vector<32x1024xf32>, vector<4x1024xf32> -> vector<4x1024xf32>
    %87 = arith.addf %83, %86 : vector<4x1024xf32>
    %c0_67 = arith.constant 0 : index
    %c672 = arith.constant 672 : index
    %88 = vector.load %arg2[%c0_67, %c672] : memref<4x864xf32, #tpu.memory_space<vmem>>, vector<4x32xf32>
    %c0_68 = arith.constant 0 : index
    %c72 = arith.constant 72 : index
    %89 = vector.load %arg1[%c0_68, %c72] : memref<32x1280xf32, #tpu.memory_space<vmem>>, vector<32x1024xf32>
    %cst_69 = arith.constant dense<0.000000e+00> : vector<4x1024xf32>
    %90 = tpu.matmul %88, %89, %cst_69 {dimension_numbers = #tpu.dot_dimension_numbers<[1], [0], [0], [1], [0, 0, 1, 1], [], []>} : vector<4x32xf32>, vector<32x1024xf32>, vector<4x1024xf32> -> vector<4x1024xf32>
    %91 = arith.addf %87, %90 : vector<4x1024xf32>
    %c0_70 = arith.constant 0 : index
    %c704 = arith.constant 704 : index
    %92 = vector.load %arg2[%c0_70, %c704] : memref<4x864xf32, #tpu.memory_space<vmem>>, vector<4x32xf32>
    %c0_71 = arith.constant 0 : index
    %c75_72 = arith.constant 75 : index
    %93 = vector.load %arg1[%c0_71, %c75_72] : memref<32x1280xf32, #tpu.memory_space<vmem>>, vector<32x1024xf32>
    %cst_73 = arith.constant dense<0.000000e+00> : vector<4x1024xf32>
    %94 = tpu.matmul %92, %93, %cst_73 {dimension_numbers = #tpu.dot_dimension_numbers<[1], [0], [0], [1], [0, 0, 1, 1], [], []>} : vector<4x32xf32>, vector<32x1024xf32>, vector<4x1024xf32> -> vector<4x1024xf32>
    %95 = arith.addf %91, %94 : vector<4x1024xf32>
    %c0_74 = arith.constant 0 : index
    %c736 = arith.constant 736 : index
    %96 = vector.load %arg2[%c0_74, %c736] : memref<4x864xf32, #tpu.memory_space<vmem>>, vector<4x32xf32>
    %c0_75 = arith.constant 0 : index
    %c78 = arith.constant 78 : index
    %97 = vector.load %arg1[%c0_75, %c78] : memref<32x1280xf32, #tpu.memory_space<vmem>>, vector<32x1024xf32>
    %cst_76 = arith.constant dense<0.000000e+00> : vector<4x1024xf32>
    %98 = tpu.matmul %96, %97, %cst_76 {dimension_numbers = #tpu.dot_dimension_numbers<[1], [0], [0], [1], [0, 0, 1, 1], [], []>} : vector<4x32xf32>, vector<32x1024xf32>, vector<4x1024xf32> -> vector<4x1024xf32>
    %99 = arith.addf %95, %98 : vector<4x1024xf32>
    %c0_77 = arith.constant 0 : index
    %c768 = arith.constant 768 : index
    %100 = vector.load %arg2[%c0_77, %c768] : memref<4x864xf32, #tpu.memory_space<vmem>>, vector<4x32xf32>
    %c0_78 = arith.constant 0 : index
    %c144 = arith.constant 144 : index
    %101 = vector.load %arg1[%c0_78, %c144] : memref<32x1280xf32, #tpu.memory_space<vmem>>, vector<32x1024xf32>
    %cst_79 = arith.constant dense<0.000000e+00> : vector<4x1024xf32>
    %102 = tpu.matmul %100, %101, %cst_79 {dimension_numbers = #tpu.dot_dimension_numbers<[1], [0], [0], [1], [0, 0, 1, 1], [], []>} : vector<4x32xf32>, vector<32x1024xf32>, vector<4x1024xf32> -> vector<4x1024xf32>
    %103 = arith.addf %99, %102 : vector<4x1024xf32>
    %c0_80 = arith.constant 0 : index
    %c800 = arith.constant 800 : index
    %104 = vector.load %arg2[%c0_80, %c800] : memref<4x864xf32, #tpu.memory_space<vmem>>, vector<4x32xf32>
    %c0_81 = arith.constant 0 : index
    %c147 = arith.constant 147 : index
    %105 = vector.load %arg1[%c0_81, %c147] : memref<32x1280xf32, #tpu.memory_space<vmem>>, vector<32x1024xf32>
    %cst_82 = arith.constant dense<0.000000e+00> : vector<4x1024xf32>
    %106 = tpu.matmul %104, %105, %cst_82 {dimension_numbers = #tpu.dot_dimension_numbers<[1], [0], [0], [1], [0, 0, 1, 1], [], []>} : vector<4x32xf32>, vector<32x1024xf32>, vector<4x1024xf32> -> vector<4x1024xf32>
    %107 = arith.addf %103, %106 : vector<4x1024xf32>
    %c0_83 = arith.constant 0 : index
    %c832 = arith.constant 832 : index
    %108 = vector.load %arg2[%c0_83, %c832] : memref<4x864xf32, #tpu.memory_space<vmem>>, vector<4x32xf32>
    %c0_84 = arith.constant 0 : index
    %c150 = arith.constant 150 : index
    %109 = vector.load %arg1[%c0_84, %c150] : memref<32x1280xf32, #tpu.memory_space<vmem>>, vector<32x1024xf32>
    %cst_85 = arith.constant dense<0.000000e+00> : vector<4x1024xf32>
    %110 = tpu.matmul %108, %109, %cst_85 {dimension_numbers = #tpu.dot_dimension_numbers<[1], [0], [0], [1], [0, 0, 1, 1], [], []>} : vector<4x32xf32>, vector<32x1024xf32>, vector<4x1024xf32> -> vector<4x1024xf32>
    %111 = arith.addf %107, %110 : vector<4x1024xf32>
    %112 = vector.extract_strided_slice %111 {offsets = [0, 0], sizes = [4, 384], strides = [1, 1]} : vector<4x1024xf32> to vector<4x384xf32>
    %c0_86 = arith.constant 0 : index
    %c0_87 = arith.constant 0 : index
    %113 = vector.load %arg4[%c0_86, %c0_87] : memref<8x384xf32, #tpu.memory_space<vmem>>, vector<4x384xf32>
    tpu.vector_store %arg4[%c0_86, %c0_87], %112 {strides = array<i32>} : memref<8x384xf32, #tpu.memory_space<vmem>>, vector<4x384xf32>,
    %114 = vector.extract_strided_slice %111 {offsets = [0, 640], sizes = [4, 384], strides = [1, 1]} : vector<4x1024xf32> to vector<4x384xf32>
    %c4 = arith.constant 4 : index
    %c0_88 = arith.constant 0 : index
    %115 = vector.load %arg4[%c4, %c0_88] : memref<8x384xf32, #tpu.memory_space<vmem>>, vector<4x384xf32>
    tpu.vector_store %arg4[%c4, %c0_88], %114 {strides = array<i32>} : memref<8x384xf32, #tpu.memory_space<vmem>>, vector<4x384xf32>,
    return
  }
  func.func @transform_0(%arg0: i32) -> (i32, i32) {
    %c0_i32 = arith.constant 0 : i32
    %c0_i32_0 = arith.constant 0 : i32
    %c0_i32_1 = arith.constant 0 : i32
    return %c0_i32, %c0_i32_0 : i32, i32
  }
  func.func @transform_1(%arg0: i32) -> (i32, i32) {
    %c0_i32 = arith.constant 0 : i32
    %c0_i32_0 = arith.constant 0 : i32
    %c0_i32_1 = arith.constant 0 : i32
    return %c0_i32, %c0_i32_0 : i32, i32
  }
  func.func @transform_2(%arg0: i32) -> (i32, i32) {
    %c0_i32 = arith.constant 0 : i32
    %c0_i32_0 = arith.constant 0 : i32
    %c0_i32_1 = arith.constant 0 : i32
    return %c0_i32, %c0_i32_0 : i32, i32
  }
  func.func @transform_3(%arg0: i32) -> (i32, i32) {
    %c0_i32 = arith.constant 0 : i32
    %c0_i32_0 = arith.constant 0 : i32
    %c0_i32_1 = arith.constant 0 : i32
    return %c0_i32, %c0_i32_0 : i32, i32
  }
}

</mosaic_0001>

<llo_original>
// kernel: classifier_module_forward.1
$region0: #{classifier_module_forward.1}
  #allocation0 [shape = 'u32[]', space=smem, size = 0x4, offset = 0x4, fixed_abs, tag = 'smem constant byte address 0x4 - core index']
  #allocation1 [shape = 'u32[144,128]{1,0:T(1,128)}', space=vmem, size = 0x12000, scoped, tag = 'internal scratch']
  %s0 = inlined_call_operand.vmem [shape: f32[32,1280], index: 0, kind: input, shape index: {}]
  %s1 = inlined_call_operand.vmem [shape: f32[4,864], index: 1, kind: input, shape index: {}]
  %s2 = inlined_call_operand.vmem [shape: f32[4,1], index: 2, kind: input, shape index: {}]
  %s3 = inlined_call_operand.vmem [shape: f32[8,384], index: 3, kind: output, shape index: {}]
  %s4 = sld [smem:[#allocation0]]
  $region22: #{classifier_module_forward.1} parent=0
    _
  %s6 = ssub.s32 1, %s4
  %s7 = scalar_select 0, %s6, %s4
  // Predicated region
  $region2: #{classifier_module_forward.1} parent=0 // pred_check
    _
  $region3: #{classifier_module_forward.1} parent=0 // pred_check_branch
    %9 = sbr.rel (0) target = $region5
  $region4: #{classifier_module_forward.1} parent=0 // pred_region
    _
  $region5: #{classifier_module_forward.1} parent=0 // pred_fallthru
    _
  // Predicated region
  $region6: #{classifier_module_forward.1} parent=0 // pred_check
    _
  $region7: #{classifier_module_forward.1} parent=0 // pred_check_branch
    %11 = sbr.rel (0) target = $region9
  $region8: #{classifier_module_forward.1} parent=0 // pred_region
    _
  $region9: #{classifier_module_forward.1} parent=0 // pred_fallthru
    _
  // Predicated region
  $region10: #{classifier_module_forward.1} parent=0 // pred_check
    _
  $region11: #{classifier_module_forward.1} parent=0 // pred_check_branch
    %13 = sbr.rel (0) target = $region13
  $region12: #{classifier_module_forward.1} parent=0 // pred_region
    _
  $region13: #{classifier_module_forward.1} parent=0 // pred_fallthru
    _
  %v14 = vld [vmem:[%s2] sm:$0xf]
  %16 = vset.pattern.permute.xlu0 0
  %17 = vperm.xlu0 %16, %v14
  %v18 = vpop.permute.xlu0 %17
  %v20 = vadd.f32 %v18, 0.0
  %v21 = vld [vmem:[%s1] sm:$0xf]
  %v22 = vld [vmem:[%s0] sm:$0xff]
  %v23 = vld [vmem:[%s0 + $0x8] sm:$0xff]
  %v24 = vld [vmem:[%s0 + $0x10] sm:$0xff]
  %v25 = vld [vmem:[%s0 + $0x18] sm:$0xff]
  %v26 = vld [vmem:[%s0 + $0x20] sm:$0xff]
  %v27 = vld [vmem:[%s0 + $0x28] sm:$0xff]
  %v28 = vld [vmem:[%s0 + $0x30] sm:$0xff]
  %v29 = vld [vmem:[%s0 + $0x38] sm:$0xff]
  %v30 = vld [vmem:[%s0 + $0x40] sm:$0xff]
  %v31 = vld [vmem:[%s0 + $0x50] sm:$0xff]
  %v32 = vld [vmem:[%s0 + $0x58] sm:$0xff]
  %v33 = vld [vmem:[%s0 + $0x60] sm:$0xff]
  %v34 = vld [vmem:[%s0 + $0x68] sm:$0xff]
  %v35 = vld [vmem:[%s0 + $0x70] sm:$0xff]
  %v36 = vld [vmem:[%s0 + $0x78] sm:$0xff]
  %v37 = vld [vmem:[%s0 + $0x80] sm:$0xff]
  %v38 = vld [vmem:[%s0 + $0x88] sm:$0xff]
  %v39 = vld [vmem:[%s0 + $0x90] sm:$0xff]
  %v40 = vld [vmem:[%s0 + $0xa0] sm:$0xff]
  %v41 = vld [vmem:[%s0 + $0xa8] sm:$0xff]
  %v42 = vld [vmem:[%s0 + $0xb0] sm:$0xff]
  %v43 = vld [vmem:[%s0 + $0xb8] sm:$0xff]
  %v44 = vld [vmem:[%s0 + $0xc0] sm:$0xff]
  %v45 = vld [vmem:[%s0 + $0xc8] sm:$0xff]
  %v46 = vld [vmem:[%s0 + $0xd0] sm:$0xff]
  %v47 = vld [vmem:[%s0 + $0xd8] sm:$0xff]
  %v48 = vld [vmem:[%s0 + $0xe0] sm:$0xff]
  %v49 = vld [vmem:[%s0 + $0xf0] sm:$0xff]
  %v50 = vld [vmem:[%s0 + $0xf8] sm:$0xff]
  %v51 = vld [vmem:[%s0 + $0x100] sm:$0xff]
  %v52 = vld [vmem:[%s0 + $0x108] sm:$0xff]
  %v53 = vld [vmem:[%s0 + $0x110] sm:$0xff]
  %v54 = vld [vmem:[%s0 + $0x118] sm:$0xff]
  %v55 = vld [vmem:[%s0 + $0x120] sm:$0xff]
  %v56 = vld [vmem:[%s0 + $0x128] sm:$0xff]
  %v57 = vld [vmem:[%s0 + $0x130] sm:$0xff]
  %94 = vrot.lane.b32.xlu0 %v22, 78
  %v95 = vpop.permute.xlu0 %94
  %96 = vrot.lane.b32.xlu0 %v23, 78
  %v97 = vpop.permute.xlu0 %96
  %98 = vrot.lane.b32.xlu0 %v24, 78
  %v99 = vpop.permute.xlu0 %98
  %100 = vrot.lane.b32.xlu0 %v25, 78
  %v101 = vpop.permute.xlu0 %100
  %102 = vrot.lane.b32.xlu0 %v26, 78
  %v103 = vpop.permute.xlu0 %102
  %104 = vrot.lane.b32.xlu0 %v27, 78
  %v105 = vpop.permute.xlu0 %104
  %106 = vrot.lane.b32.xlu0 %v28, 78
  %v107 = vpop.permute.xlu0 %106
  %108 = vrot.lane.b32.xlu0 %v29, 78
  %v109 = vpop.permute.xlu0 %108
  %110 = vrot.lane.b32.xlu0 %v30, 78
  %v111 = vpop.permute.xlu0 %110
  %112 = vrot.lane.b32.xlu0 %v31, 78
  %v113 = vpop.permute.xlu0 %112
  %114 = vrot.lane.b32.xlu0 %v32, 78
  %v115 = vpop.permute.xlu0 %114
  %116 = vrot.lane.b32.xlu0 %v33, 78
  %v117 = vpop.permute.xlu0 %116
  %118 = vrot.lane.b32.xlu0 %v34, 78
  %v119 = vpop.permute.xlu0 %118
  %120 = vrot.lane.b32.xlu0 %v35, 78
  %v121 = vpop.permute.xlu0 %120
  %122 = vrot.lane.b32.xlu0 %v36, 78
  %v123 = vpop.permute.xlu0 %122
  %124 = vrot.lane.b32.xlu0 %v37, 78
  %v125 = vpop.permute.xlu0 %124
  %126 = vrot.lane.b32.xlu0 %v38, 78
  %v127 = vpop.permute.xlu0 %126
  %128 = vrot.lane.b32.xlu0 %v39, 78
  %v129 = vpop.permute.xlu0 %128
  %130 = vrot.lane.b32.xlu0 %v40, 78
  %v131 = vpop.permute.xlu0 %130
  %132 = vrot.lane.b32.xlu0 %v41, 78
  %v133 = vpop.permute.xlu0 %132
  %134 = vrot.lane.b32.xlu0 %v42, 78
  %v135 = vpop.permute.xlu0 %134
  %136 = vrot.lane.b32.xlu0 %v43, 78
  %v137 = vpop.permute.xlu0 %136
  %138 = vrot.lane.b32.xlu0 %v44, 78
  %v139 = vpop.permute.xlu0 %138
  %140 = vrot.lane.b32.xlu0 %v45, 78
  %v141 = vpop.permute.xlu0 %140
  %142 = vrot.lane.b32.xlu0 %v46, 78
  %v143 = vpop.permute.xlu0 %142
  %144 = vrot.lane.b32.xlu0 %v47, 78
  %v145 = vpop.permute.xlu0 %144
  %146 = vrot.lane.b32.xlu0 %v48, 78
  %v147 = vpop.permute.xlu0 %146
  %148 = vrot.lane.b32.xlu0 %v49, 78
  %v149 = vpop.permute.xlu0 %148
  %150 = vrot.lane.b32.xlu0 %v50, 78
  %v151 = vpop.permute.xlu0 %150
  %152 = vrot.lane.b32.xlu0 %v51, 78
  %v153 = vpop.permute.xlu0 %152
  %154 = vrot.lane.b32.xlu0 %v52, 78
  %v155 = vpop.permute.xlu0 %154
  %156 = vrot.lane.b32.xlu0 %v53, 78
  %v157 = vpop.permute.xlu0 %156
  %158 = vrot.lane.b32.xlu0 %v54, 78
  %v159 = vpop.permute.xlu0 %158
  %160 = vrot.lane.b32.xlu0 %v55, 78
  %v161 = vpop.permute.xlu0 %160
  %162 = vrot.lane.b32.xlu0 %v56, 78
  %v163 = vpop.permute.xlu0 %162
  %164 = vrot.lane.b32.xlu0 %v57, 78
  %v165 = vpop.permute.xlu0 %164
  %vm166 = vcmask 637952
  %v167 = vsel %vm166, %v95, %v97
  %v168 = vsel %vm166, %v97, %v99
  %v169 = vsel %vm166, %v99, %v101
  %v170 = vsel %vm166, %v101, %v103
  %v171 = vsel %vm166, %v103, %v105
  %v172 = vsel %vm166, %v105, %v107
  %v173 = vsel %vm166, %v107, %v109
  %v174 = vsel %vm166, %v109, %v111
  %v175 = vsel %vm166, %v113, %v115
  %v176 = vsel %vm166, %v115, %v117
  %v177 = vsel %vm166, %v117, %v119
  %v178 = vsel %vm166, %v119, %v121
  %v179 = vsel %vm166, %v121, %v123
  %v180 = vsel %vm166, %v123, %v125
  %v181 = vsel %vm166, %v125, %v127
  %v182 = vsel %vm166, %v127, %v129
  %v183 = vsel %vm166, %v131, %v133
  %v184 = vsel %vm166, %v133, %v135
  %v185 = vsel %vm166, %v135, %v137
  %v186 = vsel %vm166, %v137, %v139
  %v187 = vsel %vm166, %v139, %v141
  %v188 = vsel %vm166, %v141, %v143
  %v189 = vsel %vm166, %v143, %v145
  %v190 = vsel %vm166, %v145, %v147
  %v191 = vsel %vm166, %v149, %v151
  %v192 = vsel %vm166, %v151, %v153
  %v193 = vsel %vm166, %v153, %v155
  %v194 = vsel %vm166, %v155, %v157
  %v195 = vsel %vm166, %v157, %v159
  %v196 = vsel %vm166, %v159, %v161
  %v197 = vsel %vm166, %v161, %v163
  %v198 = vsel %vm166, %v163, %v165
  %vm231 = vcmask 261120
  %v233 = vsel %vm231, %v21, 0
  %235 = vmatprep.subr.mxu0 %v168
  %236 = vmatpush1.msra.mxu0 %v167
  %237 = vmatprep.subr.mxu0 %v176
  %238 = vmatpush1.msra.mxu0 %v175
  %239 = vmatprep.subr.mxu0 %v184
  %240 = vmatpush1.msra.mxu0 %v183
  %241 = vmatprep.subr.mxu0 %v192
  %242 = vmatpush1.msra.mxu0 %v191
  %243 = vmatprep.subr.mxu0 0.0
  %244 = vmatpush1.msra.mxu0 0.0
  %245 = vmatprep.subr.mxu0 0.0
  %246 = vmatpush1.msra.mxu0 0.0
  %247 = vmatprep.subr.mxu0 0.0
  %248 = vmatpush1.msra.mxu0 0.0
  %249 = vmatprep.subr.mxu0 0.0
  %250 = vmatpush1.msra.mxu0 0.0
  %251 = vmatprep.subr.mxu0 0.0
  %252 = vmatpush1.msra.mxu0 0.0
  %253 = vmatprep.subr.mxu0 0.0
  %254 = vmatpush1.msra.mxu0 0.0
  %255 = vmatprep.subr.mxu0 0.0
  %256 = vmatpush1.msra.mxu0 0.0
  %257 = vmatprep.subr.mxu0 0.0
  %258 = vmatpush1.msra.mxu0 0.0
  %259 = vmatprep.subr.mxu0 0.0
  %260 = vmatpush1.msra.mxu0 0.0
  %261 = vmatprep.subr.mxu0 0.0
  %262 = vmatpush1.msra.mxu0 0.0
  %263 = vmatprep.subr.mxu0 0.0
  %264 = vmatpush1.msra.mxu0 0.0
  %265 = vmatprep.subr.mxu0 0.0
  %266 = vmatpush1.msra.mxu0 0.0
  %267 = vmatprep.subr.mxu0 0.0
  %268 = vmatpush1.msra.mxu0 0.0
  %269 = vmatprep.subr.mxu0 0.0
  %270 = vmatpush1.msra.mxu0 0.0
  %271 = vmatprep.subr.mxu0 0.0
  %272 = vmatpush1.msra.mxu0 0.0
  %273 = vmatprep.subr.mxu0 0.0
  %274 = vmatpush1.msra.mxu0 0.0
  %275 = vmatprep.subr.mxu0 0.0
  %276 = vmatpush1.msra.mxu0 0.0
  %277 = vmatprep.subr.mxu0 0.0
  %278 = vmatpush1.msra.mxu0 0.0
  %279 = vmatprep.subr.mxu0 0.0
  %280 = vmatpush1.msra.mxu0 0.0
  %281 = vmatprep.subr.mxu0 0.0
  %282 = vmatpush1.msra.mxu0 0.0
  %283 = vmatprep.subr.mxu0 0.0
  %284 = vmatpush1.msra.mxu0 0.0
  %285 = vmatprep.subr.mxu0 0.0
  %286 = vmatpush1.msra.mxu0 0.0
  %287 = vmatprep.subr.mxu0 0.0
  %288 = vmatpush1.msra.mxu0 0.0
  %289 = vmatprep.subr.mxu0 0.0
  %290 = vmatpush1.msra.mxu0 0.0
  %291 = vmatprep.subr.mxu0 0.0
  %292 = vmatpush1.msra.mxu0 0.0
  %293 = vmatprep.subr.mxu0 0.0
  %294 = vmatpush1.msra.mxu0 0.0
  %295 = vmatprep.subr.mxu0 0.0
  %296 = vmatpush1.msra.mxu0 0.0
  %297 = vmatprep.subr.mxu0 0.0
  %298 = vmatpush1.msra.mxu0 0.0
  %299 = vmatprep.mubr.f32.mxu0 0.0
  %300 = vmatmul.mubr.f32.gmra.mrb[0].mxu0 %v233
  %v301 = vpop.f32.mrb[0].mxu0
  %v302 = vadd.f32 0.0, %v301
  %v303 = vpop.f32.mrb[0].mxu0
  %v304 = vadd.f32 0.0, %v303
  %305 = vdwg.mxu0
  %306 = vmatprep.subr.mxu0 %v170
  %307 = vmatpush1.msra.mxu0 %v169
  %308 = vmatprep.subr.mxu0 %v178
  %309 = vmatpush1.msra.mxu0 %v177
  %310 = vmatprep.subr.mxu0 %v186
  %311 = vmatpush1.msra.mxu0 %v185
  %312 = vmatprep.subr.mxu0 %v194
  %313 = vmatpush1.msra.mxu0 %v193
  %314 = vmatprep.subr.mxu0 0.0
  %315 = vmatpush1.msra.mxu0 0.0
  %316 = vmatprep.subr.mxu0 0.0
  %317 = vmatpush1.msra.mxu0 0.0
  %318 = vmatprep.subr.mxu0 0.0
  %319 = vmatpush1.msra.mxu0 0.0
  %320 = vmatprep.subr.mxu0 0.0
  %321 = vmatpush1.msra.mxu0 0.0
  %322 = vmatprep.subr.mxu0 0.0
  %323 = vmatpush1.msra.mxu0 0.0
  %324 = vmatprep.subr.mxu0 0.0
  %325 = vmatpush1.msra.mxu0 0.0
  %326 = vmatprep.subr.mxu0 0.0
  %327 = vmatpush1.msra.mxu0 0.0
  %328 = vmatprep.subr.mxu0 0.0
  %329 = vmatpush1.msra.mxu0 0.0
  %330 = vmatprep.subr.mxu0 0.0
  %331 = vmatpush1.msra.mxu0 0.0
  %332 = vmatprep.subr.mxu0 0.0
  %333 = vmatpush1.msra.mxu0 0.0
  %334 = vmatprep.subr.mxu0 0.0
  %335 = vmatpush1.msra.mxu0 0.0
  %336 = vmatprep.subr.mxu0 0.0
  %337 = vmatpush1.msra.mxu0 0.0
  %338 = vmatprep.subr.mxu0 0.0
  %339 = vmatpush1.msra.mxu0 0.0
  %340 = vmatprep.subr.mxu0 0.0
  %341 = vmatpush1.msra.mxu0 0.0
  %342 = vmatprep.subr.mxu0 0.0
  %343 = vmatpush1.msra.mxu0 0.0
  %344 = vmatprep.subr.mxu0 0.0
  %345 = vmatpush1.msra.mxu0 0.0
  %346 = vmatprep.subr.mxu0 0.0
  %347 = vmatpush1.msra.mxu0 0.0
  %348 = vmatprep.subr.mxu0 0.0
  %349 = vmatpush1.msra.mxu0 0.0
  %350 = vmatprep.subr.mxu0 0.0
  %351 = vmatpush1.msra.mxu0 0.0
  %352 = vmatprep.subr.mxu0 0.0
  %353 = vmatpush1.msra.mxu0 0.0
  %354 = vmatprep.subr.mxu0 0.0
  %355 = vmatpush1.msra.mxu0 0.0
  %356 = vmatprep.subr.mxu0 0.0
  %357 = vmatpush1.msra.mxu0 0.0
  %358 = vmatprep.subr.mxu0 0.0
  %359 = vmatpush1.msra.mxu0 0.0
  %360 = vmatprep.subr.mxu0 0.0
  %361 = vmatpush1.msra.mxu0 0.0
  %362 = vmatprep.subr.mxu0 0.0
  %363 = vmatpush1.msra.mxu0 0.0
  %364 = vmatprep.subr.mxu0 0.0
  %365 = vmatpush1.msra.mxu0 0.0
  %366 = vmatprep.subr.mxu0 0.0
  %367 = vmatpush1.msra.mxu0 0.0
  %368 = vmatprep.subr.mxu0 0.0
  %369 = vmatpush1.msra.mxu0 0.0
  %370 = vmatprep.mubr.f32.mxu0 0.0
  %371 = vmatmul.mubr.f32.gmra.mrb[0].mxu0 %v233
  %v372 = vpop.f32.mrb[0].mxu0
  %v373 = vadd.f32 0.0, %v372
  %v374 = vpop.f32.mrb[0].mxu0
  %375 = vdwg.mxu0
  %376 = vmatprep.subr.mxu0 %v172
  %377 = vmatpush1.msra.mxu0 %v171
  %378 = vmatprep.subr.mxu0 %v180
  %379 = vmatpush1.msra.mxu0 %v179
  %380 = vmatprep.subr.mxu0 %v188
  %381 = vmatpush1.msra.mxu0 %v187
  %382 = vmatprep.subr.mxu0 %v196
  %383 = vmatpush1.msra.mxu0 %v195
  %384 = vmatprep.subr.mxu0 0.0
  %385 = vmatpush1.msra.mxu0 0.0
  %386 = vmatprep.subr.mxu0 0.0
  %387 = vmatpush1.msra.mxu0 0.0
  %388 = vmatprep.subr.mxu0 0.0
  %389 = vmatpush1.msra.mxu0 0.0
  %390 = vmatprep.subr.mxu0 0.0
  %391 = vmatpush1.msra.mxu0 0.0
  %392 = vmatprep.subr.mxu0 0.0
  %393 = vmatpush1.msra.mxu0 0.0
  %394 = vmatprep.subr.mxu0 0.0
  %395 = vmatpush1.msra.mxu0 0.0
  %396 = vmatprep.subr.mxu0 0.0
  %397 = vmatpush1.msra.mxu0 0.0
  %398 = vmatprep.subr.mxu0 0.0
  %399 = vmatpush1.msra.mxu0 0.0
  %400 = vmatprep.subr.mxu0 0.0
  %401 = vmatpush1.msra.mxu0 0.0
  %402 = vmatprep.subr.mxu0 0.0
  %403 = vmatpush1.msra.mxu0 0.0
  %404 = vmatprep.subr.mxu0 0.0
  %405 = vmatpush1.msra.mxu0 0.0
  %406 = vmatprep.subr.mxu0 0.0
  %407 = vmatpush1.msra.mxu0 0.0
  %408 = vmatprep.subr.mxu0 0.0
  %409 = vmatpush1.msra.mxu0 0.0
  %410 = vmatprep.subr.mxu0 0.0
  %411 = vmatpush1.msra.mxu0 0.0
  %412 = vmatprep.subr.mxu0 0.0
  %413 = vmatpush1.msra.mxu0 0.0
  %414 = vmatprep.subr.mxu0 0.0
  %415 = vmatpush1.msra.mxu0 0.0
  %416 = vmatprep.subr.mxu0 0.0
  %417 = vmatpush1.msra.mxu0 0.0
  %418 = vmatprep.subr.mxu0 0.0
  %419 = vmatpush1.msra.mxu0 0.0
  %420 = vmatprep.subr.mxu0 0.0
  %421 = vmatpush1.msra.mxu0 0.0
  %422 = vmatprep.subr.mxu0 0.0
  %423 = vmatpush1.msra.mxu0 0.0
  %424 = vmatprep.subr.mxu0 0.0
  %425 = vmatpush1.msra.mxu0 0.0
  %426 = vmatprep.subr.mxu0 0.0
  %427 = vmatpush1.msra.mxu0 0.0
  %428 = vmatprep.subr.mxu0 0.0
  %429 = vmatpush1.msra.mxu0 0.0
  %430 = vmatprep.subr.mxu0 0.0
  %431 = vmatpush1.msra.mxu0 0.0
  %432 = vmatprep.subr.mxu0 0.0
  %433 = vmatpush1.msra.mxu0 0.0
  %434 = vmatprep.subr.mxu0 0.0
  %435 = vmatpush1.msra.mxu0 0.0
  %436 = vmatprep.subr.mxu0 0.0
  %437 = vmatpush1.msra.mxu0 0.0
  %438 = vmatprep.subr.mxu0 0.0
  %439 = vmatpush1.msra.mxu0 0.0
  %440 = vmatprep.mubr.f32.mxu0 0.0
  %441 = vmatmul.mubr.f32.gmra.mrb[0].mxu0 %v233
  %v442 = vpop.f32.mrb[0].mxu0
  %v443 = vpop.f32.mrb[0].mxu0
  %v444 = vadd.f32 0.0, %v443
  %445 = vdwg.mxu0
  %446 = vmatprep.subr.mxu0 %v174
  %447 = vmatpush1.msra.mxu0 %v173
  %448 = vmatprep.subr.mxu0 %v182
  %449 = vmatpush1.msra.mxu0 %v181
  %450 = vmatprep.subr.mxu0 %v190
  %451 = vmatpush1.msra.mxu0 %v189
  %452 = vmatprep.subr.mxu0 %v198
  %453 = vmatpush1.msra.mxu0 %v197
  %454 = vmatprep.subr.mxu0 0.0
  %455 = vmatpush1.msra.mxu0 0.0
  %456 = vmatprep.subr.mxu0 0.0
  %457 = vmatpush1.msra.mxu0 0.0
  %458 = vmatprep.subr.mxu0 0.0
  %459 = vmatpush1.msra.mxu0 0.0
  %460 = vmatprep.subr.mxu0 0.0
  %461 = vmatpush1.msra.mxu0 0.0
  %462 = vmatprep.subr.mxu0 0.0
  %463 = vmatpush1.msra.mxu0 0.0
  %464 = vmatprep.subr.mxu0 0.0
  %465 = vmatpush1.msra.mxu0 0.0
  %466 = vmatprep.subr.mxu0 0.0
  %467 = vmatpush1.msra.mxu0 0.0
  %468 = vmatprep.subr.mxu0 0.0
  %469 = vmatpush1.msra.mxu0 0.0
  %470 = vmatprep.subr.mxu0 0.0
  %471 = vmatpush1.msra.mxu0 0.0
  %472 = vmatprep.subr.mxu0 0.0
  %473 = vmatpush1.msra.mxu0 0.0
  %474 = vmatprep.subr.mxu0 0.0
  %475 = vmatpush1.msra.mxu0 0.0
  %476 = vmatprep.subr.mxu0 0.0
  %477 = vmatpush1.msra.mxu0 0.0
  %478 = vmatprep.subr.mxu0 0.0
  %479 = vmatpush1.msra.mxu0 0.0
  %480 = vmatprep.subr.mxu0 0.0
  %481 = vmatpush1.msra.mxu0 0.0
  %482 = vmatprep.subr.mxu0 0.0
  %483 = vmatpush1.msra.mxu0 0.0
  %484 = vmatprep.subr.mxu0 0.0
  %485 = vmatpush1.msra.mxu0 0.0
  %486 = vmatprep.subr.mxu0 0.0
  %487 = vmatpush1.msra.mxu0 0.0
  %488 = vmatprep.subr.mxu0 0.0
  %489 = vmatpush1.msra.mxu0 0.0
  %490 = vmatprep.subr.mxu0 0.0
  %491 = vmatpush1.msra.mxu0 0.0
  %492 = vmatprep.subr.mxu0 0.0
  %493 = vmatpush1.msra.mxu0 0.0
  %494 = vmatprep.subr.mxu0 0.0
  %495 = vmatpush1.msra.mxu0 0.0
  %496 = vmatprep.subr.mxu0 0.0
  %497 = vmatpush1.msra.mxu0 0.0
  %498 = vmatprep.subr.mxu0 0.0
  %499 = vmatpush1.msra.mxu0 0.0
  %500 = vmatprep.subr.mxu0 0.0
  %501 = vmatpush1.msra.mxu0 0.0
  %502 = vmatprep.subr.mxu0 0.0
  %503 = vmatpush1.msra.mxu0 0.0
  %504 = vmatprep.subr.mxu0 0.0
  %505 = vmatpush1.msra.mxu0 0.0
  %506 = vmatprep.subr.mxu0 0.0
  %507 = vmatpush1.msra.mxu0 0.0
  %508 = vmatprep.subr.mxu0 0.0
  %509 = vmatpush1.msra.mxu0 0.0
  %510 = vmatprep.mubr.f32.mxu0 0.0
  %511 = vmatmul.mubr.f32.gmra.mrb[0].mxu0 %v233
  %v512 = vpop.f32.mrb[0].mxu0
  %v513 = vadd.f32 0.0, %v512
  %v514 = vpop.f32.mrb[0].mxu0
  %v515 = vadd.f32 0.0, %v514
  %516 = vdwg.mxu0
  %v517 = vadd.f32 %v20, %v302
  %v518 = vadd.f32 %v20, %v304
  %v519 = vadd.f32 %v20, %v373
  %v520 = vadd.f32 %v20, %v444
  %v521 = vadd.f32 %v20, %v513
  %v522 = vadd.f32 %v20, %v515
  %523 = vrot.lane.b32.xlu0 %v21, 96
  %v524 = vpop.permute.xlu0 %523
  %525 = vrot.lane.b32.xlu0 %v22, 77
  %v526 = vpop.permute.xlu0 %525
  %527 = vrot.lane.b32.xlu0 %v23, 77
  %v528 = vpop.permute.xlu0 %527
  %529 = vrot.lane.b32.xlu0 %v24, 77
  %v530 = vpop.permute.xlu0 %529
  %531 = vrot.lane.b32.xlu0 %v25, 77
  %v532 = vpop.permute.xlu0 %531
  %533 = vrot.lane.b32.xlu0 %v26, 77
  %v534 = vpop.permute.xlu0 %533
  %535 = vrot.lane.b32.xlu0 %v27, 77
  %v536 = vpop.permute.xlu0 %535
  %537 = vrot.lane.b32.xlu0 %v28, 77
  %v538 = vpop.permute.xlu0 %537
  %539 = vrot.lane.b32.xlu0 %v29, 77
  %v540 = vpop.permute.xlu0 %539
  %541 = vrot.lane.b32.xlu0 %v30, 77
  %v542 = vpop.permute.xlu0 %541
  %543 = vrot.lane.b32.xlu0 %v31, 77
  %v544 = vpop.permute.xlu0 %543
  %545 = vrot.lane.b32.xlu0 %v32, 77
  %v546 = vpop.permute.xlu0 %545
  %547 = vrot.lane.b32.xlu0 %v33, 77
  %v548 = vpop.permute.xlu0 %547
  %549 = vrot.lane.b32.xlu0 %v34, 77
  %v550 = vpop.permute.xlu0 %549
  %551 = vrot.lane.b32.xlu0 %v35, 77
  %v552 = vpop.permute.xlu0 %551
  %553 = vrot.lane.b32.xlu0 %v36, 77
  %v554 = vpop.permute.xlu0 %553
  %555 = vrot.lane.b32.xlu0 %v37, 77
  %v556 = vpop.permute.xlu0 %555
  %557 = vrot.lane.b32.xlu0 %v38, 77
  %v558 = vpop.permute.xlu0 %557
  %559 = vrot.lane.b32.xlu0 %v39, 77
  %v560 = vpop.permute.xlu0 %559
  %561 = vrot.lane.b32.xlu0 %v40, 77
  %v562 = vpop.permute.xlu0 %561
  %563 = vrot.lane.b32.xlu0 %v41, 77
  %v564 = vpop.permute.xlu0 %563
  %565 = vrot.lane.b32.xlu0 %v42, 77
  %v566 = vpop.permute.xlu0 %565
  %567 = vrot.lane.b32.xlu0 %v43, 77
  %v568 = vpop.permute.xlu0 %567
  %569 = vrot.lane.b32.xlu0 %v44, 77
  %v570 = vpop.permute.xlu0 %569
  %571 = vrot.lane.b32.xlu0 %v45, 77
  %v572 = vpop.permute.xlu0 %571
  %573 = vrot.lane.b32.xlu0 %v46, 77
  %v574 = vpop.permute.xlu0 %573
  %575 = vrot.lane.b32.xlu0 %v47, 77
  %v576 = vpop.permute.xlu0 %575
  %577 = vrot.lane.b32.xlu0 %v48, 77
  %v578 = vpop.permute.xlu0 %577
  %579 = vrot.lane.b32.xlu0 %v49, 77
  %v580 = vpop.permute.xlu0 %579
  %581 = vrot.lane.b32.xlu0 %v50, 77
  %v582 = vpop.permute.xlu0 %581
  %583 = vrot.lane.b32.xlu0 %v51, 77
  %v584 = vpop.permute.xlu0 %583
  %585 = vrot.lane.b32.xlu0 %v52, 77
  %v586 = vpop.permute.xlu0 %585
  %587 = vrot.lane.b32.xlu0 %v53, 77
  %v588 = vpop.permute.xlu0 %587
  %589 = vrot.lane.b32.xlu0 %v54, 77
  %v590 = vpop.permute.xlu0 %589
  %591 = vrot.lane.b32.xlu0 %v55, 77
  %v592 = vpop.permute.xlu0 %591
  %593 = vrot.lane.b32.xlu0 %v56, 77
  %v594 = vpop.permute.xlu0 %593
  %595 = vrot.lane.b32.xlu0 %v57, 77
  %v596 = vpop.permute.xlu0 %595
  %vm597 = vcmask 629760
  %v598 = vsel %vm597, %v526, %v528
  %v599 = vsel %vm597, %v528, %v530
  %v600 = vsel %vm597, %v530, %v532
  %v601 = vsel %vm597, %v532, %v534
  %v602 = vsel %vm597, %v534, %v536
  %v603 = vsel %vm597, %v536, %v538
  %v604 = vsel %vm597, %v538, %v540
  %v605 = vsel %vm597, %v540, %v542
  %v606 = vsel %vm597, %v544, %v546
  %v607 = vsel %vm597, %v546, %v548
  %v608 = vsel %vm597, %v548, %v550
  %v609 = vsel %vm597, %v550, %v552
  %v610 = vsel %vm597, %v552, %v554
  %v611 = vsel %vm597, %v554, %v556
  %v612 = vsel %vm597, %v556, %v558
  %v613 = vsel %vm597, %v558, %v560
  %v614 = vsel %vm597, %v562, %v564
  %v615 = vsel %vm597, %v564, %v566
  %v616 = vsel %vm597, %v566, %v568
  %v617 = vsel %vm597, %v568, %v570
  %v618 = vsel %vm597, %v570, %v572
  %v619 = vsel %vm597, %v572, %v574
  %v620 = vsel %vm597, %v574, %v576
  %v621 = vsel %vm597, %v576, %v578
  %v622 = vsel %vm597, %v580, %v582
  %v623 = vsel %vm597, %v582, %v584
  %v624 = vsel %vm597, %v584, %v586
  %v625 = vsel %vm597, %v586, %v588
  %v626 = vsel %vm597, %v588, %v590
  %v627 = vsel %vm597, %v590, %v592
  %v628 = vsel %vm597, %v592, %v594
  %v629 = vsel %vm597, %v594, %v596
  %v662 = vsel %vm231, %v524, 0
  %664 = vmatprep.subr.mxu0 %v599
  %665 = vmatpush1.msra.mxu0 %v598
  %666 = vmatprep.subr.mxu0 %v607
  %667 = vmatpush1.msra.mxu0 %v606
  %668 = vmatprep.subr.mxu0 %v615
  %669 = vmatpush1.msra.mxu0 %v614
  %670 = vmatprep.subr.mxu0 %v623
  %671 = vmatpush1.msra.mxu0 %v622
  %672 = vmatprep.subr.mxu0 0.0
  %673 = vmatpush1.msra.mxu0 0.0
  %674 = vmatprep.subr.mxu0 0.0
  %675 = vmatpush1.msra.mxu0 0.0
  %676 = vmatprep.subr.mxu0 0.0
  %677 = vmatpush1.msra.mxu0 0.0
  %678 = vmatprep.subr.mxu0 0.0
  %679 = vmatpush1.msra.mxu0 0.0
  %680 = vmatprep.subr.mxu0 0.0
  %681 = vmatpush1.msra.mxu0 0.0
  %682 = vmatprep.subr.mxu0 0.0
  %683 = vmatpush1.msra.mxu0 0.0
  %684 = vmatprep.subr.mxu0 0.0
  %685 = vmatpush1.msra.mxu0 0.0
  %686 = vmatprep.subr.mxu0 0.0
  %687 = vmatpush1.msra.mxu0 0.0
  %688 = vmatprep.subr.mxu0 0.0
  %689 = vmatpush1.msra.mxu0 0.0
  %690 = vmatprep.subr.mxu0 0.0
  %691 = vmatpush1.msra.mxu0 0.0
  %692 = vmatprep.subr.mxu0 0.0
  %693 = vmatpush1.msra.mxu0 0.0
  %694 = vmatprep.subr.mxu0 0.0
  %695 = vmatpush1.msra.mxu0 0.0
  %696 = vmatprep.subr.mxu0 0.0
  %697 = vmatpush1.msra.mxu0 0.0
  %698 = vmatprep.subr.mxu0 0.0
  %699 = vmatpush1.msra.mxu0 0.0
  %700 = vmatprep.subr.mxu0 0.0
  %701 = vmatpush1.msra.mxu0 0.0
  %702 = vmatprep.subr.mxu0 0.0
  %703 = vmatpush1.msra.mxu0 0.0
  %704 = vmatprep.subr.mxu0 0.0
  %705 = vmatpush1.msra.mxu0 0.0
  %706 = vmatprep.subr.mxu0 0.0
  %707 = vmatpush1.msra.mxu0 0.0
  %708 = vmatprep.subr.mxu0 0.0
  %709 = vmatpush1.msra.mxu0 0.0
  %710 = vmatprep.subr.mxu0 0.0
  %711 = vmatpush1.msra.mxu0 0.0
  %712 = vmatprep.subr.mxu0 0.0
  %713 = vmatpush1.msra.mxu0 0.0
  %714 = vmatprep.subr.mxu0 0.0
  %715 = vmatpush1.msra.mxu0 0.0
  %716 = vmatprep.subr.mxu0 0.0
  %717 = vmatpush1.msra.mxu0 0.0
  %718 = vmatprep.subr.mxu0 0.0
  %719 = vmatpush1.msra.mxu0 0.0
  %720 = vmatprep.subr.mxu0 0.0
  %721 = vmatpush1.msra.mxu0 0.0
  %722 = vmatprep.subr.mxu0 0.0
  %723 = vmatpush1.msra.mxu0 0.0
  %724 = vmatprep.subr.mxu0 0.0
  %725 = vmatpush1.msra.mxu0 0.0
  %726 = vmatprep.subr.mxu0 0.0
  %727 = vmatpush1.msra.mxu0 0.0
  %728 = vmatprep.mubr.f32.mxu0 0.0
  %729 = vmatmul.mubr.f32.gmra.mrb[0].mxu0 %v662
  %v730 = vpop.f32.mrb[0].mxu0
  %v731 = vadd.f32 0.0, %v730
  %v732 = vpop.f32.mrb[0].mxu0
  %v733 = vadd.f32 0.0, %v732
  %734 = vdwg.mxu0
  %735 = vmatprep.subr.mxu0 %v601
  %736 = vmatpush1.msra.mxu0 %v600
  %737 = vmatprep.subr.mxu0 %v609
  %738 = vmatpush1.msra.mxu0 %v608
  %739 = vmatprep.subr.mxu0 %v617
  %740 = vmatpush1.msra.mxu0 %v616
  %741 = vmatprep.subr.mxu0 %v625
  %742 = vmatpush1.msra.mxu0 %v624
  %743 = vmatprep.subr.mxu0 0.0
  %744 = vmatpush1.msra.mxu0 0.0
  %745 = vmatprep.subr.mxu0 0.0
  %746 = vmatpush1.msra.mxu0 0.0
  %747 = vmatprep.subr.mxu0 0.0
  %748 = vmatpush1.msra.mxu0 0.0
  %749 = vmatprep.subr.mxu0 0.0
  %750 = vmatpush1.msra.mxu0 0.0
  %751 = vmatprep.subr.mxu0 0.0
  %752 = vmatpush1.msra.mxu0 0.0
  %753 = vmatprep.subr.mxu0 0.0
  %754 = vmatpush1.msra.mxu0 0.0
  %755 = vmatprep.subr.mxu0 0.0
  %756 = vmatpush1.msra.mxu0 0.0
  %757 = vmatprep.subr.mxu0 0.0
  %758 = vmatpush1.msra.mxu0 0.0
  %759 = vmatprep.subr.mxu0 0.0
  %760 = vmatpush1.msra.mxu0 0.0
  %761 = vmatprep.subr.mxu0 0.0
  %762 = vmatpush1.msra.mxu0 0.0
  %763 = vmatprep.subr.mxu0 0.0
  %764 = vmatpush1.msra.mxu0 0.0
  %765 = vmatprep.subr.mxu0 0.0
  %766 = vmatpush1.msra.mxu0 0.0
  %767 = vmatprep.subr.mxu0 0.0
  %768 = vmatpush1.msra.mxu0 0.0
  %769 = vmatprep.subr.mxu0 0.0
  %770 = vmatpush1.msra.mxu0 0.0
  %771 = vmatprep.subr.mxu0 0.0
  %772 = vmatpush1.msra.mxu0 0.0
  %773 = vmatprep.subr.mxu0 0.0
  %774 = vmatpush1.msra.mxu0 0.0
  %775 = vmatprep.subr.mxu0 0.0
  %776 = vmatpush1.msra.mxu0 0.0
  %777 = vmatprep.subr.mxu0 0.0
  %778 = vmatpush1.msra.mxu0 0.0
  %779 = vmatprep.subr.mxu0 0.0
  %780 = vmatpush1.msra.mxu0 0.0
  %781 = vmatprep.subr.mxu0 0.0
  %782 = vmatpush1.msra.mxu0 0.0
  %783 = vmatprep.subr.mxu0 0.0
  %784 = vmatpush1.msra.mxu0 0.0
  %785 = vmatprep.subr.mxu0 0.0
  %786 = vmatpush1.msra.mxu0 0.0
  %787 = vmatprep.subr.mxu0 0.0
  %788 = vmatpush1.msra.mxu0 0.0
  %789 = vmatprep.subr.mxu0 0.0
  %790 = vmatpush1.msra.mxu0 0.0
  %791 = vmatprep.subr.mxu0 0.0
  %792 = vmatpush1.msra.mxu0 0.0
  %793 = vmatprep.subr.mxu0 0.0
  %794 = vmatpush1.msra.mxu0 0.0
  %795 = vmatprep.subr.mxu0 0.0
  %796 = vmatpush1.msra.mxu0 0.0
  %797 = vmatprep.subr.mxu0 0.0
  %798 = vmatpush1.msra.mxu0 0.0
  %799 = vmatprep.mubr.f32.mxu0 0.0
  %800 = vmatmul.mubr.f32.gmra.mrb[0].mxu0 %v662
  %v801 = vpop.f32.mrb[0].mxu0
  %v802 = vadd.f32 0.0, %v801
  %v803 = vpop.f32.mrb[0].mxu0
  %804 = vdwg.mxu0
  %805 = vmatprep.subr.mxu0 %v603
  %806 = vmatpush1.msra.mxu0 %v602
  %807 = vmatprep.subr.mxu0 %v611
  %808 = vmatpush1.msra.mxu0 %v610
  %809 = vmatprep.subr.mxu0 %v619
  %810 = vmatpush1.msra.mxu0 %v618
  %811 = vmatprep.subr.mxu0 %v627
  %812 = vmatpush1.msra.mxu0 %v626
  %813 = vmatprep.subr.mxu0 0.0
  %814 = vmatpush1.msra.mxu0 0.0
  %815 = vmatprep.subr.mxu0 0.0
  %816 = vmatpush1.msra.mxu0 0.0
  %817 = vmatprep.subr.mxu0 0.0
  %818 = vmatpush1.msra.mxu0 0.0
  %819 = vmatprep.subr.mxu0 0.0
  %820 = vmatpush1.msra.mxu0 0.0
  %821 = vmatprep.subr.mxu0 0.0
  %822 = vmatpush1.msra.mxu0 0.0
  %823 = vmatprep.subr.mxu0 0.0
  %824 = vmatpush1.msra.mxu0 0.0
  %825 = vmatprep.subr.mxu0 0.0
  %826 = vmatpush1.msra.mxu0 0.0
  %827 = vmatprep.subr.mxu0 0.0
  %828 = vmatpush1.msra.mxu0 0.0
  %829 = vmatprep.subr.mxu0 0.0
  %830 = vmatpush1.msra.mxu0 0.0
  %831 = vmatprep.subr.mxu0 0.0
  %832 = vmatpush1.msra.mxu0 0.0
  %833 = vmatprep.subr.mxu0 0.0
  %834 = vmatpush1.msra.mxu0 0.0
  %835 = vmatprep.subr.mxu0 0.0
  %836 = vmatpush1.msra.mxu0 0.0
  %837 = vmatprep.subr.mxu0 0.0
  %838 = vmatpush1.msra.mxu0 0.0
  %839 = vmatprep.subr.mxu0 0.0
  %840 = vmatpush1.msra.mxu0 0.0
  %841 = vmatprep.subr.mxu0 0.0
  %842 = vmatpush1.msra.mxu0 0.0
  %843 = vmatprep.subr.mxu0 0.0
  %844 = vmatpush1.msra.mxu0 0.0
  %845 = vmatprep.subr.mxu0 0.0
  %846 = vmatpush1.msra.mxu0 0.0
  %847 = vmatprep.subr.mxu0 0.0
  %848 = vmatpush1.msra.mxu0 0.0
  %849 = vmatprep.subr.mxu0 0.0
  %850 = vmatpush1.msra.mxu0 0.0
  %851 = vmatprep.subr.mxu0 0.0
  %852 = vmatpush1.msra.mxu0 0.0
  %853 = vmatprep.subr.mxu0 0.0
  %854 = vmatpush1.msra.mxu0 0.0
  %855 = vmatprep.subr.mxu0 0.0
  %856 = vmatpush1.msra.mxu0 0.0
  %857 = vmatprep.subr.mxu0 0.0
  %858 = vmatpush1.msra.mxu0 0.0
  %859 = vmatprep.subr.mxu0 0.0
  %860 = vmatpush1.msra.mxu0 0.0
  %861 = vmatprep.subr.mxu0 0.0
  %862 = vmatpush1.msra.mxu0 0.0
  %863 = vmatprep.subr.mxu0 0.0
  %864 = vmatpush1.msra.mxu0 0.0
  %865 = vmatprep.subr.mxu0 0.0
  %866 = vmatpush1.msra.mxu0 0.0
  %867 = vmatprep.subr.mxu0 0.0
  %868 = vmatpush1.msra.mxu0 0.0
  %869 = vmatprep.mubr.f32.mxu0 0.0
  %870 = vmatmul.mubr.f32.gmra.mrb[0].mxu0 %v662
  %v871 = vpop.f32.mrb[0].mxu0
  %v872 = vpop.f32.mrb[0].mxu0
  %v873 = vadd.f32 0.0, %v872
  %874 = vdwg.mxu0
  %875 = vmatprep.subr.mxu0 %v605
  %876 = vmatpush1.msra.mxu0 %v604
  %877 = vmatprep.subr.mxu0 %v613
  %878 = vmatpush1.msra.mxu0 %v612
  %879 = vmatprep.subr.mxu0 %v621
  %880 = vmatpush1.msra.mxu0 %v620
  %881 = vmatprep.subr.mxu0 %v629
  %882 = vmatpush1.msra.mxu0 %v628
  %883 = vmatprep.subr.mxu0 0.0
  %884 = vmatpush1.msra.mxu0 0.0
  %885 = vmatprep.subr.mxu0 0.0
  %886 = vmatpush1.msra.mxu0 0.0
  %887 = vmatprep.subr.mxu0 0.0
  %888 = vmatpush1.msra.mxu0 0.0
  %889 = vmatprep.subr.mxu0 0.0
  %890 = vmatpush1.msra.mxu0 0.0
  %891 = vmatprep.subr.mxu0 0.0
  %892 = vmatpush1.msra.mxu0 0.0
  %893 = vmatprep.subr.mxu0 0.0
  %894 = vmatpush1.msra.mxu0 0.0
  %895 = vmatprep.subr.mxu0 0.0
  %896 = vmatpush1.msra.mxu0 0.0
  %897 = vmatprep.subr.mxu0 0.0
  %898 = vmatpush1.msra.mxu0 0.0
  %899 = vmatprep.subr.mxu0 0.0
  %900 = vmatpush1.msra.mxu0 0.0
  %901 = vmatprep.subr.mxu0 0.0
  %902 = vmatpush1.msra.mxu0 0.0
  %903 = vmatprep.subr.mxu0 0.0
  %904 = vmatpush1.msra.mxu0 0.0
  %905 = vmatprep.subr.mxu0 0.0
  %906 = vmatpush1.msra.mxu0 0.0
  %907 = vmatprep.subr.mxu0 0.0
  %908 = vmatpush1.msra.mxu0 0.0
  %909 = vmatprep.subr.mxu0 0.0
  %910 = vmatpush1.msra.mxu0 0.0
  %911 = vmatprep.subr.mxu0 0.0
  %912 = vmatpush1.msra.mxu0 0.0
  %913 = vmatprep.subr.mxu0 0.0
  %914 = vmatpush1.msra.mxu0 0.0
  %915 = vmatprep.subr.mxu0 0.0
  %916 = vmatpush1.msra.mxu0 0.0
  %917 = vmatprep.subr.mxu0 0.0
  %918 = vmatpush1.msra.mxu0 0.0
  %919 = vmatprep.subr.mxu0 0.0
  %920 = vmatpush1.msra.mxu0 0.0
  %921 = vmatprep.subr.mxu0 0.0
  %922 = vmatpush1.msra.mxu0 0.0
  %923 = vmatprep.subr.mxu0 0.0
  %924 = vmatpush1.msra.mxu0 0.0
  %925 = vmatprep.subr.mxu0 0.0
  %926 = vmatpush1.msra.mxu0 0.0
  %927 = vmatprep.subr.mxu0 0.0
  %928 = vmatpush1.msra.mxu0 0.0
  %929 = vmatprep.subr.mxu0 0.0
  %930 = vmatpush1.msra.mxu0 0.0
  %931 = vmatprep.subr.mxu0 0.0
  %932 = vmatpush1.msra.mxu0 0.0
  %933 = vmatprep.subr.mxu0 0.0
  %934 = vmatpush1.msra.mxu0 0.0
  %935 = vmatprep.subr.mxu0 0.0
  %936 = vmatpush1.msra.mxu0 0.0
  %937 = vmatprep.subr.mxu0 0.0
  %938 = vmatpush1.msra.mxu0 0.0
  %939 = vmatprep.mubr.f32.mxu0 0.0
  %940 = vmatmul.mubr.f32.gmra.mrb[0].mxu0 %v662
  %v941 = vpop.f32.mrb[0].mxu0
  %v942 = vadd.f32 0.0, %v941
  %v943 = vpop.f32.mrb[0].mxu0
  %v944 = vadd.f32 0.0, %v943
  %945 = vdwg.mxu0
  %v946 = vadd.f32 %v517, %v731
  %v947 = vadd.f32 %v518, %v733
  %v948 = vadd.f32 %v519, %v802
  %v949 = vadd.f32 %v520, %v873
  %v950 = vadd.f32 %v521, %v942
  %v951 = vadd.f32 %v522, %v944
  %v952 = vld [vmem:[%s1] sm:$0xf]
  %v953 = vld [vmem:[%s0] sm:$0xff]
  %v954 = vld [vmem:[%s0 + $0x8] sm:$0xff]
  %v955 = vld [vmem:[%s0 + $0x10] sm:$0xff]
  %v956 = vld [vmem:[%s0 + $0x18] sm:$0xff]
  %v957 = vld [vmem:[%s0 + $0x20] sm:$0xff]
  %v958 = vld [vmem:[%s0 + $0x28] sm:$0xff]
  %v959 = vld [vmem:[%s0 + $0x30] sm:$0xff]
  %v960 = vld [vmem:[%s0 + $0x38] sm:$0xff]
  %v961 = vld [vmem:[%s0 + $0x40] sm:$0xff]
  %v962 = vld [vmem:[%s0 + $0x50] sm:$0xff]
  %v963 = vld [vmem:[%s0 + $0x58] sm:$0xff]
  %v964 = vld [vmem:[%s0 + $0x60] sm:$0xff]
  %v965 = vld [vmem:[%s0 + $0x68] sm:$0xff]
  %v966 = vld [vmem:[%s0 + $0x70] sm:$0xff]
  %v967 = vld [vmem:[%s0 + $0x78] sm:$0xff]
  %v968 = vld [vmem:[%s0 + $0x80] sm:$0xff]
  %v969 = vld [vmem:[%s0 + $0x88] sm:$0xff]
  %v970 = vld [vmem:[%s0 + $0x90] sm:$0xff]
  %v971 = vld [vmem:[%s0 + $0xa0] sm:$0xff]
  %v972 = vld [vmem:[%s0 + $0xa8] sm:$0xff]
  %v973 = vld [vmem:[%s0 + $0xb0] sm:$0xff]
  %v974 = vld [vmem:[%s0 + $0xb8] sm:$0xff]
  %v975 = vld [vmem:[%s0 + $0xc0] sm:$0xff]
  %v976 = vld [vmem:[%s0 + $0xc8] sm:$0xff]
  %v977 = vld [vmem:[%s0 + $0xd0] sm:$0xff]
  %v978 = vld [vmem:[%s0 + $0xd8] sm:$0xff]
  %v979 = vld [vmem:[%s0 + $0xe0] sm:$0xff]
  %v980 = vld [vmem:[%s0 + $0xf0] sm:$0xff]
  %v981 = vld [vmem:[%s0 + $0xf8] sm:$0xff]
  %v982 = vld [vmem:[%s0 + $0x100] sm:$0xff]
  %v983 = vld [vmem:[%s0 + $0x108] sm:$0xff]
  %v984 = vld [vmem:[%s0 + $0x110] sm:$0xff]
  %v985 = vld [vmem:[%s0 + $0x118] sm:$0xff]
  %v986 = vld [vmem:[%s0 + $0x120] sm:$0xff]
  %v987 = vld [vmem:[%s0 + $0x128] sm:$0xff]
  %v988 = vld [vmem:[%s0 + $0x130] sm:$0xff]
  %990 = vrot.lane.b32.xlu0 %v952, 64
  %v991 = vpop.permute.xlu0 %990
  %1028 = vrot.lane.b32.xlu0 %v953, 76
  %v1029 = vpop.permute.xlu0 %1028
  %1030 = vrot.lane.b32.xlu0 %v954, 76
  %v1031 = vpop.permute.xlu0 %1030
  %1032 = vrot.lane.b32.xlu0 %v955, 76
  %v1033 = vpop.permute.xlu0 %1032
  %1034 = vrot.lane.b32.xlu0 %v956, 76
  %v1035 = vpop.permute.xlu0 %1034
  %1036 = vrot.lane.b32.xlu0 %v957, 76
  %v1037 = vpop.permute.xlu0 %1036
  %1038 = vrot.lane.b32.xlu0 %v958, 76
  %v1039 = vpop.permute.xlu0 %1038
  %1040 = vrot.lane.b32.xlu0 %v959, 76
  %v1041 = vpop.permute.xlu0 %1040
  %1042 = vrot.lane.b32.xlu0 %v960, 76
  %v1043 = vpop.permute.xlu0 %1042
  %1044 = vrot.lane.b32.xlu0 %v961, 76
  %v1045 = vpop.permute.xlu0 %1044
  %1046 = vrot.lane.b32.xlu0 %v962, 76
  %v1047 = vpop.permute.xlu0 %1046
  %1048 = vrot.lane.b32.xlu0 %v963, 76
  %v1049 = vpop.permute.xlu0 %1048
  %1050 = vrot.lane.b32.xlu0 %v964, 76
  %v1051 = vpop.permute.xlu0 %1050
  %1052 = vrot.lane.b32.xlu0 %v965, 76
  %v1053 = vpop.permute.xlu0 %1052
  %1054 = vrot.lane.b32.xlu0 %v966, 76
  %v1055 = vpop.permute.xlu0 %1054
  %1056 = vrot.lane.b32.xlu0 %v967, 76
  %v1057 = vpop.permute.xlu0 %1056
  %1058 = vrot.lane.b32.xlu0 %v968, 76
  %v1059 = vpop.permute.xlu0 %1058
  %1060 = vrot.lane.b32.xlu0 %v969, 76
  %v1061 = vpop.permute.xlu0 %1060
  %1062 = vrot.lane.b32.xlu0 %v970, 76
  %v1063 = vpop.permute.xlu0 %1062
  %1064 = vrot.lane.b32.xlu0 %v971, 76
  %v1065 = vpop.permute.xlu0 %1064
  %1066 = vrot.lane.b32.xlu0 %v972, 76
  %v1067 = vpop.permute.xlu0 %1066
  %1068 = vrot.lane.b32.xlu0 %v973, 76
  %v1069 = vpop.permute.xlu0 %1068
  %1070 = vrot.lane.b32.xlu0 %v974, 76
  %v1071 = vpop.permute.xlu0 %1070
  %1072 = vrot.lane.b32.xlu0 %v975, 76
  %v1073 = vpop.permute.xlu0 %1072
  %1074 = vrot.lane.b32.xlu0 %v976, 76
  %v1075 = vpop.permute.xlu0 %1074
  %1076 = vrot.lane.b32.xlu0 %v977, 76
  %v1077 = vpop.permute.xlu0 %1076
  %1078 = vrot.lane.b32.xlu0 %v978, 76
  %v1079 = vpop.permute.xlu0 %1078
  %1080 = vrot.lane.b32.xlu0 %v979, 76
  %v1081 = vpop.permute.xlu0 %1080
  %1082 = vrot.lane.b32.xlu0 %v980, 76
  %v1083 = vpop.permute.xlu0 %1082
  %1084 = vrot.lane.b32.xlu0 %v981, 76
  %v1085 = vpop.permute.xlu0 %1084
  %1086 = vrot.lane.b32.xlu0 %v982, 76
  %v1087 = vpop.permute.xlu0 %1086
  %1088 = vrot.lane.b32.xlu0 %v983, 76
  %v1089 = vpop.permute.xlu0 %1088
  %1090 = vrot.lane.b32.xlu0 %v984, 76
  %v1091 = vpop.permute.xlu0 %1090
  %1092 = vrot.lane.b32.xlu0 %v985, 76
  %v1093 = vpop.permute.xlu0 %1092
  %1094 = vrot.lane.b32.xlu0 %v986, 76
  %v1095 = vpop.permute.xlu0 %1094
  %1096 = vrot.lane.b32.xlu0 %v987, 76
  %v1097 = vpop.permute.xlu0 %1096
  %1098 = vrot.lane.b32.xlu0 %v988, 76
  %v1099 = vpop.permute.xlu0 %1098
  %vm1100 = vcmask 621568
  %v1101 = vsel %vm1100, %v1029, %v1031
  %v1102 = vsel %vm1100, %v1031, %v1033
  %v1103 = vsel %vm1100, %v1033, %v1035
  %v1104 = vsel %vm1100, %v1035, %v1037
  %v1105 = vsel %vm1100, %v1037, %v1039
  %v1106 = vsel %vm1100, %v1039, %v1041
  %v1107 = vsel %vm1100, %v1041, %v1043
  %v1108 = vsel %vm1100, %v1043, %v1045
  %v1109 = vsel %vm1100, %v1047, %v1049
  %v1110 = vsel %vm1100, %v1049, %v1051
  %v1111 = vsel %vm1100, %v1051, %v1053
  %v1112 = vsel %vm1100, %v1053, %v1055
  %v1113 = vsel %vm1100, %v1055, %v1057
  %v1114 = vsel %vm1100, %v1057, %v1059
  %v1115 = vsel %vm1100, %v1059, %v1061
  %v1116 = vsel %vm1100, %v1061, %v1063
  %v1117 = vsel %vm1100, %v1065, %v1067
  %v1118 = vsel %vm1100, %v1067, %v1069
  %v1119 = vsel %vm1100, %v1069, %v1071
  %v1120 = vsel %vm1100, %v1071, %v1073
  %v1121 = vsel %vm1100, %v1073, %v1075
  %v1122 = vsel %vm1100, %v1075, %v1077
  %v1123 = vsel %vm1100, %v1077, %v1079
  %v1124 = vsel %vm1100, %v1079, %v1081
  %v1125 = vsel %vm1100, %v1083, %v1085
  %v1126 = vsel %vm1100, %v1085, %v1087
  %v1127 = vsel %vm1100, %v1087, %v1089
  %v1128 = vsel %vm1100, %v1089, %v1091
  %v1129 = vsel %vm1100, %v1091, %v1093
  %v1130 = vsel %vm1100, %v1093, %v1095
  %v1131 = vsel %vm1100, %v1095, %v1097
  %v1132 = vsel %vm1100, %v1097, %v1099
  %v1165 = vsel %vm231, %v991, 0
  %1167 = vmatprep.subr.mxu0 %v1102
  %1168 = vmatpush1.msra.mxu0 %v1101
  %1169 = vmatprep.subr.mxu0 %v1110
  %1170 = vmatpush1.msra.mxu0 %v1109
  %1171 = vmatprep.subr.mxu0 %v1118
  %1172 = vmatpush1.msra.mxu0 %v1117
  %1173 = vmatprep.subr.mxu0 %v1126
  %1174 = vmatpush1.msra.mxu0 %v1125
  %1175 = vmatprep.subr.mxu0 0.0
  %1176 = vmatpush1.msra.mxu0 0.0
  %1177 = vmatprep.subr.mxu0 0.0
  %1178 = vmatpush1.msra.mxu0 0.0
  %1179 = vmatprep.subr.mxu0 0.0
  %1180 = vmatpush1.msra.mxu0 0.0
  %1181 = vmatprep.subr.mxu0 0.0
  %1182 = vmatpush1.msra.mxu0 0.0
  %1183 = vmatprep.subr.mxu0 0.0
  %1184 = vmatpush1.msra.mxu0 0.0
  %1185 = vmatprep.subr.mxu0 0.0
  %1186 = vmatpush1.msra.mxu0 0.0
  %1187 = vmatprep.subr.mxu0 0.0
  %1188 = vmatpush1.msra.mxu0 0.0
  %1189 = vmatprep.subr.mxu0 0.0
  %1190 = vmatpush1.msra.mxu0 0.0
  %1191 = vmatprep.subr.mxu0 0.0
  %1192 = vmatpush1.msra.mxu0 0.0
  %1193 = vmatprep.subr.mxu0 0.0
  %1194 = vmatpush1.msra.mxu0 0.0
  %1195 = vmatprep.subr.mxu0 0.0
  %1196 = vmatpush1.msra.mxu0 0.0
  %1197 = vmatprep.subr.mxu0 0.0
  %1198 = vmatpush1.msra.mxu0 0.0
  %1199 = vmatprep.subr.mxu0 0.0
  %1200 = vmatpush1.msra.mxu0 0.0
  %1201 = vmatprep.subr.mxu0 0.0
  %1202 = vmatpush1.msra.mxu0 0.0
  %1203 = vmatprep.subr.mxu0 0.0
  %1204 = vmatpush1.msra.mxu0 0.0
  %1205 = vmatprep.subr.mxu0 0.0
  %1206 = vmatpush1.msra.mxu0 0.0
  %1207 = vmatprep.subr.mxu0 0.0
  %1208 = vmatpush1.msra.mxu0 0.0
  %1209 = vmatprep.subr.mxu0 0.0
  %1210 = vmatpush1.msra.mxu0 0.0
  %1211 = vmatprep.subr.mxu0 0.0
  %1212 = vmatpush1.msra.mxu0 0.0
  %1213 = vmatprep.subr.mxu0 0.0
  %1214 = vmatpush1.msra.mxu0 0.0
  %1215 = vmatprep.subr.mxu0 0.0
  %1216 = vmatpush1.msra.mxu0 0.0
  %1217 = vmatprep.subr.mxu0 0.0
  %1218 = vmatpush1.msra.mxu0 0.0
  %1219 = vmatprep.subr.mxu0 0.0
  %1220 = vmatpush1.msra.mxu0 0.0
  %1221 = vmatprep.subr.mxu0 0.0
  %1222 = vmatpush1.msra.mxu0 0.0
  %1223 = vmatprep.subr.mxu0 0.0
  %1224 = vmatpush1.msra.mxu0 0.0
  %1225 = vmatprep.subr.mxu0 0.0
  %1226 = vmatpush1.msra.mxu0 0.0
  %1227 = vmatprep.subr.mxu0 0.0
  %1228 = vmatpush1.msra.mxu0 0.0
  %1229 = vmatprep.subr.mxu0 0.0
  %1230 = vmatpush1.msra.mxu0 0.0
  %1231 = vmatprep.mubr.f32.mxu0 0.0
  %1232 = vmatmul.mubr.f32.gmra.mrb[0].mxu0 %v1165
  %v1233 = vpop.f32.mrb[0].mxu0
  %v1234 = vadd.f32 0.0, %v1233
  %v1235 = vpop.f32.mrb[0].mxu0
  %v1236 = vadd.f32 0.0, %v1235
  %1237 = vdwg.mxu0
  %1238 = vmatprep.subr.mxu0 %v1104
  %1239 = vmatpush1.msra.mxu0 %v1103
  %1240 = vmatprep.subr.mxu0 %v1112
  %1241 = vmatpush1.msra.mxu0 %v1111
  %1242 = vmatprep.subr.mxu0 %v1120
  %1243 = vmatpush1.msra.mxu0 %v1119
  %1244 = vmatprep.subr.mxu0 %v1128
  %1245 = vmatpush1.msra.mxu0 %v1127
  %1246 = vmatprep.subr.mxu0 0.0
  %1247 = vmatpush1.msra.mxu0 0.0
  %1248 = vmatprep.subr.mxu0 0.0
  %1249 = vmatpush1.msra.mxu0 0.0
  %1250 = vmatprep.subr.mxu0 0.0
  %1251 = vmatpush1.msra.mxu0 0.0
  %1252 = vmatprep.subr.mxu0 0.0
  %1253 = vmatpush1.msra.mxu0 0.0
  %1254 = vmatprep.subr.mxu0 0.0
  %1255 = vmatpush1.msra.mxu0 0.0
  %1256 = vmatprep.subr.mxu0 0.0
  %1257 = vmatpush1.msra.mxu0 0.0
  %1258 = vmatprep.subr.mxu0 0.0
  %1259 = vmatpush1.msra.mxu0 0.0
  %1260 = vmatprep.subr.mxu0 0.0
  %1261 = vmatpush1.msra.mxu0 0.0
  %1262 = vmatprep.subr.mxu0 0.0
  %1263 = vmatpush1.msra.mxu0 0.0
  %1264 = vmatprep.subr.mxu0 0.0
  %1265 = vmatpush1.msra.mxu0 0.0
  %1266 = vmatprep.subr.mxu0 0.0
  %1267 = vmatpush1.msra.mxu0 0.0
  %1268 = vmatprep.subr.mxu0 0.0
  %1269 = vmatpush1.msra.mxu0 0.0
  %1270 = vmatprep.subr.mxu0 0.0
  %1271 = vmatpush1.msra.mxu0 0.0
  %1272 = vmatprep.subr.mxu0 0.0
  %1273 = vmatpush1.msra.mxu0 0.0
  %1274 = vmatprep.subr.mxu0 0.0
  %1275 = vmatpush1.msra.mxu0 0.0
  %1276 = vmatprep.subr.mxu0 0.0
  %1277 = vmatpush1.msra.mxu0 0.0
  %1278 = vmatprep.subr.mxu0 0.0
  %1279 = vmatpush1.msra.mxu0 0.0
  %1280 = vmatprep.subr.mxu0 0.0
  %1281 = vmatpush1.msra.mxu0 0.0
  %1282 = vmatprep.subr.mxu0 0.0
  %1283 = vmatpush1.msra.mxu0 0.0
  %1284 = vmatprep.subr.mxu0 0.0
  %1285 = vmatpush1.msra.mxu0 0.0
  %1286 = vmatprep.subr.mxu0 0.0
  %1287 = vmatpush1.msra.mxu0 0.0
  %1288 = vmatprep.subr.mxu0 0.0
  %1289 = vmatpush1.msra.mxu0 0.0
  %1290 = vmatprep.subr.mxu0 0.0
  %1291 = vmatpush1.msra.mxu0 0.0
  %1292 = vmatprep.subr.mxu0 0.0
  %1293 = vmatpush1.msra.mxu0 0.0
  %1294 = vmatprep.subr.mxu0 0.0
  %1295 = vmatpush1.msra.mxu0 0.0
  %1296 = vmatprep.subr.mxu0 0.0
  %1297 = vmatpush1.msra.mxu0 0.0
  %1298 = vmatprep.subr.mxu0 0.0
  %1299 = vmatpush1.msra.mxu0 0.0
  %1300 = vmatprep.subr.mxu0 0.0
  %1301 = vmatpush1.msra.mxu0 0.0
  %1302 = vmatprep.mubr.f32.mxu0 0.0
  %1303 = vmatmul.mubr.f32.gmra.mrb[0].mxu0 %v1165
  %v1304 = vpop.f32.mrb[0].mxu0
  %v1305 = vadd.f32 0.0, %v1304
  %v1306 = vpop.f32.mrb[0].mxu0
  %1307 = vdwg.mxu0
  %1308 = vmatprep.subr.mxu0 %v1106
  %1309 = vmatpush1.msra.mxu0 %v1105
  %1310 = vmatprep.subr.mxu0 %v1114
  %1311 = vmatpush1.msra.mxu0 %v1113
  %1312 = vmatprep.subr.mxu0 %v1122
  %1313 = vmatpush1.msra.mxu0 %v1121
  %1314 = vmatprep.subr.mxu0 %v1130
  %1315 = vmatpush1.msra.mxu0 %v1129
  %1316 = vmatprep.subr.mxu0 0.0
  %1317 = vmatpush1.msra.mxu0 0.0
  %1318 = vmatprep.subr.mxu0 0.0
  %1319 = vmatpush1.msra.mxu0 0.0
  %1320 = vmatprep.subr.mxu0 0.0
  %1321 = vmatpush1.msra.mxu0 0.0
  %1322 = vmatprep.subr.mxu0 0.0
  %1323 = vmatpush1.msra.mxu0 0.0
  %1324 = vmatprep.subr.mxu0 0.0
  %1325 = vmatpush1.msra.mxu0 0.0
  %1326 = vmatprep.subr.mxu0 0.0
  %1327 = vmatpush1.msra.mxu0 0.0
  %1328 = vmatprep.subr.mxu0 0.0
  %1329 = vmatpush1.msra.mxu0 0.0
  %1330 = vmatprep.subr.mxu0 0.0
  %1331 = vmatpush1.msra.mxu0 0.0
  %1332 = vmatprep.subr.mxu0 0.0
  %1333 = vmatpush1.msra.mxu0 0.0
  %1334 = vmatprep.subr.mxu0 0.0
  %1335 = vmatpush1.msra.mxu0 0.0
  %1336 = vmatprep.subr.mxu0 0.0
  %1337 = vmatpush1.msra.mxu0 0.0
  %1338 = vmatprep.subr.mxu0 0.0
  %1339 = vmatpush1.msra.mxu0 0.0
  %1340 = vmatprep.subr.mxu0 0.0
  %1341 = vmatpush1.msra.mxu0 0.0
  %1342 = vmatprep.subr.mxu0 0.0
  %1343 = vmatpush1.msra.mxu0 0.0
  %1344 = vmatprep.subr.mxu0 0.0
  %1345 = vmatpush1.msra.mxu0 0.0
  %1346 = vmatprep.subr.mxu0 0.0
  %1347 = vmatpush1.msra.mxu0 0.0
  %1348 = vmatprep.subr.mxu0 0.0
  %1349 = vmatpush1.msra.mxu0 0.0
  %1350 = vmatprep.subr.mxu0 0.0
  %1351 = vmatpush1.msra.mxu0 0.0
  %1352 = vmatprep.subr.mxu0 0.0
  %1353 = vmatpush1.msra.mxu0 0.0
  %1354 = vmatprep.subr.mxu0 0.0
  %1355 = vmatpush1.msra.mxu0 0.0
  %1356 = vmatprep.subr.mxu0 0.0
  %1357 = vmatpush1.msra.mxu0 0.0
  %1358 = vmatprep.subr.mxu0 0.0
  %1359 = vmatpush1.msra.mxu0 0.0
  %1360 = vmatprep.subr.mxu0 0.0
  %1361 = vmatpush1.msra.mxu0 0.0
  %1362 = vmatprep.subr.mxu0 0.0
  %1363 = vmatpush1.msra.mxu0 0.0
  %1364 = vmatprep.subr.mxu0 0.0
  %1365 = vmatpush1.msra.mxu0 0.0
  %1366 = vmatprep.subr.mxu0 0.0
  %1367 = vmatpush1.msra.mxu0 0.0
  %1368 = vmatprep.subr.mxu0 0.0
  %1369 = vmatpush1.msra.mxu0 0.0
  %1370 = vmatprep.subr.mxu0 0.0
  %1371 = vmatpush1.msra.mxu0 0.0
  %1372 = vmatprep.mubr.f32.mxu0 0.0
  %1373 = vmatmul.mubr.f32.gmra.mrb[0].mxu0 %v1165
  %v1374 = vpop.f32.mrb[0].mxu0
  %v1375 = vpop.f32.mrb[0].mxu0
  %v1376 = vadd.f32 0.0, %v1375
  %1377 = vdwg.mxu0
  %1378 = vmatprep.subr.mxu0 %v1108
  %1379 = vmatpush1.msra.mxu0 %v1107
  %1380 = vmatprep.subr.mxu0 %v1116
  %1381 = vmatpush1.msra.mxu0 %v1115
  %1382 = vmatprep.subr.mxu0 %v1124
  %1383 = vmatpush1.msra.mxu0 %v1123
  %1384 = vmatprep.subr.mxu0 %v1132
  %1385 = vmatpush1.msra.mxu0 %v1131
  %1386 = vmatprep.subr.mxu0 0.0
  %1387 = vmatpush1.msra.mxu0 0.0
  %1388 = vmatprep.subr.mxu0 0.0
  %1389 = vmatpush1.msra.mxu0 0.0
  %1390 = vmatprep.subr.mxu0 0.0
  %1391 = vmatpush1.msra.mxu0 0.0
  %1392 = vmatprep.subr.mxu0 0.0
  %1393 = vmatpush1.msra.mxu0 0.0
  %1394 = vmatprep.subr.mxu0 0.0
  %1395 = vmatpush1.msra.mxu0 0.0
  %1396 = vmatprep.subr.mxu0 0.0
  %1397 = vmatpush1.msra.mxu0 0.0
  %1398 = vmatprep.subr.mxu0 0.0
  %1399 = vmatpush1.msra.mxu0 0.0
  %1400 = vmatprep.subr.mxu0 0.0
  %1401 = vmatpush1.msra.mxu0 0.0
  %1402 = vmatprep.subr.mxu0 0.0
  %1403 = vmatpush1.msra.mxu0 0.0
  %1404 = vmatprep.subr.mxu0 0.0
  %1405 = vmatpush1.msra.mxu0 0.0
  %1406 = vmatprep.subr.mxu0 0.0
  %1407 = vmatpush1.msra.mxu0 0.0
  %1408 = vmatprep.subr.mxu0 0.0
  %1409 = vmatpush1.msra.mxu0 0.0
  %1410 = vmatprep.subr.mxu0 0.0
  %1411 = vmatpush1.msra.mxu0 0.0
  %1412 = vmatprep.subr.mxu0 0.0
  %1413 = vmatpush1.msra.mxu0 0.0
  %1414 = vmatprep.subr.mxu0 0.0
  %1415 = vmatpush1.msra.mxu0 0.0
  %1416 = vmatprep.subr.mxu0 0.0
  %1417 = vmatpush1.msra.mxu0 0.0
  %1418 = vmatprep.subr.mxu0 0.0
  %1419 = vmatpush1.msra.mxu0 0.0
  %1420 = vmatprep.subr.mxu0 0.0
  %1421 = vmatpush1.msra.mxu0 0.0
  %1422 = vmatprep.subr.mxu0 0.0
  %1423 = vmatpush1.msra.mxu0 0.0
  %1424 = vmatprep.subr.mxu0 0.0
  %1425 = vmatpush1.msra.mxu0 0.0
  %1426 = vmatprep.subr.mxu0 0.0
  %1427 = vmatpush1.msra.mxu0 0.0
  %1428 = vmatprep.subr.mxu0 0.0
  %1429 = vmatpush1.msra.mxu0 0.0
  %1430 = vmatprep.subr.mxu0 0.0
  %1431 = vmatpush1.msra.mxu0 0.0
  %1432 = vmatprep.subr.mxu0 0.0
  %1433 = vmatpush1.msra.mxu0 0.0
  %1434 = vmatprep.subr.mxu0 0.0
  %1435 = vmatpush1.msra.mxu0 0.0
  %1436 = vmatprep.subr.mxu0 0.0
  %1437 = vmatpush1.msra.mxu0 0.0
  %1438 = vmatprep.subr.mxu0 0.0
  %1439 = vmatpush1.msra.mxu0 0.0
  %1440 = vmatprep.subr.mxu0 0.0
  %1441 = vmatpush1.msra.mxu0 0.0
  %1442 = vmatprep.mubr.f32.mxu0 0.0
  %1443 = vmatmul.mubr.f32.gmra.mrb[0].mxu0 %v1165
  %v1444 = vpop.f32.mrb[0].mxu0
  %v1445 = vadd.f32 0.0, %v1444
  %v1446 = vpop.f32.mrb[0].mxu0
  %v1447 = vadd.f32 0.0, %v1446
  %1448 = vdwg.mxu0
  %v1449 = vadd.f32 %v946, %v1234
  %v1450 = vadd.f32 %v947, %v1236
  %v1451 = vadd.f32 %v948, %v1305
  %v1452 = vadd.f32 %v949, %v1376
  %v1453 = vadd.f32 %v950, %v1445
  %v1454 = vadd.f32 %v951, %v1447
  %v1455 = vld [vmem:[%s1] sm:$0xf]
  %v1456 = vld [vmem:[%s0] sm:$0xff]
  %v1457 = vld [vmem:[%s0 + $0x8] sm:$0xff]
  %v1458 = vld [vmem:[%s0 + $0x10] sm:$0xff]
  %v1459 = vld [vmem:[%s0 + $0x18] sm:$0xff]
  %v1460 = vld [vmem:[%s0 + $0x20] sm:$0xff]
  %v1461 = vld [vmem:[%s0 + $0x28] sm:$0xff]
  %v1462 = vld [vmem:[%s0 + $0x30] sm:$0xff]
  %v1463 = vld [vmem:[%s0 + $0x38] sm:$0xff]
  %v1464 = vld [vmem:[%s0 + $0x40] sm:$0xff]
  %v1465 = vld [vmem:[%s0 + $0x50] sm:$0xff]
  %v1466 = vld [vmem:[%s0 + $0x58] sm:$0xff]
  %v1467 = vld [vmem:[%s0 + $0x60] sm:$0xff]
  %v1468 = vld [vmem:[%s0 + $0x68] sm:$0xff]
  %v1469 = vld [vmem:[%s0 + $0x70] sm:$0xff]
  %v1470 = vld [vmem:[%s0 + $0x78] sm:$0xff]
  %v1471 = vld [vmem:[%s0 + $0x80] sm:$0xff]
  %v1472 = vld [vmem:[%s0 + $0x88] sm:$0xff]
  %v1473 = vld [vmem:[%s0 + $0x90] sm:$0xff]
  %v1474 = vld [vmem:[%s0 + $0xa0] sm:$0xff]
  %v1475 = vld [vmem:[%s0 + $0xa8] sm:$0xff]
  %v1476 = vld [vmem:[%s0 + $0xb0] sm:$0xff]
  %v1477 = vld [vmem:[%s0 + $0xb8] sm:$0xff]
  %v1478 = vld [vmem:[%s0 + $0xc0] sm:$0xff]
  %v1479 = vld [vmem:[%s0 + $0xc8] sm:$0xff]
  %v1480 = vld [vmem:[%s0 + $0xd0] sm:$0xff]
  %v1481 = vld [vmem:[%s0 + $0xd8] sm:$0xff]
  %v1482 = vld [vmem:[%s0 + $0xe0] sm:$0xff]
  %v1483 = vld [vmem:[%s0 + $0xf0] sm:$0xff]
  %v1484 = vld [vmem:[%s0 + $0xf8] sm:$0xff]
  %v1485 = vld [vmem:[%s0 + $0x100] sm:$0xff]
  %v1486 = vld [vmem:[%s0 + $0x108] sm:$0xff]
  %v1487 = vld [vmem:[%s0 + $0x110] sm:$0xff]
  %v1488 = vld [vmem:[%s0 + $0x118] sm:$0xff]
  %v1489 = vld [vmem:[%s0 + $0x120] sm:$0xff]
  %v1490 = vld [vmem:[%s0 + $0x128] sm:$0xff]
  %v1491 = vld [vmem:[%s0 + $0x130] sm:$0xff]
  %1493 = vrot.lane.b32.xlu0 %v1455, 32
  %v1494 = vpop.permute.xlu0 %1493
  %1531 = vrot.lane.b32.xlu0 %v1456, 54
  %v1532 = vpop.permute.xlu0 %1531
  %1533 = vrot.lane.b32.xlu0 %v1457, 54
  %v1534 = vpop.permute.xlu0 %1533
  %1535 = vrot.lane.b32.xlu0 %v1458, 54
  %v1536 = vpop.permute.xlu0 %1535
  %1537 = vrot.lane.b32.xlu0 %v1459, 54
  %v1538 = vpop.permute.xlu0 %1537
  %1539 = vrot.lane.b32.xlu0 %v1460, 54
  %v1540 = vpop.permute.xlu0 %1539
  %1541 = vrot.lane.b32.xlu0 %v1461, 54
  %v1542 = vpop.permute.xlu0 %1541
  %1543 = vrot.lane.b32.xlu0 %v1462, 54
  %v1544 = vpop.permute.xlu0 %1543
  %1545 = vrot.lane.b32.xlu0 %v1463, 54
  %v1546 = vpop.permute.xlu0 %1545
  %1547 = vrot.lane.b32.xlu0 %v1464, 54
  %v1548 = vpop.permute.xlu0 %1547
  %1549 = vrot.lane.b32.xlu0 %v1465, 54
  %v1550 = vpop.permute.xlu0 %1549
  %1551 = vrot.lane.b32.xlu0 %v1466, 54
  %v1552 = vpop.permute.xlu0 %1551
  %1553 = vrot.lane.b32.xlu0 %v1467, 54
  %v1554 = vpop.permute.xlu0 %1553
  %1555 = vrot.lane.b32.xlu0 %v1468, 54
  %v1556 = vpop.permute.xlu0 %1555
  %1557 = vrot.lane.b32.xlu0 %v1469, 54
  %v1558 = vpop.permute.xlu0 %1557
  %1559 = vrot.lane.b32.xlu0 %v1470, 54
  %v1560 = vpop.permute.xlu0 %1559
  %1561 = vrot.lane.b32.xlu0 %v1471, 54
  %v1562 = vpop.permute.xlu0 %1561
  %1563 = vrot.lane.b32.xlu0 %v1472, 54
  %v1564 = vpop.permute.xlu0 %1563
  %1565 = vrot.lane.b32.xlu0 %v1473, 54
  %v1566 = vpop.permute.xlu0 %1565
  %1567 = vrot.lane.b32.xlu0 %v1474, 54
  %v1568 = vpop.permute.xlu0 %1567
  %1569 = vrot.lane.b32.xlu0 %v1475, 54
  %v1570 = vpop.permute.xlu0 %1569
  %1571 = vrot.lane.b32.xlu0 %v1476, 54
  %v1572 = vpop.permute.xlu0 %1571
  %1573 = vrot.lane.b32.xlu0 %v1477, 54
  %v1574 = vpop.permute.xlu0 %1573
  %1575 = vrot.lane.b32.xlu0 %v1478, 54
  %v1576 = vpop.permute.xlu0 %1575
  %1577 = vrot.lane.b32.xlu0 %v1479, 54
  %v1578 = vpop.permute.xlu0 %1577
  %1579 = vrot.lane.b32.xlu0 %v1480, 54
  %v1580 = vpop.permute.xlu0 %1579
  %1581 = vrot.lane.b32.xlu0 %v1481, 54
  %v1582 = vpop.permute.xlu0 %1581
  %1583 = vrot.lane.b32.xlu0 %v1482, 54
  %v1584 = vpop.permute.xlu0 %1583
  %1585 = vrot.lane.b32.xlu0 %v1483, 54
  %v1586 = vpop.permute.xlu0 %1585
  %1587 = vrot.lane.b32.xlu0 %v1484, 54
  %v1588 = vpop.permute.xlu0 %1587
  %1589 = vrot.lane.b32.xlu0 %v1485, 54
  %v1590 = vpop.permute.xlu0 %1589
  %1591 = vrot.lane.b32.xlu0 %v1486, 54
  %v1592 = vpop.permute.xlu0 %1591
  %1593 = vrot.lane.b32.xlu0 %v1487, 54
  %v1594 = vpop.permute.xlu0 %1593
  %1595 = vrot.lane.b32.xlu0 %v1488, 54
  %v1596 = vpop.permute.xlu0 %1595
  %1597 = vrot.lane.b32.xlu0 %v1489, 54
  %v1598 = vpop.permute.xlu0 %1597
  %1599 = vrot.lane.b32.xlu0 %v1490, 54
  %v1600 = vpop.permute.xlu0 %1599
  %1601 = vrot.lane.b32.xlu0 %v1491, 54
  %v1602 = vpop.permute.xlu0 %1601
  %vm1603 = vcmask 441344
  %v1604 = vsel %vm1603, %v1532, %v1534
  %v1605 = vsel %vm1603, %v1534, %v1536
  %v1606 = vsel %vm1603, %v1536, %v1538
  %v1607 = vsel %vm1603, %v1538, %v1540
  %v1608 = vsel %vm1603, %v1540, %v1542
  %v1609 = vsel %vm1603, %v1542, %v1544
  %v1610 = vsel %vm1603, %v1544, %v1546
  %v1611 = vsel %vm1603, %v1546, %v1548
  %v1612 = vsel %vm1603, %v1550, %v1552
  %v1613 = vsel %vm1603, %v1552, %v1554
  %v1614 = vsel %vm1603, %v1554, %v1556
  %v1615 = vsel %vm1603, %v1556, %v1558
  %v1616 = vsel %vm1603, %v1558, %v1560
  %v1617 = vsel %vm1603, %v1560, %v1562
  %v1618 = vsel %vm1603, %v1562, %v1564
  %v1619 = vsel %vm1603, %v1564, %v1566
  %v1620 = vsel %vm1603, %v1568, %v1570
  %v1621 = vsel %vm1603, %v1570, %v1572
  %v1622 = vsel %vm1603, %v1572, %v1574
  %v1623 = vsel %vm1603, %v1574, %v1576
  %v1624 = vsel %vm1603, %v1576, %v1578
  %v1625 = vsel %vm1603, %v1578, %v1580
  %v1626 = vsel %vm1603, %v1580, %v1582
  %v1627 = vsel %vm1603, %v1582, %v1584
  %v1628 = vsel %vm1603, %v1586, %v1588
  %v1629 = vsel %vm1603, %v1588, %v1590
  %v1630 = vsel %vm1603, %v1590, %v1592
  %v1631 = vsel %vm1603, %v1592, %v1594
  %v1632 = vsel %vm1603, %v1594, %v1596
  %v1633 = vsel %vm1603, %v1596, %v1598
  %v1634 = vsel %vm1603, %v1598, %v1600
  %v1635 = vsel %vm1603, %v1600, %v1602
  %v1668 = vsel %vm231, %v1494, 0
  %1670 = vmatprep.subr.mxu0 %v1605
  %1671 = vmatpush1.msra.mxu0 %v1604
  %1672 = vmatprep.subr.mxu0 %v1613
  %1673 = vmatpush1.msra.mxu0 %v1612
  %1674 = vmatprep.subr.mxu0 %v1621
  %1675 = vmatpush1.msra.mxu0 %v1620
  %1676 = vmatprep.subr.mxu0 %v1629
  %1677 = vmatpush1.msra.mxu0 %v1628
  %1678 = vmatprep.subr.mxu0 0.0
  %1679 = vmatpush1.msra.mxu0 0.0
  %1680 = vmatprep.subr.mxu0 0.0
  %1681 = vmatpush1.msra.mxu0 0.0
  %1682 = vmatprep.subr.mxu0 0.0
  %1683 = vmatpush1.msra.mxu0 0.0
  %1684 = vmatprep.subr.mxu0 0.0
  %1685 = vmatpush1.msra.mxu0 0.0
  %1686 = vmatprep.subr.mxu0 0.0
  %1687 = vmatpush1.msra.mxu0 0.0
  %1688 = vmatprep.subr.mxu0 0.0
  %1689 = vmatpush1.msra.mxu0 0.0
  %1690 = vmatprep.subr.mxu0 0.0
  %1691 = vmatpush1.msra.mxu0 0.0
  %1692 = vmatprep.subr.mxu0 0.0
  %1693 = vmatpush1.msra.mxu0 0.0
  %1694 = vmatprep.subr.mxu0 0.0
  %1695 = vmatpush1.msra.mxu0 0.0
  %1696 = vmatprep.subr.mxu0 0.0
  %1697 = vmatpush1.msra.mxu0 0.0
  %1698 = vmatprep.subr.mxu0 0.0
  %1699 = vmatpush1.msra.mxu0 0.0
  %1700 = vmatprep.subr.mxu0 0.0
  %1701 = vmatpush1.msra.mxu0 0.0
  %1702 = vmatprep.subr.mxu0 0.0
  %1703 = vmatpush1.msra.mxu0 0.0
  %1704 = vmatprep.subr.mxu0 0.0
  %1705 = vmatpush1.msra.mxu0 0.0
  %1706 = vmatprep.subr.mxu0 0.0
  %1707 = vmatpush1.msra.mxu0 0.0
  %1708 = vmatprep.subr.mxu0 0.0
  %1709 = vmatpush1.msra.mxu0 0.0
  %1710 = vmatprep.subr.mxu0 0.0
  %1711 = vmatpush1.msra.mxu0 0.0
  %1712 = vmatprep.subr.mxu0 0.0
  %1713 = vmatpush1.msra.mxu0 0.0
  %1714 = vmatprep.subr.mxu0 0.0
  %1715 = vmatpush1.msra.mxu0 0.0
  %1716 = vmatprep.subr.mxu0 0.0
  %1717 = vmatpush1.msra.mxu0 0.0
  %1718 = vmatprep.subr.mxu0 0.0
  %1719 = vmatpush1.msra.mxu0 0.0
  %1720 = vmatprep.subr.mxu0 0.0
  %1721 = vmatpush1.msra.mxu0 0.0
  %1722 = vmatprep.subr.mxu0 0.0
  %1723 = vmatpush1.msra.mxu0 0.0
  %1724 = vmatprep.subr.mxu0 0.0
  %1725 = vmatpush1.msra.mxu0 0.0
  %1726 = vmatprep.subr.mxu0 0.0
  %1727 = vmatpush1.msra.mxu0 0.0
  %1728 = vmatprep.subr.mxu0 0.0
  %1729 = vmatpush1.msra.mxu0 0.0
  %1730 = vmatprep.subr.mxu0 0.0
  %1731 = vmatpush1.msra.mxu0 0.0
  %1732 = vmatprep.subr.mxu0 0.0
  %1733 = vmatpush1.msra.mxu0 0.0
  %1734 = vmatprep.mubr.f32.mxu0 0.0
  %1735 = vmatmul.mubr.f32.gmra.mrb[0].mxu0 %v1668
  %v1736 = vpop.f32.mrb[0].mxu0
  %v1737 = vadd.f32 0.0, %v1736
  %v1738 = vpop.f32.mrb[0].mxu0
  %v1739 = vadd.f32 0.0, %v1738
  %1740 = vdwg.mxu0
  %1741 = vmatprep.subr.mxu0 %v1607
  %1742 = vmatpush1.msra.mxu0 %v1606
  %1743 = vmatprep.subr.mxu0 %v1615
  %1744 = vmatpush1.msra.mxu0 %v1614
  %1745 = vmatprep.subr.mxu0 %v1623
  %1746 = vmatpush1.msra.mxu0 %v1622
  %1747 = vmatprep.subr.mxu0 %v1631
  %1748 = vmatpush1.msra.mxu0 %v1630
  %1749 = vmatprep.subr.mxu0 0.0
  %1750 = vmatpush1.msra.mxu0 0.0
  %1751 = vmatprep.subr.mxu0 0.0
  %1752 = vmatpush1.msra.mxu0 0.0
  %1753 = vmatprep.subr.mxu0 0.0
  %1754 = vmatpush1.msra.mxu0 0.0
  %1755 = vmatprep.subr.mxu0 0.0
  %1756 = vmatpush1.msra.mxu0 0.0
  %1757 = vmatprep.subr.mxu0 0.0
  %1758 = vmatpush1.msra.mxu0 0.0
  %1759 = vmatprep.subr.mxu0 0.0
  %1760 = vmatpush1.msra.mxu0 0.0
  %1761 = vmatprep.subr.mxu0 0.0
  %1762 = vmatpush1.msra.mxu0 0.0
  %1763 = vmatprep.subr.mxu0 0.0
  %1764 = vmatpush1.msra.mxu0 0.0
  %1765 = vmatprep.subr.mxu0 0.0
  %1766 = vmatpush1.msra.mxu0 0.0
  %1767 = vmatprep.subr.mxu0 0.0
  %1768 = vmatpush1.msra.mxu0 0.0
  %1769 = vmatprep.subr.mxu0 0.0
  %1770 = vmatpush1.msra.mxu0 0.0
  %1771 = vmatprep.subr.mxu0 0.0
  %1772 = vmatpush1.msra.mxu0 0.0
  %1773 = vmatprep.subr.mxu0 0.0
  %1774 = vmatpush1.msra.mxu0 0.0
  %1775 = vmatprep.subr.mxu0 0.0
  %1776 = vmatpush1.msra.mxu0 0.0
  %1777 = vmatprep.subr.mxu0 0.0
  %1778 = vmatpush1.msra.mxu0 0.0
  %1779 = vmatprep.subr.mxu0 0.0
  %1780 = vmatpush1.msra.mxu0 0.0
  %1781 = vmatprep.subr.mxu0 0.0
  %1782 = vmatpush1.msra.mxu0 0.0
  %1783 = vmatprep.subr.mxu0 0.0
  %1784 = vmatpush1.msra.mxu0 0.0
  %1785 = vmatprep.subr.mxu0 0.0
  %1786 = vmatpush1.msra.mxu0 0.0
  %1787 = vmatprep.subr.mxu0 0.0
  %1788 = vmatpush1.msra.mxu0 0.0
  %1789 = vmatprep.subr.mxu0 0.0
  %1790 = vmatpush1.msra.mxu0 0.0
  %1791 = vmatprep.subr.mxu0 0.0
  %1792 = vmatpush1.msra.mxu0 0.0
  %1793 = vmatprep.subr.mxu0 0.0
  %1794 = vmatpush1.msra.mxu0 0.0
  %1795 = vmatprep.subr.mxu0 0.0
  %1796 = vmatpush1.msra.mxu0 0.0
  %1797 = vmatprep.subr.mxu0 0.0
  %1798 = vmatpush1.msra.mxu0 0.0
  %1799 = vmatprep.subr.mxu0 0.0
  %1800 = vmatpush1.msra.mxu0 0.0
  %1801 = vmatprep.subr.mxu0 0.0
  %1802 = vmatpush1.msra.mxu0 0.0
  %1803 = vmatprep.subr.mxu0 0.0
  %1804 = vmatpush1.msra.mxu0 0.0
  %1805 = vmatprep.mubr.f32.mxu0 0.0
  %1806 = vmatmul.mubr.f32.gmra.mrb[0].mxu0 %v1668
  %v1807 = vpop.f32.mrb[0].mxu0
  %v1808 = vadd.f32 0.0, %v1807
  %v1809 = vpop.f32.mrb[0].mxu0
  %1810 = vdwg.mxu0
  %1811 = vmatprep.subr.mxu0 %v1609
  %1812 = vmatpush1.msra.mxu0 %v1608
  %1813 = vmatprep.subr.mxu0 %v1617
  %1814 = vmatpush1.msra.mxu0 %v1616
  %1815 = vmatprep.subr.mxu0 %v1625
  %1816 = vmatpush1.msra.mxu0 %v1624
  %1817 = vmatprep.subr.mxu0 %v1633
  %1818 = vmatpush1.msra.mxu0 %v1632
  %1819 = vmatprep.subr.mxu0 0.0
  %1820 = vmatpush1.msra.mxu0 0.0
  %1821 = vmatprep.subr.mxu0 0.0
  %1822 = vmatpush1.msra.mxu0 0.0
  %1823 = vmatprep.subr.mxu0 0.0
  %1824 = vmatpush1.msra.mxu0 0.0
  %1825 = vmatprep.subr.mxu0 0.0
  %1826 = vmatpush1.msra.mxu0 0.0
  %1827 = vmatprep.subr.mxu0 0.0
  %1828 = vmatpush1.msra.mxu0 0.0
  %1829 = vmatprep.subr.mxu0 0.0
  %1830 = vmatpush1.msra.mxu0 0.0
  %1831 = vmatprep.subr.mxu0 0.0
  %1832 = vmatpush1.msra.mxu0 0.0
  %1833 = vmatprep.subr.mxu0 0.0
  %1834 = vmatpush1.msra.mxu0 0.0
  %1835 = vmatprep.subr.mxu0 0.0
  %1836 = vmatpush1.msra.mxu0 0.0
  %1837 = vmatprep.subr.mxu0 0.0
  %1838 = vmatpush1.msra.mxu0 0.0
  %1839 = vmatprep.subr.mxu0 0.0
  %1840 = vmatpush1.msra.mxu0 0.0
  %1841 = vmatprep.subr.mxu0 0.0
  %1842 = vmatpush1.msra.mxu0 0.0
  %1843 = vmatprep.subr.mxu0 0.0
  %1844 = vmatpush1.msra.mxu0 0.0
  %1845 = vmatprep.subr.mxu0 0.0
  %1846 = vmatpush1.msra.mxu0 0.0
  %1847 = vmatprep.subr.mxu0 0.0
  %1848 = vmatpush1.msra.mxu0 0.0
  %1849 = vmatprep.subr.mxu0 0.0
  %1850 = vmatpush1.msra.mxu0 0.0
  %1851 = vmatprep.subr.mxu0 0.0
  %1852 = vmatpush1.msra.mxu0 0.0
  %1853 = vmatprep.subr.mxu0 0.0
  %1854 = vmatpush1.msra.mxu0 0.0
  %1855 = vmatprep.subr.mxu0 0.0
  %1856 = vmatpush1.msra.mxu0 0.0
  %1857 = vmatprep.subr.mxu0 0.0
  %1858 = vmatpush1.msra.mxu0 0.0
  %1859 = vmatprep.subr.mxu0 0.0
  %1860 = vmatpush1.msra.mxu0 0.0
  %1861 = vmatprep.subr.mxu0 0.0
  %1862 = vmatpush1.msra.mxu0 0.0
  %1863 = vmatprep.subr.mxu0 0.0
  %1864 = vmatpush1.msra.mxu0 0.0
  %1865 = vmatprep.subr.mxu0 0.0
  %1866 = vmatpush1.msra.mxu0 0.0
  %1867 = vmatprep.subr.mxu0 0.0
  %1868 = vmatpush1.msra.mxu0 0.0
  %1869 = vmatprep.subr.mxu0 0.0
  %1870 = vmatpush1.msra.mxu0 0.0
  %1871 = vmatprep.subr.mxu0 0.0
  %1872 = vmatpush1.msra.mxu0 0.0
  %1873 = vmatprep.subr.mxu0 0.0
  %1874 = vmatpush1.msra.mxu0 0.0
  %1875 = vmatprep.mubr.f32.mxu0 0.0
  %1876 = vmatmul.mubr.f32.gmra.mrb[0].mxu0 %v1668
  %v1877 = vpop.f32.mrb[0].mxu0
  %v1878 = vpop.f32.mrb[0].mxu0
  %v1879 = vadd.f32 0.0, %v1878
  %1880 = vdwg.mxu0
  %1881 = vmatprep.subr.mxu0 %v1611
  %1882 = vmatpush1.msra.mxu0 %v1610
  %1883 = vmatprep.subr.mxu0 %v1619
  %1884 = vmatpush1.msra.mxu0 %v1618
  %1885 = vmatprep.subr.mxu0 %v1627
  %1886 = vmatpush1.msra.mxu0 %v1626
  %1887 = vmatprep.subr.mxu0 %v1635
  %1888 = vmatpush1.msra.mxu0 %v1634
  %1889 = vmatprep.subr.mxu0 0.0
  %1890 = vmatpush1.msra.mxu0 0.0
  %1891 = vmatprep.subr.mxu0 0.0
  %1892 = vmatpush1.msra.mxu0 0.0
  %1893 = vmatprep.subr.mxu0 0.0
  %1894 = vmatpush1.msra.mxu0 0.0
  %1895 = vmatprep.subr.mxu0 0.0
  %1896 = vmatpush1.msra.mxu0 0.0
  %1897 = vmatprep.subr.mxu0 0.0
  %1898 = vmatpush1.msra.mxu0 0.0
  %1899 = vmatprep.subr.mxu0 0.0
  %1900 = vmatpush1.msra.mxu0 0.0
  %1901 = vmatprep.subr.mxu0 0.0
  %1902 = vmatpush1.msra.mxu0 0.0
  %1903 = vmatprep.subr.mxu0 0.0
  %1904 = vmatpush1.msra.mxu0 0.0
  %1905 = vmatprep.subr.mxu0 0.0
  %1906 = vmatpush1.msra.mxu0 0.0
  %1907 = vmatprep.subr.mxu0 0.0
  %1908 = vmatpush1.msra.mxu0 0.0
  %1909 = vmatprep.subr.mxu0 0.0
  %1910 = vmatpush1.msra.mxu0 0.0
  %1911 = vmatprep.subr.mxu0 0.0
  %1912 = vmatpush1.msra.mxu0 0.0
  %1913 = vmatprep.subr.mxu0 0.0
  %1914 = vmatpush1.msra.mxu0 0.0
  %1915 = vmatprep.subr.mxu0 0.0
  %1916 = vmatpush1.msra.mxu0 0.0
  %1917 = vmatprep.subr.mxu0 0.0
  %1918 = vmatpush1.msra.mxu0 0.0
  %1919 = vmatprep.subr.mxu0 0.0
  %1920 = vmatpush1.msra.mxu0 0.0
  %1921 = vmatprep.subr.mxu0 0.0
  %1922 = vmatpush1.msra.mxu0 0.0
  %1923 = vmatprep.subr.mxu0 0.0
  %1924 = vmatpush1.msra.mxu0 0.0
  %1925 = vmatprep.subr.mxu0 0.0
  %1926 = vmatpush1.msra.mxu0 0.0
  %1927 = vmatprep.subr.mxu0 0.0
  %1928 = vmatpush1.msra.mxu0 0.0
  %1929 = vmatprep.subr.mxu0 0.0
  %1930 = vmatpush1.msra.mxu0 0.0
  %1931 = vmatprep.subr.mxu0 0.0
  %1932 = vmatpush1.msra.mxu0 0.0
  %1933 = vmatprep.subr.mxu0 0.0
  %1934 = vmatpush1.msra.mxu0 0.0
  %1935 = vmatprep.subr.mxu0 0.0
  %1936 = vmatpush1.msra.mxu0 0.0
  %1937 = vmatprep.subr.mxu0 0.0
  %1938 = vmatpush1.msra.mxu0 0.0
  %1939 = vmatprep.subr.mxu0 0.0
  %1940 = vmatpush1.msra.mxu0 0.0
  %1941 = vmatprep.subr.mxu0 0.0
  %1942 = vmatpush1.msra.mxu0 0.0
  %1943 = vmatprep.subr.mxu0 0.0
  %1944 = vmatpush1.msra.mxu0 0.0
  %1945 = vmatprep.mubr.f32.mxu0 0.0
  %1946 = vmatmul.mubr.f32.gmra.mrb[0].mxu0 %v1668
  %v1947 = vpop.f32.mrb[0].mxu0
  %v1948 = vadd.f32 0.0, %v1947
  %v1949 = vpop.f32.mrb[0].mxu0
  %v1950 = vadd.f32 0.0, %v1949
  %1951 = vdwg.mxu0
  %v1952 = vadd.f32 %v1449, %v1737
  %v1953 = vadd.f32 %v1450, %v1739
  %v1954 = vadd.f32 %v1451, %v1808
  %v1955 = vadd.f32 %v1452, %v1879
  %v1956 = vadd.f32 %v1453, %v1948
  %v1957 = vadd.f32 %v1454, %v1950
  %v1958 = vld [vmem:[%s1 + $0x4] sm:$0xf]
  %v1959 = vld [vmem:[%s0] sm:$0xff]
  %v1960 = vld [vmem:[%s0 + $0x8] sm:$0xff]
  %v1961 = vld [vmem:[%s0 + $0x10] sm:$0xff]
  %v1962 = vld [vmem:[%s0 + $0x18] sm:$0xff]
  %v1963 = vld [vmem:[%s0 + $0x20] sm:$0xff]
  %v1964 = vld [vmem:[%s0 + $0x28] sm:$0xff]
  %v1965 = vld [vmem:[%s0 + $0x30] sm:$0xff]
  %v1966 = vld [vmem:[%s0 + $0x38] sm:$0xff]
  %v1967 = vld [vmem:[%s0 + $0x40] sm:$0xff]
  %v1968 = vld [vmem:[%s0 + $0x50] sm:$0xff]
  %v1969 = vld [vmem:[%s0 + $0x58] sm:$0xff]
  %v1970 = vld [vmem:[%s0 + $0x60] sm:$0xff]
  %v1971 = vld [vmem:[%s0 + $0x68] sm:$0xff]
  %v1972 = vld [vmem:[%s0 + $0x70] sm:$0xff]
  %v1973 = vld [vmem:[%s0 + $0x78] sm:$0xff]
  %v1974 = vld [vmem:[%s0 + $0x80] sm:$0xff]
  %v1975 = vld [vmem:[%s0 + $0x88] sm:$0xff]
  %v1976 = vld [vmem:[%s0 + $0x90] sm:$0xff]
  %v1977 = vld [vmem:[%s0 + $0xa0] sm:$0xff]
  %v1978 = vld [vmem:[%s0 + $0xa8] sm:$0xff]
  %v1979 = vld [vmem:[%s0 + $0xb0] sm:$0xff]
  %v1980 = vld [vmem:[%s0 + $0xb8] sm:$0xff]
  %v1981 = vld [vmem:[%s0 + $0xc0] sm:$0xff]
  %v1982 = vld [vmem:[%s0 + $0xc8] sm:$0xff]
  %v1983 = vld [vmem:[%s0 + $0xd0] sm:$0xff]
  %v1984 = vld [vmem:[%s0 + $0xd8] sm:$0xff]
  %v1985 = vld [vmem:[%s0 + $0xe0] sm:$0xff]
  %v1986 = vld [vmem:[%s0 + $0xf0] sm:$0xff]
  %v1987 = vld [vmem:[%s0 + $0xf8] sm:$0xff]
  %v1988 = vld [vmem:[%s0 + $0x100] sm:$0xff]
  %v1989 = vld [vmem:[%s0 + $0x108] sm:$0xff]
  %v1990 = vld [vmem:[%s0 + $0x110] sm:$0xff]
  %v1991 = vld [vmem:[%s0 + $0x118] sm:$0xff]
  %v1992 = vld [vmem:[%s0 + $0x120] sm:$0xff]
  %v1993 = vld [vmem:[%s0 + $0x128] sm:$0xff]
  %v1994 = vld [vmem:[%s0 + $0x130] sm:$0xff]
  %2031 = vrot.lane.b32.xlu0 %v1959, 53
  %v2032 = vpop.permute.xlu0 %2031
  %2033 = vrot.lane.b32.xlu0 %v1960, 53
  %v2034 = vpop.permute.xlu0 %2033
  %2035 = vrot.lane.b32.xlu0 %v1961, 53
  %v2036 = vpop.permute.xlu0 %2035
  %2037 = vrot.lane.b32.xlu0 %v1962, 53
  %v2038 = vpop.permute.xlu0 %2037
  %2039 = vrot.lane.b32.xlu0 %v1963, 53
  %v2040 = vpop.permute.xlu0 %2039
  %2041 = vrot.lane.b32.xlu0 %v1964, 53
  %v2042 = vpop.permute.xlu0 %2041
  %2043 = vrot.lane.b32.xlu0 %v1965, 53
  %v2044 = vpop.permute.xlu0 %2043
  %2045 = vrot.lane.b32.xlu0 %v1966, 53
  %v2046 = vpop.permute.xlu0 %2045
  %2047 = vrot.lane.b32.xlu0 %v1967, 53
  %v2048 = vpop.permute.xlu0 %2047
  %2049 = vrot.lane.b32.xlu0 %v1968, 53
  %v2050 = vpop.permute.xlu0 %2049
  %2051 = vrot.lane.b32.xlu0 %v1969, 53
  %v2052 = vpop.permute.xlu0 %2051
  %2053 = vrot.lane.b32.xlu0 %v1970, 53
  %v2054 = vpop.permute.xlu0 %2053
  %2055 = vrot.lane.b32.xlu0 %v1971, 53
  %v2056 = vpop.permute.xlu0 %2055
  %2057 = vrot.lane.b32.xlu0 %v1972, 53
  %v2058 = vpop.permute.xlu0 %2057
  %2059 = vrot.lane.b32.xlu0 %v1973, 53
  %v2060 = vpop.permute.xlu0 %2059
  %2061 = vrot.lane.b32.xlu0 %v1974, 53
  %v2062 = vpop.permute.xlu0 %2061
  %2063 = vrot.lane.b32.xlu0 %v1975, 53
  %v2064 = vpop.permute.xlu0 %2063
  %2065 = vrot.lane.b32.xlu0 %v1976, 53
  %v2066 = vpop.permute.xlu0 %2065
  %2067 = vrot.lane.b32.xlu0 %v1977, 53
  %v2068 = vpop.permute.xlu0 %2067
  %2069 = vrot.lane.b32.xlu0 %v1978, 53
  %v2070 = vpop.permute.xlu0 %2069
  %2071 = vrot.lane.b32.xlu0 %v1979, 53
  %v2072 = vpop.permute.xlu0 %2071
  %2073 = vrot.lane.b32.xlu0 %v1980, 53
  %v2074 = vpop.permute.xlu0 %2073
  %2075 = vrot.lane.b32.xlu0 %v1981, 53
  %v2076 = vpop.permute.xlu0 %2075
  %2077 = vrot.lane.b32.xlu0 %v1982, 53
  %v2078 = vpop.permute.xlu0 %2077
  %2079 = vrot.lane.b32.xlu0 %v1983, 53
  %v2080 = vpop.permute.xlu0 %2079
  %2081 = vrot.lane.b32.xlu0 %v1984, 53
  %v2082 = vpop.permute.xlu0 %2081
  %2083 = vrot.lane.b32.xlu0 %v1985, 53
  %v2084 = vpop.permute.xlu0 %2083
  %2085 = vrot.lane.b32.xlu0 %v1986, 53
  %v2086 = vpop.permute.xlu0 %2085
  %2087 = vrot.lane.b32.xlu0 %v1987, 53
  %v2088 = vpop.permute.xlu0 %2087
  %2089 = vrot.lane.b32.xlu0 %v1988, 53
  %v2090 = vpop.permute.xlu0 %2089
  %2091 = vrot.lane.b32.xlu0 %v1989, 53
  %v2092 = vpop.permute.xlu0 %2091
  %2093 = vrot.lane.b32.xlu0 %v1990, 53
  %v2094 = vpop.permute.xlu0 %2093
  %2095 = vrot.lane.b32.xlu0 %v1991, 53
  %v2096 = vpop.permute.xlu0 %2095
  %2097 = vrot.lane.b32.xlu0 %v1992, 53
  %v2098 = vpop.permute.xlu0 %2097
  %2099 = vrot.lane.b32.xlu0 %v1993, 53
  %v2100 = vpop.permute.xlu0 %2099
  %2101 = vrot.lane.b32.xlu0 %v1994, 53
  %v2102 = vpop.permute.xlu0 %2101
  %vm2103 = vcmask 433152
  %v2104 = vsel %vm2103, %v2032, %v2034
  %v2105 = vsel %vm2103, %v2034, %v2036
  %v2106 = vsel %vm2103, %v2036, %v2038
  %v2107 = vsel %vm2103, %v2038, %v2040
  %v2108 = vsel %vm2103, %v2040, %v2042
  %v2109 = vsel %vm2103, %v2042, %v2044
  %v2110 = vsel %vm2103, %v2044, %v2046
  %v2111 = vsel %vm2103, %v2046, %v2048
  %v2112 = vsel %vm2103, %v2050, %v2052
  %v2113 = vsel %vm2103, %v2052, %v2054
  %v2114 = vsel %vm2103, %v2054, %v2056
  %v2115 = vsel %vm2103, %v2056, %v2058
  %v2116 = vsel %vm2103, %v2058, %v2060
  %v2117 = vsel %vm2103, %v2060, %v2062
  %v2118 = vsel %vm2103, %v2062, %v2064
  %v2119 = vsel %vm2103, %v2064, %v2066
  %v2120 = vsel %vm2103, %v2068, %v2070
  %v2121 = vsel %vm2103, %v2070, %v2072
  %v2122 = vsel %vm2103, %v2072, %v2074
  %v2123 = vsel %vm2103, %v2074, %v2076
  %v2124 = vsel %vm2103, %v2076, %v2078
  %v2125 = vsel %vm2103, %v2078, %v2080
  %v2126 = vsel %vm2103, %v2080, %v2082
  %v2127 = vsel %vm2103, %v2082, %v2084
  %v2128 = vsel %vm2103, %v2086, %v2088
  %v2129 = vsel %vm2103, %v2088, %v2090
  %v2130 = vsel %vm2103, %v2090, %v2092
  %v2131 = vsel %vm2103, %v2092, %v2094
  %v2132 = vsel %vm2103, %v2094, %v2096
  %v2133 = vsel %vm2103, %v2096, %v2098
  %v2134 = vsel %vm2103, %v2098, %v2100
  %v2135 = vsel %vm2103, %v2100, %v2102
  %v2169 = vsel %vm231, %v1958, 0
  %2171 = vmatprep.subr.mxu0 %v2105
  %2172 = vmatpush1.msra.mxu0 %v2104
  %2173 = vmatprep.subr.mxu0 %v2113
  %2174 = vmatpush1.msra.mxu0 %v2112
  %2175 = vmatprep.subr.mxu0 %v2121
  %2176 = vmatpush1.msra.mxu0 %v2120
  %2177 = vmatprep.subr.mxu0 %v2129
  %2178 = vmatpush1.msra.mxu0 %v2128
  %2179 = vmatprep.subr.mxu0 0.0
  %2180 = vmatpush1.msra.mxu0 0.0
  %2181 = vmatprep.subr.mxu0 0.0
  %2182 = vmatpush1.msra.mxu0 0.0
  %2183 = vmatprep.subr.mxu0 0.0
  %2184 = vmatpush1.msra.mxu0 0.0
  %2185 = vmatprep.subr.mxu0 0.0
  %2186 = vmatpush1.msra.mxu0 0.0
  %2187 = vmatprep.subr.mxu0 0.0
  %2188 = vmatpush1.msra.mxu0 0.0
  %2189 = vmatprep.subr.mxu0 0.0
  %2190 = vmatpush1.msra.mxu0 0.0
  %2191 = vmatprep.subr.mxu0 0.0
  %2192 = vmatpush1.msra.mxu0 0.0
  %2193 = vmatprep.subr.mxu0 0.0
  %2194 = vmatpush1.msra.mxu0 0.0
  %2195 = vmatprep.subr.mxu0 0.0
  %2196 = vmatpush1.msra.mxu0 0.0
  %2197 = vmatprep.subr.mxu0 0.0
  %2198 = vmatpush1.msra.mxu0 0.0
  %2199 = vmatprep.subr.mxu0 0.0
  %2200 = vmatpush1.msra.mxu0 0.0
  %2201 = vmatprep.subr.mxu0 0.0
  %2202 = vmatpush1.msra.mxu0 0.0
  %2203 = vmatprep.subr.mxu0 0.0
  %2204 = vmatpush1.msra.mxu0 0.0
  %2205 = vmatprep.subr.mxu0 0.0
  %2206 = vmatpush1.msra.mxu0 0.0
  %2207 = vmatprep.subr.mxu0 0.0
  %2208 = vmatpush1.msra.mxu0 0.0
  %2209 = vmatprep.subr.mxu0 0.0
  %2210 = vmatpush1.msra.mxu0 0.0
  %2211 = vmatprep.subr.mxu0 0.0
  %2212 = vmatpush1.msra.mxu0 0.0
  %2213 = vmatprep.subr.mxu0 0.0
  %2214 = vmatpush1.msra.mxu0 0.0
  %2215 = vmatprep.subr.mxu0 0.0
  %2216 = vmatpush1.msra.mxu0 0.0
  %2217 = vmatprep.subr.mxu0 0.0
  %2218 = vmatpush1.msra.mxu0 0.0
  %2219 = vmatprep.subr.mxu0 0.0
  %2220 = vmatpush1.msra.mxu0 0.0
  %2221 = vmatprep.subr.mxu0 0.0
  %2222 = vmatpush1.msra.mxu0 0.0
  %2223 = vmatprep.subr.mxu0 0.0
  %2224 = vmatpush1.msra.mxu0 0.0
  %2225 = vmatprep.subr.mxu0 0.0
  %2226 = vmatpush1.msra.mxu0 0.0
  %2227 = vmatprep.subr.mxu0 0.0
  %2228 = vmatpush1.msra.mxu0 0.0
  %2229 = vmatprep.subr.mxu0 0.0
  %2230 = vmatpush1.msra.mxu0 0.0
  %2231 = vmatprep.subr.mxu0 0.0
  %2232 = vmatpush1.msra.mxu0 0.0
  %2233 = vmatprep.subr.mxu0 0.0
  %2234 = vmatpush1.msra.mxu0 0.0
  %2235 = vmatprep.mubr.f32.mxu0 0.0
  %2236 = vmatmul.mubr.f32.gmra.mrb[0].mxu0 %v2169
  %v2237 = vpop.f32.mrb[0].mxu0
  %v2238 = vadd.f32 0.0, %v2237
  %v2239 = vpop.f32.mrb[0].mxu0
  %v2240 = vadd.f32 0.0, %v2239
  %2241 = vdwg.mxu0
  %2242 = vmatprep.subr.mxu0 %v2107
  %2243 = vmatpush1.msra.mxu0 %v2106
  %2244 = vmatprep.subr.mxu0 %v2115
  %2245 = vmatpush1.msra.mxu0 %v2114
  %2246 = vmatprep.subr.mxu0 %v2123
  %2247 = vmatpush1.msra.mxu0 %v2122
  %2248 = vmatprep.subr.mxu0 %v2131
  %2249 = vmatpush1.msra.mxu0 %v2130
  %2250 = vmatprep.subr.mxu0 0.0
  %2251 = vmatpush1.msra.mxu0 0.0
  %2252 = vmatprep.subr.mxu0 0.0
  %2253 = vmatpush1.msra.mxu0 0.0
  %2254 = vmatprep.subr.mxu0 0.0
  %2255 = vmatpush1.msra.mxu0 0.0
  %2256 = vmatprep.subr.mxu0 0.0
  %2257 = vmatpush1.msra.mxu0 0.0
  %2258 = vmatprep.subr.mxu0 0.0
  %2259 = vmatpush1.msra.mxu0 0.0
  %2260 = vmatprep.subr.mxu0 0.0
  %2261 = vmatpush1.msra.mxu0 0.0
  %2262 = vmatprep.subr.mxu0 0.0
  %2263 = vmatpush1.msra.mxu0 0.0
  %2264 = vmatprep.subr.mxu0 0.0
  %2265 = vmatpush1.msra.mxu0 0.0
  %2266 = vmatprep.subr.mxu0 0.0
  %2267 = vmatpush1.msra.mxu0 0.0
  %2268 = vmatprep.subr.mxu0 0.0
  %2269 = vmatpush1.msra.mxu0 0.0
  %2270 = vmatprep.subr.mxu0 0.0
  %2271 = vmatpush1.msra.mxu0 0.0
  %2272 = vmatprep.subr.mxu0 0.0
  %2273 = vmatpush1.msra.mxu0 0.0
  %2274 = vmatprep.subr.mxu0 0.0
  %2275 = vmatpush1.msra.mxu0 0.0
  %2276 = vmatprep.subr.mxu0 0.0
  %2277 = vmatpush1.msra.mxu0 0.0
  %2278 = vmatprep.subr.mxu0 0.0
  %2279 = vmatpush1.msra.mxu0 0.0
  %2280 = vmatprep.subr.mxu0 0.0
  %2281 = vmatpush1.msra.mxu0 0.0
  %2282 = vmatprep.subr.mxu0 0.0
  %2283 = vmatpush1.msra.mxu0 0.0
  %2284 = vmatprep.subr.mxu0 0.0
  %2285 = vmatpush1.msra.mxu0 0.0
  %2286 = vmatprep.subr.mxu0 0.0
  %2287 = vmatpush1.msra.mxu0 0.0
  %2288 = vmatprep.subr.mxu0 0.0
  %2289 = vmatpush1.msra.mxu0 0.0
  %2290 = vmatprep.subr.mxu0 0.0
  %2291 = vmatpush1.msra.mxu0 0.0
  %2292 = vmatprep.subr.mxu0 0.0
  %2293 = vmatpush1.msra.mxu0 0.0
  %2294 = vmatprep.subr.mxu0 0.0
  %2295 = vmatpush1.msra.mxu0 0.0
  %2296 = vmatprep.subr.mxu0 0.0
  %2297 = vmatpush1.msra.mxu0 0.0
  %2298 = vmatprep.subr.mxu0 0.0
  %2299 = vmatpush1.msra.mxu0 0.0
  %2300 = vmatprep.subr.mxu0 0.0
  %2301 = vmatpush1.msra.mxu0 0.0
  %2302 = vmatprep.subr.mxu0 0.0
  %2303 = vmatpush1.msra.mxu0 0.0
  %2304 = vmatprep.subr.mxu0 0.0
  %2305 = vmatpush1.msra.mxu0 0.0
  %2306 = vmatprep.mubr.f32.mxu0 0.0
  %2307 = vmatmul.mubr.f32.gmra.mrb[0].mxu0 %v2169
  %v2308 = vpop.f32.mrb[0].mxu0
  %v2309 = vadd.f32 0.0, %v2308
  %v2310 = vpop.f32.mrb[0].mxu0
  %2311 = vdwg.mxu0
  %2312 = vmatprep.subr.mxu0 %v2109
  %2313 = vmatpush1.msra.mxu0 %v2108
  %2314 = vmatprep.subr.mxu0 %v2117
  %2315 = vmatpush1.msra.mxu0 %v2116
  %2316 = vmatprep.subr.mxu0 %v2125
  %2317 = vmatpush1.msra.mxu0 %v2124
  %2318 = vmatprep.subr.mxu0 %v2133
  %2319 = vmatpush1.msra.mxu0 %v2132
  %2320 = vmatprep.subr.mxu0 0.0
  %2321 = vmatpush1.msra.mxu0 0.0
  %2322 = vmatprep.subr.mxu0 0.0
  %2323 = vmatpush1.msra.mxu0 0.0
  %2324 = vmatprep.subr.mxu0 0.0
  %2325 = vmatpush1.msra.mxu0 0.0
  %2326 = vmatprep.subr.mxu0 0.0
  %2327 = vmatpush1.msra.mxu0 0.0
  %2328 = vmatprep.subr.mxu0 0.0
  %2329 = vmatpush1.msra.mxu0 0.0
  %2330 = vmatprep.subr.mxu0 0.0
  %2331 = vmatpush1.msra.mxu0 0.0
  %2332 = vmatprep.subr.mxu0 0.0
  %2333 = vmatpush1.msra.mxu0 0.0
  %2334 = vmatprep.subr.mxu0 0.0
  %2335 = vmatpush1.msra.mxu0 0.0
  %2336 = vmatprep.subr.mxu0 0.0
  %2337 = vmatpush1.msra.mxu0 0.0
  %2338 = vmatprep.subr.mxu0 0.0
  %2339 = vmatpush1.msra.mxu0 0.0
  %2340 = vmatprep.subr.mxu0 0.0
  %2341 = vmatpush1.msra.mxu0 0.0
  %2342 = vmatprep.subr.mxu0 0.0
  %2343 = vmatpush1.msra.mxu0 0.0
  %2344 = vmatprep.subr.mxu0 0.0
  %2345 = vmatpush1.msra.mxu0 0.0
  %2346 = vmatprep.subr.mxu0 0.0
  %2347 = vmatpush1.msra.mxu0 0.0
  %2348 = vmatprep.subr.mxu0 0.0
  %2349 = vmatpush1.msra.mxu0 0.0
  %2350 = vmatprep.subr.mxu0 0.0
  %2351 = vmatpush1.msra.mxu0 0.0
  %2352 = vmatprep.subr.mxu0 0.0
  %2353 = vmatpush1.msra.mxu0 0.0
  %2354 = vmatprep.subr.mxu0 0.0
  %2355 = vmatpush1.msra.mxu0 0.0
  %2356 = vmatprep.subr.mxu0 0.0
  %2357 = vmatpush1.msra.mxu0 0.0
  %2358 = vmatprep.subr.mxu0 0.0
  %2359 = vmatpush1.msra.mxu0 0.0
  %2360 = vmatprep.subr.mxu0 0.0
  %2361 = vmatpush1.msra.mxu0 0.0
  %2362 = vmatprep.subr.mxu0 0.0
  %2363 = vmatpush1.msra.mxu0 0.0
  %2364 = vmatprep.subr.mxu0 0.0
  %2365 = vmatpush1.msra.mxu0 0.0
  %2366 = vmatprep.subr.mxu0 0.0
  %2367 = vmatpush1.msra.mxu0 0.0
  %2368 = vmatprep.subr.mxu0 0.0
  %2369 = vmatpush1.msra.mxu0 0.0
  %2370 = vmatprep.subr.mxu0 0.0
  %2371 = vmatpush1.msra.mxu0 0.0
  %2372 = vmatprep.subr.mxu0 0.0
  %2373 = vmatpush1.msra.mxu0 0.0
  %2374 = vmatprep.subr.mxu0 0.0
  %2375 = vmatpush1.msra.mxu0 0.0
  %2376 = vmatprep.mubr.f32.mxu0 0.0
  %2377 = vmatmul.mubr.f32.gmra.mrb[0].mxu0 %v2169
  %v2378 = vpop.f32.mrb[0].mxu0
  %v2379 = vpop.f32.mrb[0].mxu0
  %v2380 = vadd.f32 0.0, %v2379
  %2381 = vdwg.mxu0
  %2382 = vmatprep.subr.mxu0 %v2111
  %2383 = vmatpush1.msra.mxu0 %v2110
  %2384 = vmatprep.subr.mxu0 %v2119
  %2385 = vmatpush1.msra.mxu0 %v2118
  %2386 = vmatprep.subr.mxu0 %v2127
  %2387 = vmatpush1.msra.mxu0 %v2126
  %2388 = vmatprep.subr.mxu0 %v2135
  %2389 = vmatpush1.msra.mxu0 %v2134
  %2390 = vmatprep.subr.mxu0 0.0
  %2391 = vmatpush1.msra.mxu0 0.0
  %2392 = vmatprep.subr.mxu0 0.0
  %2393 = vmatpush1.msra.mxu0 0.0
  %2394 = vmatprep.subr.mxu0 0.0
  %2395 = vmatpush1.msra.mxu0 0.0
  %2396 = vmatprep.subr.mxu0 0.0
  %2397 = vmatpush1.msra.mxu0 0.0
  %2398 = vmatprep.subr.mxu0 0.0
  %2399 = vmatpush1.msra.mxu0 0.0
  %2400 = vmatprep.subr.mxu0 0.0
  %2401 = vmatpush1.msra.mxu0 0.0
  %2402 = vmatprep.subr.mxu0 0.0
  %2403 = vmatpush1.msra.mxu0 0.0
  %2404 = vmatprep.subr.mxu0 0.0
  %2405 = vmatpush1.msra.mxu0 0.0
  %2406 = vmatprep.subr.mxu0 0.0
  %2407 = vmatpush1.msra.mxu0 0.0
  %2408 = vmatprep.subr.mxu0 0.0
  %2409 = vmatpush1.msra.mxu0 0.0
  %2410 = vmatprep.subr.mxu0 0.0
  %2411 = vmatpush1.msra.mxu0 0.0
  %2412 = vmatprep.subr.mxu0 0.0
  %2413 = vmatpush1.msra.mxu0 0.0
  %2414 = vmatprep.subr.mxu0 0.0
  %2415 = vmatpush1.msra.mxu0 0.0
  %2416 = vmatprep.subr.mxu0 0.0
  %2417 = vmatpush1.msra.mxu0 0.0
  %2418 = vmatprep.subr.mxu0 0.0
  %2419 = vmatpush1.msra.mxu0 0.0
  %2420 = vmatprep.subr.mxu0 0.0
  %2421 = vmatpush1.msra.mxu0 0.0
  %2422 = vmatprep.subr.mxu0 0.0
  %2423 = vmatpush1.msra.mxu0 0.0
  %2424 = vmatprep.subr.mxu0 0.0
  %2425 = vmatpush1.msra.mxu0 0.0
  %2426 = vmatprep.subr.mxu0 0.0
  %2427 = vmatpush1.msra.mxu0 0.0
  %2428 = vmatprep.subr.mxu0 0.0
  %2429 = vmatpush1.msra.mxu0 0.0
  %2430 = vmatprep.subr.mxu0 0.0
  %2431 = vmatpush1.msra.mxu0 0.0
  %2432 = vmatprep.subr.mxu0 0.0
  %2433 = vmatpush1.msra.mxu0 0.0
  %2434 = vmatprep.subr.mxu0 0.0
  %2435 = vmatpush1.msra.mxu0 0.0
  %2436 = vmatprep.subr.mxu0 0.0
  %2437 = vmatpush1.msra.mxu0 0.0
  %2438 = vmatprep.subr.mxu0 0.0
  %2439 = vmatpush1.msra.mxu0 0.0
  %2440 = vmatprep.subr.mxu0 0.0
  %2441 = vmatpush1.msra.mxu0 0.0
  %2442 = vmatprep.subr.mxu0 0.0
  %2443 = vmatpush1.msra.mxu0 0.0
  %2444 = vmatprep.subr.mxu0 0.0
  %2445 = vmatpush1.msra.mxu0 0.0
  %2446 = vmatprep.mubr.f32.mxu0 0.0
  %2447 = vmatmul.mubr.f32.gmra.mrb[0].mxu0 %v2169
  %v2448 = vpop.f32.mrb[0].mxu0
  %v2449 = vadd.f32 0.0, %v2448
  %v2450 = vpop.f32.mrb[0].mxu0
  %v2451 = vadd.f32 0.0, %v2450
  %2452 = vdwg.mxu0
  %v2453 = vadd.f32 %v1952, %v2238
  %v2454 = vadd.f32 %v1953, %v2240
  %v2455 = vadd.f32 %v1954, %v2309
  %v2456 = vadd.f32 %v1955, %v2380
  %v2457 = vadd.f32 %v1956, %v2449
  %v2458 = vadd.f32 %v1957, %v2451
  %2459 = vrot.lane.b32.xlu0 %v1958, 96
  %v2460 = vpop.permute.xlu0 %2459
  %2461 = vrot.lane.b32.xlu0 %v1959, 52
  %v2462 = vpop.permute.xlu0 %2461
  %2463 = vrot.lane.b32.xlu0 %v1960, 52
  %v2464 = vpop.permute.xlu0 %2463
  %2465 = vrot.lane.b32.xlu0 %v1961, 52
  %v2466 = vpop.permute.xlu0 %2465
  %2467 = vrot.lane.b32.xlu0 %v1962, 52
  %v2468 = vpop.permute.xlu0 %2467
  %2469 = vrot.lane.b32.xlu0 %v1963, 52
  %v2470 = vpop.permute.xlu0 %2469
  %2471 = vrot.lane.b32.xlu0 %v1964, 52
  %v2472 = vpop.permute.xlu0 %2471
  %2473 = vrot.lane.b32.xlu0 %v1965, 52
  %v2474 = vpop.permute.xlu0 %2473
  %2475 = vrot.lane.b32.xlu0 %v1966, 52
  %v2476 = vpop.permute.xlu0 %2475
  %2477 = vrot.lane.b32.xlu0 %v1967, 52
  %v2478 = vpop.permute.xlu0 %2477
  %2479 = vrot.lane.b32.xlu0 %v1968, 52
  %v2480 = vpop.permute.xlu0 %2479
  %2481 = vrot.lane.b32.xlu0 %v1969, 52
  %v2482 = vpop.permute.xlu0 %2481
  %2483 = vrot.lane.b32.xlu0 %v1970, 52
  %v2484 = vpop.permute.xlu0 %2483
  %2485 = vrot.lane.b32.xlu0 %v1971, 52
  %v2486 = vpop.permute.xlu0 %2485
  %2487 = vrot.lane.b32.xlu0 %v1972, 52
  %v2488 = vpop.permute.xlu0 %2487
  %2489 = vrot.lane.b32.xlu0 %v1973, 52
  %v2490 = vpop.permute.xlu0 %2489
  %2491 = vrot.lane.b32.xlu0 %v1974, 52
  %v2492 = vpop.permute.xlu0 %2491
  %2493 = vrot.lane.b32.xlu0 %v1975, 52
  %v2494 = vpop.permute.xlu0 %2493
  %2495 = vrot.lane.b32.xlu0 %v1976, 52
  %v2496 = vpop.permute.xlu0 %2495
  %2497 = vrot.lane.b32.xlu0 %v1977, 52
  %v2498 = vpop.permute.xlu0 %2497
  %2499 = vrot.lane.b32.xlu0 %v1978, 52
  %v2500 = vpop.permute.xlu0 %2499
  %2501 = vrot.lane.b32.xlu0 %v1979, 52
  %v2502 = vpop.permute.xlu0 %2501
  %2503 = vrot.lane.b32.xlu0 %v1980, 52
  %v2504 = vpop.permute.xlu0 %2503
  %2505 = vrot.lane.b32.xlu0 %v1981, 52
  %v2506 = vpop.permute.xlu0 %2505
  %2507 = vrot.lane.b32.xlu0 %v1982, 52
  %v2508 = vpop.permute.xlu0 %2507
  %2509 = vrot.lane.b32.xlu0 %v1983, 52
  %v2510 = vpop.permute.xlu0 %2509
  %2511 = vrot.lane.b32.xlu0 %v1984, 52
  %v2512 = vpop.permute.xlu0 %2511
  %2513 = vrot.lane.b32.xlu0 %v1985, 52
  %v2514 = vpop.permute.xlu0 %2513
  %2515 = vrot.lane.b32.xlu0 %v1986, 52
  %v2516 = vpop.permute.xlu0 %2515
  %2517 = vrot.lane.b32.xlu0 %v1987, 52
  %v2518 = vpop.permute.xlu0 %2517
  %2519 = vrot.lane.b32.xlu0 %v1988, 52
  %v2520 = vpop.permute.xlu0 %2519
  %2521 = vrot.lane.b32.xlu0 %v1989, 52
  %v2522 = vpop.permute.xlu0 %2521
  %2523 = vrot.lane.b32.xlu0 %v1990, 52
  %v2524 = vpop.permute.xlu0 %2523
  %2525 = vrot.lane.b32.xlu0 %v1991, 52
  %v2526 = vpop.permute.xlu0 %2525
  %2527 = vrot.lane.b32.xlu0 %v1992, 52
  %v2528 = vpop.permute.xlu0 %2527
  %2529 = vrot.lane.b32.xlu0 %v1993, 52
  %v2530 = vpop.permute.xlu0 %2529
  %2531 = vrot.lane.b32.xlu0 %v1994, 52
  %v2532 = vpop.permute.xlu0 %2531
  %vm2533 = vcmask 424960
  %v2534 = vsel %vm2533, %v2462, %v2464
  %v2535 = vsel %vm2533, %v2464, %v2466
  %v2536 = vsel %vm2533, %v2466, %v2468
  %v2537 = vsel %vm2533, %v2468, %v2470
  %v2538 = vsel %vm2533, %v2470, %v2472
  %v2539 = vsel %vm2533, %v2472, %v2474
  %v2540 = vsel %vm2533, %v2474, %v2476
  %v2541 = vsel %vm2533, %v2476, %v2478
  %v2542 = vsel %vm2533, %v2480, %v2482
  %v2543 = vsel %vm2533, %v2482, %v2484
  %v2544 = vsel %vm2533, %v2484, %v2486
  %v2545 = vsel %vm2533, %v2486, %v2488
  %v2546 = vsel %vm2533, %v2488, %v2490
  %v2547 = vsel %vm2533, %v2490, %v2492
  %v2548 = vsel %vm2533, %v2492, %v2494
  %v2549 = vsel %vm2533, %v2494, %v2496
  %v2550 = vsel %vm2533, %v2498, %v2500
  %v2551 = vsel %vm2533, %v2500, %v2502
  %v2552 = vsel %vm2533, %v2502, %v2504
  %v2553 = vsel %vm2533, %v2504, %v2506
  %v2554 = vsel %vm2533, %v2506, %v2508
  %v2555 = vsel %vm2533, %v2508, %v2510
  %v2556 = vsel %vm2533, %v2510, %v2512
  %v2557 = vsel %vm2533, %v2512, %v2514
  %v2558 = vsel %vm2533, %v2516, %v2518
  %v2559 = vsel %vm2533, %v2518, %v2520
  %v2560 = vsel %vm2533, %v2520, %v2522
  %v2561 = vsel %vm2533, %v2522, %v2524
  %v2562 = vsel %vm2533, %v2524, %v2526
  %v2563 = vsel %vm2533, %v2526, %v2528
  %v2564 = vsel %vm2533, %v2528, %v2530
  %v2565 = vsel %vm2533, %v2530, %v2532
  %v2598 = vsel %vm231, %v2460, 0
  %2600 = vmatprep.subr.mxu0 %v2535
  %2601 = vmatpush1.msra.mxu0 %v2534
  %2602 = vmatprep.subr.mxu0 %v2543
  %2603 = vmatpush1.msra.mxu0 %v2542
  %2604 = vmatprep.subr.mxu0 %v2551
  %2605 = vmatpush1.msra.mxu0 %v2550
  %2606 = vmatprep.subr.mxu0 %v2559
  %2607 = vmatpush1.msra.mxu0 %v2558
  %2608 = vmatprep.subr.mxu0 0.0
  %2609 = vmatpush1.msra.mxu0 0.0
  %2610 = vmatprep.subr.mxu0 0.0
  %2611 = vmatpush1.msra.mxu0 0.0
  %2612 = vmatprep.subr.mxu0 0.0
  %2613 = vmatpush1.msra.mxu0 0.0
  %2614 = vmatprep.subr.mxu0 0.0
  %2615 = vmatpush1.msra.mxu0 0.0
  %2616 = vmatprep.subr.mxu0 0.0
  %2617 = vmatpush1.msra.mxu0 0.0
  %2618 = vmatprep.subr.mxu0 0.0
  %2619 = vmatpush1.msra.mxu0 0.0
  %2620 = vmatprep.subr.mxu0 0.0
  %2621 = vmatpush1.msra.mxu0 0.0
  %2622 = vmatprep.subr.mxu0 0.0
  %2623 = vmatpush1.msra.mxu0 0.0
  %2624 = vmatprep.subr.mxu0 0.0
  %2625 = vmatpush1.msra.mxu0 0.0
  %2626 = vmatprep.subr.mxu0 0.0
  %2627 = vmatpush1.msra.mxu0 0.0
  %2628 = vmatprep.subr.mxu0 0.0
  %2629 = vmatpush1.msra.mxu0 0.0
  %2630 = vmatprep.subr.mxu0 0.0
  %2631 = vmatpush1.msra.mxu0 0.0
  %2632 = vmatprep.subr.mxu0 0.0
  %2633 = vmatpush1.msra.mxu0 0.0
  %2634 = vmatprep.subr.mxu0 0.0
  %2635 = vmatpush1.msra.mxu0 0.0
  %2636 = vmatprep.subr.mxu0 0.0
  %2637 = vmatpush1.msra.mxu0 0.0
  %2638 = vmatprep.subr.mxu0 0.0
  %2639 = vmatpush1.msra.mxu0 0.0
  %2640 = vmatprep.subr.mxu0 0.0
  %2641 = vmatpush1.msra.mxu0 0.0
  %2642 = vmatprep.subr.mxu0 0.0
  %2643 = vmatpush1.msra.mxu0 0.0
  %2644 = vmatprep.subr.mxu0 0.0
  %2645 = vmatpush1.msra.mxu0 0.0
  %2646 = vmatprep.subr.mxu0 0.0
  %2647 = vmatpush1.msra.mxu0 0.0
  %2648 = vmatprep.subr.mxu0 0.0
  %2649 = vmatpush1.msra.mxu0 0.0
  %2650 = vmatprep.subr.mxu0 0.0
  %2651 = vmatpush1.msra.mxu0 0.0
  %2652 = vmatprep.subr.mxu0 0.0
  %2653 = vmatpush1.msra.mxu0 0.0
  %2654 = vmatprep.subr.mxu0 0.0
  %2655 = vmatpush1.msra.mxu0 0.0
  %2656 = vmatprep.subr.mxu0 0.0
  %2657 = vmatpush1.msra.mxu0 0.0
  %2658 = vmatprep.subr.mxu0 0.0
  %2659 = vmatpush1.msra.mxu0 0.0
  %2660 = vmatprep.subr.mxu0 0.0
  %2661 = vmatpush1.msra.mxu0 0.0
  %2662 = vmatprep.subr.mxu0 0.0
  %2663 = vmatpush1.msra.mxu0 0.0
  %2664 = vmatprep.mubr.f32.mxu0 0.0
  %2665 = vmatmul.mubr.f32.gmra.mrb[0].mxu0 %v2598
  %v2666 = vpop.f32.mrb[0].mxu0
  %v2667 = vadd.f32 0.0, %v2666
  %v2668 = vpop.f32.mrb[0].mxu0
  %v2669 = vadd.f32 0.0, %v2668
  %2670 = vdwg.mxu0
  %2671 = vmatprep.subr.mxu0 %v2537
  %2672 = vmatpush1.msra.mxu0 %v2536
  %2673 = vmatprep.subr.mxu0 %v2545
  %2674 = vmatpush1.msra.mxu0 %v2544
  %2675 = vmatprep.subr.mxu0 %v2553
  %2676 = vmatpush1.msra.mxu0 %v2552
  %2677 = vmatprep.subr.mxu0 %v2561
  %2678 = vmatpush1.msra.mxu0 %v2560
  %2679 = vmatprep.subr.mxu0 0.0
  %2680 = vmatpush1.msra.mxu0 0.0
  %2681 = vmatprep.subr.mxu0 0.0
  %2682 = vmatpush1.msra.mxu0 0.0
  %2683 = vmatprep.subr.mxu0 0.0
  %2684 = vmatpush1.msra.mxu0 0.0
  %2685 = vmatprep.subr.mxu0 0.0
  %2686 = vmatpush1.msra.mxu0 0.0
  %2687 = vmatprep.subr.mxu0 0.0
  %2688 = vmatpush1.msra.mxu0 0.0
  %2689 = vmatprep.subr.mxu0 0.0
  %2690 = vmatpush1.msra.mxu0 0.0
  %2691 = vmatprep.subr.mxu0 0.0
  %2692 = vmatpush1.msra.mxu0 0.0
  %2693 = vmatprep.subr.mxu0 0.0
  %2694 = vmatpush1.msra.mxu0 0.0
  %2695 = vmatprep.subr.mxu0 0.0
  %2696 = vmatpush1.msra.mxu0 0.0
  %2697 = vmatprep.subr.mxu0 0.0
  %2698 = vmatpush1.msra.mxu0 0.0
  %2699 = vmatprep.subr.mxu0 0.0
  %2700 = vmatpush1.msra.mxu0 0.0
  %2701 = vmatprep.subr.mxu0 0.0
  %2702 = vmatpush1.msra.mxu0 0.0
  %2703 = vmatprep.subr.mxu0 0.0
  %2704 = vmatpush1.msra.mxu0 0.0
  %2705 = vmatprep.subr.mxu0 0.0
  %2706 = vmatpush1.msra.mxu0 0.0
  %2707 = vmatprep.subr.mxu0 0.0
  %2708 = vmatpush1.msra.mxu0 0.0
  %2709 = vmatprep.subr.mxu0 0.0
  %2710 = vmatpush1.msra.mxu0 0.0
  %2711 = vmatprep.subr.mxu0 0.0
  %2712 = vmatpush1.msra.mxu0 0.0
  %2713 = vmatprep.subr.mxu0 0.0
  %2714 = vmatpush1.msra.mxu0 0.0
  %2715 = vmatprep.subr.mxu0 0.0
  %2716 = vmatpush1.msra.mxu0 0.0
  %2717 = vmatprep.subr.mxu0 0.0
  %2718 = vmatpush1.msra.mxu0 0.0
  %2719 = vmatprep.subr.mxu0 0.0
  %2720 = vmatpush1.msra.mxu0 0.0
  %2721 = vmatprep.subr.mxu0 0.0
  %2722 = vmatpush1.msra.mxu0 0.0
  %2723 = vmatprep.subr.mxu0 0.0
  %2724 = vmatpush1.msra.mxu0 0.0
  %2725 = vmatprep.subr.mxu0 0.0
  %2726 = vmatpush1.msra.mxu0 0.0
  %2727 = vmatprep.subr.mxu0 0.0
  %2728 = vmatpush1.msra.mxu0 0.0
  %2729 = vmatprep.subr.mxu0 0.0
  %2730 = vmatpush1.msra.mxu0 0.0
  %2731 = vmatprep.subr.mxu0 0.0
  %2732 = vmatpush1.msra.mxu0 0.0
  %2733 = vmatprep.subr.mxu0 0.0
  %2734 = vmatpush1.msra.mxu0 0.0
  %2735 = vmatprep.mubr.f32.mxu0 0.0
  %2736 = vmatmul.mubr.f32.gmra.mrb[0].mxu0 %v2598
  %v2737 = vpop.f32.mrb[0].mxu0
  %v2738 = vadd.f32 0.0, %v2737
  %v2739 = vpop.f32.mrb[0].mxu0
  %2740 = vdwg.mxu0
  %2741 = vmatprep.subr.mxu0 %v2539
  %2742 = vmatpush1.msra.mxu0 %v2538
  %2743 = vmatprep.subr.mxu0 %v2547
  %2744 = vmatpush1.msra.mxu0 %v2546
  %2745 = vmatprep.subr.mxu0 %v2555
  %2746 = vmatpush1.msra.mxu0 %v2554
  %2747 = vmatprep.subr.mxu0 %v2563
  %2748 = vmatpush1.msra.mxu0 %v2562
  %2749 = vmatprep.subr.mxu0 0.0
  %2750 = vmatpush1.msra.mxu0 0.0
  %2751 = vmatprep.subr.mxu0 0.0
  %2752 = vmatpush1.msra.mxu0 0.0
  %2753 = vmatprep.subr.mxu0 0.0
  %2754 = vmatpush1.msra.mxu0 0.0
  %2755 = vmatprep.subr.mxu0 0.0
  %2756 = vmatpush1.msra.mxu0 0.0
  %2757 = vmatprep.subr.mxu0 0.0
  %2758 = vmatpush1.msra.mxu0 0.0
  %2759 = vmatprep.subr.mxu0 0.0
  %2760 = vmatpush1.msra.mxu0 0.0
  %2761 = vmatprep.subr.mxu0 0.0
  %2762 = vmatpush1.msra.mxu0 0.0
  %2763 = vmatprep.subr.mxu0 0.0
  %2764 = vmatpush1.msra.mxu0 0.0
  %2765 = vmatprep.subr.mxu0 0.0
  %2766 = vmatpush1.msra.mxu0 0.0
  %2767 = vmatprep.subr.mxu0 0.0
  %2768 = vmatpush1.msra.mxu0 0.0
  %2769 = vmatprep.subr.mxu0 0.0
  %2770 = vmatpush1.msra.mxu0 0.0
  %2771 = vmatprep.subr.mxu0 0.0
  %2772 = vmatpush1.msra.mxu0 0.0
  %2773 = vmatprep.subr.mxu0 0.0
  %2774 = vmatpush1.msra.mxu0 0.0
  %2775 = vmatprep.subr.mxu0 0.0
  %2776 = vmatpush1.msra.mxu0 0.0
  %2777 = vmatprep.subr.mxu0 0.0
  %2778 = vmatpush1.msra.mxu0 0.0
  %2779 = vmatprep.subr.mxu0 0.0
  %2780 = vmatpush1.msra.mxu0 0.0
  %2781 = vmatprep.subr.mxu0 0.0
  %2782 = vmatpush1.msra.mxu0 0.0
  %2783 = vmatprep.subr.mxu0 0.0
  %2784 = vmatpush1.msra.mxu0 0.0
  %2785 = vmatprep.subr.mxu0 0.0
  %2786 = vmatpush1.msra.mxu0 0.0
  %2787 = vmatprep.subr.mxu0 0.0
  %2788 = vmatpush1.msra.mxu0 0.0
  %2789 = vmatprep.subr.mxu0 0.0
  %2790 = vmatpush1.msra.mxu0 0.0
  %2791 = vmatprep.subr.mxu0 0.0
  %2792 = vmatpush1.msra.mxu0 0.0
  %2793 = vmatprep.subr.mxu0 0.0
  %2794 = vmatpush1.msra.mxu0 0.0
  %2795 = vmatprep.subr.mxu0 0.0
  %2796 = vmatpush1.msra.mxu0 0.0
  %2797 = vmatprep.subr.mxu0 0.0
  %2798 = vmatpush1.msra.mxu0 0.0
  %2799 = vmatprep.subr.mxu0 0.0
  %2800 = vmatpush1.msra.mxu0 0.0
  %2801 = vmatprep.subr.mxu0 0.0
  %2802 = vmatpush1.msra.mxu0 0.0
  %2803 = vmatprep.subr.mxu0 0.0
  %2804 = vmatpush1.msra.mxu0 0.0
  %2805 = vmatprep.mubr.f32.mxu0 0.0
  %2806 = vmatmul.mubr.f32.gmra.mrb[0].mxu0 %v2598
  %v2807 = vpop.f32.mrb[0].mxu0
  %v2808 = vpop.f32.mrb[0].mxu0
  %v2809 = vadd.f32 0.0, %v2808
  %2810 = vdwg.mxu0
  %2811 = vmatprep.subr.mxu0 %v2541
  %2812 = vmatpush1.msra.mxu0 %v2540
  %2813 = vmatprep.subr.mxu0 %v2549
  %2814 = vmatpush1.msra.mxu0 %v2548
  %2815 = vmatprep.subr.mxu0 %v2557
  %2816 = vmatpush1.msra.mxu0 %v2556
  %2817 = vmatprep.subr.mxu0 %v2565
  %2818 = vmatpush1.msra.mxu0 %v2564
  %2819 = vmatprep.subr.mxu0 0.0
  %2820 = vmatpush1.msra.mxu0 0.0
  %2821 = vmatprep.subr.mxu0 0.0
  %2822 = vmatpush1.msra.mxu0 0.0
  %2823 = vmatprep.subr.mxu0 0.0
  %2824 = vmatpush1.msra.mxu0 0.0
  %2825 = vmatprep.subr.mxu0 0.0
  %2826 = vmatpush1.msra.mxu0 0.0
  %2827 = vmatprep.subr.mxu0 0.0
  %2828 = vmatpush1.msra.mxu0 0.0
  %2829 = vmatprep.subr.mxu0 0.0
  %2830 = vmatpush1.msra.mxu0 0.0
  %2831 = vmatprep.subr.mxu0 0.0
  %2832 = vmatpush1.msra.mxu0 0.0
  %2833 = vmatprep.subr.mxu0 0.0
  %2834 = vmatpush1.msra.mxu0 0.0
  %2835 = vmatprep.subr.mxu0 0.0
  %2836 = vmatpush1.msra.mxu0 0.0
  %2837 = vmatprep.subr.mxu0 0.0
  %2838 = vmatpush1.msra.mxu0 0.0
  %2839 = vmatprep.subr.mxu0 0.0
  %2840 = vmatpush1.msra.mxu0 0.0
  %2841 = vmatprep.subr.mxu0 0.0
  %2842 = vmatpush1.msra.mxu0 0.0
  %2843 = vmatprep.subr.mxu0 0.0
  %2844 = vmatpush1.msra.mxu0 0.0
  %2845 = vmatprep.subr.mxu0 0.0
  %2846 = vmatpush1.msra.mxu0 0.0
  %2847 = vmatprep.subr.mxu0 0.0
  %2848 = vmatpush1.msra.mxu0 0.0
  %2849 = vmatprep.subr.mxu0 0.0
  %2850 = vmatpush1.msra.mxu0 0.0
  %2851 = vmatprep.subr.mxu0 0.0
  %2852 = vmatpush1.msra.mxu0 0.0
  %2853 = vmatprep.subr.mxu0 0.0
  %2854 = vmatpush1.msra.mxu0 0.0
  %2855 = vmatprep.subr.mxu0 0.0
  %2856 = vmatpush1.msra.mxu0 0.0
  %2857 = vmatprep.subr.mxu0 0.0
  %2858 = vmatpush1.msra.mxu0 0.0
  %2859 = vmatprep.subr.mxu0 0.0
  %2860 = vmatpush1.msra.mxu0 0.0
  %2861 = vmatprep.subr.mxu0 0.0
  %2862 = vmatpush1.msra.mxu0 0.0
  %2863 = vmatprep.subr.mxu0 0.0
  %2864 = vmatpush1.msra.mxu0 0.0
  %2865 = vmatprep.subr.mxu0 0.0
  %2866 = vmatpush1.msra.mxu0 0.0
  %2867 = vmatprep.subr.mxu0 0.0
  %2868 = vmatpush1.msra.mxu0 0.0
  %2869 = vmatprep.subr.mxu0 0.0
  %2870 = vmatpush1.msra.mxu0 0.0
  %2871 = vmatprep.subr.mxu0 0.0
  %2872 = vmatpush1.msra.mxu0 0.0
  %2873 = vmatprep.subr.mxu0 0.0
  %2874 = vmatpush1.msra.mxu0 0.0
  %2875 = vmatprep.mubr.f32.mxu0 0.0
  %2876 = vmatmul.mubr.f32.gmra.mrb[0].mxu0 %v2598
  %v2877 = vpop.f32.mrb[0].mxu0
  %v2878 = vadd.f32 0.0, %v2877
  %v2879 = vpop.f32.mrb[0].mxu0
  %v2880 = vadd.f32 0.0, %v2879
  %2881 = vdwg.mxu0
  %v2882 = vadd.f32 %v2453, %v2667
  %v2883 = vadd.f32 %v2454, %v2669
  %v2884 = vadd.f32 %v2455, %v2738
  %v2885 = vadd.f32 %v2456, %v2809
  %v2886 = vadd.f32 %v2457, %v2878
  %v2887 = vadd.f32 %v2458, %v2880
  %v2888 = vld [vmem:[%s1 + $0x4] sm:$0xf]
  %v2889 = vld [vmem:[%s0] sm:$0xff]
  %v2890 = vld [vmem:[%s0 + $0x8] sm:$0xff]
  %v2891 = vld [vmem:[%s0 + $0x10] sm:$0xff]
  %v2892 = vld [vmem:[%s0 + $0x18] sm:$0xff]
  %v2893 = vld [vmem:[%s0 + $0x20] sm:$0xff]
  %v2894 = vld [vmem:[%s0 + $0x28] sm:$0xff]
  %v2895 = vld [vmem:[%s0 + $0x30] sm:$0xff]
  %v2896 = vld [vmem:[%s0 + $0x38] sm:$0xff]
  %v2897 = vld [vmem:[%s0 + $0x40] sm:$0xff]
  %v2898 = vld [vmem:[%s0 + $0x50] sm:$0xff]
  %v2899 = vld [vmem:[%s0 + $0x58] sm:$0xff]
  %v2900 = vld [vmem:[%s0 + $0x60] sm:$0xff]
  %v2901 = vld [vmem:[%s0 + $0x68] sm:$0xff]
  %v2902 = vld [vmem:[%s0 + $0x70] sm:$0xff]
  %v2903 = vld [vmem:[%s0 + $0x78] sm:$0xff]
  %v2904 = vld [vmem:[%s0 + $0x80] sm:$0xff]
  %v2905 = vld [vmem:[%s0 + $0x88] sm:$0xff]
  %v2906 = vld [vmem:[%s0 + $0x90] sm:$0xff]
  %v2907 = vld [vmem:[%s0 + $0xa0] sm:$0xff]
  %v2908 = vld [vmem:[%s0 + $0xa8] sm:$0xff]
  %v2909 = vld [vmem:[%s0 + $0xb0] sm:$0xff]
  %v2910 = vld [vmem:[%s0 + $0xb8] sm:$0xff]
  %v2911 = vld [vmem:[%s0 + $0xc0] sm:$0xff]
  %v2912 = vld [vmem:[%s0 + $0xc8] sm:$0xff]
  %v2913 = vld [vmem:[%s0 + $0xd0] sm:$0xff]
  %v2914 = vld [vmem:[%s0 + $0xd8] sm:$0xff]
  %v2915 = vld [vmem:[%s0 + $0xe0] sm:$0xff]
  %v2916 = vld [vmem:[%s0 + $0xf0] sm:$0xff]
  %v2917 = vld [vmem:[%s0 + $0xf8] sm:$0xff]
  %v2918 = vld [vmem:[%s0 + $0x100] sm:$0xff]
  %v2919 = vld [vmem:[%s0 + $0x108] sm:$0xff]
  %v2920 = vld [vmem:[%s0 + $0x110] sm:$0xff]
  %v2921 = vld [vmem:[%s0 + $0x118] sm:$0xff]
  %v2922 = vld [vmem:[%s0 + $0x120] sm:$0xff]
  %v2923 = vld [vmem:[%s0 + $0x128] sm:$0xff]
  %v2924 = vld [vmem:[%s0 + $0x130] sm:$0xff]
  %2926 = vrot.lane.b32.xlu0 %v2888, 64
  %v2927 = vpop.permute.xlu0 %2926
  %2964 = vrot.lane.b32.xlu0 %v2889, 30
  %v2965 = vpop.permute.xlu0 %2964
  %2966 = vrot.lane.b32.xlu0 %v2890, 30
  %v2967 = vpop.permute.xlu0 %2966
  %2968 = vrot.lane.b32.xlu0 %v2891, 30
  %v2969 = vpop.permute.xlu0 %2968
  %2970 = vrot.lane.b32.xlu0 %v2892, 30
  %v2971 = vpop.permute.xlu0 %2970
  %2972 = vrot.lane.b32.xlu0 %v2893, 30
  %v2973 = vpop.permute.xlu0 %2972
  %2974 = vrot.lane.b32.xlu0 %v2894, 30
  %v2975 = vpop.permute.xlu0 %2974
  %2976 = vrot.lane.b32.xlu0 %v2895, 30
  %v2977 = vpop.permute.xlu0 %2976
  %2978 = vrot.lane.b32.xlu0 %v2896, 30
  %v2979 = vpop.permute.xlu0 %2978
  %2980 = vrot.lane.b32.xlu0 %v2897, 30
  %v2981 = vpop.permute.xlu0 %2980
  %2982 = vrot.lane.b32.xlu0 %v2898, 30
  %v2983 = vpop.permute.xlu0 %2982
  %2984 = vrot.lane.b32.xlu0 %v2899, 30
  %v2985 = vpop.permute.xlu0 %2984
  %2986 = vrot.lane.b32.xlu0 %v2900, 30
  %v2987 = vpop.permute.xlu0 %2986
  %2988 = vrot.lane.b32.xlu0 %v2901, 30
  %v2989 = vpop.permute.xlu0 %2988
  %2990 = vrot.lane.b32.xlu0 %v2902, 30
  %v2991 = vpop.permute.xlu0 %2990
  %2992 = vrot.lane.b32.xlu0 %v2903, 30
  %v2993 = vpop.permute.xlu0 %2992
  %2994 = vrot.lane.b32.xlu0 %v2904, 30
  %v2995 = vpop.permute.xlu0 %2994
  %2996 = vrot.lane.b32.xlu0 %v2905, 30
  %v2997 = vpop.permute.xlu0 %2996
  %2998 = vrot.lane.b32.xlu0 %v2906, 30
  %v2999 = vpop.permute.xlu0 %2998
  %3000 = vrot.lane.b32.xlu0 %v2907, 30
  %v3001 = vpop.permute.xlu0 %3000
  %3002 = vrot.lane.b32.xlu0 %v2908, 30
  %v3003 = vpop.permute.xlu0 %3002
  %3004 = vrot.lane.b32.xlu0 %v2909, 30
  %v3005 = vpop.permute.xlu0 %3004
  %3006 = vrot.lane.b32.xlu0 %v2910, 30
  %v3007 = vpop.permute.xlu0 %3006
  %3008 = vrot.lane.b32.xlu0 %v2911, 30
  %v3009 = vpop.permute.xlu0 %3008
  %3010 = vrot.lane.b32.xlu0 %v2912, 30
  %v3011 = vpop.permute.xlu0 %3010
  %3012 = vrot.lane.b32.xlu0 %v2913, 30
  %v3013 = vpop.permute.xlu0 %3012
  %3014 = vrot.lane.b32.xlu0 %v2914, 30
  %v3015 = vpop.permute.xlu0 %3014
  %3016 = vrot.lane.b32.xlu0 %v2915, 30
  %v3017 = vpop.permute.xlu0 %3016
  %3018 = vrot.lane.b32.xlu0 %v2916, 30
  %v3019 = vpop.permute.xlu0 %3018
  %3020 = vrot.lane.b32.xlu0 %v2917, 30
  %v3021 = vpop.permute.xlu0 %3020
  %3022 = vrot.lane.b32.xlu0 %v2918, 30
  %v3023 = vpop.permute.xlu0 %3022
  %3024 = vrot.lane.b32.xlu0 %v2919, 30
  %v3025 = vpop.permute.xlu0 %3024
  %3026 = vrot.lane.b32.xlu0 %v2920, 30
  %v3027 = vpop.permute.xlu0 %3026
  %3028 = vrot.lane.b32.xlu0 %v2921, 30
  %v3029 = vpop.permute.xlu0 %3028
  %3030 = vrot.lane.b32.xlu0 %v2922, 30
  %v3031 = vpop.permute.xlu0 %3030
  %3032 = vrot.lane.b32.xlu0 %v2923, 30
  %v3033 = vpop.permute.xlu0 %3032
  %3034 = vrot.lane.b32.xlu0 %v2924, 30
  %v3035 = vpop.permute.xlu0 %3034
  %vm3036 = vcmask 244736
  %v3037 = vsel %vm3036, %v2965, %v2967
  %v3038 = vsel %vm3036, %v2967, %v2969
  %v3039 = vsel %vm3036, %v2969, %v2971
  %v3040 = vsel %vm3036, %v2971, %v2973
  %v3041 = vsel %vm3036, %v2973, %v2975
  %v3042 = vsel %vm3036, %v2975, %v2977
  %v3043 = vsel %vm3036, %v2977, %v2979
  %v3044 = vsel %vm3036, %v2979, %v2981
  %v3045 = vsel %vm3036, %v2983, %v2985
  %v3046 = vsel %vm3036, %v2985, %v2987
  %v3047 = vsel %vm3036, %v2987, %v2989
  %v3048 = vsel %vm3036, %v2989, %v2991
  %v3049 = vsel %vm3036, %v2991, %v2993
  %v3050 = vsel %vm3036, %v2993, %v2995
  %v3051 = vsel %vm3036, %v2995, %v2997
  %v3052 = vsel %vm3036, %v2997, %v2999
  %v3053 = vsel %vm3036, %v3001, %v3003
  %v3054 = vsel %vm3036, %v3003, %v3005
  %v3055 = vsel %vm3036, %v3005, %v3007
  %v3056 = vsel %vm3036, %v3007, %v3009
  %v3057 = vsel %vm3036, %v3009, %v3011
  %v3058 = vsel %vm3036, %v3011, %v3013
  %v3059 = vsel %vm3036, %v3013, %v3015
  %v3060 = vsel %vm3036, %v3015, %v3017
  %v3061 = vsel %vm3036, %v3019, %v3021
  %v3062 = vsel %vm3036, %v3021, %v3023
  %v3063 = vsel %vm3036, %v3023, %v3025
  %v3064 = vsel %vm3036, %v3025, %v3027
  %v3065 = vsel %vm3036, %v3027, %v3029
  %v3066 = vsel %vm3036, %v3029, %v3031
  %v3067 = vsel %vm3036, %v3031, %v3033
  %v3068 = vsel %vm3036, %v3033, %v3035
  %v3101 = vsel %vm231, %v2927, 0
  %3103 = vmatprep.subr.mxu0 %v3038
  %3104 = vmatpush1.msra.mxu0 %v3037
  %3105 = vmatprep.subr.mxu0 %v3046
  %3106 = vmatpush1.msra.mxu0 %v3045
  %3107 = vmatprep.subr.mxu0 %v3054
  %3108 = vmatpush1.msra.mxu0 %v3053
  %3109 = vmatprep.subr.mxu0 %v3062
  %3110 = vmatpush1.msra.mxu0 %v3061
  %3111 = vmatprep.subr.mxu0 0.0
  %3112 = vmatpush1.msra.mxu0 0.0
  %3113 = vmatprep.subr.mxu0 0.0
  %3114 = vmatpush1.msra.mxu0 0.0
  %3115 = vmatprep.subr.mxu0 0.0
  %3116 = vmatpush1.msra.mxu0 0.0
  %3117 = vmatprep.subr.mxu0 0.0
  %3118 = vmatpush1.msra.mxu0 0.0
  %3119 = vmatprep.subr.mxu0 0.0
  %3120 = vmatpush1.msra.mxu0 0.0
  %3121 = vmatprep.subr.mxu0 0.0
  %3122 = vmatpush1.msra.mxu0 0.0
  %3123 = vmatprep.subr.mxu0 0.0
  %3124 = vmatpush1.msra.mxu0 0.0
  %3125 = vmatprep.subr.mxu0 0.0
  %3126 = vmatpush1.msra.mxu0 0.0
  %3127 = vmatprep.subr.mxu0 0.0
  %3128 = vmatpush1.msra.mxu0 0.0
  %3129 = vmatprep.subr.mxu0 0.0
  %3130 = vmatpush1.msra.mxu0 0.0
  %3131 = vmatprep.subr.mxu0 0.0
  %3132 = vmatpush1.msra.mxu0 0.0
  %3133 = vmatprep.subr.mxu0 0.0
  %3134 = vmatpush1.msra.mxu0 0.0
  %3135 = vmatprep.subr.mxu0 0.0
  %3136 = vmatpush1.msra.mxu0 0.0
  %3137 = vmatprep.subr.mxu0 0.0
  %3138 = vmatpush1.msra.mxu0 0.0
  %3139 = vmatprep.subr.mxu0 0.0
  %3140 = vmatpush1.msra.mxu0 0.0
  %3141 = vmatprep.subr.mxu0 0.0
  %3142 = vmatpush1.msra.mxu0 0.0
  %3143 = vmatprep.subr.mxu0 0.0
  %3144 = vmatpush1.msra.mxu0 0.0
  %3145 = vmatprep.subr.mxu0 0.0
  %3146 = vmatpush1.msra.mxu0 0.0
  %3147 = vmatprep.subr.mxu0 0.0
  %3148 = vmatpush1.msra.mxu0 0.0
  %3149 = vmatprep.subr.mxu0 0.0
  %3150 = vmatpush1.msra.mxu0 0.0
  %3151 = vmatprep.subr.mxu0 0.0
  %3152 = vmatpush1.msra.mxu0 0.0
  %3153 = vmatprep.subr.mxu0 0.0
  %3154 = vmatpush1.msra.mxu0 0.0
  %3155 = vmatprep.subr.mxu0 0.0
  %3156 = vmatpush1.msra.mxu0 0.0
  %3157 = vmatprep.subr.mxu0 0.0
  %3158 = vmatpush1.msra.mxu0 0.0
  %3159 = vmatprep.subr.mxu0 0.0
  %3160 = vmatpush1.msra.mxu0 0.0
  %3161 = vmatprep.subr.mxu0 0.0
  %3162 = vmatpush1.msra.mxu0 0.0
  %3163 = vmatprep.subr.mxu0 0.0
  %3164 = vmatpush1.msra.mxu0 0.0
  %3165 = vmatprep.subr.mxu0 0.0
  %3166 = vmatpush1.msra.mxu0 0.0
  %3167 = vmatprep.mubr.f32.mxu0 0.0
  %3168 = vmatmul.mubr.f32.gmra.mrb[0].mxu0 %v3101
  %v3169 = vpop.f32.mrb[0].mxu0
  %v3170 = vadd.f32 0.0, %v3169
  %v3171 = vpop.f32.mrb[0].mxu0
  %v3172 = vadd.f32 0.0, %v3171
  %3173 = vdwg.mxu0
  %3174 = vmatprep.subr.mxu0 %v3040
  %3175 = vmatpush1.msra.mxu0 %v3039
  %3176 = vmatprep.subr.mxu0 %v3048
  %3177 = vmatpush1.msra.mxu0 %v3047
  %3178 = vmatprep.subr.mxu0 %v3056
  %3179 = vmatpush1.msra.mxu0 %v3055
  %3180 = vmatprep.subr.mxu0 %v3064
  %3181 = vmatpush1.msra.mxu0 %v3063
  %3182 = vmatprep.subr.mxu0 0.0
  %3183 = vmatpush1.msra.mxu0 0.0
  %3184 = vmatprep.subr.mxu0 0.0
  %3185 = vmatpush1.msra.mxu0 0.0
  %3186 = vmatprep.subr.mxu0 0.0
  %3187 = vmatpush1.msra.mxu0 0.0
  %3188 = vmatprep.subr.mxu0 0.0
  %3189 = vmatpush1.msra.mxu0 0.0
  %3190 = vmatprep.subr.mxu0 0.0
  %3191 = vmatpush1.msra.mxu0 0.0
  %3192 = vmatprep.subr.mxu0 0.0
  %3193 = vmatpush1.msra.mxu0 0.0
  %3194 = vmatprep.subr.mxu0 0.0
  %3195 = vmatpush1.msra.mxu0 0.0
  %3196 = vmatprep.subr.mxu0 0.0
  %3197 = vmatpush1.msra.mxu0 0.0
  %3198 = vmatprep.subr.mxu0 0.0
  %3199 = vmatpush1.msra.mxu0 0.0
  %3200 = vmatprep.subr.mxu0 0.0
  %3201 = vmatpush1.msra.mxu0 0.0
  %3202 = vmatprep.subr.mxu0 0.0
  %3203 = vmatpush1.msra.mxu0 0.0
  %3204 = vmatprep.subr.mxu0 0.0
  %3205 = vmatpush1.msra.mxu0 0.0
  %3206 = vmatprep.subr.mxu0 0.0
  %3207 = vmatpush1.msra.mxu0 0.0
  %3208 = vmatprep.subr.mxu0 0.0
  %3209 = vmatpush1.msra.mxu0 0.0
  %3210 = vmatprep.subr.mxu0 0.0
  %3211 = vmatpush1.msra.mxu0 0.0
  %3212 = vmatprep.subr.mxu0 0.0
  %3213 = vmatpush1.msra.mxu0 0.0
  %3214 = vmatprep.subr.mxu0 0.0
  %3215 = vmatpush1.msra.mxu0 0.0
  %3216 = vmatprep.subr.mxu0 0.0
  %3217 = vmatpush1.msra.mxu0 0.0
  %3218 = vmatprep.subr.mxu0 0.0
  %3219 = vmatpush1.msra.mxu0 0.0
  %3220 = vmatprep.subr.mxu0 0.0
  %3221 = vmatpush1.msra.mxu0 0.0
  %3222 = vmatprep.subr.mxu0 0.0
  %3223 = vmatpush1.msra.mxu0 0.0
  %3224 = vmatprep.subr.mxu0 0.0
  %3225 = vmatpush1.msra.mxu0 0.0
  %3226 = vmatprep.subr.mxu0 0.0
  %3227 = vmatpush1.msra.mxu0 0.0
  %3228 = vmatprep.subr.mxu0 0.0
  %3229 = vmatpush1.msra.mxu0 0.0
  %3230 = vmatprep.subr.mxu0 0.0
  %3231 = vmatpush1.msra.mxu0 0.0
  %3232 = vmatprep.subr.mxu0 0.0
  %3233 = vmatpush1.msra.mxu0 0.0
  %3234 = vmatprep.subr.mxu0 0.0
  %3235 = vmatpush1.msra.mxu0 0.0
  %3236 = vmatprep.subr.mxu0 0.0
  %3237 = vmatpush1.msra.mxu0 0.0
  %3238 = vmatprep.mubr.f32.mxu0 0.0
  %3239 = vmatmul.mubr.f32.gmra.mrb[0].mxu0 %v3101
  %v3240 = vpop.f32.mrb[0].mxu0
  %v3241 = vadd.f32 0.0, %v3240
  %v3242 = vpop.f32.mrb[0].mxu0
  %3243 = vdwg.mxu0
  %3244 = vmatprep.subr.mxu0 %v3042
  %3245 = vmatpush1.msra.mxu0 %v3041
  %3246 = vmatprep.subr.mxu0 %v3050
  %3247 = vmatpush1.msra.mxu0 %v3049
  %3248 = vmatprep.subr.mxu0 %v3058
  %3249 = vmatpush1.msra.mxu0 %v3057
  %3250 = vmatprep.subr.mxu0 %v3066
  %3251 = vmatpush1.msra.mxu0 %v3065
  %3252 = vmatprep.subr.mxu0 0.0
  %3253 = vmatpush1.msra.mxu0 0.0
  %3254 = vmatprep.subr.mxu0 0.0
  %3255 = vmatpush1.msra.mxu0 0.0
  %3256 = vmatprep.subr.mxu0 0.0
  %3257 = vmatpush1.msra.mxu0 0.0
  %3258 = vmatprep.subr.mxu0 0.0
  %3259 = vmatpush1.msra.mxu0 0.0
  %3260 = vmatprep.subr.mxu0 0.0
  %3261 = vmatpush1.msra.mxu0 0.0
  %3262 = vmatprep.subr.mxu0 0.0
  %3263 = vmatpush1.msra.mxu0 0.0
  %3264 = vmatprep.subr.mxu0 0.0
  %3265 = vmatpush1.msra.mxu0 0.0
  %3266 = vmatprep.subr.mxu0 0.0
  %3267 = vmatpush1.msra.mxu0 0.0
  %3268 = vmatprep.subr.mxu0 0.0
  %3269 = vmatpush1.msra.mxu0 0.0
  %3270 = vmatprep.subr.mxu0 0.0
  %3271 = vmatpush1.msra.mxu0 0.0
  %3272 = vmatprep.subr.mxu0 0.0
  %3273 = vmatpush1.msra.mxu0 0.0
  %3274 = vmatprep.subr.mxu0 0.0
  %3275 = vmatpush1.msra.mxu0 0.0
  %3276 = vmatprep.subr.mxu0 0.0
  %3277 = vmatpush1.msra.mxu0 0.0
  %3278 = vmatprep.subr.mxu0 0.0
  %3279 = vmatpush1.msra.mxu0 0.0
  %3280 = vmatprep.subr.mxu0 0.0
  %3281 = vmatpush1.msra.mxu0 0.0
  %3282 = vmatprep.subr.mxu0 0.0
  %3283 = vmatpush1.msra.mxu0 0.0
  %3284 = vmatprep.subr.mxu0 0.0
  %3285 = vmatpush1.msra.mxu0 0.0
  %3286 = vmatprep.subr.mxu0 0.0
  %3287 = vmatpush1.msra.mxu0 0.0
  %3288 = vmatprep.subr.mxu0 0.0
  %3289 = vmatpush1.msra.mxu0 0.0
  %3290 = vmatprep.subr.mxu0 0.0
  %3291 = vmatpush1.msra.mxu0 0.0
  %3292 = vmatprep.subr.mxu0 0.0
  %3293 = vmatpush1.msra.mxu0 0.0
  %3294 = vmatprep.subr.mxu0 0.0
  %3295 = vmatpush1.msra.mxu0 0.0
  %3296 = vmatprep.subr.mxu0 0.0
  %3297 = vmatpush1.msra.mxu0 0.0
  %3298 = vmatprep.subr.mxu0 0.0
  %3299 = vmatpush1.msra.mxu0 0.0
  %3300 = vmatprep.subr.mxu0 0.0
  %3301 = vmatpush1.msra.mxu0 0.0
  %3302 = vmatprep.subr.mxu0 0.0
  %3303 = vmatpush1.msra.mxu0 0.0
  %3304 = vmatprep.subr.mxu0 0.0
  %3305 = vmatpush1.msra.mxu0 0.0
  %3306 = vmatprep.subr.mxu0 0.0
  %3307 = vmatpush1.msra.mxu0 0.0
  %3308 = vmatprep.mubr.f32.mxu0 0.0
  %3309 = vmatmul.mubr.f32.gmra.mrb[0].mxu0 %v3101
  %v3310 = vpop.f32.mrb[0].mxu0
  %v3311 = vpop.f32.mrb[0].mxu0
  %v3312 = vadd.f32 0.0, %v3311
  %3313 = vdwg.mxu0
  %3314 = vmatprep.subr.mxu0 %v3044
  %3315 = vmatpush1.msra.mxu0 %v3043
  %3316 = vmatprep.subr.mxu0 %v3052
  %3317 = vmatpush1.msra.mxu0 %v3051
  %3318 = vmatprep.subr.mxu0 %v3060
  %3319 = vmatpush1.msra.mxu0 %v3059
  %3320 = vmatprep.subr.mxu0 %v3068
  %3321 = vmatpush1.msra.mxu0 %v3067
  %3322 = vmatprep.subr.mxu0 0.0
  %3323 = vmatpush1.msra.mxu0 0.0
  %3324 = vmatprep.subr.mxu0 0.0
  %3325 = vmatpush1.msra.mxu0 0.0
  %3326 = vmatprep.subr.mxu0 0.0
  %3327 = vmatpush1.msra.mxu0 0.0
  %3328 = vmatprep.subr.mxu0 0.0
  %3329 = vmatpush1.msra.mxu0 0.0
  %3330 = vmatprep.subr.mxu0 0.0
  %3331 = vmatpush1.msra.mxu0 0.0
  %3332 = vmatprep.subr.mxu0 0.0
  %3333 = vmatpush1.msra.mxu0 0.0
  %3334 = vmatprep.subr.mxu0 0.0
  %3335 = vmatpush1.msra.mxu0 0.0
  %3336 = vmatprep.subr.mxu0 0.0
  %3337 = vmatpush1.msra.mxu0 0.0
  %3338 = vmatprep.subr.mxu0 0.0
  %3339 = vmatpush1.msra.mxu0 0.0
  %3340 = vmatprep.subr.mxu0 0.0
  %3341 = vmatpush1.msra.mxu0 0.0
  %3342 = vmatprep.subr.mxu0 0.0
  %3343 = vmatpush1.msra.mxu0 0.0
  %3344 = vmatprep.subr.mxu0 0.0
  %3345 = vmatpush1.msra.mxu0 0.0
  %3346 = vmatprep.subr.mxu0 0.0
  %3347 = vmatpush1.msra.mxu0 0.0
  %3348 = vmatprep.subr.mxu0 0.0
  %3349 = vmatpush1.msra.mxu0 0.0
  %3350 = vmatprep.subr.mxu0 0.0
  %3351 = vmatpush1.msra.mxu0 0.0
  %3352 = vmatprep.subr.mxu0 0.0
  %3353 = vmatpush1.msra.mxu0 0.0
  %3354 = vmatprep.subr.mxu0 0.0
  %3355 = vmatpush1.msra.mxu0 0.0
  %3356 = vmatprep.subr.mxu0 0.0
  %3357 = vmatpush1.msra.mxu0 0.0
  %3358 = vmatprep.subr.mxu0 0.0
  %3359 = vmatpush1.msra.mxu0 0.0
  %3360 = vmatprep.subr.mxu0 0.0
  %3361 = vmatpush1.msra.mxu0 0.0
  %3362 = vmatprep.subr.mxu0 0.0
  %3363 = vmatpush1.msra.mxu0 0.0
  %3364 = vmatprep.subr.mxu0 0.0
  %3365 = vmatpush1.msra.mxu0 0.0
  %3366 = vmatprep.subr.mxu0 0.0
  %3367 = vmatpush1.msra.mxu0 0.0
  %3368 = vmatprep.subr.mxu0 0.0
  %3369 = vmatpush1.msra.mxu0 0.0
  %3370 = vmatprep.subr.mxu0 0.0
  %3371 = vmatpush1.msra.mxu0 0.0
  %3372 = vmatprep.subr.mxu0 0.0
  %3373 = vmatpush1.msra.mxu0 0.0
  %3374 = vmatprep.subr.mxu0 0.0
  %3375 = vmatpush1.msra.mxu0 0.0
  %3376 = vmatprep.subr.mxu0 0.0
  %3377 = vmatpush1.msra.mxu0 0.0
  %3378 = vmatprep.mubr.f32.mxu0 0.0
  %3379 = vmatmul.mubr.f32.gmra.mrb[0].mxu0 %v3101
  %v3380 = vpop.f32.mrb[0].mxu0
  %v3381 = vadd.f32 0.0, %v3380
  %v3382 = vpop.f32.mrb[0].mxu0
  %v3383 = vadd.f32 0.0, %v3382
  %3384 = vdwg.mxu0
  %v3385 = vadd.f32 %v2882, %v3170
  %v3386 = vadd.f32 %v2883, %v3172
  %v3387 = vadd.f32 %v2884, %v3241
  %v3388 = vadd.f32 %v2885, %v3312
  %v3389 = vadd.f32 %v2886, %v3381
  %v3390 = vadd.f32 %v2887, %v3383
  %v3391 = vld [vmem:[%s1 + $0x4] sm:$0xf]
  %v3392 = vld [vmem:[%s0] sm:$0xff]
  %v3393 = vld [vmem:[%s0 + $0x8] sm:$0xff]
  %v3394 = vld [vmem:[%s0 + $0x10] sm:$0xff]
  %v3395 = vld [vmem:[%s0 + $0x18] sm:$0xff]
  %v3396 = vld [vmem:[%s0 + $0x20] sm:$0xff]
  %v3397 = vld [vmem:[%s0 + $0x28] sm:$0xff]
  %v3398 = vld [vmem:[%s0 + $0x30] sm:$0xff]
  %v3399 = vld [vmem:[%s0 + $0x38] sm:$0xff]
  %v3400 = vld [vmem:[%s0 + $0x40] sm:$0xff]
  %v3401 = vld [vmem:[%s0 + $0x50] sm:$0xff]
  %v3402 = vld [vmem:[%s0 + $0x58] sm:$0xff]
  %v3403 = vld [vmem:[%s0 + $0x60] sm:$0xff]
  %v3404 = vld [vmem:[%s0 + $0x68] sm:$0xff]
  %v3405 = vld [vmem:[%s0 + $0x70] sm:$0xff]
  %v3406 = vld [vmem:[%s0 + $0x78] sm:$0xff]
  %v3407 = vld [vmem:[%s0 + $0x80] sm:$0xff]
  %v3408 = vld [vmem:[%s0 + $0x88] sm:$0xff]
  %v3409 = vld [vmem:[%s0 + $0x90] sm:$0xff]
  %v3410 = vld [vmem:[%s0 + $0xa0] sm:$0xff]
  %v3411 = vld [vmem:[%s0 + $0xa8] sm:$0xff]
  %v3412 = vld [vmem:[%s0 + $0xb0] sm:$0xff]
  %v3413 = vld [vmem:[%s0 + $0xb8] sm:$0xff]
  %v3414 = vld [vmem:[%s0 + $0xc0] sm:$0xff]
  %v3415 = vld [vmem:[%s0 + $0xc8] sm:$0xff]
  %v3416 = vld [vmem:[%s0 + $0xd0] sm:$0xff]
  %v3417 = vld [vmem:[%s0 + $0xd8] sm:$0xff]
  %v3418 = vld [vmem:[%s0 + $0xe0] sm:$0xff]
  %v3419 = vld [vmem:[%s0 + $0xf0] sm:$0xff]
  %v3420 = vld [vmem:[%s0 + $0xf8] sm:$0xff]
  %v3421 = vld [vmem:[%s0 + $0x100] sm:$0xff]
  %v3422 = vld [vmem:[%s0 + $0x108] sm:$0xff]
  %v3423 = vld [vmem:[%s0 + $0x110] sm:$0xff]
  %v3424 = vld [vmem:[%s0 + $0x118] sm:$0xff]
  %v3425 = vld [vmem:[%s0 + $0x120] sm:$0xff]
  %v3426 = vld [vmem:[%s0 + $0x128] sm:$0xff]
  %v3427 = vld [vmem:[%s0 + $0x130] sm:$0xff]
  %3429 = vrot.lane.b32.xlu0 %v3391, 32
  %v3430 = vpop.permute.xlu0 %3429
  %3467 = vrot.lane.b32.xlu0 %v3392, 29
  %v3468 = vpop.permute.xlu0 %3467
  %3469 = vrot.lane.b32.xlu0 %v3393, 29
  %v3470 = vpop.permute.xlu0 %3469
  %3471 = vrot.lane.b32.xlu0 %v3394, 29
  %v3472 = vpop.permute.xlu0 %3471
  %3473 = vrot.lane.b32.xlu0 %v3395, 29
  %v3474 = vpop.permute.xlu0 %3473
  %3475 = vrot.lane.b32.xlu0 %v3396, 29
  %v3476 = vpop.permute.xlu0 %3475
  %3477 = vrot.lane.b32.xlu0 %v3397, 29
  %v3478 = vpop.permute.xlu0 %3477
  %3479 = vrot.lane.b32.xlu0 %v3398, 29
  %v3480 = vpop.permute.xlu0 %3479
  %3481 = vrot.lane.b32.xlu0 %v3399, 29
  %v3482 = vpop.permute.xlu0 %3481
  %3483 = vrot.lane.b32.xlu0 %v3400, 29
  %v3484 = vpop.permute.xlu0 %3483
  %3485 = vrot.lane.b32.xlu0 %v3401, 29
  %v3486 = vpop.permute.xlu0 %3485
  %3487 = vrot.lane.b32.xlu0 %v3402, 29
  %v3488 = vpop.permute.xlu0 %3487
  %3489 = vrot.lane.b32.xlu0 %v3403, 29
  %v3490 = vpop.permute.xlu0 %3489
  %3491 = vrot.lane.b32.xlu0 %v3404, 29
  %v3492 = vpop.permute.xlu0 %3491
  %3493 = vrot.lane.b32.xlu0 %v3405, 29
  %v3494 = vpop.permute.xlu0 %3493
  %3495 = vrot.lane.b32.xlu0 %v3406, 29
  %v3496 = vpop.permute.xlu0 %3495
  %3497 = vrot.lane.b32.xlu0 %v3407, 29
  %v3498 = vpop.permute.xlu0 %3497
  %3499 = vrot.lane.b32.xlu0 %v3408, 29
  %v3500 = vpop.permute.xlu0 %3499
  %3501 = vrot.lane.b32.xlu0 %v3409, 29
  %v3502 = vpop.permute.xlu0 %3501
  %3503 = vrot.lane.b32.xlu0 %v3410, 29
  %v3504 = vpop.permute.xlu0 %3503
  %3505 = vrot.lane.b32.xlu0 %v3411, 29
  %v3506 = vpop.permute.xlu0 %3505
  %3507 = vrot.lane.b32.xlu0 %v3412, 29
  %v3508 = vpop.permute.xlu0 %3507
  %3509 = vrot.lane.b32.xlu0 %v3413, 29
  %v3510 = vpop.permute.xlu0 %3509
  %3511 = vrot.lane.b32.xlu0 %v3414, 29
  %v3512 = vpop.permute.xlu0 %3511
  %3513 = vrot.lane.b32.xlu0 %v3415, 29
  %v3514 = vpop.permute.xlu0 %3513
  %3515 = vrot.lane.b32.xlu0 %v3416, 29
  %v3516 = vpop.permute.xlu0 %3515
  %3517 = vrot.lane.b32.xlu0 %v3417, 29
  %v3518 = vpop.permute.xlu0 %3517
  %3519 = vrot.lane.b32.xlu0 %v3418, 29
  %v3520 = vpop.permute.xlu0 %3519
  %3521 = vrot.lane.b32.xlu0 %v3419, 29
  %v3522 = vpop.permute.xlu0 %3521
  %3523 = vrot.lane.b32.xlu0 %v3420, 29
  %v3524 = vpop.permute.xlu0 %3523
  %3525 = vrot.lane.b32.xlu0 %v3421, 29
  %v3526 = vpop.permute.xlu0 %3525
  %3527 = vrot.lane.b32.xlu0 %v3422, 29
  %v3528 = vpop.permute.xlu0 %3527
  %3529 = vrot.lane.b32.xlu0 %v3423, 29
  %v3530 = vpop.permute.xlu0 %3529
  %3531 = vrot.lane.b32.xlu0 %v3424, 29
  %v3532 = vpop.permute.xlu0 %3531
  %3533 = vrot.lane.b32.xlu0 %v3425, 29
  %v3534 = vpop.permute.xlu0 %3533
  %3535 = vrot.lane.b32.xlu0 %v3426, 29
  %v3536 = vpop.permute.xlu0 %3535
  %3537 = vrot.lane.b32.xlu0 %v3427, 29
  %v3538 = vpop.permute.xlu0 %3537
  %vm3539 = vcmask 236544
  %v3540 = vsel %vm3539, %v3468, %v3470
  %v3541 = vsel %vm3539, %v3470, %v3472
  %v3542 = vsel %vm3539, %v3472, %v3474
  %v3543 = vsel %vm3539, %v3474, %v3476
  %v3544 = vsel %vm3539, %v3476, %v3478
  %v3545 = vsel %vm3539, %v3478, %v3480
  %v3546 = vsel %vm3539, %v3480, %v3482
  %v3547 = vsel %vm3539, %v3482, %v3484
  %v3548 = vsel %vm3539, %v3486, %v3488
  %v3549 = vsel %vm3539, %v3488, %v3490
  %v3550 = vsel %vm3539, %v3490, %v3492
  %v3551 = vsel %vm3539, %v3492, %v3494
  %v3552 = vsel %vm3539, %v3494, %v3496
  %v3553 = vsel %vm3539, %v3496, %v3498
  %v3554 = vsel %vm3539, %v3498, %v3500
  %v3555 = vsel %vm3539, %v3500, %v3502
  %v3556 = vsel %vm3539, %v3504, %v3506
  %v3557 = vsel %vm3539, %v3506, %v3508
  %v3558 = vsel %vm3539, %v3508, %v3510
  %v3559 = vsel %vm3539, %v3510, %v3512
  %v3560 = vsel %vm3539, %v3512, %v3514
  %v3561 = vsel %vm3539, %v3514, %v3516
  %v3562 = vsel %vm3539, %v3516, %v3518
  %v3563 = vsel %vm3539, %v3518, %v3520
  %v3564 = vsel %vm3539, %v3522, %v3524
  %v3565 = vsel %vm3539, %v3524, %v3526
  %v3566 = vsel %vm3539, %v3526, %v3528
  %v3567 = vsel %vm3539, %v3528, %v3530
  %v3568 = vsel %vm3539, %v3530, %v3532
  %v3569 = vsel %vm3539, %v3532, %v3534
  %v3570 = vsel %vm3539, %v3534, %v3536
  %v3571 = vsel %vm3539, %v3536, %v3538
  %v3604 = vsel %vm231, %v3430, 0
  %3606 = vmatprep.subr.mxu0 %v3541
  %3607 = vmatpush1.msra.mxu0 %v3540
  %3608 = vmatprep.subr.mxu0 %v3549
  %3609 = vmatpush1.msra.mxu0 %v3548
  %3610 = vmatprep.subr.mxu0 %v3557
  %3611 = vmatpush1.msra.mxu0 %v3556
  %3612 = vmatprep.subr.mxu0 %v3565
  %3613 = vmatpush1.msra.mxu0 %v3564
  %3614 = vmatprep.subr.mxu0 0.0
  %3615 = vmatpush1.msra.mxu0 0.0
  %3616 = vmatprep.subr.mxu0 0.0
  %3617 = vmatpush1.msra.mxu0 0.0
  %3618 = vmatprep.subr.mxu0 0.0
  %3619 = vmatpush1.msra.mxu0 0.0
  %3620 = vmatprep.subr.mxu0 0.0
  %3621 = vmatpush1.msra.mxu0 0.0
  %3622 = vmatprep.subr.mxu0 0.0
  %3623 = vmatpush1.msra.mxu0 0.0
  %3624 = vmatprep.subr.mxu0 0.0
  %3625 = vmatpush1.msra.mxu0 0.0
  %3626 = vmatprep.subr.mxu0 0.0
  %3627 = vmatpush1.msra.mxu0 0.0
  %3628 = vmatprep.subr.mxu0 0.0
  %3629 = vmatpush1.msra.mxu0 0.0
  %3630 = vmatprep.subr.mxu0 0.0
  %3631 = vmatpush1.msra.mxu0 0.0
  %3632 = vmatprep.subr.mxu0 0.0
  %3633 = vmatpush1.msra.mxu0 0.0
  %3634 = vmatprep.subr.mxu0 0.0
  %3635 = vmatpush1.msra.mxu0 0.0
  %3636 = vmatprep.subr.mxu0 0.0
  %3637 = vmatpush1.msra.mxu0 0.0
  %3638 = vmatprep.subr.mxu0 0.0
  %3639 = vmatpush1.msra.mxu0 0.0
  %3640 = vmatprep.subr.mxu0 0.0
  %3641 = vmatpush1.msra.mxu0 0.0
  %3642 = vmatprep.subr.mxu0 0.0
  %3643 = vmatpush1.msra.mxu0 0.0
  %3644 = vmatprep.subr.mxu0 0.0
  %3645 = vmatpush1.msra.mxu0 0.0
  %3646 = vmatprep.subr.mxu0 0.0
  %3647 = vmatpush1.msra.mxu0 0.0
  %3648 = vmatprep.subr.mxu0 0.0
  %3649 = vmatpush1.msra.mxu0 0.0
  %3650 = vmatprep.subr.mxu0 0.0
  %3651 = vmatpush1.msra.mxu0 0.0
  %3652 = vmatprep.subr.mxu0 0.0
  %3653 = vmatpush1.msra.mxu0 0.0
  %3654 = vmatprep.subr.mxu0 0.0
  %3655 = vmatpush1.msra.mxu0 0.0
  %3656 = vmatprep.subr.mxu0 0.0
  %3657 = vmatpush1.msra.mxu0 0.0
  %3658 = vmatprep.subr.mxu0 0.0
  %3659 = vmatpush1.msra.mxu0 0.0
  %3660 = vmatprep.subr.mxu0 0.0
  %3661 = vmatpush1.msra.mxu0 0.0
  %3662 = vmatprep.subr.mxu0 0.0
  %3663 = vmatpush1.msra.mxu0 0.0
  %3664 = vmatprep.subr.mxu0 0.0
  %3665 = vmatpush1.msra.mxu0 0.0
  %3666 = vmatprep.subr.mxu0 0.0
  %3667 = vmatpush1.msra.mxu0 0.0
  %3668 = vmatprep.subr.mxu0 0.0
  %3669 = vmatpush1.msra.mxu0 0.0
  %3670 = vmatprep.mubr.f32.mxu0 0.0
  %3671 = vmatmul.mubr.f32.gmra.mrb[0].mxu0 %v3604
  %v3672 = vpop.f32.mrb[0].mxu0
  %v3673 = vadd.f32 0.0, %v3672
  %v3674 = vpop.f32.mrb[0].mxu0
  %v3675 = vadd.f32 0.0, %v3674
  %3676 = vdwg.mxu0
  %3677 = vmatprep.subr.mxu0 %v3543
  %3678 = vmatpush1.msra.mxu0 %v3542
  %3679 = vmatprep.subr.mxu0 %v3551
  %3680 = vmatpush1.msra.mxu0 %v3550
  %3681 = vmatprep.subr.mxu0 %v3559
  %3682 = vmatpush1.msra.mxu0 %v3558
  %3683 = vmatprep.subr.mxu0 %v3567
  %3684 = vmatpush1.msra.mxu0 %v3566
  %3685 = vmatprep.subr.mxu0 0.0
  %3686 = vmatpush1.msra.mxu0 0.0
  %3687 = vmatprep.subr.mxu0 0.0
  %3688 = vmatpush1.msra.mxu0 0.0
  %3689 = vmatprep.subr.mxu0 0.0
  %3690 = vmatpush1.msra.mxu0 0.0
  %3691 = vmatprep.subr.mxu0 0.0
  %3692 = vmatpush1.msra.mxu0 0.0
  %3693 = vmatprep.subr.mxu0 0.0
  %3694 = vmatpush1.msra.mxu0 0.0
  %3695 = vmatprep.subr.mxu0 0.0
  %3696 = vmatpush1.msra.mxu0 0.0
  %3697 = vmatprep.subr.mxu0 0.0
  %3698 = vmatpush1.msra.mxu0 0.0
  %3699 = vmatprep.subr.mxu0 0.0
  %3700 = vmatpush1.msra.mxu0 0.0
  %3701 = vmatprep.subr.mxu0 0.0
  %3702 = vmatpush1.msra.mxu0 0.0
  %3703 = vmatprep.subr.mxu0 0.0
  %3704 = vmatpush1.msra.mxu0 0.0
  %3705 = vmatprep.subr.mxu0 0.0
  %3706 = vmatpush1.msra.mxu0 0.0
  %3707 = vmatprep.subr.mxu0 0.0
  %3708 = vmatpush1.msra.mxu0 0.0
  %3709 = vmatprep.subr.mxu0 0.0
  %3710 = vmatpush1.msra.mxu0 0.0
  %3711 = vmatprep.subr.mxu0 0.0
  %3712 = vmatpush1.msra.mxu0 0.0
  %3713 = vmatprep.subr.mxu0 0.0
  %3714 = vmatpush1.msra.mxu0 0.0
  %3715 = vmatprep.subr.mxu0 0.0
  %3716 = vmatpush1.msra.mxu0 0.0
  %3717 = vmatprep.subr.mxu0 0.0
  %3718 = vmatpush1.msra.mxu0 0.0
  %3719 = vmatprep.subr.mxu0 0.0
  %3720 = vmatpush1.msra.mxu0 0.0
  %3721 = vmatprep.subr.mxu0 0.0
  %3722 = vmatpush1.msra.mxu0 0.0
  %3723 = vmatprep.subr.mxu0 0.0
  %3724 = vmatpush1.msra.mxu0 0.0
  %3725 = vmatprep.subr.mxu0 0.0
  %3726 = vmatpush1.msra.mxu0 0.0
  %3727 = vmatprep.subr.mxu0 0.0
  %3728 = vmatpush1.msra.mxu0 0.0
  %3729 = vmatprep.subr.mxu0 0.0
  %3730 = vmatpush1.msra.mxu0 0.0
  %3731 = vmatprep.subr.mxu0 0.0
  %3732 = vmatpush1.msra.mxu0 0.0
  %3733 = vmatprep.subr.mxu0 0.0
  %3734 = vmatpush1.msra.mxu0 0.0
  %3735 = vmatprep.subr.mxu0 0.0
  %3736 = vmatpush1.msra.mxu0 0.0
  %3737 = vmatprep.subr.mxu0 0.0
  %3738 = vmatpush1.msra.mxu0 0.0
  %3739 = vmatprep.subr.mxu0 0.0
  %3740 = vmatpush1.msra.mxu0 0.0
  %3741 = vmatprep.mubr.f32.mxu0 0.0
  %3742 = vmatmul.mubr.f32.gmra.mrb[0].mxu0 %v3604
  %v3743 = vpop.f32.mrb[0].mxu0
  %v3744 = vadd.f32 0.0, %v3743
  %v3745 = vpop.f32.mrb[0].mxu0
  %3746 = vdwg.mxu0
  %3747 = vmatprep.subr.mxu0 %v3545
  %3748 = vmatpush1.msra.mxu0 %v3544
  %3749 = vmatprep.subr.mxu0 %v3553
  %3750 = vmatpush1.msra.mxu0 %v3552
  %3751 = vmatprep.subr.mxu0 %v3561
  %3752 = vmatpush1.msra.mxu0 %v3560
  %3753 = vmatprep.subr.mxu0 %v3569
  %3754 = vmatpush1.msra.mxu0 %v3568
  %3755 = vmatprep.subr.mxu0 0.0
  %3756 = vmatpush1.msra.mxu0 0.0
  %3757 = vmatprep.subr.mxu0 0.0
  %3758 = vmatpush1.msra.mxu0 0.0
  %3759 = vmatprep.subr.mxu0 0.0
  %3760 = vmatpush1.msra.mxu0 0.0
  %3761 = vmatprep.subr.mxu0 0.0
  %3762 = vmatpush1.msra.mxu0 0.0
  %3763 = vmatprep.subr.mxu0 0.0
  %3764 = vmatpush1.msra.mxu0 0.0
  %3765 = vmatprep.subr.mxu0 0.0
  %3766 = vmatpush1.msra.mxu0 0.0
  %3767 = vmatprep.subr.mxu0 0.0
  %3768 = vmatpush1.msra.mxu0 0.0
  %3769 = vmatprep.subr.mxu0 0.0
  %3770 = vmatpush1.msra.mxu0 0.0
  %3771 = vmatprep.subr.mxu0 0.0
  %3772 = vmatpush1.msra.mxu0 0.0
  %3773 = vmatprep.subr.mxu0 0.0
  %3774 = vmatpush1.msra.mxu0 0.0
  %3775 = vmatprep.subr.mxu0 0.0
  %3776 = vmatpush1.msra.mxu0 0.0
  %3777 = vmatprep.subr.mxu0 0.0
  %3778 = vmatpush1.msra.mxu0 0.0
  %3779 = vmatprep.subr.mxu0 0.0
  %3780 = vmatpush1.msra.mxu0 0.0
  %3781 = vmatprep.subr.mxu0 0.0
  %3782 = vmatpush1.msra.mxu0 0.0
  %3783 = vmatprep.subr.mxu0 0.0
  %3784 = vmatpush1.msra.mxu0 0.0
  %3785 = vmatprep.subr.mxu0 0.0
  %3786 = vmatpush1.msra.mxu0 0.0
  %3787 = vmatprep.subr.mxu0 0.0
  %3788 = vmatpush1.msra.mxu0 0.0
  %3789 = vmatprep.subr.mxu0 0.0
  %3790 = vmatpush1.msra.mxu0 0.0
  %3791 = vmatprep.subr.mxu0 0.0
  %3792 = vmatpush1.msra.mxu0 0.0
  %3793 = vmatprep.subr.mxu0 0.0
  %3794 = vmatpush1.msra.mxu0 0.0
  %3795 = vmatprep.subr.mxu0 0.0
  %3796 = vmatpush1.msra.mxu0 0.0
  %3797 = vmatprep.subr.mxu0 0.0
  %3798 = vmatpush1.msra.mxu0 0.0
  %3799 = vmatprep.subr.mxu0 0.0
  %3800 = vmatpush1.msra.mxu0 0.0
  %3801 = vmatprep.subr.mxu0 0.0
  %3802 = vmatpush1.msra.mxu0 0.0
  %3803 = vmatprep.subr.mxu0 0.0
  %3804 = vmatpush1.msra.mxu0 0.0
  %3805 = vmatprep.subr.mxu0 0.0
  %3806 = vmatpush1.msra.mxu0 0.0
  %3807 = vmatprep.subr.mxu0 0.0
  %3808 = vmatpush1.msra.mxu0 0.0
  %3809 = vmatprep.subr.mxu0 0.0
  %3810 = vmatpush1.msra.mxu0 0.0
  %3811 = vmatprep.mubr.f32.mxu0 0.0
  %3812 = vmatmul.mubr.f32.gmra.mrb[0].mxu0 %v3604
  %v3813 = vpop.f32.mrb[0].mxu0
  %v3814 = vpop.f32.mrb[0].mxu0
  %v3815 = vadd.f32 0.0, %v3814
  %3816 = vdwg.mxu0
  %3817 = vmatprep.subr.mxu0 %v3547
  %3818 = vmatpush1.msra.mxu0 %v3546
  %3819 = vmatprep.subr.mxu0 %v3555
  %3820 = vmatpush1.msra.mxu0 %v3554
  %3821 = vmatprep.subr.mxu0 %v3563
  %3822 = vmatpush1.msra.mxu0 %v3562
  %3823 = vmatprep.subr.mxu0 %v3571
  %3824 = vmatpush1.msra.mxu0 %v3570
  %3825 = vmatprep.subr.mxu0 0.0
  %3826 = vmatpush1.msra.mxu0 0.0
  %3827 = vmatprep.subr.mxu0 0.0
  %3828 = vmatpush1.msra.mxu0 0.0
  %3829 = vmatprep.subr.mxu0 0.0
  %3830 = vmatpush1.msra.mxu0 0.0
  %3831 = vmatprep.subr.mxu0 0.0
  %3832 = vmatpush1.msra.mxu0 0.0
  %3833 = vmatprep.subr.mxu0 0.0
  %3834 = vmatpush1.msra.mxu0 0.0
  %3835 = vmatprep.subr.mxu0 0.0
  %3836 = vmatpush1.msra.mxu0 0.0
  %3837 = vmatprep.subr.mxu0 0.0
  %3838 = vmatpush1.msra.mxu0 0.0
  %3839 = vmatprep.subr.mxu0 0.0
  %3840 = vmatpush1.msra.mxu0 0.0
  %3841 = vmatprep.subr.mxu0 0.0
  %3842 = vmatpush1.msra.mxu0 0.0
  %3843 = vmatprep.subr.mxu0 0.0
  %3844 = vmatpush1.msra.mxu0 0.0
  %3845 = vmatprep.subr.mxu0 0.0
  %3846 = vmatpush1.msra.mxu0 0.0
  %3847 = vmatprep.subr.mxu0 0.0
  %3848 = vmatpush1.msra.mxu0 0.0
  %3849 = vmatprep.subr.mxu0 0.0
  %3850 = vmatpush1.msra.mxu0 0.0
  %3851 = vmatprep.subr.mxu0 0.0
  %3852 = vmatpush1.msra.mxu0 0.0
  %3853 = vmatprep.subr.mxu0 0.0
  %3854 = vmatpush1.msra.mxu0 0.0
  %3855 = vmatprep.subr.mxu0 0.0
  %3856 = vmatpush1.msra.mxu0 0.0
  %3857 = vmatprep.subr.mxu0 0.0
  %3858 = vmatpush1.msra.mxu0 0.0
  %3859 = vmatprep.subr.mxu0 0.0
  %3860 = vmatpush1.msra.mxu0 0.0
  %3861 = vmatprep.subr.mxu0 0.0
  %3862 = vmatpush1.msra.mxu0 0.0
  %3863 = vmatprep.subr.mxu0 0.0
  %3864 = vmatpush1.msra.mxu0 0.0
  %3865 = vmatprep.subr.mxu0 0.0
  %3866 = vmatpush1.msra.mxu0 0.0
  %3867 = vmatprep.subr.mxu0 0.0
  %3868 = vmatpush1.msra.mxu0 0.0
  %3869 = vmatprep.subr.mxu0 0.0
  %3870 = vmatpush1.msra.mxu0 0.0
  %3871 = vmatprep.subr.mxu0 0.0
  %3872 = vmatpush1.msra.mxu0 0.0
  %3873 = vmatprep.subr.mxu0 0.0
  %3874 = vmatpush1.msra.mxu0 0.0
  %3875 = vmatprep.subr.mxu0 0.0
  %3876 = vmatpush1.msra.mxu0 0.0
  %3877 = vmatprep.subr.mxu0 0.0
  %3878 = vmatpush1.msra.mxu0 0.0
  %3879 = vmatprep.subr.mxu0 0.0
  %3880 = vmatpush1.msra.mxu0 0.0
  %3881 = vmatprep.mubr.f32.mxu0 0.0
  %3882 = vmatmul.mubr.f32.gmra.mrb[0].mxu0 %v3604
  %v3883 = vpop.f32.mrb[0].mxu0
  %v3884 = vadd.f32 0.0, %v3883
  %v3885 = vpop.f32.mrb[0].mxu0
  %v3886 = vadd.f32 0.0, %v3885
  %3887 = vdwg.mxu0
  %v3888 = vadd.f32 %v3385, %v3673
  %v3889 = vadd.f32 %v3386, %v3675
  %v3890 = vadd.f32 %v3387, %v3744
  %v3891 = vadd.f32 %v3388, %v3815
  %v3892 = vadd.f32 %v3389, %v3884
  %v3893 = vadd.f32 %v3390, %v3886
  %v3894 = vld [vmem:[%s1 + $0x8] sm:$0xf]
  %v3895 = vld [vmem:[%s0] sm:$0xff]
  %v3896 = vld [vmem:[%s0 + $0x8] sm:$0xff]
  %v3897 = vld [vmem:[%s0 + $0x10] sm:$0xff]
  %v3898 = vld [vmem:[%s0 + $0x18] sm:$0xff]
  %v3899 = vld [vmem:[%s0 + $0x20] sm:$0xff]
  %v3900 = vld [vmem:[%s0 + $0x28] sm:$0xff]
  %v3901 = vld [vmem:[%s0 + $0x30] sm:$0xff]
  %v3902 = vld [vmem:[%s0 + $0x38] sm:$0xff]
  %v3903 = vld [vmem:[%s0 + $0x40] sm:$0xff]
  %v3904 = vld [vmem:[%s0 + $0x50] sm:$0xff]
  %v3905 = vld [vmem:[%s0 + $0x58] sm:$0xff]
  %v3906 = vld [vmem:[%s0 + $0x60] sm:$0xff]
  %v3907 = vld [vmem:[%s0 + $0x68] sm:$0xff]
  %v3908 = vld [vmem:[%s0 + $0x70] sm:$0xff]
  %v3909 = vld [vmem:[%s0 + $0x78] sm:$0xff]
  %v3910 = vld [vmem:[%s0 + $0x80] sm:$0xff]
  %v3911 = vld [vmem:[%s0 + $0x88] sm:$0xff]
  %v3912 = vld [vmem:[%s0 + $0x90] sm:$0xff]
  %v3913 = vld [vmem:[%s0 + $0xa0] sm:$0xff]
  %v3914 = vld [vmem:[%s0 + $0xa8] sm:$0xff]
  %v3915 = vld [vmem:[%s0 + $0xb0] sm:$0xff]
  %v3916 = vld [vmem:[%s0 + $0xb8] sm:$0xff]
  %v3917 = vld [vmem:[%s0 + $0xc0] sm:$0xff]
  %v3918 = vld [vmem:[%s0 + $0xc8] sm:$0xff]
  %v3919 = vld [vmem:[%s0 + $0xd0] sm:$0xff]
  %v3920 = vld [vmem:[%s0 + $0xd8] sm:$0xff]
  %v3921 = vld [vmem:[%s0 + $0xe0] sm:$0xff]
  %v3922 = vld [vmem:[%s0 + $0xf0] sm:$0xff]
  %v3923 = vld [vmem:[%s0 + $0xf8] sm:$0xff]
  %v3924 = vld [vmem:[%s0 + $0x100] sm:$0xff]
  %v3925 = vld [vmem:[%s0 + $0x108] sm:$0xff]
  %v3926 = vld [vmem:[%s0 + $0x110] sm:$0xff]
  %v3927 = vld [vmem:[%s0 + $0x118] sm:$0xff]
  %v3928 = vld [vmem:[%s0 + $0x120] sm:$0xff]
  %v3929 = vld [vmem:[%s0 + $0x128] sm:$0xff]
  %v3930 = vld [vmem:[%s0 + $0x130] sm:$0xff]
  %3967 = vrot.lane.b32.xlu0 %v3895, 28
  %v3968 = vpop.permute.xlu0 %3967
  %3969 = vrot.lane.b32.xlu0 %v3896, 28
  %v3970 = vpop.permute.xlu0 %3969
  %3971 = vrot.lane.b32.xlu0 %v3897, 28
  %v3972 = vpop.permute.xlu0 %3971
  %3973 = vrot.lane.b32.xlu0 %v3898, 28
  %v3974 = vpop.permute.xlu0 %3973
  %3975 = vrot.lane.b32.xlu0 %v3899, 28
  %v3976 = vpop.permute.xlu0 %3975
  %3977 = vrot.lane.b32.xlu0 %v3900, 28
  %v3978 = vpop.permute.xlu0 %3977
  %3979 = vrot.lane.b32.xlu0 %v3901, 28
  %v3980 = vpop.permute.xlu0 %3979
  %3981 = vrot.lane.b32.xlu0 %v3902, 28
  %v3982 = vpop.permute.xlu0 %3981
  %3983 = vrot.lane.b32.xlu0 %v3903, 28
  %v3984 = vpop.permute.xlu0 %3983
  %3985 = vrot.lane.b32.xlu0 %v3904, 28
  %v3986 = vpop.permute.xlu0 %3985
  %3987 = vrot.lane.b32.xlu0 %v3905, 28
  %v3988 = vpop.permute.xlu0 %3987
  %3989 = vrot.lane.b32.xlu0 %v3906, 28
  %v3990 = vpop.permute.xlu0 %3989
  %3991 = vrot.lane.b32.xlu0 %v3907, 28
  %v3992 = vpop.permute.xlu0 %3991
  %3993 = vrot.lane.b32.xlu0 %v3908, 28
  %v3994 = vpop.permute.xlu0 %3993
  %3995 = vrot.lane.b32.xlu0 %v3909, 28
  %v3996 = vpop.permute.xlu0 %3995
  %3997 = vrot.lane.b32.xlu0 %v3910, 28
  %v3998 = vpop.permute.xlu0 %3997
  %3999 = vrot.lane.b32.xlu0 %v3911, 28
  %v4000 = vpop.permute.xlu0 %3999
  %4001 = vrot.lane.b32.xlu0 %v3912, 28
  %v4002 = vpop.permute.xlu0 %4001
  %4003 = vrot.lane.b32.xlu0 %v3913, 28
  %v4004 = vpop.permute.xlu0 %4003
  %4005 = vrot.lane.b32.xlu0 %v3914, 28
  %v4006 = vpop.permute.xlu0 %4005
  %4007 = vrot.lane.b32.xlu0 %v3915, 28
  %v4008 = vpop.permute.xlu0 %4007
  %4009 = vrot.lane.b32.xlu0 %v3916, 28
  %v4010 = vpop.permute.xlu0 %4009
  %4011 = vrot.lane.b32.xlu0 %v3917, 28
  %v4012 = vpop.permute.xlu0 %4011
  %4013 = vrot.lane.b32.xlu0 %v3918, 28
  %v4014 = vpop.permute.xlu0 %4013
  %4015 = vrot.lane.b32.xlu0 %v3919, 28
  %v4016 = vpop.permute.xlu0 %4015
  %4017 = vrot.lane.b32.xlu0 %v3920, 28
  %v4018 = vpop.permute.xlu0 %4017
  %4019 = vrot.lane.b32.xlu0 %v3921, 28
  %v4020 = vpop.permute.xlu0 %4019
  %4021 = vrot.lane.b32.xlu0 %v3922, 28
  %v4022 = vpop.permute.xlu0 %4021
  %4023 = vrot.lane.b32.xlu0 %v3923, 28
  %v4024 = vpop.permute.xlu0 %4023
  %4025 = vrot.lane.b32.xlu0 %v3924, 28
  %v4026 = vpop.permute.xlu0 %4025
  %4027 = vrot.lane.b32.xlu0 %v3925, 28
  %v4028 = vpop.permute.xlu0 %4027
  %4029 = vrot.lane.b32.xlu0 %v3926, 28
  %v4030 = vpop.permute.xlu0 %4029
  %4031 = vrot.lane.b32.xlu0 %v3927, 28
  %v4032 = vpop.permute.xlu0 %4031
  %4033 = vrot.lane.b32.xlu0 %v3928, 28
  %v4034 = vpop.permute.xlu0 %4033
  %4035 = vrot.lane.b32.xlu0 %v3929, 28
  %v4036 = vpop.permute.xlu0 %4035
  %4037 = vrot.lane.b32.xlu0 %v3930, 28
  %v4038 = vpop.permute.xlu0 %4037
  %vm4039 = vcmask 228352
  %v4040 = vsel %vm4039, %v3968, %v3970
  %v4041 = vsel %vm4039, %v3970, %v3972
  %v4042 = vsel %vm4039, %v3972, %v3974
  %v4043 = vsel %vm4039, %v3974, %v3976
  %v4044 = vsel %vm4039, %v3976, %v3978
  %v4045 = vsel %vm4039, %v3978, %v3980
  %v4046 = vsel %vm4039, %v3980, %v3982
  %v4047 = vsel %vm4039, %v3982, %v3984
  %v4048 = vsel %vm4039, %v3986, %v3988
  %v4049 = vsel %vm4039, %v3988, %v3990
  %v4050 = vsel %vm4039, %v3990, %v3992
  %v4051 = vsel %vm4039, %v3992, %v3994
  %v4052 = vsel %vm4039, %v3994, %v3996
  %v4053 = vsel %vm4039, %v3996, %v3998
  %v4054 = vsel %vm4039, %v3998, %v4000
  %v4055 = vsel %vm4039, %v4000, %v4002
  %v4056 = vsel %vm4039, %v4004, %v4006
  %v4057 = vsel %vm4039, %v4006, %v4008
  %v4058 = vsel %vm4039, %v4008, %v4010
  %v4059 = vsel %vm4039, %v4010, %v4012
  %v4060 = vsel %vm4039, %v4012, %v4014
  %v4061 = vsel %vm4039, %v4014, %v4016
  %v4062 = vsel %vm4039, %v4016, %v4018
  %v4063 = vsel %vm4039, %v4018, %v4020
  %v4064 = vsel %vm4039, %v4022, %v4024
  %v4065 = vsel %vm4039, %v4024, %v4026
  %v4066 = vsel %vm4039, %v4026, %v4028
  %v4067 = vsel %vm4039, %v4028, %v4030
  %v4068 = vsel %vm4039, %v4030, %v4032
  %v4069 = vsel %vm4039, %v4032, %v4034
  %v4070 = vsel %vm4039, %v4034, %v4036
  %v4071 = vsel %vm4039, %v4036, %v4038
  %v4105 = vsel %vm231, %v3894, 0
  %4107 = vmatprep.subr.mxu0 %v4041
  %4108 = vmatpush1.msra.mxu0 %v4040
  %4109 = vmatprep.subr.mxu0 %v4049
  %4110 = vmatpush1.msra.mxu0 %v4048
  %4111 = vmatprep.subr.mxu0 %v4057
  %4112 = vmatpush1.msra.mxu0 %v4056
  %4113 = vmatprep.subr.mxu0 %v4065
  %4114 = vmatpush1.msra.mxu0 %v4064
  %4115 = vmatprep.subr.mxu0 0.0
  %4116 = vmatpush1.msra.mxu0 0.0
  %4117 = vmatprep.subr.mxu0 0.0
  %4118 = vmatpush1.msra.mxu0 0.0
  %4119 = vmatprep.subr.mxu0 0.0
  %4120 = vmatpush1.msra.mxu0 0.0
  %4121 = vmatprep.subr.mxu0 0.0
  %4122 = vmatpush1.msra.mxu0 0.0
  %4123 = vmatprep.subr.mxu0 0.0
  %4124 = vmatpush1.msra.mxu0 0.0
  %4125 = vmatprep.subr.mxu0 0.0
  %4126 = vmatpush1.msra.mxu0 0.0
  %4127 = vmatprep.subr.mxu0 0.0
  %4128 = vmatpush1.msra.mxu0 0.0
  %4129 = vmatprep.subr.mxu0 0.0
  %4130 = vmatpush1.msra.mxu0 0.0
  %4131 = vmatprep.subr.mxu0 0.0
  %4132 = vmatpush1.msra.mxu0 0.0
  %4133 = vmatprep.subr.mxu0 0.0
  %4134 = vmatpush1.msra.mxu0 0.0
  %4135 = vmatprep.subr.mxu0 0.0
  %4136 = vmatpush1.msra.mxu0 0.0
  %4137 = vmatprep.subr.mxu0 0.0
  %4138 = vmatpush1.msra.mxu0 0.0
  %4139 = vmatprep.subr.mxu0 0.0
  %4140 = vmatpush1.msra.mxu0 0.0
  %4141 = vmatprep.subr.mxu0 0.0
  %4142 = vmatpush1.msra.mxu0 0.0
  %4143 = vmatprep.subr.mxu0 0.0
  %4144 = vmatpush1.msra.mxu0 0.0
  %4145 = vmatprep.subr.mxu0 0.0
  %4146 = vmatpush1.msra.mxu0 0.0
  %4147 = vmatprep.subr.mxu0 0.0
  %4148 = vmatpush1.msra.mxu0 0.0
  %4149 = vmatprep.subr.mxu0 0.0
  %4150 = vmatpush1.msra.mxu0 0.0
  %4151 = vmatprep.subr.mxu0 0.0
  %4152 = vmatpush1.msra.mxu0 0.0
  %4153 = vmatprep.subr.mxu0 0.0
  %4154 = vmatpush1.msra.mxu0 0.0
  %4155 = vmatprep.subr.mxu0 0.0
  %4156 = vmatpush1.msra.mxu0 0.0
  %4157 = vmatprep.subr.mxu0 0.0
  %4158 = vmatpush1.msra.mxu0 0.0
  %4159 = vmatprep.subr.mxu0 0.0
  %4160 = vmatpush1.msra.mxu0 0.0
  %4161 = vmatprep.subr.mxu0 0.0
  %4162 = vmatpush1.msra.mxu0 0.0
  %4163 = vmatprep.subr.mxu0 0.0
  %4164 = vmatpush1.msra.mxu0 0.0
  %4165 = vmatprep.subr.mxu0 0.0
  %4166 = vmatpush1.msra.mxu0 0.0
  %4167 = vmatprep.subr.mxu0 0.0
  %4168 = vmatpush1.msra.mxu0 0.0
  %4169 = vmatprep.subr.mxu0 0.0
  %4170 = vmatpush1.msra.mxu0 0.0
  %4171 = vmatprep.mubr.f32.mxu0 0.0
  %4172 = vmatmul.mubr.f32.gmra.mrb[0].mxu0 %v4105
  %v4173 = vpop.f32.mrb[0].mxu0
  %v4174 = vadd.f32 0.0, %v4173
  %v4175 = vpop.f32.mrb[0].mxu0
  %v4176 = vadd.f32 0.0, %v4175
  %4177 = vdwg.mxu0
  %4178 = vmatprep.subr.mxu0 %v4043
  %4179 = vmatpush1.msra.mxu0 %v4042
  %4180 = vmatprep.subr.mxu0 %v4051
  %4181 = vmatpush1.msra.mxu0 %v4050
  %4182 = vmatprep.subr.mxu0 %v4059
  %4183 = vmatpush1.msra.mxu0 %v4058
  %4184 = vmatprep.subr.mxu0 %v4067
  %4185 = vmatpush1.msra.mxu0 %v4066
  %4186 = vmatprep.subr.mxu0 0.0
  %4187 = vmatpush1.msra.mxu0 0.0
  %4188 = vmatprep.subr.mxu0 0.0
  %4189 = vmatpush1.msra.mxu0 0.0
  %4190 = vmatprep.subr.mxu0 0.0
  %4191 = vmatpush1.msra.mxu0 0.0
  %4192 = vmatprep.subr.mxu0 0.0
  %4193 = vmatpush1.msra.mxu0 0.0
  %4194 = vmatprep.subr.mxu0 0.0
  %4195 = vmatpush1.msra.mxu0 0.0
  %4196 = vmatprep.subr.mxu0 0.0
  %4197 = vmatpush1.msra.mxu0 0.0
  %4198 = vmatprep.subr.mxu0 0.0
  %4199 = vmatpush1.msra.mxu0 0.0
  %4200 = vmatprep.subr.mxu0 0.0
  %4201 = vmatpush1.msra.mxu0 0.0
  %4202 = vmatprep.subr.mxu0 0.0
  %4203 = vmatpush1.msra.mxu0 0.0
  %4204 = vmatprep.subr.mxu0 0.0
  %4205 = vmatpush1.msra.mxu0 0.0
  %4206 = vmatprep.subr.mxu0 0.0
  %4207 = vmatpush1.msra.mxu0 0.0
  %4208 = vmatprep.subr.mxu0 0.0
  %4209 = vmatpush1.msra.mxu0 0.0
  %4210 = vmatprep.subr.mxu0 0.0
  %4211 = vmatpush1.msra.mxu0 0.0
  %4212 = vmatprep.subr.mxu0 0.0
  %4213 = vmatpush1.msra.mxu0 0.0
  %4214 = vmatprep.subr.mxu0 0.0
  %4215 = vmatpush1.msra.mxu0 0.0
  %4216 = vmatprep.subr.mxu0 0.0
  %4217 = vmatpush1.msra.mxu0 0.0
  %4218 = vmatprep.subr.mxu0 0.0
  %4219 = vmatpush1.msra.mxu0 0.0
  %4220 = vmatprep.subr.mxu0 0.0
  %4221 = vmatpush1.msra.mxu0 0.0
  %4222 = vmatprep.subr.mxu0 0.0
  %4223 = vmatpush1.msra.mxu0 0.0
  %4224 = vmatprep.subr.mxu0 0.0
  %4225 = vmatpush1.msra.mxu0 0.0
  %4226 = vmatprep.subr.mxu0 0.0
  %4227 = vmatpush1.msra.mxu0 0.0
  %4228 = vmatprep.subr.mxu0 0.0
  %4229 = vmatpush1.msra.mxu0 0.0
  %4230 = vmatprep.subr.mxu0 0.0
  %4231 = vmatpush1.msra.mxu0 0.0
  %4232 = vmatprep.subr.mxu0 0.0
  %4233 = vmatpush1.msra.mxu0 0.0
  %4234 = vmatprep.subr.mxu0 0.0
  %4235 = vmatpush1.msra.mxu0 0.0
  %4236 = vmatprep.subr.mxu0 0.0
  %4237 = vmatpush1.msra.mxu0 0.0
  %4238 = vmatprep.subr.mxu0 0.0
  %4239 = vmatpush1.msra.mxu0 0.0
  %4240 = vmatprep.subr.mxu0 0.0
  %4241 = vmatpush1.msra.mxu0 0.0
  %4242 = vmatprep.mubr.f32.mxu0 0.0
  %4243 = vmatmul.mubr.f32.gmra.mrb[0].mxu0 %v4105
  %v4244 = vpop.f32.mrb[0].mxu0
  %v4245 = vadd.f32 0.0, %v4244
  %v4246 = vpop.f32.mrb[0].mxu0
  %4247 = vdwg.mxu0
  %4248 = vmatprep.subr.mxu0 %v4045
  %4249 = vmatpush1.msra.mxu0 %v4044
  %4250 = vmatprep.subr.mxu0 %v4053
  %4251 = vmatpush1.msra.mxu0 %v4052
  %4252 = vmatprep.subr.mxu0 %v4061
  %4253 = vmatpush1.msra.mxu0 %v4060
  %4254 = vmatprep.subr.mxu0 %v4069
  %4255 = vmatpush1.msra.mxu0 %v4068
  %4256 = vmatprep.subr.mxu0 0.0
  %4257 = vmatpush1.msra.mxu0 0.0
  %4258 = vmatprep.subr.mxu0 0.0
  %4259 = vmatpush1.msra.mxu0 0.0
  %4260 = vmatprep.subr.mxu0 0.0
  %4261 = vmatpush1.msra.mxu0 0.0
  %4262 = vmatprep.subr.mxu0 0.0
  %4263 = vmatpush1.msra.mxu0 0.0
  %4264 = vmatprep.subr.mxu0 0.0
  %4265 = vmatpush1.msra.mxu0 0.0
  %4266 = vmatprep.subr.mxu0 0.0
  %4267 = vmatpush1.msra.mxu0 0.0
  %4268 = vmatprep.subr.mxu0 0.0
  %4269 = vmatpush1.msra.mxu0 0.0
  %4270 = vmatprep.subr.mxu0 0.0
  %4271 = vmatpush1.msra.mxu0 0.0
  %4272 = vmatprep.subr.mxu0 0.0
  %4273 = vmatpush1.msra.mxu0 0.0
  %4274 = vmatprep.subr.mxu0 0.0
  %4275 = vmatpush1.msra.mxu0 0.0
  %4276 = vmatprep.subr.mxu0 0.0
  %4277 = vmatpush1.msra.mxu0 0.0
  %4278 = vmatprep.subr.mxu0 0.0
  %4279 = vmatpush1.msra.mxu0 0.0
  %4280 = vmatprep.subr.mxu0 0.0
  %4281 = vmatpush1.msra.mxu0 0.0
  %4282 = vmatprep.subr.mxu0 0.0
  %4283 = vmatpush1.msra.mxu0 0.0
  %4284 = vmatprep.subr.mxu0 0.0
  %4285 = vmatpush1.msra.mxu0 0.0
  %4286 = vmatprep.subr.mxu0 0.0
  %4287 = vmatpush1.msra.mxu0 0.0
  %4288 = vmatprep.subr.mxu0 0.0
  %4289 = vmatpush1.msra.mxu0 0.0
  %4290 = vmatprep.subr.mxu0 0.0
  %4291 = vmatpush1.msra.mxu0 0.0
  %4292 = vmatprep.subr.mxu0 0.0
  %4293 = vmatpush1.msra.mxu0 0.0
  %4294 = vmatprep.subr.mxu0 0.0
  %4295 = vmatpush1.msra.mxu0 0.0
  %4296 = vmatprep.subr.mxu0 0.0
  %4297 = vmatpush1.msra.mxu0 0.0
  %4298 = vmatprep.subr.mxu0 0.0
  %4299 = vmatpush1.msra.mxu0 0.0
  %4300 = vmatprep.subr.mxu0 0.0
  %4301 = vmatpush1.msra.mxu0 0.0
  %4302 = vmatprep.subr.mxu0 0.0
  %4303 = vmatpush1.msra.mxu0 0.0
  %4304 = vmatprep.subr.mxu0 0.0
  %4305 = vmatpush1.msra.mxu0 0.0
  %4306 = vmatprep.subr.mxu0 0.0
  %4307 = vmatpush1.msra.mxu0 0.0
  %4308 = vmatprep.subr.mxu0 0.0
  %4309 = vmatpush1.msra.mxu0 0.0
  %4310 = vmatprep.subr.mxu0 0.0
  %4311 = vmatpush1.msra.mxu0 0.0
  %4312 = vmatprep.mubr.f32.mxu0 0.0
  %4313 = vmatmul.mubr.f32.gmra.mrb[0].mxu0 %v4105
  %v4314 = vpop.f32.mrb[0].mxu0
  %v4315 = vpop.f32.mrb[0].mxu0
  %v4316 = vadd.f32 0.0, %v4315
  %4317 = vdwg.mxu0
  %4318 = vmatprep.subr.mxu0 %v4047
  %4319 = vmatpush1.msra.mxu0 %v4046
  %4320 = vmatprep.subr.mxu0 %v4055
  %4321 = vmatpush1.msra.mxu0 %v4054
  %4322 = vmatprep.subr.mxu0 %v4063
  %4323 = vmatpush1.msra.mxu0 %v4062
  %4324 = vmatprep.subr.mxu0 %v4071
  %4325 = vmatpush1.msra.mxu0 %v4070
  %4326 = vmatprep.subr.mxu0 0.0
  %4327 = vmatpush1.msra.mxu0 0.0
  %4328 = vmatprep.subr.mxu0 0.0
  %4329 = vmatpush1.msra.mxu0 0.0
  %4330 = vmatprep.subr.mxu0 0.0
  %4331 = vmatpush1.msra.mxu0 0.0
  %4332 = vmatprep.subr.mxu0 0.0
  %4333 = vmatpush1.msra.mxu0 0.0
  %4334 = vmatprep.subr.mxu0 0.0
  %4335 = vmatpush1.msra.mxu0 0.0
  %4336 = vmatprep.subr.mxu0 0.0
  %4337 = vmatpush1.msra.mxu0 0.0
  %4338 = vmatprep.subr.mxu0 0.0
  %4339 = vmatpush1.msra.mxu0 0.0
  %4340 = vmatprep.subr.mxu0 0.0
  %4341 = vmatpush1.msra.mxu0 0.0
  %4342 = vmatprep.subr.mxu0 0.0
  %4343 = vmatpush1.msra.mxu0 0.0
  %4344 = vmatprep.subr.mxu0 0.0
  %4345 = vmatpush1.msra.mxu0 0.0
  %4346 = vmatprep.subr.mxu0 0.0
  %4347 = vmatpush1.msra.mxu0 0.0
  %4348 = vmatprep.subr.mxu0 0.0
  %4349 = vmatpush1.msra.mxu0 0.0
  %4350 = vmatprep.subr.mxu0 0.0
  %4351 = vmatpush1.msra.mxu0 0.0
  %4352 = vmatprep.subr.mxu0 0.0
  %4353 = vmatpush1.msra.mxu0 0.0
  %4354 = vmatprep.subr.mxu0 0.0
  %4355 = vmatpush1.msra.mxu0 0.0
  %4356 = vmatprep.subr.mxu0 0.0
  %4357 = vmatpush1.msra.mxu0 0.0
  %4358 = vmatprep.subr.mxu0 0.0
  %4359 = vmatpush1.msra.mxu0 0.0
  %4360 = vmatprep.subr.mxu0 0.0
  %4361 = vmatpush1.msra.mxu0 0.0
  %4362 = vmatprep.subr.mxu0 0.0
  %4363 = vmatpush1.msra.mxu0 0.0
  %4364 = vmatprep.subr.mxu0 0.0
  %4365 = vmatpush1.msra.mxu0 0.0
  %4366 = vmatprep.subr.mxu0 0.0
  %4367 = vmatpush1.msra.mxu0 0.0
  %4368 = vmatprep.subr.mxu0 0.0
  %4369 = vmatpush1.msra.mxu0 0.0
  %4370 = vmatprep.subr.mxu0 0.0
  %4371 = vmatpush1.msra.mxu0 0.0
  %4372 = vmatprep.subr.mxu0 0.0
  %4373 = vmatpush1.msra.mxu0 0.0
  %4374 = vmatprep.subr.mxu0 0.0
  %4375 = vmatpush1.msra.mxu0 0.0
  %4376 = vmatprep.subr.mxu0 0.0
  %4377 = vmatpush1.msra.mxu0 0.0
  %4378 = vmatprep.subr.mxu0 0.0
  %4379 = vmatpush1.msra.mxu0 0.0
  %4380 = vmatprep.subr.mxu0 0.0
  %4381 = vmatpush1.msra.mxu0 0.0
  %4382 = vmatprep.mubr.f32.mxu0 0.0
  %4383 = vmatmul.mubr.f32.gmra.mrb[0].mxu0 %v4105
  %v4384 = vpop.f32.mrb[0].mxu0
  %v4385 = vadd.f32 0.0, %v4384
  %v4386 = vpop.f32.mrb[0].mxu0
  %v4387 = vadd.f32 0.0, %v4386
  %4388 = vdwg.mxu0
  %v4389 = vadd.f32 %v3888, %v4174
  %v4390 = vadd.f32 %v3889, %v4176
  %v4391 = vadd.f32 %v3890, %v4245
  %v4392 = vadd.f32 %v3891, %v4316
  %v4393 = vadd.f32 %v3892, %v4385
  %v4394 = vadd.f32 %v3893, %v4387
  %4395 = vrot.lane.b32.xlu0 %v3894, 96
  %v4396 = vpop.permute.xlu0 %4395
  %4397 = vrot.lane.b32.xlu0 %v3895, 103
  %v4398 = vpop.permute.xlu0 %4397
  %4399 = vrot.lane.b32.xlu0 %v3896, 103
  %v4400 = vpop.permute.xlu0 %4399
  %4401 = vrot.lane.b32.xlu0 %v3897, 103
  %v4402 = vpop.permute.xlu0 %4401
  %4403 = vrot.lane.b32.xlu0 %v3898, 103
  %v4404 = vpop.permute.xlu0 %4403
  %4405 = vrot.lane.b32.xlu0 %v3899, 103
  %v4406 = vpop.permute.xlu0 %4405
  %4407 = vrot.lane.b32.xlu0 %v3900, 103
  %v4408 = vpop.permute.xlu0 %4407
  %4409 = vrot.lane.b32.xlu0 %v3901, 103
  %v4410 = vpop.permute.xlu0 %4409
  %4411 = vrot.lane.b32.xlu0 %v3902, 103
  %v4412 = vpop.permute.xlu0 %4411
  %4413 = vrot.lane.b32.xlu0 %v3903, 103
  %v4414 = vpop.permute.xlu0 %4413
  %4415 = vrot.lane.b32.xlu0 %v3904, 103
  %v4416 = vpop.permute.xlu0 %4415
  %4417 = vrot.lane.b32.xlu0 %v3905, 103
  %v4418 = vpop.permute.xlu0 %4417
  %4419 = vrot.lane.b32.xlu0 %v3906, 103
  %v4420 = vpop.permute.xlu0 %4419
  %4421 = vrot.lane.b32.xlu0 %v3907, 103
  %v4422 = vpop.permute.xlu0 %4421
  %4423 = vrot.lane.b32.xlu0 %v3908, 103
  %v4424 = vpop.permute.xlu0 %4423
  %4425 = vrot.lane.b32.xlu0 %v3909, 103
  %v4426 = vpop.permute.xlu0 %4425
  %4427 = vrot.lane.b32.xlu0 %v3910, 103
  %v4428 = vpop.permute.xlu0 %4427
  %4429 = vrot.lane.b32.xlu0 %v3911, 103
  %v4430 = vpop.permute.xlu0 %4429
  %4431 = vrot.lane.b32.xlu0 %v3912, 103
  %v4432 = vpop.permute.xlu0 %4431
  %4433 = vrot.lane.b32.xlu0 %v3913, 103
  %v4434 = vpop.permute.xlu0 %4433
  %4435 = vrot.lane.b32.xlu0 %v3914, 103
  %v4436 = vpop.permute.xlu0 %4435
  %4437 = vrot.lane.b32.xlu0 %v3915, 103
  %v4438 = vpop.permute.xlu0 %4437
  %4439 = vrot.lane.b32.xlu0 %v3916, 103
  %v4440 = vpop.permute.xlu0 %4439
  %4441 = vrot.lane.b32.xlu0 %v3917, 103
  %v4442 = vpop.permute.xlu0 %4441
  %4443 = vrot.lane.b32.xlu0 %v3918, 103
  %v4444 = vpop.permute.xlu0 %4443
  %4445 = vrot.lane.b32.xlu0 %v3919, 103
  %v4446 = vpop.permute.xlu0 %4445
  %4447 = vrot.lane.b32.xlu0 %v3920, 103
  %v4448 = vpop.permute.xlu0 %4447
  %4449 = vrot.lane.b32.xlu0 %v3921, 103
  %v4450 = vpop.permute.xlu0 %4449
  %4451 = vrot.lane.b32.xlu0 %v3922, 103
  %v4452 = vpop.permute.xlu0 %4451
  %4453 = vrot.lane.b32.xlu0 %v3923, 103
  %v4454 = vpop.permute.xlu0 %4453
  %4455 = vrot.lane.b32.xlu0 %v3924, 103
  %v4456 = vpop.permute.xlu0 %4455
  %4457 = vrot.lane.b32.xlu0 %v3925, 103
  %v4458 = vpop.permute.xlu0 %4457
  %4459 = vrot.lane.b32.xlu0 %v3926, 103
  %v4460 = vpop.permute.xlu0 %4459
  %4461 = vrot.lane.b32.xlu0 %v3927, 103
  %v4462 = vpop.permute.xlu0 %4461
  %4463 = vrot.lane.b32.xlu0 %v3928, 103
  %v4464 = vpop.permute.xlu0 %4463
  %4465 = vrot.lane.b32.xlu0 %v3929, 103
  %v4466 = vpop.permute.xlu0 %4465
  %4467 = vrot.lane.b32.xlu0 %v3930, 103
  %v4468 = vpop.permute.xlu0 %4467
  %vm4469 = vcmask 842752
  %v4470 = vsel %vm4469, %v4398, %v4400
  %v4471 = vsel %vm4469, %v4400, %v4402
  %v4472 = vsel %vm4469, %v4402, %v4404
  %v4473 = vsel %vm4469, %v4404, %v4406
  %v4474 = vsel %vm4469, %v4406, %v4408
  %v4475 = vsel %vm4469, %v4408, %v4410
  %v4476 = vsel %vm4469, %v4410, %v4412
  %v4477 = vsel %vm4469, %v4412, %v4414
  %v4478 = vsel %vm4469, %v4416, %v4418
  %v4479 = vsel %vm4469, %v4418, %v4420
  %v4480 = vsel %vm4469, %v4420, %v4422
  %v4481 = vsel %vm4469, %v4422, %v4424
  %v4482 = vsel %vm4469, %v4424, %v4426
  %v4483 = vsel %vm4469, %v4426, %v4428
  %v4484 = vsel %vm4469, %v4428, %v4430
  %v4485 = vsel %vm4469, %v4430, %v4432
  %v4486 = vsel %vm4469, %v4434, %v4436
  %v4487 = vsel %vm4469, %v4436, %v4438
  %v4488 = vsel %vm4469, %v4438, %v4440
  %v4489 = vsel %vm4469, %v4440, %v4442
  %v4490 = vsel %vm4469, %v4442, %v4444
  %v4491 = vsel %vm4469, %v4444, %v4446
  %v4492 = vsel %vm4469, %v4446, %v4448
  %v4493 = vsel %vm4469, %v4448, %v4450
  %v4494 = vsel %vm4469, %v4452, %v4454
  %v4495 = vsel %vm4469, %v4454, %v4456
  %v4496 = vsel %vm4469, %v4456, %v4458
  %v4497 = vsel %vm4469, %v4458, %v4460
  %v4498 = vsel %vm4469, %v4460, %v4462
  %v4499 = vsel %vm4469, %v4462, %v4464
  %v4500 = vsel %vm4469, %v4464, %v4466
  %v4501 = vsel %vm4469, %v4466, %v4468
  %v4534 = vsel %vm231, %v4396, 0
  %4536 = vmatprep.subr.mxu0 %v4471
  %4537 = vmatpush1.msra.mxu0 %v4470
  %4538 = vmatprep.subr.mxu0 %v4479
  %4539 = vmatpush1.msra.mxu0 %v4478
  %4540 = vmatprep.subr.mxu0 %v4487
  %4541 = vmatpush1.msra.mxu0 %v4486
  %4542 = vmatprep.subr.mxu0 %v4495
  %4543 = vmatpush1.msra.mxu0 %v4494
  %4544 = vmatprep.subr.mxu0 0.0
  %4545 = vmatpush1.msra.mxu0 0.0
  %4546 = vmatprep.subr.mxu0 0.0
  %4547 = vmatpush1.msra.mxu0 0.0
  %4548 = vmatprep.subr.mxu0 0.0
  %4549 = vmatpush1.msra.mxu0 0.0
  %4550 = vmatprep.subr.mxu0 0.0
  %4551 = vmatpush1.msra.mxu0 0.0
  %4552 = vmatprep.subr.mxu0 0.0
  %4553 = vmatpush1.msra.mxu0 0.0
  %4554 = vmatprep.subr.mxu0 0.0
  %4555 = vmatpush1.msra.mxu0 0.0
  %4556 = vmatprep.subr.mxu0 0.0
  %4557 = vmatpush1.msra.mxu0 0.0
  %4558 = vmatprep.subr.mxu0 0.0
  %4559 = vmatpush1.msra.mxu0 0.0
  %4560 = vmatprep.subr.mxu0 0.0
  %4561 = vmatpush1.msra.mxu0 0.0
  %4562 = vmatprep.subr.mxu0 0.0
  %4563 = vmatpush1.msra.mxu0 0.0
  %4564 = vmatprep.subr.mxu0 0.0
  %4565 = vmatpush1.msra.mxu0 0.0
  %4566 = vmatprep.subr.mxu0 0.0
  %4567 = vmatpush1.msra.mxu0 0.0
  %4568 = vmatprep.subr.mxu0 0.0
  %4569 = vmatpush1.msra.mxu0 0.0
  %4570 = vmatprep.subr.mxu0 0.0
  %4571 = vmatpush1.msra.mxu0 0.0
  %4572 = vmatprep.subr.mxu0 0.0
  %4573 = vmatpush1.msra.mxu0 0.0
  %4574 = vmatprep.subr.mxu0 0.0
  %4575 = vmatpush1.msra.mxu0 0.0
  %4576 = vmatprep.subr.mxu0 0.0
  %4577 = vmatpush1.msra.mxu0 0.0
  %4578 = vmatprep.subr.mxu0 0.0
  %4579 = vmatpush1.msra.mxu0 0.0
  %4580 = vmatprep.subr.mxu0 0.0
  %4581 = vmatpush1.msra.mxu0 0.0
  %4582 = vmatprep.subr.mxu0 0.0
  %4583 = vmatpush1.msra.mxu0 0.0
  %4584 = vmatprep.subr.mxu0 0.0
  %4585 = vmatpush1.msra.mxu0 0.0
  %4586 = vmatprep.subr.mxu0 0.0
  %4587 = vmatpush1.msra.mxu0 0.0
  %4588 = vmatprep.subr.mxu0 0.0
  %4589 = vmatpush1.msra.mxu0 0.0
  %4590 = vmatprep.subr.mxu0 0.0
  %4591 = vmatpush1.msra.mxu0 0.0
  %4592 = vmatprep.subr.mxu0 0.0
  %4593 = vmatpush1.msra.mxu0 0.0
  %4594 = vmatprep.subr.mxu0 0.0
  %4595 = vmatpush1.msra.mxu0 0.0
  %4596 = vmatprep.subr.mxu0 0.0
  %4597 = vmatpush1.msra.mxu0 0.0
  %4598 = vmatprep.subr.mxu0 0.0
  %4599 = vmatpush1.msra.mxu0 0.0
  %4600 = vmatprep.mubr.f32.mxu0 0.0
  %4601 = vmatmul.mubr.f32.gmra.mrb[0].mxu0 %v4534
  %v4602 = vpop.f32.mrb[0].mxu0
  %v4603 = vadd.f32 0.0, %v4602
  %v4604 = vpop.f32.mrb[0].mxu0
  %v4605 = vadd.f32 0.0, %v4604
  %4606 = vdwg.mxu0
  %4607 = vmatprep.subr.mxu0 %v4473
  %4608 = vmatpush1.msra.mxu0 %v4472
  %4609 = vmatprep.subr.mxu0 %v4481
  %4610 = vmatpush1.msra.mxu0 %v4480
  %4611 = vmatprep.subr.mxu0 %v4489
  %4612 = vmatpush1.msra.mxu0 %v4488
  %4613 = vmatprep.subr.mxu0 %v4497
  %4614 = vmatpush1.msra.mxu0 %v4496
  %4615 = vmatprep.subr.mxu0 0.0
  %4616 = vmatpush1.msra.mxu0 0.0
  %4617 = vmatprep.subr.mxu0 0.0
  %4618 = vmatpush1.msra.mxu0 0.0
  %4619 = vmatprep.subr.mxu0 0.0
  %4620 = vmatpush1.msra.mxu0 0.0
  %4621 = vmatprep.subr.mxu0 0.0
  %4622 = vmatpush1.msra.mxu0 0.0
  %4623 = vmatprep.subr.mxu0 0.0
  %4624 = vmatpush1.msra.mxu0 0.0
  %4625 = vmatprep.subr.mxu0 0.0
  %4626 = vmatpush1.msra.mxu0 0.0
  %4627 = vmatprep.subr.mxu0 0.0
  %4628 = vmatpush1.msra.mxu0 0.0
  %4629 = vmatprep.subr.mxu0 0.0
  %4630 = vmatpush1.msra.mxu0 0.0
  %4631 = vmatprep.subr.mxu0 0.0
  %4632 = vmatpush1.msra.mxu0 0.0
  %4633 = vmatprep.subr.mxu0 0.0
  %4634 = vmatpush1.msra.mxu0 0.0
  %4635 = vmatprep.subr.mxu0 0.0
  %4636 = vmatpush1.msra.mxu0 0.0
  %4637 = vmatprep.subr.mxu0 0.0
  %4638 = vmatpush1.msra.mxu0 0.0
  %4639 = vmatprep.subr.mxu0 0.0
  %4640 = vmatpush1.msra.mxu0 0.0
  %4641 = vmatprep.subr.mxu0 0.0
  %4642 = vmatpush1.msra.mxu0 0.0
  %4643 = vmatprep.subr.mxu0 0.0
  %4644 = vmatpush1.msra.mxu0 0.0
  %4645 = vmatprep.subr.mxu0 0.0
  %4646 = vmatpush1.msra.mxu0 0.0
  %4647 = vmatprep.subr.mxu0 0.0
  %4648 = vmatpush1.msra.mxu0 0.0
  %4649 = vmatprep.subr.mxu0 0.0
  %4650 = vmatpush1.msra.mxu0 0.0
  %4651 = vmatprep.subr.mxu0 0.0
  %4652 = vmatpush1.msra.mxu0 0.0
  %4653 = vmatprep.subr.mxu0 0.0
  %4654 = vmatpush1.msra.mxu0 0.0
  %4655 = vmatprep.subr.mxu0 0.0
  %4656 = vmatpush1.msra.mxu0 0.0
  %4657 = vmatprep.subr.mxu0 0.0
  %4658 = vmatpush1.msra.mxu0 0.0
  %4659 = vmatprep.subr.mxu0 0.0
  %4660 = vmatpush1.msra.mxu0 0.0
  %4661 = vmatprep.subr.mxu0 0.0
  %4662 = vmatpush1.msra.mxu0 0.0
  %4663 = vmatprep.subr.mxu0 0.0
  %4664 = vmatpush1.msra.mxu0 0.0
  %4665 = vmatprep.subr.mxu0 0.0
  %4666 = vmatpush1.msra.mxu0 0.0
  %4667 = vmatprep.subr.mxu0 0.0
  %4668 = vmatpush1.msra.mxu0 0.0
  %4669 = vmatprep.subr.mxu0 0.0
  %4670 = vmatpush1.msra.mxu0 0.0
  %4671 = vmatprep.mubr.f32.mxu0 0.0
  %4672 = vmatmul.mubr.f32.gmra.mrb[0].mxu0 %v4534
  %v4673 = vpop.f32.mrb[0].mxu0
  %v4674 = vadd.f32 0.0, %v4673
  %v4675 = vpop.f32.mrb[0].mxu0
  %4676 = vdwg.mxu0
  %4677 = vmatprep.subr.mxu0 %v4475
  %4678 = vmatpush1.msra.mxu0 %v4474
  %4679 = vmatprep.subr.mxu0 %v4483
  %4680 = vmatpush1.msra.mxu0 %v4482
  %4681 = vmatprep.subr.mxu0 %v4491
  %4682 = vmatpush1.msra.mxu0 %v4490
  %4683 = vmatprep.subr.mxu0 %v4499
  %4684 = vmatpush1.msra.mxu0 %v4498
  %4685 = vmatprep.subr.mxu0 0.0
  %4686 = vmatpush1.msra.mxu0 0.0
  %4687 = vmatprep.subr.mxu0 0.0
  %4688 = vmatpush1.msra.mxu0 0.0
  %4689 = vmatprep.subr.mxu0 0.0
  %4690 = vmatpush1.msra.mxu0 0.0
  %4691 = vmatprep.subr.mxu0 0.0
  %4692 = vmatpush1.msra.mxu0 0.0
  %4693 = vmatprep.subr.mxu0 0.0
  %4694 = vmatpush1.msra.mxu0 0.0
  %4695 = vmatprep.subr.mxu0 0.0
  %4696 = vmatpush1.msra.mxu0 0.0
  %4697 = vmatprep.subr.mxu0 0.0
  %4698 = vmatpush1.msra.mxu0 0.0
  %4699 = vmatprep.subr.mxu0 0.0
  %4700 = vmatpush1.msra.mxu0 0.0
  %4701 = vmatprep.subr.mxu0 0.0
  %4702 = vmatpush1.msra.mxu0 0.0
  %4703 = vmatprep.subr.mxu0 0.0
  %4704 = vmatpush1.msra.mxu0 0.0
  %4705 = vmatprep.subr.mxu0 0.0
  %4706 = vmatpush1.msra.mxu0 0.0
  %4707 = vmatprep.subr.mxu0 0.0
  %4708 = vmatpush1.msra.mxu0 0.0
  %4709 = vmatprep.subr.mxu0 0.0
  %4710 = vmatpush1.msra.mxu0 0.0
  %4711 = vmatprep.subr.mxu0 0.0
  %4712 = vmatpush1.msra.mxu0 0.0
  %4713 = vmatprep.subr.mxu0 0.0
  %4714 = vmatpush1.msra.mxu0 0.0
  %4715 = vmatprep.subr.mxu0 0.0
  %4716 = vmatpush1.msra.mxu0 0.0
  %4717 = vmatprep.subr.mxu0 0.0
  %4718 = vmatpush1.msra.mxu0 0.0
  %4719 = vmatprep.subr.mxu0 0.0
  %4720 = vmatpush1.msra.mxu0 0.0
  %4721 = vmatprep.subr.mxu0 0.0
  %4722 = vmatpush1.msra.mxu0 0.0
  %4723 = vmatprep.subr.mxu0 0.0
  %4724 = vmatpush1.msra.mxu0 0.0
  %4725 = vmatprep.subr.mxu0 0.0
  %4726 = vmatpush1.msra.mxu0 0.0
  %4727 = vmatprep.subr.mxu0 0.0
  %4728 = vmatpush1.msra.mxu0 0.0
  %4729 = vmatprep.subr.mxu0 0.0
  %4730 = vmatpush1.msra.mxu0 0.0
  %4731 = vmatprep.subr.mxu0 0.0
  %4732 = vmatpush1.msra.mxu0 0.0
  %4733 = vmatprep.subr.mxu0 0.0
  %4734 = vmatpush1.msra.mxu0 0.0
  %4735 = vmatprep.subr.mxu0 0.0
  %4736 = vmatpush1.msra.mxu0 0.0
  %4737 = vmatprep.subr.mxu0 0.0
  %4738 = vmatpush1.msra.mxu0 0.0
  %4739 = vmatprep.subr.mxu0 0.0
  %4740 = vmatpush1.msra.mxu0 0.0
  %4741 = vmatprep.mubr.f32.mxu0 0.0
  %4742 = vmatmul.mubr.f32.gmra.mrb[0].mxu0 %v4534
  %v4743 = vpop.f32.mrb[0].mxu0
  %v4744 = vpop.f32.mrb[0].mxu0
  %v4745 = vadd.f32 0.0, %v4744
  %4746 = vdwg.mxu0
  %4747 = vmatprep.subr.mxu0 %v4477
  %4748 = vmatpush1.msra.mxu0 %v4476
  %4749 = vmatprep.subr.mxu0 %v4485
  %4750 = vmatpush1.msra.mxu0 %v4484
  %4751 = vmatprep.subr.mxu0 %v4493
  %4752 = vmatpush1.msra.mxu0 %v4492
  %4753 = vmatprep.subr.mxu0 %v4501
  %4754 = vmatpush1.msra.mxu0 %v4500
  %4755 = vmatprep.subr.mxu0 0.0
  %4756 = vmatpush1.msra.mxu0 0.0
  %4757 = vmatprep.subr.mxu0 0.0
  %4758 = vmatpush1.msra.mxu0 0.0
  %4759 = vmatprep.subr.mxu0 0.0
  %4760 = vmatpush1.msra.mxu0 0.0
  %4761 = vmatprep.subr.mxu0 0.0
  %4762 = vmatpush1.msra.mxu0 0.0
  %4763 = vmatprep.subr.mxu0 0.0
  %4764 = vmatpush1.msra.mxu0 0.0
  %4765 = vmatprep.subr.mxu0 0.0
  %4766 = vmatpush1.msra.mxu0 0.0
  %4767 = vmatprep.subr.mxu0 0.0
  %4768 = vmatpush1.msra.mxu0 0.0
  %4769 = vmatprep.subr.mxu0 0.0
  %4770 = vmatpush1.msra.mxu0 0.0
  %4771 = vmatprep.subr.mxu0 0.0
  %4772 = vmatpush1.msra.mxu0 0.0
  %4773 = vmatprep.subr.mxu0 0.0
  %4774 = vmatpush1.msra.mxu0 0.0
  %4775 = vmatprep.subr.mxu0 0.0
  %4776 = vmatpush1.msra.mxu0 0.0
  %4777 = vmatprep.subr.mxu0 0.0
  %4778 = vmatpush1.msra.mxu0 0.0
  %4779 = vmatprep.subr.mxu0 0.0
  %4780 = vmatpush1.msra.mxu0 0.0
  %4781 = vmatprep.subr.mxu0 0.0
  %4782 = vmatpush1.msra.mxu0 0.0
  %4783 = vmatprep.subr.mxu0 0.0
  %4784 = vmatpush1.msra.mxu0 0.0
  %4785 = vmatprep.subr.mxu0 0.0
  %4786 = vmatpush1.msra.mxu0 0.0
  %4787 = vmatprep.subr.mxu0 0.0
  %4788 = vmatpush1.msra.mxu0 0.0
  %4789 = vmatprep.subr.mxu0 0.0
  %4790 = vmatpush1.msra.mxu0 0.0
  %4791 = vmatprep.subr.mxu0 0.0
  %4792 = vmatpush1.msra.mxu0 0.0
  %4793 = vmatprep.subr.mxu0 0.0
  %4794 = vmatpush1.msra.mxu0 0.0
  %4795 = vmatprep.subr.mxu0 0.0
  %4796 = vmatpush1.msra.mxu0 0.0
  %4797 = vmatprep.subr.mxu0 0.0
  %4798 = vmatpush1.msra.mxu0 0.0
  %4799 = vmatprep.subr.mxu0 0.0
  %4800 = vmatpush1.msra.mxu0 0.0
  %4801 = vmatprep.subr.mxu0 0.0
  %4802 = vmatpush1.msra.mxu0 0.0
  %4803 = vmatprep.subr.mxu0 0.0
  %4804 = vmatpush1.msra.mxu0 0.0
  %4805 = vmatprep.subr.mxu0 0.0
  %4806 = vmatpush1.msra.mxu0 0.0
  %4807 = vmatprep.subr.mxu0 0.0
  %4808 = vmatpush1.msra.mxu0 0.0
  %4809 = vmatprep.subr.mxu0 0.0
  %4810 = vmatpush1.msra.mxu0 0.0
  %4811 = vmatprep.mubr.f32.mxu0 0.0
  %4812 = vmatmul.mubr.f32.gmra.mrb[0].mxu0 %v4534
  %v4813 = vpop.f32.mrb[0].mxu0
  %v4814 = vadd.f32 0.0, %v4813
  %v4815 = vpop.f32.mrb[0].mxu0
  %v4816 = vadd.f32 0.0, %v4815
  %4817 = vdwg.mxu0
  %v4818 = vadd.f32 %v4389, %v4603
  %v4819 = vadd.f32 %v4390, %v4605
  %v4820 = vadd.f32 %v4391, %v4674
  %v4821 = vadd.f32 %v4392, %v4745
  %v4822 = vadd.f32 %v4393, %v4814
  %v4823 = vadd.f32 %v4394, %v4816
  %v4824 = vld [vmem:[%s1 + $0x8] sm:$0xf]
  %v4825 = vld [vmem:[%s0] sm:$0xff]
  %v4826 = vld [vmem:[%s0 + $0x8] sm:$0xff]
  %v4827 = vld [vmem:[%s0 + $0x10] sm:$0xff]
  %v4828 = vld [vmem:[%s0 + $0x18] sm:$0xff]
  %v4829 = vld [vmem:[%s0 + $0x20] sm:$0xff]
  %v4830 = vld [vmem:[%s0 + $0x28] sm:$0xff]
  %v4831 = vld [vmem:[%s0 + $0x30] sm:$0xff]
  %v4832 = vld [vmem:[%s0 + $0x38] sm:$0xff]
  %v4833 = vld [vmem:[%s0 + $0x40] sm:$0xff]
  %v4834 = vld [vmem:[%s0 + $0x50] sm:$0xff]
  %v4835 = vld [vmem:[%s0 + $0x58] sm:$0xff]
  %v4836 = vld [vmem:[%s0 + $0x60] sm:$0xff]
  %v4837 = vld [vmem:[%s0 + $0x68] sm:$0xff]
  %v4838 = vld [vmem:[%s0 + $0x70] sm:$0xff]
  %v4839 = vld [vmem:[%s0 + $0x78] sm:$0xff]
  %v4840 = vld [vmem:[%s0 + $0x80] sm:$0xff]
  %v4841 = vld [vmem:[%s0 + $0x88] sm:$0xff]
  %v4842 = vld [vmem:[%s0 + $0x90] sm:$0xff]
  %v4843 = vld [vmem:[%s0 + $0xa0] sm:$0xff]
  %v4844 = vld [vmem:[%s0 + $0xa8] sm:$0xff]
  %v4845 = vld [vmem:[%s0 + $0xb0] sm:$0xff]
  %v4846 = vld [vmem:[%s0 + $0xb8] sm:$0xff]
  %v4847 = vld [vmem:[%s0 + $0xc0] sm:$0xff]
  %v4848 = vld [vmem:[%s0 + $0xc8] sm:$0xff]
  %v4849 = vld [vmem:[%s0 + $0xd0] sm:$0xff]
  %v4850 = vld [vmem:[%s0 + $0xd8] sm:$0xff]
  %v4851 = vld [vmem:[%s0 + $0xe0] sm:$0xff]
  %v4852 = vld [vmem:[%s0 + $0xf0] sm:$0xff]
  %v4853 = vld [vmem:[%s0 + $0xf8] sm:$0xff]
  %v4854 = vld [vmem:[%s0 + $0x100] sm:$0xff]
  %v4855 = vld [vmem:[%s0 + $0x108] sm:$0xff]
  %v4856 = vld [vmem:[%s0 + $0x110] sm:$0xff]
  %v4857 = vld [vmem:[%s0 + $0x118] sm:$0xff]
  %v4858 = vld [vmem:[%s0 + $0x120] sm:$0xff]
  %v4859 = vld [vmem:[%s0 + $0x128] sm:$0xff]
  %v4860 = vld [vmem:[%s0 + $0x130] sm:$0xff]
  %4862 = vrot.lane.b32.xlu0 %v4824, 64
  %v4863 = vpop.permute.xlu0 %4862
  %4900 = vrot.lane.b32.xlu0 %v4825, 101
  %v4901 = vpop.permute.xlu0 %4900
  %4902 = vrot.lane.b32.xlu0 %v4826, 101
  %v4903 = vpop.permute.xlu0 %4902
  %4904 = vrot.lane.b32.xlu0 %v4827, 101
  %v4905 = vpop.permute.xlu0 %4904
  %4906 = vrot.lane.b32.xlu0 %v4828, 101
  %v4907 = vpop.permute.xlu0 %4906
  %4908 = vrot.lane.b32.xlu0 %v4829, 101
  %v4909 = vpop.permute.xlu0 %4908
  %4910 = vrot.lane.b32.xlu0 %v4830, 101
  %v4911 = vpop.permute.xlu0 %4910
  %4912 = vrot.lane.b32.xlu0 %v4831, 101
  %v4913 = vpop.permute.xlu0 %4912
  %4914 = vrot.lane.b32.xlu0 %v4832, 101
  %v4915 = vpop.permute.xlu0 %4914
  %4916 = vrot.lane.b32.xlu0 %v4833, 101
  %v4917 = vpop.permute.xlu0 %4916
  %4918 = vrot.lane.b32.xlu0 %v4834, 101
  %v4919 = vpop.permute.xlu0 %4918
  %4920 = vrot.lane.b32.xlu0 %v4835, 101
  %v4921 = vpop.permute.xlu0 %4920
  %4922 = vrot.lane.b32.xlu0 %v4836, 101
  %v4923 = vpop.permute.xlu0 %4922
  %4924 = vrot.lane.b32.xlu0 %v4837, 101
  %v4925 = vpop.permute.xlu0 %4924
  %4926 = vrot.lane.b32.xlu0 %v4838, 101
  %v4927 = vpop.permute.xlu0 %4926
  %4928 = vrot.lane.b32.xlu0 %v4839, 101
  %v4929 = vpop.permute.xlu0 %4928
  %4930 = vrot.lane.b32.xlu0 %v4840, 101
  %v4931 = vpop.permute.xlu0 %4930
  %4932 = vrot.lane.b32.xlu0 %v4841, 101
  %v4933 = vpop.permute.xlu0 %4932
  %4934 = vrot.lane.b32.xlu0 %v4842, 101
  %v4935 = vpop.permute.xlu0 %4934
  %4936 = vrot.lane.b32.xlu0 %v4843, 101
  %v4937 = vpop.permute.xlu0 %4936
  %4938 = vrot.lane.b32.xlu0 %v4844, 101
  %v4939 = vpop.permute.xlu0 %4938
  %4940 = vrot.lane.b32.xlu0 %v4845, 101
  %v4941 = vpop.permute.xlu0 %4940
  %4942 = vrot.lane.b32.xlu0 %v4846, 101
  %v4943 = vpop.permute.xlu0 %4942
  %4944 = vrot.lane.b32.xlu0 %v4847, 101
  %v4945 = vpop.permute.xlu0 %4944
  %4946 = vrot.lane.b32.xlu0 %v4848, 101
  %v4947 = vpop.permute.xlu0 %4946
  %4948 = vrot.lane.b32.xlu0 %v4849, 101
  %v4949 = vpop.permute.xlu0 %4948
  %4950 = vrot.lane.b32.xlu0 %v4850, 101
  %v4951 = vpop.permute.xlu0 %4950
  %4952 = vrot.lane.b32.xlu0 %v4851, 101
  %v4953 = vpop.permute.xlu0 %4952
  %4954 = vrot.lane.b32.xlu0 %v4852, 101
  %v4955 = vpop.permute.xlu0 %4954
  %4956 = vrot.lane.b32.xlu0 %v4853, 101
  %v4957 = vpop.permute.xlu0 %4956
  %4958 = vrot.lane.b32.xlu0 %v4854, 101
  %v4959 = vpop.permute.xlu0 %4958
  %4960 = vrot.lane.b32.xlu0 %v4855, 101
  %v4961 = vpop.permute.xlu0 %4960
  %4962 = vrot.lane.b32.xlu0 %v4856, 101
  %v4963 = vpop.permute.xlu0 %4962
  %4964 = vrot.lane.b32.xlu0 %v4857, 101
  %v4965 = vpop.permute.xlu0 %4964
  %4966 = vrot.lane.b32.xlu0 %v4858, 101
  %v4967 = vpop.permute.xlu0 %4966
  %4968 = vrot.lane.b32.xlu0 %v4859, 101
  %v4969 = vpop.permute.xlu0 %4968
  %4970 = vrot.lane.b32.xlu0 %v4860, 101
  %v4971 = vpop.permute.xlu0 %4970
  %vm4972 = vcmask 826368
  %v4973 = vsel %vm4972, %v4901, %v4903
  %v4974 = vsel %vm4972, %v4903, %v4905
  %v4975 = vsel %vm4972, %v4905, %v4907
  %v4976 = vsel %vm4972, %v4907, %v4909
  %v4977 = vsel %vm4972, %v4909, %v4911
  %v4978 = vsel %vm4972, %v4911, %v4913
  %v4979 = vsel %vm4972, %v4913, %v4915
  %v4980 = vsel %vm4972, %v4915, %v4917
  %v4981 = vsel %vm4972, %v4919, %v4921
  %v4982 = vsel %vm4972, %v4921, %v4923
  %v4983 = vsel %vm4972, %v4923, %v4925
  %v4984 = vsel %vm4972, %v4925, %v4927
  %v4985 = vsel %vm4972, %v4927, %v4929
  %v4986 = vsel %vm4972, %v4929, %v4931
  %v4987 = vsel %vm4972, %v4931, %v4933
  %v4988 = vsel %vm4972, %v4933, %v4935
  %v4989 = vsel %vm4972, %v4937, %v4939
  %v4990 = vsel %vm4972, %v4939, %v4941
  %v4991 = vsel %vm4972, %v4941, %v4943
  %v4992 = vsel %vm4972, %v4943, %v4945
  %v4993 = vsel %vm4972, %v4945, %v4947
  %v4994 = vsel %vm4972, %v4947, %v4949
  %v4995 = vsel %vm4972, %v4949, %v4951
  %v4996 = vsel %vm4972, %v4951, %v4953
  %v4997 = vsel %vm4972, %v4955, %v4957
  %v4998 = vsel %vm4972, %v4957, %v4959
  %v4999 = vsel %vm4972, %v4959, %v4961
  %v5000 = vsel %vm4972, %v4961, %v4963
  %v5001 = vsel %vm4972, %v4963, %v4965
  %v5002 = vsel %vm4972, %v4965, %v4967
  %v5003 = vsel %vm4972, %v4967, %v4969
  %v5004 = vsel %vm4972, %v4969, %v4971
  %v5037 = vsel %vm231, %v4863, 0
  %5039 = vmatprep.subr.mxu0 %v4974
  %5040 = vmatpush1.msra.mxu0 %v4973
  %5041 = vmatprep.subr.mxu0 %v4982
  %5042 = vmatpush1.msra.mxu0 %v4981
  %5043 = vmatprep.subr.mxu0 %v4990
  %5044 = vmatpush1.msra.mxu0 %v4989
  %5045 = vmatprep.subr.mxu0 %v4998
  %5046 = vmatpush1.msra.mxu0 %v4997
  %5047 = vmatprep.subr.mxu0 0.0
  %5048 = vmatpush1.msra.mxu0 0.0
  %5049 = vmatprep.subr.mxu0 0.0
  %5050 = vmatpush1.msra.mxu0 0.0
  %5051 = vmatprep.subr.mxu0 0.0
  %5052 = vmatpush1.msra.mxu0 0.0
  %5053 = vmatprep.subr.mxu0 0.0
  %5054 = vmatpush1.msra.mxu0 0.0
  %5055 = vmatprep.subr.mxu0 0.0
  %5056 = vmatpush1.msra.mxu0 0.0
  %5057 = vmatprep.subr.mxu0 0.0
  %5058 = vmatpush1.msra.mxu0 0.0
  %5059 = vmatprep.subr.mxu0 0.0
  %5060 = vmatpush1.msra.mxu0 0.0
  %5061 = vmatprep.subr.mxu0 0.0
  %5062 = vmatpush1.msra.mxu0 0.0
  %5063 = vmatprep.subr.mxu0 0.0
  %5064 = vmatpush1.msra.mxu0 0.0
  %5065 = vmatprep.subr.mxu0 0.0
  %5066 = vmatpush1.msra.mxu0 0.0
  %5067 = vmatprep.subr.mxu0 0.0
  %5068 = vmatpush1.msra.mxu0 0.0
  %5069 = vmatprep.subr.mxu0 0.0
  %5070 = vmatpush1.msra.mxu0 0.0
  %5071 = vmatprep.subr.mxu0 0.0
  %5072 = vmatpush1.msra.mxu0 0.0
  %5073 = vmatprep.subr.mxu0 0.0
  %5074 = vmatpush1.msra.mxu0 0.0
  %5075 = vmatprep.subr.mxu0 0.0
  %5076 = vmatpush1.msra.mxu0 0.0
  %5077 = vmatprep.subr.mxu0 0.0
  %5078 = vmatpush1.msra.mxu0 0.0
  %5079 = vmatprep.subr.mxu0 0.0
  %5080 = vmatpush1.msra.mxu0 0.0
  %5081 = vmatprep.subr.mxu0 0.0
  %5082 = vmatpush1.msra.mxu0 0.0
  %5083 = vmatprep.subr.mxu0 0.0
  %5084 = vmatpush1.msra.mxu0 0.0
  %5085 = vmatprep.subr.mxu0 0.0
  %5086 = vmatpush1.msra.mxu0 0.0
  %5087 = vmatprep.subr.mxu0 0.0
  %5088 = vmatpush1.msra.mxu0 0.0
  %5089 = vmatprep.subr.mxu0 0.0
  %5090 = vmatpush1.msra.mxu0 0.0
  %5091 = vmatprep.subr.mxu0 0.0
  %5092 = vmatpush1.msra.mxu0 0.0
  %5093 = vmatprep.subr.mxu0 0.0
  %5094 = vmatpush1.msra.mxu0 0.0
  %5095 = vmatprep.subr.mxu0 0.0
  %5096 = vmatpush1.msra.mxu0 0.0
  %5097 = vmatprep.subr.mxu0 0.0
  %5098 = vmatpush1.msra.mxu0 0.0
  %5099 = vmatprep.subr.mxu0 0.0
  %5100 = vmatpush1.msra.mxu0 0.0
  %5101 = vmatprep.subr.mxu0 0.0
  %5102 = vmatpush1.msra.mxu0 0.0
  %5103 = vmatprep.mubr.f32.mxu0 0.0
  %5104 = vmatmul.mubr.f32.gmra.mrb[0].mxu0 %v5037
  %v5105 = vpop.f32.mrb[0].mxu0
  %v5106 = vadd.f32 0.0, %v5105
  %v5107 = vpop.f32.mrb[0].mxu0
  %v5108 = vadd.f32 0.0, %v5107
  %5109 = vdwg.mxu0
  %5110 = vmatprep.subr.mxu0 %v4976
  %5111 = vmatpush1.msra.mxu0 %v4975
  %5112 = vmatprep.subr.mxu0 %v4984
  %5113 = vmatpush1.msra.mxu0 %v4983
  %5114 = vmatprep.subr.mxu0 %v4992
  %5115 = vmatpush1.msra.mxu0 %v4991
  %5116 = vmatprep.subr.mxu0 %v5000
  %5117 = vmatpush1.msra.mxu0 %v4999
  %5118 = vmatprep.subr.mxu0 0.0
  %5119 = vmatpush1.msra.mxu0 0.0
  %5120 = vmatprep.subr.mxu0 0.0
  %5121 = vmatpush1.msra.mxu0 0.0
  %5122 = vmatprep.subr.mxu0 0.0
  %5123 = vmatpush1.msra.mxu0 0.0
  %5124 = vmatprep.subr.mxu0 0.0
  %5125 = vmatpush1.msra.mxu0 0.0
  %5126 = vmatprep.subr.mxu0 0.0
  %5127 = vmatpush1.msra.mxu0 0.0
  %5128 = vmatprep.subr.mxu0 0.0
  %5129 = vmatpush1.msra.mxu0 0.0
  %5130 = vmatprep.subr.mxu0 0.0
  %5131 = vmatpush1.msra.mxu0 0.0
  %5132 = vmatprep.subr.mxu0 0.0
  %5133 = vmatpush1.msra.mxu0 0.0
  %5134 = vmatprep.subr.mxu0 0.0
  %5135 = vmatpush1.msra.mxu0 0.0
  %5136 = vmatprep.subr.mxu0 0.0
  %5137 = vmatpush1.msra.mxu0 0.0
  %5138 = vmatprep.subr.mxu0 0.0
  %5139 = vmatpush1.msra.mxu0 0.0
  %5140 = vmatprep.subr.mxu0 0.0
  %5141 = vmatpush1.msra.mxu0 0.0
  %5142 = vmatprep.subr.mxu0 0.0
  %5143 = vmatpush1.msra.mxu0 0.0
  %5144 = vmatprep.subr.mxu0 0.0
  %5145 = vmatpush1.msra.mxu0 0.0
  %5146 = vmatprep.subr.mxu0 0.0
  %5147 = vmatpush1.msra.mxu0 0.0
  %5148 = vmatprep.subr.mxu0 0.0
  %5149 = vmatpush1.msra.mxu0 0.0
  %5150 = vmatprep.subr.mxu0 0.0
  %5151 = vmatpush1.msra.mxu0 0.0
  %5152 = vmatprep.subr.mxu0 0.0
  %5153 = vmatpush1.msra.mxu0 0.0
  %5154 = vmatprep.subr.mxu0 0.0
  %5155 = vmatpush1.msra.mxu0 0.0
  %5156 = vmatprep.subr.mxu0 0.0
  %5157 = vmatpush1.msra.mxu0 0.0
  %5158 = vmatprep.subr.mxu0 0.0
  %5159 = vmatpush1.msra.mxu0 0.0
  %5160 = vmatprep.subr.mxu0 0.0
  %5161 = vmatpush1.msra.mxu0 0.0
  %5162 = vmatprep.subr.mxu0 0.0
  %5163 = vmatpush1.msra.mxu0 0.0
  %5164 = vmatprep.subr.mxu0 0.0
  %5165 = vmatpush1.msra.mxu0 0.0
  %5166 = vmatprep.subr.mxu0 0.0
  %5167 = vmatpush1.msra.mxu0 0.0
  %5168 = vmatprep.subr.mxu0 0.0
  %5169 = vmatpush1.msra.mxu0 0.0
  %5170 = vmatprep.subr.mxu0 0.0
  %5171 = vmatpush1.msra.mxu0 0.0
  %5172 = vmatprep.subr.mxu0 0.0
  %5173 = vmatpush1.msra.mxu0 0.0
  %5174 = vmatprep.mubr.f32.mxu0 0.0
  %5175 = vmatmul.mubr.f32.gmra.mrb[0].mxu0 %v5037
  %v5176 = vpop.f32.mrb[0].mxu0
  %v5177 = vadd.f32 0.0, %v5176
  %v5178 = vpop.f32.mrb[0].mxu0
  %5179 = vdwg.mxu0
  %5180 = vmatprep.subr.mxu0 %v4978
  %5181 = vmatpush1.msra.mxu0 %v4977
  %5182 = vmatprep.subr.mxu0 %v4986
  %5183 = vmatpush1.msra.mxu0 %v4985
  %5184 = vmatprep.subr.mxu0 %v4994
  %5185 = vmatpush1.msra.mxu0 %v4993
  %5186 = vmatprep.subr.mxu0 %v5002
  %5187 = vmatpush1.msra.mxu0 %v5001
  %5188 = vmatprep.subr.mxu0 0.0
  %5189 = vmatpush1.msra.mxu0 0.0
  %5190 = vmatprep.subr.mxu0 0.0
  %5191 = vmatpush1.msra.mxu0 0.0
  %5192 = vmatprep.subr.mxu0 0.0
  %5193 = vmatpush1.msra.mxu0 0.0
  %5194 = vmatprep.subr.mxu0 0.0
  %5195 = vmatpush1.msra.mxu0 0.0
  %5196 = vmatprep.subr.mxu0 0.0
  %5197 = vmatpush1.msra.mxu0 0.0
  %5198 = vmatprep.subr.mxu0 0.0
  %5199 = vmatpush1.msra.mxu0 0.0
  %5200 = vmatprep.subr.mxu0 0.0
  %5201 = vmatpush1.msra.mxu0 0.0
  %5202 = vmatprep.subr.mxu0 0.0
  %5203 = vmatpush1.msra.mxu0 0.0
  %5204 = vmatprep.subr.mxu0 0.0
  %5205 = vmatpush1.msra.mxu0 0.0
  %5206 = vmatprep.subr.mxu0 0.0
  %5207 = vmatpush1.msra.mxu0 0.0
  %5208 = vmatprep.subr.mxu0 0.0
  %5209 = vmatpush1.msra.mxu0 0.0
  %5210 = vmatprep.subr.mxu0 0.0
  %5211 = vmatpush1.msra.mxu0 0.0
  %5212 = vmatprep.subr.mxu0 0.0
  %5213 = vmatpush1.msra.mxu0 0.0
  %5214 = vmatprep.subr.mxu0 0.0
  %5215 = vmatpush1.msra.mxu0 0.0
  %5216 = vmatprep.subr.mxu0 0.0
  %5217 = vmatpush1.msra.mxu0 0.0
  %5218 = vmatprep.subr.mxu0 0.0
  %5219 = vmatpush1.msra.mxu0 0.0
  %5220 = vmatprep.subr.mxu0 0.0
  %5221 = vmatpush1.msra.mxu0 0.0
  %5222 = vmatprep.subr.mxu0 0.0
  %5223 = vmatpush1.msra.mxu0 0.0
  %5224 = vmatprep.subr.mxu0 0.0
  %5225 = vmatpush1.msra.mxu0 0.0
  %5226 = vmatprep.subr.mxu0 0.0
  %5227 = vmatpush1.msra.mxu0 0.0
  %5228 = vmatprep.subr.mxu0 0.0
  %5229 = vmatpush1.msra.mxu0 0.0
  %5230 = vmatprep.subr.mxu0 0.0
  %5231 = vmatpush1.msra.mxu0 0.0
  %5232 = vmatprep.subr.mxu0 0.0
  %5233 = vmatpush1.msra.mxu0 0.0
  %5234 = vmatprep.subr.mxu0 0.0
  %5235 = vmatpush1.msra.mxu0 0.0
  %5236 = vmatprep.subr.mxu0 0.0
  %5237 = vmatpush1.msra.mxu0 0.0
  %5238 = vmatprep.subr.mxu0 0.0
  %5239 = vmatpush1.msra.mxu0 0.0
  %5240 = vmatprep.subr.mxu0 0.0
  %5241 = vmatpush1.msra.mxu0 0.0
  %5242 = vmatprep.subr.mxu0 0.0
  %5243 = vmatpush1.msra.mxu0 0.0
  %5244 = vmatprep.mubr.f32.mxu0 0.0
  %5245 = vmatmul.mubr.f32.gmra.mrb[0].mxu0 %v5037
  %v5246 = vpop.f32.mrb[0].mxu0
  %v5247 = vpop.f32.mrb[0].mxu0
  %v5248 = vadd.f32 0.0, %v5247
  %5249 = vdwg.mxu0
  %5250 = vmatprep.subr.mxu0 %v4980
  %5251 = vmatpush1.msra.mxu0 %v4979
  %5252 = vmatprep.subr.mxu0 %v4988
  %5253 = vmatpush1.msra.mxu0 %v4987
  %5254 = vmatprep.subr.mxu0 %v4996
  %5255 = vmatpush1.msra.mxu0 %v4995
  %5256 = vmatprep.subr.mxu0 %v5004
  %5257 = vmatpush1.msra.mxu0 %v5003
  %5258 = vmatprep.subr.mxu0 0.0
  %5259 = vmatpush1.msra.mxu0 0.0
  %5260 = vmatprep.subr.mxu0 0.0
  %5261 = vmatpush1.msra.mxu0 0.0
  %5262 = vmatprep.subr.mxu0 0.0
  %5263 = vmatpush1.msra.mxu0 0.0
  %5264 = vmatprep.subr.mxu0 0.0
  %5265 = vmatpush1.msra.mxu0 0.0
  %5266 = vmatprep.subr.mxu0 0.0
  %5267 = vmatpush1.msra.mxu0 0.0
  %5268 = vmatprep.subr.mxu0 0.0
  %5269 = vmatpush1.msra.mxu0 0.0
  %5270 = vmatprep.subr.mxu0 0.0
  %5271 = vmatpush1.msra.mxu0 0.0
  %5272 = vmatprep.subr.mxu0 0.0
  %5273 = vmatpush1.msra.mxu0 0.0
  %5274 = vmatprep.subr.mxu0 0.0
  %5275 = vmatpush1.msra.mxu0 0.0
  %5276 = vmatprep.subr.mxu0 0.0
  %5277 = vmatpush1.msra.mxu0 0.0
  %5278 = vmatprep.subr.mxu0 0.0
  %5279 = vmatpush1.msra.mxu0 0.0
  %5280 = vmatprep.subr.mxu0 0.0
  %5281 = vmatpush1.msra.mxu0 0.0
  %5282 = vmatprep.subr.mxu0 0.0
  %5283 = vmatpush1.msra.mxu0 0.0
  %5284 = vmatprep.subr.mxu0 0.0
  %5285 = vmatpush1.msra.mxu0 0.0
  %5286 = vmatprep.subr.mxu0 0.0
  %5287 = vmatpush1.msra.mxu0 0.0
  %5288 = vmatprep.subr.mxu0 0.0
  %5289 = vmatpush1.msra.mxu0 0.0
  %5290 = vmatprep.subr.mxu0 0.0
  %5291 = vmatpush1.msra.mxu0 0.0
  %5292 = vmatprep.subr.mxu0 0.0
  %5293 = vmatpush1.msra.mxu0 0.0
  %5294 = vmatprep.subr.mxu0 0.0
  %5295 = vmatpush1.msra.mxu0 0.0
  %5296 = vmatprep.subr.mxu0 0.0
  %5297 = vmatpush1.msra.mxu0 0.0
  %5298 = vmatprep.subr.mxu0 0.0
  %5299 = vmatpush1.msra.mxu0 0.0
  %5300 = vmatprep.subr.mxu0 0.0
  %5301 = vmatpush1.msra.mxu0 0.0
  %5302 = vmatprep.subr.mxu0 0.0
  %5303 = vmatpush1.msra.mxu0 0.0
  %5304 = vmatprep.subr.mxu0 0.0
  %5305 = vmatpush1.msra.mxu0 0.0
  %5306 = vmatprep.subr.mxu0 0.0
  %5307 = vmatpush1.msra.mxu0 0.0
  %5308 = vmatprep.subr.mxu0 0.0
  %5309 = vmatpush1.msra.mxu0 0.0
  %5310 = vmatprep.subr.mxu0 0.0
  %5311 = vmatpush1.msra.mxu0 0.0
  %5312 = vmatprep.subr.mxu0 0.0
  %5313 = vmatpush1.msra.mxu0 0.0
  %5314 = vmatprep.mubr.f32.mxu0 0.0
  %5315 = vmatmul.mubr.f32.gmra.mrb[0].mxu0 %v5037
  %v5316 = vpop.f32.mrb[0].mxu0
  %v5317 = vadd.f32 0.0, %v5316
  %v5318 = vpop.f32.mrb[0].mxu0
  %v5319 = vadd.f32 0.0, %v5318
  %5320 = vdwg.mxu0
  %v5321 = vadd.f32 %v4818, %v5106
  %v5322 = vadd.f32 %v4819, %v5108
  %v5323 = vadd.f32 %v4820, %v5177
  %v5324 = vadd.f32 %v4821, %v5248
  %v5325 = vadd.f32 %v4822, %v5317
  %v5326 = vadd.f32 %v4823, %v5319
  %v5327 = vld [vmem:[%s1 + $0x8] sm:$0xf]
  %v5328 = vld [vmem:[%s0] sm:$0xff]
  %v5329 = vld [vmem:[%s0 + $0x8] sm:$0xff]
  %v5330 = vld [vmem:[%s0 + $0x10] sm:$0xff]
  %v5331 = vld [vmem:[%s0 + $0x18] sm:$0xff]
  %v5332 = vld [vmem:[%s0 + $0x20] sm:$0xff]
  %v5333 = vld [vmem:[%s0 + $0x28] sm:$0xff]
  %v5334 = vld [vmem:[%s0 + $0x30] sm:$0xff]
  %v5335 = vld [vmem:[%s0 + $0x38] sm:$0xff]
  %v5336 = vld [vmem:[%s0 + $0x40] sm:$0xff]
  %v5337 = vld [vmem:[%s0 + $0x50] sm:$0xff]
  %v5338 = vld [vmem:[%s0 + $0x58] sm:$0xff]
  %v5339 = vld [vmem:[%s0 + $0x60] sm:$0xff]
  %v5340 = vld [vmem:[%s0 + $0x68] sm:$0xff]
  %v5341 = vld [vmem:[%s0 + $0x70] sm:$0xff]
  %v5342 = vld [vmem:[%s0 + $0x78] sm:$0xff]
  %v5343 = vld [vmem:[%s0 + $0x80] sm:$0xff]
  %v5344 = vld [vmem:[%s0 + $0x88] sm:$0xff]
  %v5345 = vld [vmem:[%s0 + $0x90] sm:$0xff]
  %v5346 = vld [vmem:[%s0 + $0xa0] sm:$0xff]
  %v5347 = vld [vmem:[%s0 + $0xa8] sm:$0xff]
  %v5348 = vld [vmem:[%s0 + $0xb0] sm:$0xff]
  %v5349 = vld [vmem:[%s0 + $0xb8] sm:$0xff]
  %v5350 = vld [vmem:[%s0 + $0xc0] sm:$0xff]
  %v5351 = vld [vmem:[%s0 + $0xc8] sm:$0xff]
  %v5352 = vld [vmem:[%s0 + $0xd0] sm:$0xff]
  %v5353 = vld [vmem:[%s0 + $0xd8] sm:$0xff]
  %v5354 = vld [vmem:[%s0 + $0xe0] sm:$0xff]
  %v5355 = vld [vmem:[%s0 + $0xf0] sm:$0xff]
  %v5356 = vld [vmem:[%s0 + $0xf8] sm:$0xff]
  %v5357 = vld [vmem:[%s0 + $0x100] sm:$0xff]
  %v5358 = vld [vmem:[%s0 + $0x108] sm:$0xff]
  %v5359 = vld [vmem:[%s0 + $0x110] sm:$0xff]
  %v5360 = vld [vmem:[%s0 + $0x118] sm:$0xff]
  %v5361 = vld [vmem:[%s0 + $0x120] sm:$0xff]
  %v5362 = vld [vmem:[%s0 + $0x128] sm:$0xff]
  %v5363 = vld [vmem:[%s0 + $0x130] sm:$0xff]
  %5365 = vrot.lane.b32.xlu0 %v5327, 32
  %v5366 = vpop.permute.xlu0 %5365
  %5403 = vrot.lane.b32.xlu0 %v5328, 99
  %v5404 = vpop.permute.xlu0 %5403
  %5405 = vrot.lane.b32.xlu0 %v5329, 99
  %v5406 = vpop.permute.xlu0 %5405
  %5407 = vrot.lane.b32.xlu0 %v5330, 99
  %v5408 = vpop.permute.xlu0 %5407
  %5409 = vrot.lane.b32.xlu0 %v5331, 99
  %v5410 = vpop.permute.xlu0 %5409
  %5411 = vrot.lane.b32.xlu0 %v5332, 99
  %v5412 = vpop.permute.xlu0 %5411
  %5413 = vrot.lane.b32.xlu0 %v5333, 99
  %v5414 = vpop.permute.xlu0 %5413
  %5415 = vrot.lane.b32.xlu0 %v5334, 99
  %v5416 = vpop.permute.xlu0 %5415
  %5417 = vrot.lane.b32.xlu0 %v5335, 99
  %v5418 = vpop.permute.xlu0 %5417
  %5419 = vrot.lane.b32.xlu0 %v5336, 99
  %v5420 = vpop.permute.xlu0 %5419
  %5421 = vrot.lane.b32.xlu0 %v5337, 99
  %v5422 = vpop.permute.xlu0 %5421
  %5423 = vrot.lane.b32.xlu0 %v5338, 99
  %v5424 = vpop.permute.xlu0 %5423
  %5425 = vrot.lane.b32.xlu0 %v5339, 99
  %v5426 = vpop.permute.xlu0 %5425
  %5427 = vrot.lane.b32.xlu0 %v5340, 99
  %v5428 = vpop.permute.xlu0 %5427
  %5429 = vrot.lane.b32.xlu0 %v5341, 99
  %v5430 = vpop.permute.xlu0 %5429
  %5431 = vrot.lane.b32.xlu0 %v5342, 99
  %v5432 = vpop.permute.xlu0 %5431
  %5433 = vrot.lane.b32.xlu0 %v5343, 99
  %v5434 = vpop.permute.xlu0 %5433
  %5435 = vrot.lane.b32.xlu0 %v5344, 99
  %v5436 = vpop.permute.xlu0 %5435
  %5437 = vrot.lane.b32.xlu0 %v5345, 99
  %v5438 = vpop.permute.xlu0 %5437
  %5439 = vrot.lane.b32.xlu0 %v5346, 99
  %v5440 = vpop.permute.xlu0 %5439
  %5441 = vrot.lane.b32.xlu0 %v5347, 99
  %v5442 = vpop.permute.xlu0 %5441
  %5443 = vrot.lane.b32.xlu0 %v5348, 99
  %v5444 = vpop.permute.xlu0 %5443
  %5445 = vrot.lane.b32.xlu0 %v5349, 99
  %v5446 = vpop.permute.xlu0 %5445
  %5447 = vrot.lane.b32.xlu0 %v5350, 99
  %v5448 = vpop.permute.xlu0 %5447
  %5449 = vrot.lane.b32.xlu0 %v5351, 99
  %v5450 = vpop.permute.xlu0 %5449
  %5451 = vrot.lane.b32.xlu0 %v5352, 99
  %v5452 = vpop.permute.xlu0 %5451
  %5453 = vrot.lane.b32.xlu0 %v5353, 99
  %v5454 = vpop.permute.xlu0 %5453
  %5455 = vrot.lane.b32.xlu0 %v5354, 99
  %v5456 = vpop.permute.xlu0 %5455
  %5457 = vrot.lane.b32.xlu0 %v5355, 99
  %v5458 = vpop.permute.xlu0 %5457
  %5459 = vrot.lane.b32.xlu0 %v5356, 99
  %v5460 = vpop.permute.xlu0 %5459
  %5461 = vrot.lane.b32.xlu0 %v5357, 99
  %v5462 = vpop.permute.xlu0 %5461
  %5463 = vrot.lane.b32.xlu0 %v5358, 99
  %v5464 = vpop.permute.xlu0 %5463
  %5465 = vrot.lane.b32.xlu0 %v5359, 99
  %v5466 = vpop.permute.xlu0 %5465
  %5467 = vrot.lane.b32.xlu0 %v5360, 99
  %v5468 = vpop.permute.xlu0 %5467
  %5469 = vrot.lane.b32.xlu0 %v5361, 99
  %v5470 = vpop.permute.xlu0 %5469
  %5471 = vrot.lane.b32.xlu0 %v5362, 99
  %v5472 = vpop.permute.xlu0 %5471
  %5473 = vrot.lane.b32.xlu0 %v5363, 99
  %v5474 = vpop.permute.xlu0 %5473
  %vm5475 = vcmask 809984
  %v5476 = vsel %vm5475, %v5404, %v5406
  %v5477 = vsel %vm5475, %v5406, %v5408
  %v5478 = vsel %vm5475, %v5408, %v5410
  %v5479 = vsel %vm5475, %v5410, %v5412
  %v5480 = vsel %vm5475, %v5412, %v5414
  %v5481 = vsel %vm5475, %v5414, %v5416
  %v5482 = vsel %vm5475, %v5416, %v5418
  %v5483 = vsel %vm5475, %v5418, %v5420
  %v5484 = vsel %vm5475, %v5422, %v5424
  %v5485 = vsel %vm5475, %v5424, %v5426
  %v5486 = vsel %vm5475, %v5426, %v5428
  %v5487 = vsel %vm5475, %v5428, %v5430
  %v5488 = vsel %vm5475, %v5430, %v5432
  %v5489 = vsel %vm5475, %v5432, %v5434
  %v5490 = vsel %vm5475, %v5434, %v5436
  %v5491 = vsel %vm5475, %v5436, %v5438
  %v5492 = vsel %vm5475, %v5440, %v5442
  %v5493 = vsel %vm5475, %v5442, %v5444
  %v5494 = vsel %vm5475, %v5444, %v5446
  %v5495 = vsel %vm5475, %v5446, %v5448
  %v5496 = vsel %vm5475, %v5448, %v5450
  %v5497 = vsel %vm5475, %v5450, %v5452
  %v5498 = vsel %vm5475, %v5452, %v5454
  %v5499 = vsel %vm5475, %v5454, %v5456
  %v5500 = vsel %vm5475, %v5458, %v5460
  %v5501 = vsel %vm5475, %v5460, %v5462
  %v5502 = vsel %vm5475, %v5462, %v5464
  %v5503 = vsel %vm5475, %v5464, %v5466
  %v5504 = vsel %vm5475, %v5466, %v5468
  %v5505 = vsel %vm5475, %v5468, %v5470
  %v5506 = vsel %vm5475, %v5470, %v5472
  %v5507 = vsel %vm5475, %v5472, %v5474
  %v5540 = vsel %vm231, %v5366, 0
  %5542 = vmatprep.subr.mxu0 %v5477
  %5543 = vmatpush1.msra.mxu0 %v5476
  %5544 = vmatprep.subr.mxu0 %v5485
  %5545 = vmatpush1.msra.mxu0 %v5484
  %5546 = vmatprep.subr.mxu0 %v5493
  %5547 = vmatpush1.msra.mxu0 %v5492
  %5548 = vmatprep.subr.mxu0 %v5501
  %5549 = vmatpush1.msra.mxu0 %v5500
  %5550 = vmatprep.subr.mxu0 0.0
  %5551 = vmatpush1.msra.mxu0 0.0
  %5552 = vmatprep.subr.mxu0 0.0
  %5553 = vmatpush1.msra.mxu0 0.0
  %5554 = vmatprep.subr.mxu0 0.0
  %5555 = vmatpush1.msra.mxu0 0.0
  %5556 = vmatprep.subr.mxu0 0.0
  %5557 = vmatpush1.msra.mxu0 0.0
  %5558 = vmatprep.subr.mxu0 0.0
  %5559 = vmatpush1.msra.mxu0 0.0
  %5560 = vmatprep.subr.mxu0 0.0
  %5561 = vmatpush1.msra.mxu0 0.0
  %5562 = vmatprep.subr.mxu0 0.0
  %5563 = vmatpush1.msra.mxu0 0.0
  %5564 = vmatprep.subr.mxu0 0.0
  %5565 = vmatpush1.msra.mxu0 0.0
  %5566 = vmatprep.subr.mxu0 0.0
  %5567 = vmatpush1.msra.mxu0 0.0
  %5568 = vmatprep.subr.mxu0 0.0
  %5569 = vmatpush1.msra.mxu0 0.0
  %5570 = vmatprep.subr.mxu0 0.0
  %5571 = vmatpush1.msra.mxu0 0.0
  %5572 = vmatprep.subr.mxu0 0.0
  %5573 = vmatpush1.msra.mxu0 0.0
  %5574 = vmatprep.subr.mxu0 0.0
  %5575 = vmatpush1.msra.mxu0 0.0
  %5576 = vmatprep.subr.mxu0 0.0
  %5577 = vmatpush1.msra.mxu0 0.0
  %5578 = vmatprep.subr.mxu0 0.0
  %5579 = vmatpush1.msra.mxu0 0.0
  %5580 = vmatprep.subr.mxu0 0.0
  %5581 = vmatpush1.msra.mxu0 0.0
  %5582 = vmatprep.subr.mxu0 0.0
  %5583 = vmatpush1.msra.mxu0 0.0
  %5584 = vmatprep.subr.mxu0 0.0
  %5585 = vmatpush1.msra.mxu0 0.0
  %5586 = vmatprep.subr.mxu0 0.0
  %5587 = vmatpush1.msra.mxu0 0.0
  %5588 = vmatprep.subr.mxu0 0.0
  %5589 = vmatpush1.msra.mxu0 0.0
  %5590 = vmatprep.subr.mxu0 0.0
  %5591 = vmatpush1.msra.mxu0 0.0
  %5592 = vmatprep.subr.mxu0 0.0
  %5593 = vmatpush1.msra.mxu0 0.0
  %5594 = vmatprep.subr.mxu0 0.0
  %5595 = vmatpush1.msra.mxu0 0.0
  %5596 = vmatprep.subr.mxu0 0.0
  %5597 = vmatpush1.msra.mxu0 0.0
  %5598 = vmatprep.subr.mxu0 0.0
  %5599 = vmatpush1.msra.mxu0 0.0
  %5600 = vmatprep.subr.mxu0 0.0
  %5601 = vmatpush1.msra.mxu0 0.0
  %5602 = vmatprep.subr.mxu0 0.0
  %5603 = vmatpush1.msra.mxu0 0.0
  %5604 = vmatprep.subr.mxu0 0.0
  %5605 = vmatpush1.msra.mxu0 0.0
  %5606 = vmatprep.mubr.f32.mxu0 0.0
  %5607 = vmatmul.mubr.f32.gmra.mrb[0].mxu0 %v5540
  %v5608 = vpop.f32.mrb[0].mxu0
  %v5609 = vadd.f32 0.0, %v5608
  %v5610 = vpop.f32.mrb[0].mxu0
  %v5611 = vadd.f32 0.0, %v5610
  %5612 = vdwg.mxu0
  %5613 = vmatprep.subr.mxu0 %v5479
  %5614 = vmatpush1.msra.mxu0 %v5478
  %5615 = vmatprep.subr.mxu0 %v5487
  %5616 = vmatpush1.msra.mxu0 %v5486
  %5617 = vmatprep.subr.mxu0 %v5495
  %5618 = vmatpush1.msra.mxu0 %v5494
  %5619 = vmatprep.subr.mxu0 %v5503
  %5620 = vmatpush1.msra.mxu0 %v5502
  %5621 = vmatprep.subr.mxu0 0.0
  %5622 = vmatpush1.msra.mxu0 0.0
  %5623 = vmatprep.subr.mxu0 0.0
  %5624 = vmatpush1.msra.mxu0 0.0
  %5625 = vmatprep.subr.mxu0 0.0
  %5626 = vmatpush1.msra.mxu0 0.0
  %5627 = vmatprep.subr.mxu0 0.0
  %5628 = vmatpush1.msra.mxu0 0.0
  %5629 = vmatprep.subr.mxu0 0.0
  %5630 = vmatpush1.msra.mxu0 0.0
  %5631 = vmatprep.subr.mxu0 0.0
  %5632 = vmatpush1.msra.mxu0 0.0
  %5633 = vmatprep.subr.mxu0 0.0
  %5634 = vmatpush1.msra.mxu0 0.0
  %5635 = vmatprep.subr.mxu0 0.0
  %5636 = vmatpush1.msra.mxu0 0.0
  %5637 = vmatprep.subr.mxu0 0.0
  %5638 = vmatpush1.msra.mxu0 0.0
  %5639 = vmatprep.subr.mxu0 0.0
  %5640 = vmatpush1.msra.mxu0 0.0
  %5641 = vmatprep.subr.mxu0 0.0
  %5642 = vmatpush1.msra.mxu0 0.0
  %5643 = vmatprep.subr.mxu0 0.0
  %5644 = vmatpush1.msra.mxu0 0.0
  %5645 = vmatprep.subr.mxu0 0.0
  %5646 = vmatpush1.msra.mxu0 0.0
  %5647 = vmatprep.subr.mxu0 0.0
  %5648 = vmatpush1.msra.mxu0 0.0
  %5649 = vmatprep.subr.mxu0 0.0
  %5650 = vmatpush1.msra.mxu0 0.0
  %5651 = vmatprep.subr.mxu0 0.0
  %5652 = vmatpush1.msra.mxu0 0.0
  %5653 = vmatprep.subr.mxu0 0.0
  %5654 = vmatpush1.msra.mxu0 0.0
  %5655 = vmatprep.subr.mxu0 0.0
  %5656 = vmatpush1.msra.mxu0 0.0
  %5657 = vmatprep.subr.mxu0 0.0
  %5658 = vmatpush1.msra.mxu0 0.0
  %5659 = vmatprep.subr.mxu0 0.0
  %5660 = vmatpush1.msra.mxu0 0.0
  %5661 = vmatprep.subr.mxu0 0.0
  %5662 = vmatpush1.msra.mxu0 0.0
  %5663 = vmatprep.subr.mxu0 0.0
  %5664 = vmatpush1.msra.mxu0 0.0
  %5665 = vmatprep.subr.mxu0 0.0
  %5666 = vmatpush1.msra.mxu0 0.0
  %5667 = vmatprep.subr.mxu0 0.0
  %5668 = vmatpush1.msra.mxu0 0.0
  %5669 = vmatprep.subr.mxu0 0.0
  %5670 = vmatpush1.msra.mxu0 0.0
  %5671 = vmatprep.subr.mxu0 0.0
  %5672 = vmatpush1.msra.mxu0 0.0
  %5673 = vmatprep.subr.mxu0 0.0
  %5674 = vmatpush1.msra.mxu0 0.0
  %5675 = vmatprep.subr.mxu0 0.0
  %5676 = vmatpush1.msra.mxu0 0.0
  %5677 = vmatprep.mubr.f32.mxu0 0.0
  %5678 = vmatmul.mubr.f32.gmra.mrb[0].mxu0 %v5540
  %v5679 = vpop.f32.mrb[0].mxu0
  %v5680 = vadd.f32 0.0, %v5679
  %v5681 = vpop.f32.mrb[0].mxu0
  %5682 = vdwg.mxu0
  %5683 = vmatprep.subr.mxu0 %v5481
  %5684 = vmatpush1.msra.mxu0 %v5480
  %5685 = vmatprep.subr.mxu0 %v5489
  %5686 = vmatpush1.msra.mxu0 %v5488
  %5687 = vmatprep.subr.mxu0 %v5497
  %5688 = vmatpush1.msra.mxu0 %v5496
  %5689 = vmatprep.subr.mxu0 %v5505
  %5690 = vmatpush1.msra.mxu0 %v5504
  %5691 = vmatprep.subr.mxu0 0.0
  %5692 = vmatpush1.msra.mxu0 0.0
  %5693 = vmatprep.subr.mxu0 0.0
  %5694 = vmatpush1.msra.mxu0 0.0
  %5695 = vmatprep.subr.mxu0 0.0
  %5696 = vmatpush1.msra.mxu0 0.0
  %5697 = vmatprep.subr.mxu0 0.0
  %5698 = vmatpush1.msra.mxu0 0.0
  %5699 = vmatprep.subr.mxu0 0.0
  %5700 = vmatpush1.msra.mxu0 0.0
  %5701 = vmatprep.subr.mxu0 0.0
  %5702 = vmatpush1.msra.mxu0 0.0
  %5703 = vmatprep.subr.mxu0 0.0
  %5704 = vmatpush1.msra.mxu0 0.0
  %5705 = vmatprep.subr.mxu0 0.0
  %5706 = vmatpush1.msra.mxu0 0.0
  %5707 = vmatprep.subr.mxu0 0.0
  %5708 = vmatpush1.msra.mxu0 0.0
  %5709 = vmatprep.subr.mxu0 0.0
  %5710 = vmatpush1.msra.mxu0 0.0
  %5711 = vmatprep.subr.mxu0 0.0
  %5712 = vmatpush1.msra.mxu0 0.0
  %5713 = vmatprep.subr.mxu0 0.0
  %5714 = vmatpush1.msra.mxu0 0.0
  %5715 = vmatprep.subr.mxu0 0.0
  %5716 = vmatpush1.msra.mxu0 0.0
  %5717 = vmatprep.subr.mxu0 0.0
  %5718 = vmatpush1.msra.mxu0 0.0
  %5719 = vmatprep.subr.mxu0 0.0
  %5720 = vmatpush1.msra.mxu0 0.0
  %5721 = vmatprep.subr.mxu0 0.0
  %5722 = vmatpush1.msra.mxu0 0.0
  %5723 = vmatprep.subr.mxu0 0.0
  %5724 = vmatpush1.msra.mxu0 0.0
  %5725 = vmatprep.subr.mxu0 0.0
  %5726 = vmatpush1.msra.mxu0 0.0
  %5727 = vmatprep.subr.mxu0 0.0
  %5728 = vmatpush1.msra.mxu0 0.0
  %5729 = vmatprep.subr.mxu0 0.0
  %5730 = vmatpush1.msra.mxu0 0.0
  %5731 = vmatprep.subr.mxu0 0.0
  %5732 = vmatpush1.msra.mxu0 0.0
  %5733 = vmatprep.subr.mxu0 0.0
  %5734 = vmatpush1.msra.mxu0 0.0
  %5735 = vmatprep.subr.mxu0 0.0
  %5736 = vmatpush1.msra.mxu0 0.0
  %5737 = vmatprep.subr.mxu0 0.0
  %5738 = vmatpush1.msra.mxu0 0.0
  %5739 = vmatprep.subr.mxu0 0.0
  %5740 = vmatpush1.msra.mxu0 0.0
  %5741 = vmatprep.subr.mxu0 0.0
  %5742 = vmatpush1.msra.mxu0 0.0
  %5743 = vmatprep.subr.mxu0 0.0
  %5744 = vmatpush1.msra.mxu0 0.0
  %5745 = vmatprep.subr.mxu0 0.0
  %5746 = vmatpush1.msra.mxu0 0.0
  %5747 = vmatprep.mubr.f32.mxu0 0.0
  %5748 = vmatmul.mubr.f32.gmra.mrb[0].mxu0 %v5540
  %v5749 = vpop.f32.mrb[0].mxu0
  %v5750 = vpop.f32.mrb[0].mxu0
  %v5751 = vadd.f32 0.0, %v5750
  %5752 = vdwg.mxu0
  %5753 = vmatprep.subr.mxu0 %v5483
  %5754 = vmatpush1.msra.mxu0 %v5482
  %5755 = vmatprep.subr.mxu0 %v5491
  %5756 = vmatpush1.msra.mxu0 %v5490
  %5757 = vmatprep.subr.mxu0 %v5499
  %5758 = vmatpush1.msra.mxu0 %v5498
  %5759 = vmatprep.subr.mxu0 %v5507
  %5760 = vmatpush1.msra.mxu0 %v5506
  %5761 = vmatprep.subr.mxu0 0.0
  %5762 = vmatpush1.msra.mxu0 0.0
  %5763 = vmatprep.subr.mxu0 0.0
  %5764 = vmatpush1.msra.mxu0 0.0
  %5765 = vmatprep.subr.mxu0 0.0
  %5766 = vmatpush1.msra.mxu0 0.0
  %5767 = vmatprep.subr.mxu0 0.0
  %5768 = vmatpush1.msra.mxu0 0.0
  %5769 = vmatprep.subr.mxu0 0.0
  %5770 = vmatpush1.msra.mxu0 0.0
  %5771 = vmatprep.subr.mxu0 0.0
  %5772 = vmatpush1.msra.mxu0 0.0
  %5773 = vmatprep.subr.mxu0 0.0
  %5774 = vmatpush1.msra.mxu0 0.0
  %5775 = vmatprep.subr.mxu0 0.0
  %5776 = vmatpush1.msra.mxu0 0.0
  %5777 = vmatprep.subr.mxu0 0.0
  %5778 = vmatpush1.msra.mxu0 0.0
  %5779 = vmatprep.subr.mxu0 0.0
  %5780 = vmatpush1.msra.mxu0 0.0
  %5781 = vmatprep.subr.mxu0 0.0
  %5782 = vmatpush1.msra.mxu0 0.0
  %5783 = vmatprep.subr.mxu0 0.0
  %5784 = vmatpush1.msra.mxu0 0.0
  %5785 = vmatprep.subr.mxu0 0.0
  %5786 = vmatpush1.msra.mxu0 0.0
  %5787 = vmatprep.subr.mxu0 0.0
  %5788 = vmatpush1.msra.mxu0 0.0
  %5789 = vmatprep.subr.mxu0 0.0
  %5790 = vmatpush1.msra.mxu0 0.0
  %5791 = vmatprep.subr.mxu0 0.0
  %5792 = vmatpush1.msra.mxu0 0.0
  %5793 = vmatprep.subr.mxu0 0.0
  %5794 = vmatpush1.msra.mxu0 0.0
  %5795 = vmatprep.subr.mxu0 0.0
  %5796 = vmatpush1.msra.mxu0 0.0
  %5797 = vmatprep.subr.mxu0 0.0
  %5798 = vmatpush1.msra.mxu0 0.0
  %5799 = vmatprep.subr.mxu0 0.0
  %5800 = vmatpush1.msra.mxu0 0.0
  %5801 = vmatprep.subr.mxu0 0.0
  %5802 = vmatpush1.msra.mxu0 0.0
  %5803 = vmatprep.subr.mxu0 0.0
  %5804 = vmatpush1.msra.mxu0 0.0
  %5805 = vmatprep.subr.mxu0 0.0
  %5806 = vmatpush1.msra.mxu0 0.0
  %5807 = vmatprep.subr.mxu0 0.0
  %5808 = vmatpush1.msra.mxu0 0.0
  %5809 = vmatprep.subr.mxu0 0.0
  %5810 = vmatpush1.msra.mxu0 0.0
  %5811 = vmatprep.subr.mxu0 0.0
  %5812 = vmatpush1.msra.mxu0 0.0
  %5813 = vmatprep.subr.mxu0 0.0
  %5814 = vmatpush1.msra.mxu0 0.0
  %5815 = vmatprep.subr.mxu0 0.0
  %5816 = vmatpush1.msra.mxu0 0.0
  %5817 = vmatprep.mubr.f32.mxu0 0.0
  %5818 = vmatmul.mubr.f32.gmra.mrb[0].mxu0 %v5540
  %v5819 = vpop.f32.mrb[0].mxu0
  %v5820 = vadd.f32 0.0, %v5819
  %v5821 = vpop.f32.mrb[0].mxu0
  %v5822 = vadd.f32 0.0, %v5821
  %5823 = vdwg.mxu0
  %v5824 = vadd.f32 %v5321, %v5609
  %v5825 = vadd.f32 %v5322, %v5611
  %v5826 = vadd.f32 %v5323, %v5680
  %v5827 = vadd.f32 %v5324, %v5751
  %v5828 = vadd.f32 %v5325, %v5820
  %v5829 = vadd.f32 %v5326, %v5822
  %v5830 = vld [vmem:[%s1 + $0xc] sm:$0xf]
  %v5831 = vld [vmem:[%s0] sm:$0xff]
  %v5832 = vld [vmem:[%s0 + $0x8] sm:$0xff]
  %v5833 = vld [vmem:[%s0 + $0x10] sm:$0xff]
  %v5834 = vld [vmem:[%s0 + $0x18] sm:$0xff]
  %v5835 = vld [vmem:[%s0 + $0x20] sm:$0xff]
  %v5836 = vld [vmem:[%s0 + $0x28] sm:$0xff]
  %v5837 = vld [vmem:[%s0 + $0x30] sm:$0xff]
  %v5838 = vld [vmem:[%s0 + $0x38] sm:$0xff]
  %v5839 = vld [vmem:[%s0 + $0x40] sm:$0xff]
  %v5840 = vld [vmem:[%s0 + $0x50] sm:$0xff]
  %v5841 = vld [vmem:[%s0 + $0x58] sm:$0xff]
  %v5842 = vld [vmem:[%s0 + $0x60] sm:$0xff]
  %v5843 = vld [vmem:[%s0 + $0x68] sm:$0xff]
  %v5844 = vld [vmem:[%s0 + $0x70] sm:$0xff]
  %v5845 = vld [vmem:[%s0 + $0x78] sm:$0xff]
  %v5846 = vld [vmem:[%s0 + $0x80] sm:$0xff]
  %v5847 = vld [vmem:[%s0 + $0x88] sm:$0xff]
  %v5848 = vld [vmem:[%s0 + $0x90] sm:$0xff]
  %v5849 = vld [vmem:[%s0 + $0xa0] sm:$0xff]
  %v5850 = vld [vmem:[%s0 + $0xa8] sm:$0xff]
  %v5851 = vld [vmem:[%s0 + $0xb0] sm:$0xff]
  %v5852 = vld [vmem:[%s0 + $0xb8] sm:$0xff]
  %v5853 = vld [vmem:[%s0 + $0xc0] sm:$0xff]
  %v5854 = vld [vmem:[%s0 + $0xc8] sm:$0xff]
  %v5855 = vld [vmem:[%s0 + $0xd0] sm:$0xff]
  %v5856 = vld [vmem:[%s0 + $0xd8] sm:$0xff]
  %v5857 = vld [vmem:[%s0 + $0xe0] sm:$0xff]
  %v5858 = vld [vmem:[%s0 + $0xf0] sm:$0xff]
  %v5859 = vld [vmem:[%s0 + $0xf8] sm:$0xff]
  %v5860 = vld [vmem:[%s0 + $0x100] sm:$0xff]
  %v5861 = vld [vmem:[%s0 + $0x108] sm:$0xff]
  %v5862 = vld [vmem:[%s0 + $0x110] sm:$0xff]
  %v5863 = vld [vmem:[%s0 + $0x118] sm:$0xff]
  %v5864 = vld [vmem:[%s0 + $0x120] sm:$0xff]
  %v5865 = vld [vmem:[%s0 + $0x128] sm:$0xff]
  %v5866 = vld [vmem:[%s0 + $0x130] sm:$0xff]
  %5903 = vrot.lane.b32.xlu0 %v5831, 55
  %v5904 = vpop.permute.xlu0 %5903
  %5905 = vrot.lane.b32.xlu0 %v5832, 55
  %v5906 = vpop.permute.xlu0 %5905
  %5907 = vrot.lane.b32.xlu0 %v5833, 55
  %v5908 = vpop.permute.xlu0 %5907
  %5909 = vrot.lane.b32.xlu0 %v5834, 55
  %v5910 = vpop.permute.xlu0 %5909
  %5911 = vrot.lane.b32.xlu0 %v5835, 55
  %v5912 = vpop.permute.xlu0 %5911
  %5913 = vrot.lane.b32.xlu0 %v5836, 55
  %v5914 = vpop.permute.xlu0 %5913
  %5915 = vrot.lane.b32.xlu0 %v5837, 55
  %v5916 = vpop.permute.xlu0 %5915
  %5917 = vrot.lane.b32.xlu0 %v5838, 55
  %v5918 = vpop.permute.xlu0 %5917
  %5919 = vrot.lane.b32.xlu0 %v5839, 55
  %v5920 = vpop.permute.xlu0 %5919
  %5921 = vrot.lane.b32.xlu0 %v5840, 55
  %v5922 = vpop.permute.xlu0 %5921
  %5923 = vrot.lane.b32.xlu0 %v5841, 55
  %v5924 = vpop.permute.xlu0 %5923
  %5925 = vrot.lane.b32.xlu0 %v5842, 55
  %v5926 = vpop.permute.xlu0 %5925
  %5927 = vrot.lane.b32.xlu0 %v5843, 55
  %v5928 = vpop.permute.xlu0 %5927
  %5929 = vrot.lane.b32.xlu0 %v5844, 55
  %v5930 = vpop.permute.xlu0 %5929
  %5931 = vrot.lane.b32.xlu0 %v5845, 55
  %v5932 = vpop.permute.xlu0 %5931
  %5933 = vrot.lane.b32.xlu0 %v5846, 55
  %v5934 = vpop.permute.xlu0 %5933
  %5935 = vrot.lane.b32.xlu0 %v5847, 55
  %v5936 = vpop.permute.xlu0 %5935
  %5937 = vrot.lane.b32.xlu0 %v5848, 55
  %v5938 = vpop.permute.xlu0 %5937
  %5939 = vrot.lane.b32.xlu0 %v5849, 55
  %v5940 = vpop.permute.xlu0 %5939
  %5941 = vrot.lane.b32.xlu0 %v5850, 55
  %v5942 = vpop.permute.xlu0 %5941
  %5943 = vrot.lane.b32.xlu0 %v5851, 55
  %v5944 = vpop.permute.xlu0 %5943
  %5945 = vrot.lane.b32.xlu0 %v5852, 55
  %v5946 = vpop.permute.xlu0 %5945
  %5947 = vrot.lane.b32.xlu0 %v5853, 55
  %v5948 = vpop.permute.xlu0 %5947
  %5949 = vrot.lane.b32.xlu0 %v5854, 55
  %v5950 = vpop.permute.xlu0 %5949
  %5951 = vrot.lane.b32.xlu0 %v5855, 55
  %v5952 = vpop.permute.xlu0 %5951
  %5953 = vrot.lane.b32.xlu0 %v5856, 55
  %v5954 = vpop.permute.xlu0 %5953
  %5955 = vrot.lane.b32.xlu0 %v5857, 55
  %v5956 = vpop.permute.xlu0 %5955
  %5957 = vrot.lane.b32.xlu0 %v5858, 55
  %v5958 = vpop.permute.xlu0 %5957
  %5959 = vrot.lane.b32.xlu0 %v5859, 55
  %v5960 = vpop.permute.xlu0 %5959
  %5961 = vrot.lane.b32.xlu0 %v5860, 55
  %v5962 = vpop.permute.xlu0 %5961
  %5963 = vrot.lane.b32.xlu0 %v5861, 55
  %v5964 = vpop.permute.xlu0 %5963
  %5965 = vrot.lane.b32.xlu0 %v5862, 55
  %v5966 = vpop.permute.xlu0 %5965
  %5967 = vrot.lane.b32.xlu0 %v5863, 55
  %v5968 = vpop.permute.xlu0 %5967
  %5969 = vrot.lane.b32.xlu0 %v5864, 55
  %v5970 = vpop.permute.xlu0 %5969
  %5971 = vrot.lane.b32.xlu0 %v5865, 55
  %v5972 = vpop.permute.xlu0 %5971
  %5973 = vrot.lane.b32.xlu0 %v5866, 55
  %v5974 = vpop.permute.xlu0 %5973
  %vm5975 = vcmask 449536
  %v5976 = vsel %vm5975, %v5904, %v5906
  %v5977 = vsel %vm5975, %v5906, %v5908
  %v5978 = vsel %vm5975, %v5908, %v5910
  %v5979 = vsel %vm5975, %v5910, %v5912
  %v5980 = vsel %vm5975, %v5912, %v5914
  %v5981 = vsel %vm5975, %v5914, %v5916
  %v5982 = vsel %vm5975, %v5916, %v5918
  %v5983 = vsel %vm5975, %v5918, %v5920
  %v5984 = vsel %vm5975, %v5922, %v5924
  %v5985 = vsel %vm5975, %v5924, %v5926
  %v5986 = vsel %vm5975, %v5926, %v5928
  %v5987 = vsel %vm5975, %v5928, %v5930
  %v5988 = vsel %vm5975, %v5930, %v5932
  %v5989 = vsel %vm5975, %v5932, %v5934
  %v5990 = vsel %vm5975, %v5934, %v5936
  %v5991 = vsel %vm5975, %v5936, %v5938
  %v5992 = vsel %vm5975, %v5940, %v5942
  %v5993 = vsel %vm5975, %v5942, %v5944
  %v5994 = vsel %vm5975, %v5944, %v5946
  %v5995 = vsel %vm5975, %v5946, %v5948
  %v5996 = vsel %vm5975, %v5948, %v5950
  %v5997 = vsel %vm5975, %v5950, %v5952
  %v5998 = vsel %vm5975, %v5952, %v5954
  %v5999 = vsel %vm5975, %v5954, %v5956
  %v6000 = vsel %vm5975, %v5958, %v5960
  %v6001 = vsel %vm5975, %v5960, %v5962
  %v6002 = vsel %vm5975, %v5962, %v5964
  %v6003 = vsel %vm5975, %v5964, %v5966
  %v6004 = vsel %vm5975, %v5966, %v5968
  %v6005 = vsel %vm5975, %v5968, %v5970
  %v6006 = vsel %vm5975, %v5970, %v5972
  %v6007 = vsel %vm5975, %v5972, %v5974
  %v6041 = vsel %vm231, %v5830, 0
  %6043 = vmatprep.subr.mxu0 %v5977
  %6044 = vmatpush1.msra.mxu0 %v5976
  %6045 = vmatprep.subr.mxu0 %v5985
  %6046 = vmatpush1.msra.mxu0 %v5984
  %6047 = vmatprep.subr.mxu0 %v5993
  %6048 = vmatpush1.msra.mxu0 %v5992
  %6049 = vmatprep.subr.mxu0 %v6001
  %6050 = vmatpush1.msra.mxu0 %v6000
  %6051 = vmatprep.subr.mxu0 0.0
  %6052 = vmatpush1.msra.mxu0 0.0
  %6053 = vmatprep.subr.mxu0 0.0
  %6054 = vmatpush1.msra.mxu0 0.0
  %6055 = vmatprep.subr.mxu0 0.0
  %6056 = vmatpush1.msra.mxu0 0.0
  %6057 = vmatprep.subr.mxu0 0.0
  %6058 = vmatpush1.msra.mxu0 0.0
  %6059 = vmatprep.subr.mxu0 0.0
  %6060 = vmatpush1.msra.mxu0 0.0
  %6061 = vmatprep.subr.mxu0 0.0
  %6062 = vmatpush1.msra.mxu0 0.0
  %6063 = vmatprep.subr.mxu0 0.0
  %6064 = vmatpush1.msra.mxu0 0.0
  %6065 = vmatprep.subr.mxu0 0.0
  %6066 = vmatpush1.msra.mxu0 0.0
  %6067 = vmatprep.subr.mxu0 0.0
  %6068 = vmatpush1.msra.mxu0 0.0
  %6069 = vmatprep.subr.mxu0 0.0
  %6070 = vmatpush1.msra.mxu0 0.0
  %6071 = vmatprep.subr.mxu0 0.0
  %6072 = vmatpush1.msra.mxu0 0.0
  %6073 = vmatprep.subr.mxu0 0.0
  %6074 = vmatpush1.msra.mxu0 0.0
  %6075 = vmatprep.subr.mxu0 0.0
  %6076 = vmatpush1.msra.mxu0 0.0
  %6077 = vmatprep.subr.mxu0 0.0
  %6078 = vmatpush1.msra.mxu0 0.0
  %6079 = vmatprep.subr.mxu0 0.0
  %6080 = vmatpush1.msra.mxu0 0.0
  %6081 = vmatprep.subr.mxu0 0.0
  %6082 = vmatpush1.msra.mxu0 0.0
  %6083 = vmatprep.subr.mxu0 0.0
  %6084 = vmatpush1.msra.mxu0 0.0
  %6085 = vmatprep.subr.mxu0 0.0
  %6086 = vmatpush1.msra.mxu0 0.0
  %6087 = vmatprep.subr.mxu0 0.0
  %6088 = vmatpush1.msra.mxu0 0.0
  %6089 = vmatprep.subr.mxu0 0.0
  %6090 = vmatpush1.msra.mxu0 0.0
  %6091 = vmatprep.subr.mxu0 0.0
  %6092 = vmatpush1.msra.mxu0 0.0
  %6093 = vmatprep.subr.mxu0 0.0
  %6094 = vmatpush1.msra.mxu0 0.0
  %6095 = vmatprep.subr.mxu0 0.0
  %6096 = vmatpush1.msra.mxu0 0.0
  %6097 = vmatprep.subr.mxu0 0.0
  %6098 = vmatpush1.msra.mxu0 0.0
  %6099 = vmatprep.subr.mxu0 0.0
  %6100 = vmatpush1.msra.mxu0 0.0
  %6101 = vmatprep.subr.mxu0 0.0
  %6102 = vmatpush1.msra.mxu0 0.0
  %6103 = vmatprep.subr.mxu0 0.0
  %6104 = vmatpush1.msra.mxu0 0.0
  %6105 = vmatprep.subr.mxu0 0.0
  %6106 = vmatpush1.msra.mxu0 0.0
  %6107 = vmatprep.mubr.f32.mxu0 0.0
  %6108 = vmatmul.mubr.f32.gmra.mrb[0].mxu0 %v6041
  %v6109 = vpop.f32.mrb[0].mxu0
  %v6110 = vadd.f32 0.0, %v6109
  %v6111 = vpop.f32.mrb[0].mxu0
  %v6112 = vadd.f32 0.0, %v6111
  %6113 = vdwg.mxu0
  %6114 = vmatprep.subr.mxu0 %v5979
  %6115 = vmatpush1.msra.mxu0 %v5978
  %6116 = vmatprep.subr.mxu0 %v5987
  %6117 = vmatpush1.msra.mxu0 %v5986
  %6118 = vmatprep.subr.mxu0 %v5995
  %6119 = vmatpush1.msra.mxu0 %v5994
  %6120 = vmatprep.subr.mxu0 %v6003
  %6121 = vmatpush1.msra.mxu0 %v6002
  %6122 = vmatprep.subr.mxu0 0.0
  %6123 = vmatpush1.msra.mxu0 0.0
  %6124 = vmatprep.subr.mxu0 0.0
  %6125 = vmatpush1.msra.mxu0 0.0
  %6126 = vmatprep.subr.mxu0 0.0
  %6127 = vmatpush1.msra.mxu0 0.0
  %6128 = vmatprep.subr.mxu0 0.0
  %6129 = vmatpush1.msra.mxu0 0.0
  %6130 = vmatprep.subr.mxu0 0.0
  %6131 = vmatpush1.msra.mxu0 0.0
  %6132 = vmatprep.subr.mxu0 0.0
  %6133 = vmatpush1.msra.mxu0 0.0
  %6134 = vmatprep.subr.mxu0 0.0
  %6135 = vmatpush1.msra.mxu0 0.0
  %6136 = vmatprep.subr.mxu0 0.0
  %6137 = vmatpush1.msra.mxu0 0.0
  %6138 = vmatprep.subr.mxu0 0.0
  %6139 = vmatpush1.msra.mxu0 0.0
  %6140 = vmatprep.subr.mxu0 0.0
  %6141 = vmatpush1.msra.mxu0 0.0
  %6142 = vmatprep.subr.mxu0 0.0
  %6143 = vmatpush1.msra.mxu0 0.0
  %6144 = vmatprep.subr.mxu0 0.0
  %6145 = vmatpush1.msra.mxu0 0.0
  %6146 = vmatprep.subr.mxu0 0.0
  %6147 = vmatpush1.msra.mxu0 0.0
  %6148 = vmatprep.subr.mxu0 0.0
  %6149 = vmatpush1.msra.mxu0 0.0
  %6150 = vmatprep.subr.mxu0 0.0
  %6151 = vmatpush1.msra.mxu0 0.0
  %6152 = vmatprep.subr.mxu0 0.0
  %6153 = vmatpush1.msra.mxu0 0.0
  %6154 = vmatprep.subr.mxu0 0.0
  %6155 = vmatpush1.msra.mxu0 0.0
  %6156 = vmatprep.subr.mxu0 0.0
  %6157 = vmatpush1.msra.mxu0 0.0
  %6158 = vmatprep.subr.mxu0 0.0
  %6159 = vmatpush1.msra.mxu0 0.0
  %6160 = vmatprep.subr.mxu0 0.0
  %6161 = vmatpush1.msra.mxu0 0.0
  %6162 = vmatprep.subr.mxu0 0.0
  %6163 = vmatpush1.msra.mxu0 0.0
  %6164 = vmatprep.subr.mxu0 0.0
  %6165 = vmatpush1.msra.mxu0 0.0
  %6166 = vmatprep.subr.mxu0 0.0
  %6167 = vmatpush1.msra.mxu0 0.0
  %6168 = vmatprep.subr.mxu0 0.0
  %6169 = vmatpush1.msra.mxu0 0.0
  %6170 = vmatprep.subr.mxu0 0.0
  %6171 = vmatpush1.msra.mxu0 0.0
  %6172 = vmatprep.subr.mxu0 0.0
  %6173 = vmatpush1.msra.mxu0 0.0
  %6174 = vmatprep.subr.mxu0 0.0
  %6175 = vmatpush1.msra.mxu0 0.0
  %6176 = vmatprep.subr.mxu0 0.0
  %6177 = vmatpush1.msra.mxu0 0.0
  %6178 = vmatprep.mubr.f32.mxu0 0.0
  %6179 = vmatmul.mubr.f32.gmra.mrb[0].mxu0 %v6041
  %v6180 = vpop.f32.mrb[0].mxu0
  %v6181 = vadd.f32 0.0, %v6180
  %v6182 = vpop.f32.mrb[0].mxu0
  %6183 = vdwg.mxu0
  %6184 = vmatprep.subr.mxu0 %v5981
  %6185 = vmatpush1.msra.mxu0 %v5980
  %6186 = vmatprep.subr.mxu0 %v5989
  %6187 = vmatpush1.msra.mxu0 %v5988
  %6188 = vmatprep.subr.mxu0 %v5997
  %6189 = vmatpush1.msra.mxu0 %v5996
  %6190 = vmatprep.subr.mxu0 %v6005
  %6191 = vmatpush1.msra.mxu0 %v6004
  %6192 = vmatprep.subr.mxu0 0.0
  %6193 = vmatpush1.msra.mxu0 0.0
  %6194 = vmatprep.subr.mxu0 0.0
  %6195 = vmatpush1.msra.mxu0 0.0
  %6196 = vmatprep.subr.mxu0 0.0
  %6197 = vmatpush1.msra.mxu0 0.0
  %6198 = vmatprep.subr.mxu0 0.0
  %6199 = vmatpush1.msra.mxu0 0.0
  %6200 = vmatprep.subr.mxu0 0.0
  %6201 = vmatpush1.msra.mxu0 0.0
  %6202 = vmatprep.subr.mxu0 0.0
  %6203 = vmatpush1.msra.mxu0 0.0
  %6204 = vmatprep.subr.mxu0 0.0
  %6205 = vmatpush1.msra.mxu0 0.0
  %6206 = vmatprep.subr.mxu0 0.0
  %6207 = vmatpush1.msra.mxu0 0.0
  %6208 = vmatprep.subr.mxu0 0.0
  %6209 = vmatpush1.msra.mxu0 0.0
  %6210 = vmatprep.subr.mxu0 0.0
  %6211 = vmatpush1.msra.mxu0 0.0
  %6212 = vmatprep.subr.mxu0 0.0
  %6213 = vmatpush1.msra.mxu0 0.0
  %6214 = vmatprep.subr.mxu0 0.0
  %6215 = vmatpush1.msra.mxu0 0.0
  %6216 = vmatprep.subr.mxu0 0.0
  %6217 = vmatpush1.msra.mxu0 0.0
  %6218 = vmatprep.subr.mxu0 0.0
  %6219 = vmatpush1.msra.mxu0 0.0
  %6220 = vmatprep.subr.mxu0 0.0
  %6221 = vmatpush1.msra.mxu0 0.0
  %6222 = vmatprep.subr.mxu0 0.0
  %6223 = vmatpush1.msra.mxu0 0.0
  %6224 = vmatprep.subr.mxu0 0.0
  %6225 = vmatpush1.msra.mxu0 0.0
  %6226 = vmatprep.subr.mxu0 0.0
  %6227 = vmatpush1.msra.mxu0 0.0
  %6228 = vmatprep.subr.mxu0 0.0
  %6229 = vmatpush1.msra.mxu0 0.0
  %6230 = vmatprep.subr.mxu0 0.0
  %6231 = vmatpush1.msra.mxu0 0.0
  %6232 = vmatprep.subr.mxu0 0.0
  %6233 = vmatpush1.msra.mxu0 0.0
  %6234 = vmatprep.subr.mxu0 0.0
  %6235 = vmatpush1.msra.mxu0 0.0
  %6236 = vmatprep.subr.mxu0 0.0
  %6237 = vmatpush1.msra.mxu0 0.0
  %6238 = vmatprep.subr.mxu0 0.0
  %6239 = vmatpush1.msra.mxu0 0.0
  %6240 = vmatprep.subr.mxu0 0.0
  %6241 = vmatpush1.msra.mxu0 0.0
  %6242 = vmatprep.subr.mxu0 0.0
  %6243 = vmatpush1.msra.mxu0 0.0
  %6244 = vmatprep.subr.mxu0 0.0
  %6245 = vmatpush1.msra.mxu0 0.0
  %6246 = vmatprep.subr.mxu0 0.0
  %6247 = vmatpush1.msra.mxu0 0.0
  %6248 = vmatprep.mubr.f32.mxu0 0.0
  %6249 = vmatmul.mubr.f32.gmra.mrb[0].mxu0 %v6041
  %v6250 = vpop.f32.mrb[0].mxu0
  %v6251 = vpop.f32.mrb[0].mxu0
  %v6252 = vadd.f32 0.0, %v6251
  %6253 = vdwg.mxu0
  %6254 = vmatprep.subr.mxu0 %v5983
  %6255 = vmatpush1.msra.mxu0 %v5982
  %6256 = vmatprep.subr.mxu0 %v5991
  %6257 = vmatpush1.msra.mxu0 %v5990
  %6258 = vmatprep.subr.mxu0 %v5999
  %6259 = vmatpush1.msra.mxu0 %v5998
  %6260 = vmatprep.subr.mxu0 %v6007
  %6261 = vmatpush1.msra.mxu0 %v6006
  %6262 = vmatprep.subr.mxu0 0.0
  %6263 = vmatpush1.msra.mxu0 0.0
  %6264 = vmatprep.subr.mxu0 0.0
  %6265 = vmatpush1.msra.mxu0 0.0
  %6266 = vmatprep.subr.mxu0 0.0
  %6267 = vmatpush1.msra.mxu0 0.0
  %6268 = vmatprep.subr.mxu0 0.0
  %6269 = vmatpush1.msra.mxu0 0.0
  %6270 = vmatprep.subr.mxu0 0.0
  %6271 = vmatpush1.msra.mxu0 0.0
  %6272 = vmatprep.subr.mxu0 0.0
  %6273 = vmatpush1.msra.mxu0 0.0
  %6274 = vmatprep.subr.mxu0 0.0
  %6275 = vmatpush1.msra.mxu0 0.0
  %6276 = vmatprep.subr.mxu0 0.0
  %6277 = vmatpush1.msra.mxu0 0.0
  %6278 = vmatprep.subr.mxu0 0.0
  %6279 = vmatpush1.msra.mxu0 0.0
  %6280 = vmatprep.subr.mxu0 0.0
  %6281 = vmatpush1.msra.mxu0 0.0
  %6282 = vmatprep.subr.mxu0 0.0
  %6283 = vmatpush1.msra.mxu0 0.0
  %6284 = vmatprep.subr.mxu0 0.0
  %6285 = vmatpush1.msra.mxu0 0.0
  %6286 = vmatprep.subr.mxu0 0.0
  %6287 = vmatpush1.msra.mxu0 0.0
  %6288 = vmatprep.subr.mxu0 0.0
  %6289 = vmatpush1.msra.mxu0 0.0
  %6290 = vmatprep.subr.mxu0 0.0
  %6291 = vmatpush1.msra.mxu0 0.0
  %6292 = vmatprep.subr.mxu0 0.0
  %6293 = vmatpush1.msra.mxu0 0.0
  %6294 = vmatprep.subr.mxu0 0.0
  %6295 = vmatpush1.msra.mxu0 0.0
  %6296 = vmatprep.subr.mxu0 0.0
  %6297 = vmatpush1.msra.mxu0 0.0
  %6298 = vmatprep.subr.mxu0 0.0
  %6299 = vmatpush1.msra.mxu0 0.0
  %6300 = vmatprep.subr.mxu0 0.0
  %6301 = vmatpush1.msra.mxu0 0.0
  %6302 = vmatprep.subr.mxu0 0.0
  %6303 = vmatpush1.msra.mxu0 0.0
  %6304 = vmatprep.subr.mxu0 0.0
  %6305 = vmatpush1.msra.mxu0 0.0
  %6306 = vmatprep.subr.mxu0 0.0
  %6307 = vmatpush1.msra.mxu0 0.0
  %6308 = vmatprep.subr.mxu0 0.0
  %6309 = vmatpush1.msra.mxu0 0.0
  %6310 = vmatprep.subr.mxu0 0.0
  %6311 = vmatpush1.msra.mxu0 0.0
  %6312 = vmatprep.subr.mxu0 0.0
  %6313 = vmatpush1.msra.mxu0 0.0
  %6314 = vmatprep.subr.mxu0 0.0
  %6315 = vmatpush1.msra.mxu0 0.0
  %6316 = vmatprep.subr.mxu0 0.0
  %6317 = vmatpush1.msra.mxu0 0.0
  %6318 = vmatprep.mubr.f32.mxu0 0.0
  %6319 = vmatmul.mubr.f32.gmra.mrb[0].mxu0 %v6041
  %v6320 = vpop.f32.mrb[0].mxu0
  %v6321 = vadd.f32 0.0, %v6320
  %v6322 = vpop.f32.mrb[0].mxu0
  %v6323 = vadd.f32 0.0, %v6322
  %6324 = vdwg.mxu0
  %v6325 = vadd.f32 %v5824, %v6110
  %v6326 = vadd.f32 %v5825, %v6112
  %v6327 = vadd.f32 %v5826, %v6181
  %v6328 = vadd.f32 %v5827, %v6252
  %v6329 = vadd.f32 %v5828, %v6321
  %v6330 = vadd.f32 %v5829, %v6323
  %6331 = vrot.lane.b32.xlu0 %v5830, 96
  %v6332 = vpop.permute.xlu0 %6331
  %v6333 = vsel %vm231, %v6332, 0
  %6335 = vmatprep.subr.mxu0 %v2105
  %6336 = vmatpush1.msra.mxu0 %v2104
  %6337 = vmatprep.subr.mxu0 %v2113
  %6338 = vmatpush1.msra.mxu0 %v2112
  %6339 = vmatprep.subr.mxu0 %v2121
  %6340 = vmatpush1.msra.mxu0 %v2120
  %6341 = vmatprep.subr.mxu0 %v2129
  %6342 = vmatpush1.msra.mxu0 %v2128
  %6343 = vmatprep.subr.mxu0 0.0
  %6344 = vmatpush1.msra.mxu0 0.0
  %6345 = vmatprep.subr.mxu0 0.0
  %6346 = vmatpush1.msra.mxu0 0.0
  %6347 = vmatprep.subr.mxu0 0.0
  %6348 = vmatpush1.msra.mxu0 0.0
  %6349 = vmatprep.subr.mxu0 0.0
  %6350 = vmatpush1.msra.mxu0 0.0
  %6351 = vmatprep.subr.mxu0 0.0
  %6352 = vmatpush1.msra.mxu0 0.0
  %6353 = vmatprep.subr.mxu0 0.0
  %6354 = vmatpush1.msra.mxu0 0.0
  %6355 = vmatprep.subr.mxu0 0.0
  %6356 = vmatpush1.msra.mxu0 0.0
  %6357 = vmatprep.subr.mxu0 0.0
  %6358 = vmatpush1.msra.mxu0 0.0
  %6359 = vmatprep.subr.mxu0 0.0
  %6360 = vmatpush1.msra.mxu0 0.0
  %6361 = vmatprep.subr.mxu0 0.0
  %6362 = vmatpush1.msra.mxu0 0.0
  %6363 = vmatprep.subr.mxu0 0.0
  %6364 = vmatpush1.msra.mxu0 0.0
  %6365 = vmatprep.subr.mxu0 0.0
  %6366 = vmatpush1.msra.mxu0 0.0
  %6367 = vmatprep.subr.mxu0 0.0
  %6368 = vmatpush1.msra.mxu0 0.0
  %6369 = vmatprep.subr.mxu0 0.0
  %6370 = vmatpush1.msra.mxu0 0.0
  %6371 = vmatprep.subr.mxu0 0.0
  %6372 = vmatpush1.msra.mxu0 0.0
  %6373 = vmatprep.subr.mxu0 0.0
  %6374 = vmatpush1.msra.mxu0 0.0
  %6375 = vmatprep.subr.mxu0 0.0
  %6376 = vmatpush1.msra.mxu0 0.0
  %6377 = vmatprep.subr.mxu0 0.0
  %6378 = vmatpush1.msra.mxu0 0.0
  %6379 = vmatprep.subr.mxu0 0.0
  %6380 = vmatpush1.msra.mxu0 0.0
  %6381 = vmatprep.subr.mxu0 0.0
  %6382 = vmatpush1.msra.mxu0 0.0
  %6383 = vmatprep.subr.mxu0 0.0
  %6384 = vmatpush1.msra.mxu0 0.0
  %6385 = vmatprep.subr.mxu0 0.0
  %6386 = vmatpush1.msra.mxu0 0.0
  %6387 = vmatprep.subr.mxu0 0.0
  %6388 = vmatpush1.msra.mxu0 0.0
  %6389 = vmatprep.subr.mxu0 0.0
  %6390 = vmatpush1.msra.mxu0 0.0
  %6391 = vmatprep.subr.mxu0 0.0
  %6392 = vmatpush1.msra.mxu0 0.0
  %6393 = vmatprep.subr.mxu0 0.0
  %6394 = vmatpush1.msra.mxu0 0.0
  %6395 = vmatprep.subr.mxu0 0.0
  %6396 = vmatpush1.msra.mxu0 0.0
  %6397 = vmatprep.subr.mxu0 0.0
  %6398 = vmatpush1.msra.mxu0 0.0
  %6399 = vmatprep.mubr.f32.mxu0 0.0
  %6400 = vmatmul.mubr.f32.gmra.mrb[0].mxu0 %v6333
  %v6401 = vpop.f32.mrb[0].mxu0
  %v6402 = vadd.f32 0.0, %v6401
  %v6403 = vpop.f32.mrb[0].mxu0
  %v6404 = vadd.f32 0.0, %v6403
  %6405 = vdwg.mxu0
  %6406 = vmatprep.subr.mxu0 %v2107
  %6407 = vmatpush1.msra.mxu0 %v2106
  %6408 = vmatprep.subr.mxu0 %v2115
  %6409 = vmatpush1.msra.mxu0 %v2114
  %6410 = vmatprep.subr.mxu0 %v2123
  %6411 = vmatpush1.msra.mxu0 %v2122
  %6412 = vmatprep.subr.mxu0 %v2131
  %6413 = vmatpush1.msra.mxu0 %v2130
  %6414 = vmatprep.subr.mxu0 0.0
  %6415 = vmatpush1.msra.mxu0 0.0
  %6416 = vmatprep.subr.mxu0 0.0
  %6417 = vmatpush1.msra.mxu0 0.0
  %6418 = vmatprep.subr.mxu0 0.0
  %6419 = vmatpush1.msra.mxu0 0.0
  %6420 = vmatprep.subr.mxu0 0.0
  %6421 = vmatpush1.msra.mxu0 0.0
  %6422 = vmatprep.subr.mxu0 0.0
  %6423 = vmatpush1.msra.mxu0 0.0
  %6424 = vmatprep.subr.mxu0 0.0
  %6425 = vmatpush1.msra.mxu0 0.0
  %6426 = vmatprep.subr.mxu0 0.0
  %6427 = vmatpush1.msra.mxu0 0.0
  %6428 = vmatprep.subr.mxu0 0.0
  %6429 = vmatpush1.msra.mxu0 0.0
  %6430 = vmatprep.subr.mxu0 0.0
  %6431 = vmatpush1.msra.mxu0 0.0
  %6432 = vmatprep.subr.mxu0 0.0
  %6433 = vmatpush1.msra.mxu0 0.0
  %6434 = vmatprep.subr.mxu0 0.0
  %6435 = vmatpush1.msra.mxu0 0.0
  %6436 = vmatprep.subr.mxu0 0.0
  %6437 = vmatpush1.msra.mxu0 0.0
  %6438 = vmatprep.subr.mxu0 0.0
  %6439 = vmatpush1.msra.mxu0 0.0
  %6440 = vmatprep.subr.mxu0 0.0
  %6441 = vmatpush1.msra.mxu0 0.0
  %6442 = vmatprep.subr.mxu0 0.0
  %6443 = vmatpush1.msra.mxu0 0.0
  %6444 = vmatprep.subr.mxu0 0.0
  %6445 = vmatpush1.msra.mxu0 0.0
  %6446 = vmatprep.subr.mxu0 0.0
  %6447 = vmatpush1.msra.mxu0 0.0
  %6448 = vmatprep.subr.mxu0 0.0
  %6449 = vmatpush1.msra.mxu0 0.0
  %6450 = vmatprep.subr.mxu0 0.0
  %6451 = vmatpush1.msra.mxu0 0.0
  %6452 = vmatprep.subr.mxu0 0.0
  %6453 = vmatpush1.msra.mxu0 0.0
  %6454 = vmatprep.subr.mxu0 0.0
  %6455 = vmatpush1.msra.mxu0 0.0
  %6456 = vmatprep.subr.mxu0 0.0
  %6457 = vmatpush1.msra.mxu0 0.0
  %6458 = vmatprep.subr.mxu0 0.0
  %6459 = vmatpush1.msra.mxu0 0.0
  %6460 = vmatprep.subr.mxu0 0.0
  %6461 = vmatpush1.msra.mxu0 0.0
  %6462 = vmatprep.subr.mxu0 0.0
  %6463 = vmatpush1.msra.mxu0 0.0
  %6464 = vmatprep.subr.mxu0 0.0
  %6465 = vmatpush1.msra.mxu0 0.0
  %6466 = vmatprep.subr.mxu0 0.0
  %6467 = vmatpush1.msra.mxu0 0.0
  %6468 = vmatprep.subr.mxu0 0.0
  %6469 = vmatpush1.msra.mxu0 0.0
  %6470 = vmatprep.mubr.f32.mxu0 0.0
  %6471 = vmatmul.mubr.f32.gmra.mrb[0].mxu0 %v6333
  %v6472 = vpop.f32.mrb[0].mxu0
  %v6473 = vadd.f32 0.0, %v6472
  %v6474 = vpop.f32.mrb[0].mxu0
  %6475 = vdwg.mxu0
  %6476 = vmatprep.subr.mxu0 %v2109
  %6477 = vmatpush1.msra.mxu0 %v2108
  %6478 = vmatprep.subr.mxu0 %v2117
  %6479 = vmatpush1.msra.mxu0 %v2116
  %6480 = vmatprep.subr.mxu0 %v2125
  %6481 = vmatpush1.msra.mxu0 %v2124
  %6482 = vmatprep.subr.mxu0 %v2133
  %6483 = vmatpush1.msra.mxu0 %v2132
  %6484 = vmatprep.subr.mxu0 0.0
  %6485 = vmatpush1.msra.mxu0 0.0
  %6486 = vmatprep.subr.mxu0 0.0
  %6487 = vmatpush1.msra.mxu0 0.0
  %6488 = vmatprep.subr.mxu0 0.0
  %6489 = vmatpush1.msra.mxu0 0.0
  %6490 = vmatprep.subr.mxu0 0.0
  %6491 = vmatpush1.msra.mxu0 0.0
  %6492 = vmatprep.subr.mxu0 0.0
  %6493 = vmatpush1.msra.mxu0 0.0
  %6494 = vmatprep.subr.mxu0 0.0
  %6495 = vmatpush1.msra.mxu0 0.0
  %6496 = vmatprep.subr.mxu0 0.0
  %6497 = vmatpush1.msra.mxu0 0.0
  %6498 = vmatprep.subr.mxu0 0.0
  %6499 = vmatpush1.msra.mxu0 0.0
  %6500 = vmatprep.subr.mxu0 0.0
  %6501 = vmatpush1.msra.mxu0 0.0
  %6502 = vmatprep.subr.mxu0 0.0
  %6503 = vmatpush1.msra.mxu0 0.0
  %6504 = vmatprep.subr.mxu0 0.0
  %6505 = vmatpush1.msra.mxu0 0.0
  %6506 = vmatprep.subr.mxu0 0.0
  %6507 = vmatpush1.msra.mxu0 0.0
  %6508 = vmatprep.subr.mxu0 0.0
  %6509 = vmatpush1.msra.mxu0 0.0
  %6510 = vmatprep.subr.mxu0 0.0
  %6511 = vmatpush1.msra.mxu0 0.0
  %6512 = vmatprep.subr.mxu0 0.0
  %6513 = vmatpush1.msra.mxu0 0.0
  %6514 = vmatprep.subr.mxu0 0.0
  %6515 = vmatpush1.msra.mxu0 0.0
  %6516 = vmatprep.subr.mxu0 0.0
  %6517 = vmatpush1.msra.mxu0 0.0
  %6518 = vmatprep.subr.mxu0 0.0
  %6519 = vmatpush1.msra.mxu0 0.0
  %6520 = vmatprep.subr.mxu0 0.0
  %6521 = vmatpush1.msra.mxu0 0.0
  %6522 = vmatprep.subr.mxu0 0.0
  %6523 = vmatpush1.msra.mxu0 0.0
  %6524 = vmatprep.subr.mxu0 0.0
  %6525 = vmatpush1.msra.mxu0 0.0
  %6526 = vmatprep.subr.mxu0 0.0
  %6527 = vmatpush1.msra.mxu0 0.0
  %6528 = vmatprep.subr.mxu0 0.0
  %6529 = vmatpush1.msra.mxu0 0.0
  %6530 = vmatprep.subr.mxu0 0.0
  %6531 = vmatpush1.msra.mxu0 0.0
  %6532 = vmatprep.subr.mxu0 0.0
  %6533 = vmatpush1.msra.mxu0 0.0
  %6534 = vmatprep.subr.mxu0 0.0
  %6535 = vmatpush1.msra.mxu0 0.0
  %6536 = vmatprep.subr.mxu0 0.0
  %6537 = vmatpush1.msra.mxu0 0.0
  %6538 = vmatprep.subr.mxu0 0.0
  %6539 = vmatpush1.msra.mxu0 0.0
  %6540 = vmatprep.mubr.f32.mxu0 0.0
  %6541 = vmatmul.mubr.f32.gmra.mrb[0].mxu0 %v6333
  %v6542 = vpop.f32.mrb[0].mxu0
  %v6543 = vpop.f32.mrb[0].mxu0
  %v6544 = vadd.f32 0.0, %v6543
  %6545 = vdwg.mxu0
  %6546 = vmatprep.subr.mxu0 %v2111
  %6547 = vmatpush1.msra.mxu0 %v2110
  %6548 = vmatprep.subr.mxu0 %v2119
  %6549 = vmatpush1.msra.mxu0 %v2118
  %6550 = vmatprep.subr.mxu0 %v2127
  %6551 = vmatpush1.msra.mxu0 %v2126
  %6552 = vmatprep.subr.mxu0 %v2135
  %6553 = vmatpush1.msra.mxu0 %v2134
  %6554 = vmatprep.subr.mxu0 0.0
  %6555 = vmatpush1.msra.mxu0 0.0
  %6556 = vmatprep.subr.mxu0 0.0
  %6557 = vmatpush1.msra.mxu0 0.0
  %6558 = vmatprep.subr.mxu0 0.0
  %6559 = vmatpush1.msra.mxu0 0.0
  %6560 = vmatprep.subr.mxu0 0.0
  %6561 = vmatpush1.msra.mxu0 0.0
  %6562 = vmatprep.subr.mxu0 0.0
  %6563 = vmatpush1.msra.mxu0 0.0
  %6564 = vmatprep.subr.mxu0 0.0
  %6565 = vmatpush1.msra.mxu0 0.0
  %6566 = vmatprep.subr.mxu0 0.0
  %6567 = vmatpush1.msra.mxu0 0.0
  %6568 = vmatprep.subr.mxu0 0.0
  %6569 = vmatpush1.msra.mxu0 0.0
  %6570 = vmatprep.subr.mxu0 0.0
  %6571 = vmatpush1.msra.mxu0 0.0
  %6572 = vmatprep.subr.mxu0 0.0
  %6573 = vmatpush1.msra.mxu0 0.0
  %6574 = vmatprep.subr.mxu0 0.0
  %6575 = vmatpush1.msra.mxu0 0.0
  %6576 = vmatprep.subr.mxu0 0.0
  %6577 = vmatpush1.msra.mxu0 0.0
  %6578 = vmatprep.subr.mxu0 0.0
  %6579 = vmatpush1.msra.mxu0 0.0
  %6580 = vmatprep.subr.mxu0 0.0
  %6581 = vmatpush1.msra.mxu0 0.0
  %6582 = vmatprep.subr.mxu0 0.0
  %6583 = vmatpush1.msra.mxu0 0.0
  %6584 = vmatprep.subr.mxu0 0.0
  %6585 = vmatpush1.msra.mxu0 0.0
  %6586 = vmatprep.subr.mxu0 0.0
  %6587 = vmatpush1.msra.mxu0 0.0
  %6588 = vmatprep.subr.mxu0 0.0
  %6589 = vmatpush1.msra.mxu0 0.0
  %6590 = vmatprep.subr.mxu0 0.0
  %6591 = vmatpush1.msra.mxu0 0.0
  %6592 = vmatprep.subr.mxu0 0.0
  %6593 = vmatpush1.msra.mxu0 0.0
  %6594 = vmatprep.subr.mxu0 0.0
  %6595 = vmatpush1.msra.mxu0 0.0
  %6596 = vmatprep.subr.mxu0 0.0
  %6597 = vmatpush1.msra.mxu0 0.0
  %6598 = vmatprep.subr.mxu0 0.0
  %6599 = vmatpush1.msra.mxu0 0.0
  %6600 = vmatprep.subr.mxu0 0.0
  %6601 = vmatpush1.msra.mxu0 0.0
  %6602 = vmatprep.subr.mxu0 0.0
  %6603 = vmatpush1.msra.mxu0 0.0
  %6604 = vmatprep.subr.mxu0 0.0
  %6605 = vmatpush1.msra.mxu0 0.0
  %6606 = vmatprep.subr.mxu0 0.0
  %6607 = vmatpush1.msra.mxu0 0.0
  %6608 = vmatprep.subr.mxu0 0.0
  %6609 = vmatpush1.msra.mxu0 0.0
  %6610 = vmatprep.mubr.f32.mxu0 0.0
  %6611 = vmatmul.mubr.f32.gmra.mrb[0].mxu0 %v6333
  %v6612 = vpop.f32.mrb[0].mxu0
  %v6613 = vadd.f32 0.0, %v6612
  %v6614 = vpop.f32.mrb[0].mxu0
  %v6615 = vadd.f32 0.0, %v6614
  %6616 = vdwg.mxu0
  %v6617 = vadd.f32 %v6325, %v6402
  %v6618 = vadd.f32 %v6326, %v6404
  %v6619 = vadd.f32 %v6327, %v6473
  %v6620 = vadd.f32 %v6328, %v6544
  %v6621 = vadd.f32 %v6329, %v6613
  %v6622 = vadd.f32 %v6330, %v6615
  %v6623 = vld [vmem:[%s1 + $0xc] sm:$0xf]
  %v6624 = vld [vmem:[%s0] sm:$0xff]
  %v6625 = vld [vmem:[%s0 + $0x8] sm:$0xff]
  %v6626 = vld [vmem:[%s0 + $0x10] sm:$0xff]
  %v6627 = vld [vmem:[%s0 + $0x18] sm:$0xff]
  %v6628 = vld [vmem:[%s0 + $0x20] sm:$0xff]
  %v6629 = vld [vmem:[%s0 + $0x28] sm:$0xff]
  %v6630 = vld [vmem:[%s0 + $0x30] sm:$0xff]
  %v6631 = vld [vmem:[%s0 + $0x38] sm:$0xff]
  %v6632 = vld [vmem:[%s0 + $0x40] sm:$0xff]
  %v6633 = vld [vmem:[%s0 + $0x50] sm:$0xff]
  %v6634 = vld [vmem:[%s0 + $0x58] sm:$0xff]
  %v6635 = vld [vmem:[%s0 + $0x60] sm:$0xff]
  %v6636 = vld [vmem:[%s0 + $0x68] sm:$0xff]
  %v6637 = vld [vmem:[%s0 + $0x70] sm:$0xff]
  %v6638 = vld [vmem:[%s0 + $0x78] sm:$0xff]
  %v6639 = vld [vmem:[%s0 + $0x80] sm:$0xff]
  %v6640 = vld [vmem:[%s0 + $0x88] sm:$0xff]
  %v6641 = vld [vmem:[%s0 + $0x90] sm:$0xff]
  %v6642 = vld [vmem:[%s0 + $0xa0] sm:$0xff]
  %v6643 = vld [vmem:[%s0 + $0xa8] sm:$0xff]
  %v6644 = vld [vmem:[%s0 + $0xb0] sm:$0xff]
  %v6645 = vld [vmem:[%s0 + $0xb8] sm:$0xff]
  %v6646 = vld [vmem:[%s0 + $0xc0] sm:$0xff]
  %v6647 = vld [vmem:[%s0 + $0xc8] sm:$0xff]
  %v6648 = vld [vmem:[%s0 + $0xd0] sm:$0xff]
  %v6649 = vld [vmem:[%s0 + $0xd8] sm:$0xff]
  %v6650 = vld [vmem:[%s0 + $0xe0] sm:$0xff]
  %v6651 = vld [vmem:[%s0 + $0xf0] sm:$0xff]
  %v6652 = vld [vmem:[%s0 + $0xf8] sm:$0xff]
  %v6653 = vld [vmem:[%s0 + $0x100] sm:$0xff]
  %v6654 = vld [vmem:[%s0 + $0x108] sm:$0xff]
  %v6655 = vld [vmem:[%s0 + $0x110] sm:$0xff]
  %v6656 = vld [vmem:[%s0 + $0x118] sm:$0xff]
  %v6657 = vld [vmem:[%s0 + $0x120] sm:$0xff]
  %v6658 = vld [vmem:[%s0 + $0x128] sm:$0xff]
  %v6659 = vld [vmem:[%s0 + $0x130] sm:$0xff]
  %6661 = vrot.lane.b32.xlu0 %v6623, 64
  %v6662 = vpop.permute.xlu0 %6661
  %6699 = vrot.lane.b32.xlu0 %v6624, 51
  %v6700 = vpop.permute.xlu0 %6699
  %6701 = vrot.lane.b32.xlu0 %v6625, 51
  %v6702 = vpop.permute.xlu0 %6701
  %6703 = vrot.lane.b32.xlu0 %v6626, 51
  %v6704 = vpop.permute.xlu0 %6703
  %6705 = vrot.lane.b32.xlu0 %v6627, 51
  %v6706 = vpop.permute.xlu0 %6705
  %6707 = vrot.lane.b32.xlu0 %v6628, 51
  %v6708 = vpop.permute.xlu0 %6707
  %6709 = vrot.lane.b32.xlu0 %v6629, 51
  %v6710 = vpop.permute.xlu0 %6709
  %6711 = vrot.lane.b32.xlu0 %v6630, 51
  %v6712 = vpop.permute.xlu0 %6711
  %6713 = vrot.lane.b32.xlu0 %v6631, 51
  %v6714 = vpop.permute.xlu0 %6713
  %6715 = vrot.lane.b32.xlu0 %v6632, 51
  %v6716 = vpop.permute.xlu0 %6715
  %6717 = vrot.lane.b32.xlu0 %v6633, 51
  %v6718 = vpop.permute.xlu0 %6717
  %6719 = vrot.lane.b32.xlu0 %v6634, 51
  %v6720 = vpop.permute.xlu0 %6719
  %6721 = vrot.lane.b32.xlu0 %v6635, 51
  %v6722 = vpop.permute.xlu0 %6721
  %6723 = vrot.lane.b32.xlu0 %v6636, 51
  %v6724 = vpop.permute.xlu0 %6723
  %6725 = vrot.lane.b32.xlu0 %v6637, 51
  %v6726 = vpop.permute.xlu0 %6725
  %6727 = vrot.lane.b32.xlu0 %v6638, 51
  %v6728 = vpop.permute.xlu0 %6727
  %6729 = vrot.lane.b32.xlu0 %v6639, 51
  %v6730 = vpop.permute.xlu0 %6729
  %6731 = vrot.lane.b32.xlu0 %v6640, 51
  %v6732 = vpop.permute.xlu0 %6731
  %6733 = vrot.lane.b32.xlu0 %v6641, 51
  %v6734 = vpop.permute.xlu0 %6733
  %6735 = vrot.lane.b32.xlu0 %v6642, 51
  %v6736 = vpop.permute.xlu0 %6735
  %6737 = vrot.lane.b32.xlu0 %v6643, 51
  %v6738 = vpop.permute.xlu0 %6737
  %6739 = vrot.lane.b32.xlu0 %v6644, 51
  %v6740 = vpop.permute.xlu0 %6739
  %6741 = vrot.lane.b32.xlu0 %v6645, 51
  %v6742 = vpop.permute.xlu0 %6741
  %6743 = vrot.lane.b32.xlu0 %v6646, 51
  %v6744 = vpop.permute.xlu0 %6743
  %6745 = vrot.lane.b32.xlu0 %v6647, 51
  %v6746 = vpop.permute.xlu0 %6745
  %6747 = vrot.lane.b32.xlu0 %v6648, 51
  %v6748 = vpop.permute.xlu0 %6747
  %6749 = vrot.lane.b32.xlu0 %v6649, 51
  %v6750 = vpop.permute.xlu0 %6749
  %6751 = vrot.lane.b32.xlu0 %v6650, 51
  %v6752 = vpop.permute.xlu0 %6751
  %6753 = vrot.lane.b32.xlu0 %v6651, 51
  %v6754 = vpop.permute.xlu0 %6753
  %6755 = vrot.lane.b32.xlu0 %v6652, 51
  %v6756 = vpop.permute.xlu0 %6755
  %6757 = vrot.lane.b32.xlu0 %v6653, 51
  %v6758 = vpop.permute.xlu0 %6757
  %6759 = vrot.lane.b32.xlu0 %v6654, 51
  %v6760 = vpop.permute.xlu0 %6759
  %6761 = vrot.lane.b32.xlu0 %v6655, 51
  %v6762 = vpop.permute.xlu0 %6761
  %6763 = vrot.lane.b32.xlu0 %v6656, 51
  %v6764 = vpop.permute.xlu0 %6763
  %6765 = vrot.lane.b32.xlu0 %v6657, 51
  %v6766 = vpop.permute.xlu0 %6765
  %6767 = vrot.lane.b32.xlu0 %v6658, 51
  %v6768 = vpop.permute.xlu0 %6767
  %6769 = vrot.lane.b32.xlu0 %v6659, 51
  %v6770 = vpop.permute.xlu0 %6769
  %vm6771 = vcmask 416768
  %v6772 = vsel %vm6771, %v6700, %v6702
  %v6773 = vsel %vm6771, %v6702, %v6704
  %v6774 = vsel %vm6771, %v6704, %v6706
  %v6775 = vsel %vm6771, %v6706, %v6708
  %v6776 = vsel %vm6771, %v6708, %v6710
  %v6777 = vsel %vm6771, %v6710, %v6712
  %v6778 = vsel %vm6771, %v6712, %v6714
  %v6779 = vsel %vm6771, %v6714, %v6716
  %v6780 = vsel %vm6771, %v6718, %v6720
  %v6781 = vsel %vm6771, %v6720, %v6722
  %v6782 = vsel %vm6771, %v6722, %v6724
  %v6783 = vsel %vm6771, %v6724, %v6726
  %v6784 = vsel %vm6771, %v6726, %v6728
  %v6785 = vsel %vm6771, %v6728, %v6730
  %v6786 = vsel %vm6771, %v6730, %v6732
  %v6787 = vsel %vm6771, %v6732, %v6734
  %v6788 = vsel %vm6771, %v6736, %v6738
  %v6789 = vsel %vm6771, %v6738, %v6740
  %v6790 = vsel %vm6771, %v6740, %v6742
  %v6791 = vsel %vm6771, %v6742, %v6744
  %v6792 = vsel %vm6771, %v6744, %v6746
  %v6793 = vsel %vm6771, %v6746, %v6748
  %v6794 = vsel %vm6771, %v6748, %v6750
  %v6795 = vsel %vm6771, %v6750, %v6752
  %v6796 = vsel %vm6771, %v6754, %v6756
  %v6797 = vsel %vm6771, %v6756, %v6758
  %v6798 = vsel %vm6771, %v6758, %v6760
  %v6799 = vsel %vm6771, %v6760, %v6762
  %v6800 = vsel %vm6771, %v6762, %v6764
  %v6801 = vsel %vm6771, %v6764, %v6766
  %v6802 = vsel %vm6771, %v6766, %v6768
  %v6803 = vsel %vm6771, %v6768, %v6770
  %v6836 = vsel %vm231, %v6662, 0
  %6838 = vmatprep.subr.mxu0 %v6773
  %6839 = vmatpush1.msra.mxu0 %v6772
  %6840 = vmatprep.subr.mxu0 %v6781
  %6841 = vmatpush1.msra.mxu0 %v6780
  %6842 = vmatprep.subr.mxu0 %v6789
  %6843 = vmatpush1.msra.mxu0 %v6788
  %6844 = vmatprep.subr.mxu0 %v6797
  %6845 = vmatpush1.msra.mxu0 %v6796
  %6846 = vmatprep.subr.mxu0 0.0
  %6847 = vmatpush1.msra.mxu0 0.0
  %6848 = vmatprep.subr.mxu0 0.0
  %6849 = vmatpush1.msra.mxu0 0.0
  %6850 = vmatprep.subr.mxu0 0.0
  %6851 = vmatpush1.msra.mxu0 0.0
  %6852 = vmatprep.subr.mxu0 0.0
  %6853 = vmatpush1.msra.mxu0 0.0
  %6854 = vmatprep.subr.mxu0 0.0
  %6855 = vmatpush1.msra.mxu0 0.0
  %6856 = vmatprep.subr.mxu0 0.0
  %6857 = vmatpush1.msra.mxu0 0.0
  %6858 = vmatprep.subr.mxu0 0.0
  %6859 = vmatpush1.msra.mxu0 0.0
  %6860 = vmatprep.subr.mxu0 0.0
  %6861 = vmatpush1.msra.mxu0 0.0
  %6862 = vmatprep.subr.mxu0 0.0
  %6863 = vmatpush1.msra.mxu0 0.0
  %6864 = vmatprep.subr.mxu0 0.0
  %6865 = vmatpush1.msra.mxu0 0.0
  %6866 = vmatprep.subr.mxu0 0.0
  %6867 = vmatpush1.msra.mxu0 0.0
  %6868 = vmatprep.subr.mxu0 0.0
  %6869 = vmatpush1.msra.mxu0 0.0
  %6870 = vmatprep.subr.mxu0 0.0
  %6871 = vmatpush1.msra.mxu0 0.0
  %6872 = vmatprep.subr.mxu0 0.0
  %6873 = vmatpush1.msra.mxu0 0.0
  %6874 = vmatprep.subr.mxu0 0.0
  %6875 = vmatpush1.msra.mxu0 0.0
  %6876 = vmatprep.subr.mxu0 0.0
  %6877 = vmatpush1.msra.mxu0 0.0
  %6878 = vmatprep.subr.mxu0 0.0
  %6879 = vmatpush1.msra.mxu0 0.0
  %6880 = vmatprep.subr.mxu0 0.0
  %6881 = vmatpush1.msra.mxu0 0.0
  %6882 = vmatprep.subr.mxu0 0.0
  %6883 = vmatpush1.msra.mxu0 0.0
  %6884 = vmatprep.subr.mxu0 0.0
  %6885 = vmatpush1.msra.mxu0 0.0
  %6886 = vmatprep.subr.mxu0 0.0
  %6887 = vmatpush1.msra.mxu0 0.0
  %6888 = vmatprep.subr.mxu0 0.0
  %6889 = vmatpush1.msra.mxu0 0.0
  %6890 = vmatprep.subr.mxu0 0.0
  %6891 = vmatpush1.msra.mxu0 0.0
  %6892 = vmatprep.subr.mxu0 0.0
  %6893 = vmatpush1.msra.mxu0 0.0
  %6894 = vmatprep.subr.mxu0 0.0
  %6895 = vmatpush1.msra.mxu0 0.0
  %6896 = vmatprep.subr.mxu0 0.0
  %6897 = vmatpush1.msra.mxu0 0.0
  %6898 = vmatprep.subr.mxu0 0.0
  %6899 = vmatpush1.msra.mxu0 0.0
  %6900 = vmatprep.subr.mxu0 0.0
  %6901 = vmatpush1.msra.mxu0 0.0
  %6902 = vmatprep.mubr.f32.mxu0 0.0
  %6903 = vmatmul.mubr.f32.gmra.mrb[0].mxu0 %v6836
  %v6904 = vpop.f32.mrb[0].mxu0
  %v6905 = vadd.f32 0.0, %v6904
  %v6906 = vpop.f32.mrb[0].mxu0
  %v6907 = vadd.f32 0.0, %v6906
  %6908 = vdwg.mxu0
  %6909 = vmatprep.subr.mxu0 %v6775
  %6910 = vmatpush1.msra.mxu0 %v6774
  %6911 = vmatprep.subr.mxu0 %v6783
  %6912 = vmatpush1.msra.mxu0 %v6782
  %6913 = vmatprep.subr.mxu0 %v6791
  %6914 = vmatpush1.msra.mxu0 %v6790
  %6915 = vmatprep.subr.mxu0 %v6799
  %6916 = vmatpush1.msra.mxu0 %v6798
  %6917 = vmatprep.subr.mxu0 0.0
  %6918 = vmatpush1.msra.mxu0 0.0
  %6919 = vmatprep.subr.mxu0 0.0
  %6920 = vmatpush1.msra.mxu0 0.0
  %6921 = vmatprep.subr.mxu0 0.0
  %6922 = vmatpush1.msra.mxu0 0.0
  %6923 = vmatprep.subr.mxu0 0.0
  %6924 = vmatpush1.msra.mxu0 0.0
  %6925 = vmatprep.subr.mxu0 0.0
  %6926 = vmatpush1.msra.mxu0 0.0
  %6927 = vmatprep.subr.mxu0 0.0
  %6928 = vmatpush1.msra.mxu0 0.0
  %6929 = vmatprep.subr.mxu0 0.0
  %6930 = vmatpush1.msra.mxu0 0.0
  %6931 = vmatprep.subr.mxu0 0.0
  %6932 = vmatpush1.msra.mxu0 0.0
  %6933 = vmatprep.subr.mxu0 0.0
  %6934 = vmatpush1.msra.mxu0 0.0
  %6935 = vmatprep.subr.mxu0 0.0
  %6936 = vmatpush1.msra.mxu0 0.0
  %6937 = vmatprep.subr.mxu0 0.0
  %6938 = vmatpush1.msra.mxu0 0.0
  %6939 = vmatprep.subr.mxu0 0.0
  %6940 = vmatpush1.msra.mxu0 0.0
  %6941 = vmatprep.subr.mxu0 0.0
  %6942 = vmatpush1.msra.mxu0 0.0
  %6943 = vmatprep.subr.mxu0 0.0
  %6944 = vmatpush1.msra.mxu0 0.0
  %6945 = vmatprep.subr.mxu0 0.0
  %6946 = vmatpush1.msra.mxu0 0.0
  %6947 = vmatprep.subr.mxu0 0.0
  %6948 = vmatpush1.msra.mxu0 0.0
  %6949 = vmatprep.subr.mxu0 0.0
  %6950 = vmatpush1.msra.mxu0 0.0
  %6951 = vmatprep.subr.mxu0 0.0
  %6952 = vmatpush1.msra.mxu0 0.0
  %6953 = vmatprep.subr.mxu0 0.0
  %6954 = vmatpush1.msra.mxu0 0.0
  %6955 = vmatprep.subr.mxu0 0.0
  %6956 = vmatpush1.msra.mxu0 0.0
  %6957 = vmatprep.subr.mxu0 0.0
  %6958 = vmatpush1.msra.mxu0 0.0
  %6959 = vmatprep.subr.mxu0 0.0
  %6960 = vmatpush1.msra.mxu0 0.0
  %6961 = vmatprep.subr.mxu0 0.0
  %6962 = vmatpush1.msra.mxu0 0.0
  %6963 = vmatprep.subr.mxu0 0.0
  %6964 = vmatpush1.msra.mxu0 0.0
  %6965 = vmatprep.subr.mxu0 0.0
  %6966 = vmatpush1.msra.mxu0 0.0
  %6967 = vmatprep.subr.mxu0 0.0
  %6968 = vmatpush1.msra.mxu0 0.0
  %6969 = vmatprep.subr.mxu0 0.0
  %6970 = vmatpush1.msra.mxu0 0.0
  %6971 = vmatprep.subr.mxu0 0.0
  %6972 = vmatpush1.msra.mxu0 0.0
  %6973 = vmatprep.mubr.f32.mxu0 0.0
  %6974 = vmatmul.mubr.f32.gmra.mrb[0].mxu0 %v6836
  %v6975 = vpop.f32.mrb[0].mxu0
  %v6976 = vadd.f32 0.0, %v6975
  %v6977 = vpop.f32.mrb[0].mxu0
  %6978 = vdwg.mxu0
  %6979 = vmatprep.subr.mxu0 %v6777
  %6980 = vmatpush1.msra.mxu0 %v6776
  %6981 = vmatprep.subr.mxu0 %v6785
  %6982 = vmatpush1.msra.mxu0 %v6784
  %6983 = vmatprep.subr.mxu0 %v6793
  %6984 = vmatpush1.msra.mxu0 %v6792
  %6985 = vmatprep.subr.mxu0 %v6801
  %6986 = vmatpush1.msra.mxu0 %v6800
  %6987 = vmatprep.subr.mxu0 0.0
  %6988 = vmatpush1.msra.mxu0 0.0
  %6989 = vmatprep.subr.mxu0 0.0
  %6990 = vmatpush1.msra.mxu0 0.0
  %6991 = vmatprep.subr.mxu0 0.0
  %6992 = vmatpush1.msra.mxu0 0.0
  %6993 = vmatprep.subr.mxu0 0.0
  %6994 = vmatpush1.msra.mxu0 0.0
  %6995 = vmatprep.subr.mxu0 0.0
  %6996 = vmatpush1.msra.mxu0 0.0
  %6997 = vmatprep.subr.mxu0 0.0
  %6998 = vmatpush1.msra.mxu0 0.0
  %6999 = vmatprep.subr.mxu0 0.0
  %7000 = vmatpush1.msra.mxu0 0.0
  %7001 = vmatprep.subr.mxu0 0.0
  %7002 = vmatpush1.msra.mxu0 0.0
  %7003 = vmatprep.subr.mxu0 0.0
  %7004 = vmatpush1.msra.mxu0 0.0
  %7005 = vmatprep.subr.mxu0 0.0
  %7006 = vmatpush1.msra.mxu0 0.0
  %7007 = vmatprep.subr.mxu0 0.0
  %7008 = vmatpush1.msra.mxu0 0.0
  %7009 = vmatprep.subr.mxu0 0.0
  %7010 = vmatpush1.msra.mxu0 0.0
  %7011 = vmatprep.subr.mxu0 0.0
  %7012 = vmatpush1.msra.mxu0 0.0
  %7013 = vmatprep.subr.mxu0 0.0
  %7014 = vmatpush1.msra.mxu0 0.0
  %7015 = vmatprep.subr.mxu0 0.0
  %7016 = vmatpush1.msra.mxu0 0.0
  %7017 = vmatprep.subr.mxu0 0.0
  %7018 = vmatpush1.msra.mxu0 0.0
  %7019 = vmatprep.subr.mxu0 0.0
  %7020 = vmatpush1.msra.mxu0 0.0
  %7021 = vmatprep.subr.mxu0 0.0
  %7022 = vmatpush1.msra.mxu0 0.0
  %7023 = vmatprep.subr.mxu0 0.0
  %7024 = vmatpush1.msra.mxu0 0.0
  %7025 = vmatprep.subr.mxu0 0.0
  %7026 = vmatpush1.msra.mxu0 0.0
  %7027 = vmatprep.subr.mxu0 0.0
  %7028 = vmatpush1.msra.mxu0 0.0
  %7029 = vmatprep.subr.mxu0 0.0
  %7030 = vmatpush1.msra.mxu0 0.0
  %7031 = vmatprep.subr.mxu0 0.0
  %7032 = vmatpush1.msra.mxu0 0.0
  %7033 = vmatprep.subr.mxu0 0.0
  %7034 = vmatpush1.msra.mxu0 0.0
  %7035 = vmatprep.subr.mxu0 0.0
  %7036 = vmatpush1.msra.mxu0 0.0
  %7037 = vmatprep.subr.mxu0 0.0
  %7038 = vmatpush1.msra.mxu0 0.0
  %7039 = vmatprep.subr.mxu0 0.0
  %7040 = vmatpush1.msra.mxu0 0.0
  %7041 = vmatprep.subr.mxu0 0.0
  %7042 = vmatpush1.msra.mxu0 0.0
  %7043 = vmatprep.mubr.f32.mxu0 0.0
  %7044 = vmatmul.mubr.f32.gmra.mrb[0].mxu0 %v6836
  %v7045 = vpop.f32.mrb[0].mxu0
  %v7046 = vpop.f32.mrb[0].mxu0
  %v7047 = vadd.f32 0.0, %v7046
  %7048 = vdwg.mxu0
  %7049 = vmatprep.subr.mxu0 %v6779
  %7050 = vmatpush1.msra.mxu0 %v6778
  %7051 = vmatprep.subr.mxu0 %v6787
  %7052 = vmatpush1.msra.mxu0 %v6786
  %7053 = vmatprep.subr.mxu0 %v6795
  %7054 = vmatpush1.msra.mxu0 %v6794
  %7055 = vmatprep.subr.mxu0 %v6803
  %7056 = vmatpush1.msra.mxu0 %v6802
  %7057 = vmatprep.subr.mxu0 0.0
  %7058 = vmatpush1.msra.mxu0 0.0
  %7059 = vmatprep.subr.mxu0 0.0
  %7060 = vmatpush1.msra.mxu0 0.0
  %7061 = vmatprep.subr.mxu0 0.0
  %7062 = vmatpush1.msra.mxu0 0.0
  %7063 = vmatprep.subr.mxu0 0.0
  %7064 = vmatpush1.msra.mxu0 0.0
  %7065 = vmatprep.subr.mxu0 0.0
  %7066 = vmatpush1.msra.mxu0 0.0
  %7067 = vmatprep.subr.mxu0 0.0
  %7068 = vmatpush1.msra.mxu0 0.0
  %7069 = vmatprep.subr.mxu0 0.0
  %7070 = vmatpush1.msra.mxu0 0.0
  %7071 = vmatprep.subr.mxu0 0.0
  %7072 = vmatpush1.msra.mxu0 0.0
  %7073 = vmatprep.subr.mxu0 0.0
  %7074 = vmatpush1.msra.mxu0 0.0
  %7075 = vmatprep.subr.mxu0 0.0
  %7076 = vmatpush1.msra.mxu0 0.0
  %7077 = vmatprep.subr.mxu0 0.0
  %7078 = vmatpush1.msra.mxu0 0.0
  %7079 = vmatprep.subr.mxu0 0.0
  %7080 = vmatpush1.msra.mxu0 0.0
  %7081 = vmatprep.subr.mxu0 0.0
  %7082 = vmatpush1.msra.mxu0 0.0
  %7083 = vmatprep.subr.mxu0 0.0
  %7084 = vmatpush1.msra.mxu0 0.0
  %7085 = vmatprep.subr.mxu0 0.0
  %7086 = vmatpush1.msra.mxu0 0.0
  %7087 = vmatprep.subr.mxu0 0.0
  %7088 = vmatpush1.msra.mxu0 0.0
  %7089 = vmatprep.subr.mxu0 0.0
  %7090 = vmatpush1.msra.mxu0 0.0
  %7091 = vmatprep.subr.mxu0 0.0
  %7092 = vmatpush1.msra.mxu0 0.0
  %7093 = vmatprep.subr.mxu0 0.0
  %7094 = vmatpush1.msra.mxu0 0.0
  %7095 = vmatprep.subr.mxu0 0.0
  %7096 = vmatpush1.msra.mxu0 0.0
  %7097 = vmatprep.subr.mxu0 0.0
  %7098 = vmatpush1.msra.mxu0 0.0
  %7099 = vmatprep.subr.mxu0 0.0
  %7100 = vmatpush1.msra.mxu0 0.0
  %7101 = vmatprep.subr.mxu0 0.0
  %7102 = vmatpush1.msra.mxu0 0.0
  %7103 = vmatprep.subr.mxu0 0.0
  %7104 = vmatpush1.msra.mxu0 0.0
  %7105 = vmatprep.subr.mxu0 0.0
  %7106 = vmatpush1.msra.mxu0 0.0
  %7107 = vmatprep.subr.mxu0 0.0
  %7108 = vmatpush1.msra.mxu0 0.0
  %7109 = vmatprep.subr.mxu0 0.0
  %7110 = vmatpush1.msra.mxu0 0.0
  %7111 = vmatprep.subr.mxu0 0.0
  %7112 = vmatpush1.msra.mxu0 0.0
  %7113 = vmatprep.mubr.f32.mxu0 0.0
  %7114 = vmatmul.mubr.f32.gmra.mrb[0].mxu0 %v6836
  %v7115 = vpop.f32.mrb[0].mxu0
  %v7116 = vadd.f32 0.0, %v7115
  %v7117 = vpop.f32.mrb[0].mxu0
  %v7118 = vadd.f32 0.0, %v7117
  %7119 = vdwg.mxu0
  %v7120 = vadd.f32 %v6617, %v6905
  %v7121 = vadd.f32 %v6618, %v6907
  %v7122 = vadd.f32 %v6619, %v6976
  %v7123 = vadd.f32 %v6620, %v7047
  %v7124 = vadd.f32 %v6621, %v7116
  %v7125 = vadd.f32 %v6622, %v7118
  %v7126 = vld [vmem:[%s1 + $0xc] sm:$0xf]
  %v7127 = vld [vmem:[%s0] sm:$0xff]
  %v7128 = vld [vmem:[%s0 + $0x8] sm:$0xff]
  %v7129 = vld [vmem:[%s0 + $0x10] sm:$0xff]
  %v7130 = vld [vmem:[%s0 + $0x18] sm:$0xff]
  %v7131 = vld [vmem:[%s0 + $0x20] sm:$0xff]
  %v7132 = vld [vmem:[%s0 + $0x28] sm:$0xff]
  %v7133 = vld [vmem:[%s0 + $0x30] sm:$0xff]
  %v7134 = vld [vmem:[%s0 + $0x38] sm:$0xff]
  %v7135 = vld [vmem:[%s0 + $0x40] sm:$0xff]
  %v7136 = vld [vmem:[%s0 + $0x50] sm:$0xff]
  %v7137 = vld [vmem:[%s0 + $0x58] sm:$0xff]
  %v7138 = vld [vmem:[%s0 + $0x60] sm:$0xff]
  %v7139 = vld [vmem:[%s0 + $0x68] sm:$0xff]
  %v7140 = vld [vmem:[%s0 + $0x70] sm:$0xff]
  %v7141 = vld [vmem:[%s0 + $0x78] sm:$0xff]
  %v7142 = vld [vmem:[%s0 + $0x80] sm:$0xff]
  %v7143 = vld [vmem:[%s0 + $0x88] sm:$0xff]
  %v7144 = vld [vmem:[%s0 + $0x90] sm:$0xff]
  %v7145 = vld [vmem:[%s0 + $0xa0] sm:$0xff]
  %v7146 = vld [vmem:[%s0 + $0xa8] sm:$0xff]
  %v7147 = vld [vmem:[%s0 + $0xb0] sm:$0xff]
  %v7148 = vld [vmem:[%s0 + $0xb8] sm:$0xff]
  %v7149 = vld [vmem:[%s0 + $0xc0] sm:$0xff]
  %v7150 = vld [vmem:[%s0 + $0xc8] sm:$0xff]
  %v7151 = vld [vmem:[%s0 + $0xd0] sm:$0xff]
  %v7152 = vld [vmem:[%s0 + $0xd8] sm:$0xff]
  %v7153 = vld [vmem:[%s0 + $0xe0] sm:$0xff]
  %v7154 = vld [vmem:[%s0 + $0xf0] sm:$0xff]
  %v7155 = vld [vmem:[%s0 + $0xf8] sm:$0xff]
  %v7156 = vld [vmem:[%s0 + $0x100] sm:$0xff]
  %v7157 = vld [vmem:[%s0 + $0x108] sm:$0xff]
  %v7158 = vld [vmem:[%s0 + $0x110] sm:$0xff]
  %v7159 = vld [vmem:[%s0 + $0x118] sm:$0xff]
  %v7160 = vld [vmem:[%s0 + $0x120] sm:$0xff]
  %v7161 = vld [vmem:[%s0 + $0x128] sm:$0xff]
  %v7162 = vld [vmem:[%s0 + $0x130] sm:$0xff]
  %7164 = vrot.lane.b32.xlu0 %v7126, 32
  %v7165 = vpop.permute.xlu0 %7164
  %7202 = vrot.lane.b32.xlu0 %v7127, 7
  %v7203 = vpop.permute.xlu0 %7202
  %7204 = vrot.lane.b32.xlu0 %v7128, 7
  %v7205 = vpop.permute.xlu0 %7204
  %7206 = vrot.lane.b32.xlu0 %v7129, 7
  %v7207 = vpop.permute.xlu0 %7206
  %7208 = vrot.lane.b32.xlu0 %v7130, 7
  %v7209 = vpop.permute.xlu0 %7208
  %7210 = vrot.lane.b32.xlu0 %v7131, 7
  %v7211 = vpop.permute.xlu0 %7210
  %7212 = vrot.lane.b32.xlu0 %v7132, 7
  %v7213 = vpop.permute.xlu0 %7212
  %7214 = vrot.lane.b32.xlu0 %v7133, 7
  %v7215 = vpop.permute.xlu0 %7214
  %7216 = vrot.lane.b32.xlu0 %v7134, 7
  %v7217 = vpop.permute.xlu0 %7216
  %7218 = vrot.lane.b32.xlu0 %v7135, 7
  %v7219 = vpop.permute.xlu0 %7218
  %7220 = vrot.lane.b32.xlu0 %v7136, 7
  %v7221 = vpop.permute.xlu0 %7220
  %7222 = vrot.lane.b32.xlu0 %v7137, 7
  %v7223 = vpop.permute.xlu0 %7222
  %7224 = vrot.lane.b32.xlu0 %v7138, 7
  %v7225 = vpop.permute.xlu0 %7224
  %7226 = vrot.lane.b32.xlu0 %v7139, 7
  %v7227 = vpop.permute.xlu0 %7226
  %7228 = vrot.lane.b32.xlu0 %v7140, 7
  %v7229 = vpop.permute.xlu0 %7228
  %7230 = vrot.lane.b32.xlu0 %v7141, 7
  %v7231 = vpop.permute.xlu0 %7230
  %7232 = vrot.lane.b32.xlu0 %v7142, 7
  %v7233 = vpop.permute.xlu0 %7232
  %7234 = vrot.lane.b32.xlu0 %v7143, 7
  %v7235 = vpop.permute.xlu0 %7234
  %7236 = vrot.lane.b32.xlu0 %v7144, 7
  %v7237 = vpop.permute.xlu0 %7236
  %7238 = vrot.lane.b32.xlu0 %v7145, 7
  %v7239 = vpop.permute.xlu0 %7238
  %7240 = vrot.lane.b32.xlu0 %v7146, 7
  %v7241 = vpop.permute.xlu0 %7240
  %7242 = vrot.lane.b32.xlu0 %v7147, 7
  %v7243 = vpop.permute.xlu0 %7242
  %7244 = vrot.lane.b32.xlu0 %v7148, 7
  %v7245 = vpop.permute.xlu0 %7244
  %7246 = vrot.lane.b32.xlu0 %v7149, 7
  %v7247 = vpop.permute.xlu0 %7246
  %7248 = vrot.lane.b32.xlu0 %v7150, 7
  %v7249 = vpop.permute.xlu0 %7248
  %7250 = vrot.lane.b32.xlu0 %v7151, 7
  %v7251 = vpop.permute.xlu0 %7250
  %7252 = vrot.lane.b32.xlu0 %v7152, 7
  %v7253 = vpop.permute.xlu0 %7252
  %7254 = vrot.lane.b32.xlu0 %v7153, 7
  %v7255 = vpop.permute.xlu0 %7254
  %7256 = vrot.lane.b32.xlu0 %v7154, 7
  %v7257 = vpop.permute.xlu0 %7256
  %7258 = vrot.lane.b32.xlu0 %v7155, 7
  %v7259 = vpop.permute.xlu0 %7258
  %7260 = vrot.lane.b32.xlu0 %v7156, 7
  %v7261 = vpop.permute.xlu0 %7260
  %7262 = vrot.lane.b32.xlu0 %v7157, 7
  %v7263 = vpop.permute.xlu0 %7262
  %7264 = vrot.lane.b32.xlu0 %v7158, 7
  %v7265 = vpop.permute.xlu0 %7264
  %7266 = vrot.lane.b32.xlu0 %v7159, 7
  %v7267 = vpop.permute.xlu0 %7266
  %7268 = vrot.lane.b32.xlu0 %v7160, 7
  %v7269 = vpop.permute.xlu0 %7268
  %7270 = vrot.lane.b32.xlu0 %v7161, 7
  %v7271 = vpop.permute.xlu0 %7270
  %7272 = vrot.lane.b32.xlu0 %v7162, 7
  %v7273 = vpop.permute.xlu0 %7272
  %vm7274 = vcmask 56320
  %v7275 = vsel %vm7274, %v7203, %v7205
  %v7276 = vsel %vm7274, %v7205, %v7207
  %v7277 = vsel %vm7274, %v7207, %v7209
  %v7278 = vsel %vm7274, %v7209, %v7211
  %v7279 = vsel %vm7274, %v7211, %v7213
  %v7280 = vsel %vm7274, %v7213, %v7215
  %v7281 = vsel %vm7274, %v7215, %v7217
  %v7282 = vsel %vm7274, %v7217, %v7219
  %v7283 = vsel %vm7274, %v7221, %v7223
  %v7284 = vsel %vm7274, %v7223, %v7225
  %v7285 = vsel %vm7274, %v7225, %v7227
  %v7286 = vsel %vm7274, %v7227, %v7229
  %v7287 = vsel %vm7274, %v7229, %v7231
  %v7288 = vsel %vm7274, %v7231, %v7233
  %v7289 = vsel %vm7274, %v7233, %v7235
  %v7290 = vsel %vm7274, %v7235, %v7237
  %v7291 = vsel %vm7274, %v7239, %v7241
  %v7292 = vsel %vm7274, %v7241, %v7243
  %v7293 = vsel %vm7274, %v7243, %v7245
  %v7294 = vsel %vm7274, %v7245, %v7247
  %v7295 = vsel %vm7274, %v7247, %v7249
  %v7296 = vsel %vm7274, %v7249, %v7251
  %v7297 = vsel %vm7274, %v7251, %v7253
  %v7298 = vsel %vm7274, %v7253, %v7255
  %v7299 = vsel %vm7274, %v7257, %v7259
  %v7300 = vsel %vm7274, %v7259, %v7261
  %v7301 = vsel %vm7274, %v7261, %v7263
  %v7302 = vsel %vm7274, %v7263, %v7265
  %v7303 = vsel %vm7274, %v7265, %v7267
  %v7304 = vsel %vm7274, %v7267, %v7269
  %v7305 = vsel %vm7274, %v7269, %v7271
  %v7306 = vsel %vm7274, %v7271, %v7273
  %v7339 = vsel %vm231, %v7165, 0
  %7341 = vmatprep.subr.mxu0 %v7276
  %7342 = vmatpush1.msra.mxu0 %v7275
  %7343 = vmatprep.subr.mxu0 %v7284
  %7344 = vmatpush1.msra.mxu0 %v7283
  %7345 = vmatprep.subr.mxu0 %v7292
  %7346 = vmatpush1.msra.mxu0 %v7291
  %7347 = vmatprep.subr.mxu0 %v7300
  %7348 = vmatpush1.msra.mxu0 %v7299
  %7349 = vmatprep.subr.mxu0 0.0
  %7350 = vmatpush1.msra.mxu0 0.0
  %7351 = vmatprep.subr.mxu0 0.0
  %7352 = vmatpush1.msra.mxu0 0.0
  %7353 = vmatprep.subr.mxu0 0.0
  %7354 = vmatpush1.msra.mxu0 0.0
  %7355 = vmatprep.subr.mxu0 0.0
  %7356 = vmatpush1.msra.mxu0 0.0
  %7357 = vmatprep.subr.mxu0 0.0
  %7358 = vmatpush1.msra.mxu0 0.0
  %7359 = vmatprep.subr.mxu0 0.0
  %7360 = vmatpush1.msra.mxu0 0.0
  %7361 = vmatprep.subr.mxu0 0.0
  %7362 = vmatpush1.msra.mxu0 0.0
  %7363 = vmatprep.subr.mxu0 0.0
  %7364 = vmatpush1.msra.mxu0 0.0
  %7365 = vmatprep.subr.mxu0 0.0
  %7366 = vmatpush1.msra.mxu0 0.0
  %7367 = vmatprep.subr.mxu0 0.0
  %7368 = vmatpush1.msra.mxu0 0.0
  %7369 = vmatprep.subr.mxu0 0.0
  %7370 = vmatpush1.msra.mxu0 0.0
  %7371 = vmatprep.subr.mxu0 0.0
  %7372 = vmatpush1.msra.mxu0 0.0
  %7373 = vmatprep.subr.mxu0 0.0
  %7374 = vmatpush1.msra.mxu0 0.0
  %7375 = vmatprep.subr.mxu0 0.0
  %7376 = vmatpush1.msra.mxu0 0.0
  %7377 = vmatprep.subr.mxu0 0.0
  %7378 = vmatpush1.msra.mxu0 0.0
  %7379 = vmatprep.subr.mxu0 0.0
  %7380 = vmatpush1.msra.mxu0 0.0
  %7381 = vmatprep.subr.mxu0 0.0
  %7382 = vmatpush1.msra.mxu0 0.0
  %7383 = vmatprep.subr.mxu0 0.0
  %7384 = vmatpush1.msra.mxu0 0.0
  %7385 = vmatprep.subr.mxu0 0.0
  %7386 = vmatpush1.msra.mxu0 0.0
  %7387 = vmatprep.subr.mxu0 0.0
  %7388 = vmatpush1.msra.mxu0 0.0
  %7389 = vmatprep.subr.mxu0 0.0
  %7390 = vmatpush1.msra.mxu0 0.0
  %7391 = vmatprep.subr.mxu0 0.0
  %7392 = vmatpush1.msra.mxu0 0.0
  %7393 = vmatprep.subr.mxu0 0.0
  %7394 = vmatpush1.msra.mxu0 0.0
  %7395 = vmatprep.subr.mxu0 0.0
  %7396 = vmatpush1.msra.mxu0 0.0
  %7397 = vmatprep.subr.mxu0 0.0
  %7398 = vmatpush1.msra.mxu0 0.0
  %7399 = vmatprep.subr.mxu0 0.0
  %7400 = vmatpush1.msra.mxu0 0.0
  %7401 = vmatprep.subr.mxu0 0.0
  %7402 = vmatpush1.msra.mxu0 0.0
  %7403 = vmatprep.subr.mxu0 0.0
  %7404 = vmatpush1.msra.mxu0 0.0
  %7405 = vmatprep.mubr.f32.mxu0 0.0
  %7406 = vmatmul.mubr.f32.gmra.mrb[0].mxu0 %v7339
  %v7407 = vpop.f32.mrb[0].mxu0
  %v7408 = vadd.f32 0.0, %v7407
  %v7409 = vpop.f32.mrb[0].mxu0
  %v7410 = vadd.f32 0.0, %v7409
  %7411 = vdwg.mxu0
  %7412 = vmatprep.subr.mxu0 %v7278
  %7413 = vmatpush1.msra.mxu0 %v7277
  %7414 = vmatprep.subr.mxu0 %v7286
  %7415 = vmatpush1.msra.mxu0 %v7285
  %7416 = vmatprep.subr.mxu0 %v7294
  %7417 = vmatpush1.msra.mxu0 %v7293
  %7418 = vmatprep.subr.mxu0 %v7302
  %7419 = vmatpush1.msra.mxu0 %v7301
  %7420 = vmatprep.subr.mxu0 0.0
  %7421 = vmatpush1.msra.mxu0 0.0
  %7422 = vmatprep.subr.mxu0 0.0
  %7423 = vmatpush1.msra.mxu0 0.0
  %7424 = vmatprep.subr.mxu0 0.0
  %7425 = vmatpush1.msra.mxu0 0.0
  %7426 = vmatprep.subr.mxu0 0.0
  %7427 = vmatpush1.msra.mxu0 0.0
  %7428 = vmatprep.subr.mxu0 0.0
  %7429 = vmatpush1.msra.mxu0 0.0
  %7430 = vmatprep.subr.mxu0 0.0
  %7431 = vmatpush1.msra.mxu0 0.0
  %7432 = vmatprep.subr.mxu0 0.0
  %7433 = vmatpush1.msra.mxu0 0.0
  %7434 = vmatprep.subr.mxu0 0.0
  %7435 = vmatpush1.msra.mxu0 0.0
  %7436 = vmatprep.subr.mxu0 0.0
  %7437 = vmatpush1.msra.mxu0 0.0
  %7438 = vmatprep.subr.mxu0 0.0
  %7439 = vmatpush1.msra.mxu0 0.0
  %7440 = vmatprep.subr.mxu0 0.0
  %7441 = vmatpush1.msra.mxu0 0.0
  %7442 = vmatprep.subr.mxu0 0.0
  %7443 = vmatpush1.msra.mxu0 0.0
  %7444 = vmatprep.subr.mxu0 0.0
  %7445 = vmatpush1.msra.mxu0 0.0
  %7446 = vmatprep.subr.mxu0 0.0
  %7447 = vmatpush1.msra.mxu0 0.0
  %7448 = vmatprep.subr.mxu0 0.0
  %7449 = vmatpush1.msra.mxu0 0.0
  %7450 = vmatprep.subr.mxu0 0.0
  %7451 = vmatpush1.msra.mxu0 0.0
  %7452 = vmatprep.subr.mxu0 0.0
  %7453 = vmatpush1.msra.mxu0 0.0
  %7454 = vmatprep.subr.mxu0 0.0
  %7455 = vmatpush1.msra.mxu0 0.0
  %7456 = vmatprep.subr.mxu0 0.0
  %7457 = vmatpush1.msra.mxu0 0.0
  %7458 = vmatprep.subr.mxu0 0.0
  %7459 = vmatpush1.msra.mxu0 0.0
  %7460 = vmatprep.subr.mxu0 0.0
  %7461 = vmatpush1.msra.mxu0 0.0
  %7462 = vmatprep.subr.mxu0 0.0
  %7463 = vmatpush1.msra.mxu0 0.0
  %7464 = vmatprep.subr.mxu0 0.0
  %7465 = vmatpush1.msra.mxu0 0.0
  %7466 = vmatprep.subr.mxu0 0.0
  %7467 = vmatpush1.msra.mxu0 0.0
  %7468 = vmatprep.subr.mxu0 0.0
  %7469 = vmatpush1.msra.mxu0 0.0
  %7470 = vmatprep.subr.mxu0 0.0
  %7471 = vmatpush1.msra.mxu0 0.0
  %7472 = vmatprep.subr.mxu0 0.0
  %7473 = vmatpush1.msra.mxu0 0.0
  %7474 = vmatprep.subr.mxu0 0.0
  %7475 = vmatpush1.msra.mxu0 0.0
  %7476 = vmatprep.mubr.f32.mxu0 0.0
  %7477 = vmatmul.mubr.f32.gmra.mrb[0].mxu0 %v7339
  %v7478 = vpop.f32.mrb[0].mxu0
  %v7479 = vadd.f32 0.0, %v7478
  %v7480 = vpop.f32.mrb[0].mxu0
  %7481 = vdwg.mxu0
  %7482 = vmatprep.subr.mxu0 %v7280
  %7483 = vmatpush1.msra.mxu0 %v7279
  %7484 = vmatprep.subr.mxu0 %v7288
  %7485 = vmatpush1.msra.mxu0 %v7287
  %7486 = vmatprep.subr.mxu0 %v7296
  %7487 = vmatpush1.msra.mxu0 %v7295
  %7488 = vmatprep.subr.mxu0 %v7304
  %7489 = vmatpush1.msra.mxu0 %v7303
  %7490 = vmatprep.subr.mxu0 0.0
  %7491 = vmatpush1.msra.mxu0 0.0
  %7492 = vmatprep.subr.mxu0 0.0
  %7493 = vmatpush1.msra.mxu0 0.0
  %7494 = vmatprep.subr.mxu0 0.0
  %7495 = vmatpush1.msra.mxu0 0.0
  %7496 = vmatprep.subr.mxu0 0.0
  %7497 = vmatpush1.msra.mxu0 0.0
  %7498 = vmatprep.subr.mxu0 0.0
  %7499 = vmatpush1.msra.mxu0 0.0
  %7500 = vmatprep.subr.mxu0 0.0
  %7501 = vmatpush1.msra.mxu0 0.0
  %7502 = vmatprep.subr.mxu0 0.0
  %7503 = vmatpush1.msra.mxu0 0.0
  %7504 = vmatprep.subr.mxu0 0.0
  %7505 = vmatpush1.msra.mxu0 0.0
  %7506 = vmatprep.subr.mxu0 0.0
  %7507 = vmatpush1.msra.mxu0 0.0
  %7508 = vmatprep.subr.mxu0 0.0
  %7509 = vmatpush1.msra.mxu0 0.0
  %7510 = vmatprep.subr.mxu0 0.0
  %7511 = vmatpush1.msra.mxu0 0.0
  %7512 = vmatprep.subr.mxu0 0.0
  %7513 = vmatpush1.msra.mxu0 0.0
  %7514 = vmatprep.subr.mxu0 0.0
  %7515 = vmatpush1.msra.mxu0 0.0
  %7516 = vmatprep.subr.mxu0 0.0
  %7517 = vmatpush1.msra.mxu0 0.0
  %7518 = vmatprep.subr.mxu0 0.0
  %7519 = vmatpush1.msra.mxu0 0.0
  %7520 = vmatprep.subr.mxu0 0.0
  %7521 = vmatpush1.msra.mxu0 0.0
  %7522 = vmatprep.subr.mxu0 0.0
  %7523 = vmatpush1.msra.mxu0 0.0
  %7524 = vmatprep.subr.mxu0 0.0
  %7525 = vmatpush1.msra.mxu0 0.0
  %7526 = vmatprep.subr.mxu0 0.0
  %7527 = vmatpush1.msra.mxu0 0.0
  %7528 = vmatprep.subr.mxu0 0.0
  %7529 = vmatpush1.msra.mxu0 0.0
  %7530 = vmatprep.subr.mxu0 0.0
  %7531 = vmatpush1.msra.mxu0 0.0
  %7532 = vmatprep.subr.mxu0 0.0
  %7533 = vmatpush1.msra.mxu0 0.0
  %7534 = vmatprep.subr.mxu0 0.0
  %7535 = vmatpush1.msra.mxu0 0.0
  %7536 = vmatprep.subr.mxu0 0.0
  %7537 = vmatpush1.msra.mxu0 0.0
  %7538 = vmatprep.subr.mxu0 0.0
  %7539 = vmatpush1.msra.mxu0 0.0
  %7540 = vmatprep.subr.mxu0 0.0
  %7541 = vmatpush1.msra.mxu0 0.0
  %7542 = vmatprep.subr.mxu0 0.0
  %7543 = vmatpush1.msra.mxu0 0.0
  %7544 = vmatprep.subr.mxu0 0.0
  %7545 = vmatpush1.msra.mxu0 0.0
  %7546 = vmatprep.mubr.f32.mxu0 0.0
  %7547 = vmatmul.mubr.f32.gmra.mrb[0].mxu0 %v7339
  %v7548 = vpop.f32.mrb[0].mxu0
  %v7549 = vpop.f32.mrb[0].mxu0
  %v7550 = vadd.f32 0.0, %v7549
  %7551 = vdwg.mxu0
  %7552 = vmatprep.subr.mxu0 %v7282
  %7553 = vmatpush1.msra.mxu0 %v7281
  %7554 = vmatprep.subr.mxu0 %v7290
  %7555 = vmatpush1.msra.mxu0 %v7289
  %7556 = vmatprep.subr.mxu0 %v7298
  %7557 = vmatpush1.msra.mxu0 %v7297
  %7558 = vmatprep.subr.mxu0 %v7306
  %7559 = vmatpush1.msra.mxu0 %v7305
  %7560 = vmatprep.subr.mxu0 0.0
  %7561 = vmatpush1.msra.mxu0 0.0
  %7562 = vmatprep.subr.mxu0 0.0
  %7563 = vmatpush1.msra.mxu0 0.0
  %7564 = vmatprep.subr.mxu0 0.0
  %7565 = vmatpush1.msra.mxu0 0.0
  %7566 = vmatprep.subr.mxu0 0.0
  %7567 = vmatpush1.msra.mxu0 0.0
  %7568 = vmatprep.subr.mxu0 0.0
  %7569 = vmatpush1.msra.mxu0 0.0
  %7570 = vmatprep.subr.mxu0 0.0
  %7571 = vmatpush1.msra.mxu0 0.0
  %7572 = vmatprep.subr.mxu0 0.0
  %7573 = vmatpush1.msra.mxu0 0.0
  %7574 = vmatprep.subr.mxu0 0.0
  %7575 = vmatpush1.msra.mxu0 0.0
  %7576 = vmatprep.subr.mxu0 0.0
  %7577 = vmatpush1.msra.mxu0 0.0
  %7578 = vmatprep.subr.mxu0 0.0
  %7579 = vmatpush1.msra.mxu0 0.0
  %7580 = vmatprep.subr.mxu0 0.0
  %7581 = vmatpush1.msra.mxu0 0.0
  %7582 = vmatprep.subr.mxu0 0.0
  %7583 = vmatpush1.msra.mxu0 0.0
  %7584 = vmatprep.subr.mxu0 0.0
  %7585 = vmatpush1.msra.mxu0 0.0
  %7586 = vmatprep.subr.mxu0 0.0
  %7587 = vmatpush1.msra.mxu0 0.0
  %7588 = vmatprep.subr.mxu0 0.0
  %7589 = vmatpush1.msra.mxu0 0.0
  %7590 = vmatprep.subr.mxu0 0.0
  %7591 = vmatpush1.msra.mxu0 0.0
  %7592 = vmatprep.subr.mxu0 0.0
  %7593 = vmatpush1.msra.mxu0 0.0
  %7594 = vmatprep.subr.mxu0 0.0
  %7595 = vmatpush1.msra.mxu0 0.0
  %7596 = vmatprep.subr.mxu0 0.0
  %7597 = vmatpush1.msra.mxu0 0.0
  %7598 = vmatprep.subr.mxu0 0.0
  %7599 = vmatpush1.msra.mxu0 0.0
  %7600 = vmatprep.subr.mxu0 0.0
  %7601 = vmatpush1.msra.mxu0 0.0
  %7602 = vmatprep.subr.mxu0 0.0
  %7603 = vmatpush1.msra.mxu0 0.0
  %7604 = vmatprep.subr.mxu0 0.0
  %7605 = vmatpush1.msra.mxu0 0.0
  %7606 = vmatprep.subr.mxu0 0.0
  %7607 = vmatpush1.msra.mxu0 0.0
  %7608 = vmatprep.subr.mxu0 0.0
  %7609 = vmatpush1.msra.mxu0 0.0
  %7610 = vmatprep.subr.mxu0 0.0
  %7611 = vmatpush1.msra.mxu0 0.0
  %7612 = vmatprep.subr.mxu0 0.0
  %7613 = vmatpush1.msra.mxu0 0.0
  %7614 = vmatprep.subr.mxu0 0.0
  %7615 = vmatpush1.msra.mxu0 0.0
  %7616 = vmatprep.mubr.f32.mxu0 0.0
  %7617 = vmatmul.mubr.f32.gmra.mrb[0].mxu0 %v7339
  %v7618 = vpop.f32.mrb[0].mxu0
  %v7619 = vadd.f32 0.0, %v7618
  %v7620 = vpop.f32.mrb[0].mxu0
  %v7621 = vadd.f32 0.0, %v7620
  %7622 = vdwg.mxu0
  %v7623 = vadd.f32 %v7120, %v7408
  %v7624 = vadd.f32 %v7121, %v7410
  %v7625 = vadd.f32 %v7122, %v7479
  %v7626 = vadd.f32 %v7123, %v7550
  %v7627 = vadd.f32 %v7124, %v7619
  %v7628 = vadd.f32 %v7125, %v7621
  %v7629 = vld [vmem:[%s1 + $0x10] sm:$0xf]
  %v7630 = vld [vmem:[%s0] sm:$0xff]
  %v7631 = vld [vmem:[%s0 + $0x8] sm:$0xff]
  %v7632 = vld [vmem:[%s0 + $0x10] sm:$0xff]
  %v7633 = vld [vmem:[%s0 + $0x18] sm:$0xff]
  %v7634 = vld [vmem:[%s0 + $0x20] sm:$0xff]
  %v7635 = vld [vmem:[%s0 + $0x28] sm:$0xff]
  %v7636 = vld [vmem:[%s0 + $0x30] sm:$0xff]
  %v7637 = vld [vmem:[%s0 + $0x38] sm:$0xff]
  %v7638 = vld [vmem:[%s0 + $0x40] sm:$0xff]
  %v7639 = vld [vmem:[%s0 + $0x50] sm:$0xff]
  %v7640 = vld [vmem:[%s0 + $0x58] sm:$0xff]
  %v7641 = vld [vmem:[%s0 + $0x60] sm:$0xff]
  %v7642 = vld [vmem:[%s0 + $0x68] sm:$0xff]
  %v7643 = vld [vmem:[%s0 + $0x70] sm:$0xff]
  %v7644 = vld [vmem:[%s0 + $0x78] sm:$0xff]
  %v7645 = vld [vmem:[%s0 + $0x80] sm:$0xff]
  %v7646 = vld [vmem:[%s0 + $0x88] sm:$0xff]
  %v7647 = vld [vmem:[%s0 + $0x90] sm:$0xff]
  %v7648 = vld [vmem:[%s0 + $0xa0] sm:$0xff]
  %v7649 = vld [vmem:[%s0 + $0xa8] sm:$0xff]
  %v7650 = vld [vmem:[%s0 + $0xb0] sm:$0xff]
  %v7651 = vld [vmem:[%s0 + $0xb8] sm:$0xff]
  %v7652 = vld [vmem:[%s0 + $0xc0] sm:$0xff]
  %v7653 = vld [vmem:[%s0 + $0xc8] sm:$0xff]
  %v7654 = vld [vmem:[%s0 + $0xd0] sm:$0xff]
  %v7655 = vld [vmem:[%s0 + $0xd8] sm:$0xff]
  %v7656 = vld [vmem:[%s0 + $0xe0] sm:$0xff]
  %v7657 = vld [vmem:[%s0 + $0xf0] sm:$0xff]
  %v7658 = vld [vmem:[%s0 + $0xf8] sm:$0xff]
  %v7659 = vld [vmem:[%s0 + $0x100] sm:$0xff]
  %v7660 = vld [vmem:[%s0 + $0x108] sm:$0xff]
  %v7661 = vld [vmem:[%s0 + $0x110] sm:$0xff]
  %v7662 = vld [vmem:[%s0 + $0x118] sm:$0xff]
  %v7663 = vld [vmem:[%s0 + $0x120] sm:$0xff]
  %v7664 = vld [vmem:[%s0 + $0x128] sm:$0xff]
  %v7665 = vld [vmem:[%s0 + $0x130] sm:$0xff]
  %7702 = vrot.lane.b32.xlu0 %v7630, 5
  %v7703 = vpop.permute.xlu0 %7702
  %7704 = vrot.lane.b32.xlu0 %v7631, 5
  %v7705 = vpop.permute.xlu0 %7704
  %7706 = vrot.lane.b32.xlu0 %v7632, 5
  %v7707 = vpop.permute.xlu0 %7706
  %7708 = vrot.lane.b32.xlu0 %v7633, 5
  %v7709 = vpop.permute.xlu0 %7708
  %7710 = vrot.lane.b32.xlu0 %v7634, 5
  %v7711 = vpop.permute.xlu0 %7710
  %7712 = vrot.lane.b32.xlu0 %v7635, 5
  %v7713 = vpop.permute.xlu0 %7712
  %7714 = vrot.lane.b32.xlu0 %v7636, 5
  %v7715 = vpop.permute.xlu0 %7714
  %7716 = vrot.lane.b32.xlu0 %v7637, 5
  %v7717 = vpop.permute.xlu0 %7716
  %7718 = vrot.lane.b32.xlu0 %v7638, 5
  %v7719 = vpop.permute.xlu0 %7718
  %7720 = vrot.lane.b32.xlu0 %v7639, 5
  %v7721 = vpop.permute.xlu0 %7720
  %7722 = vrot.lane.b32.xlu0 %v7640, 5
  %v7723 = vpop.permute.xlu0 %7722
  %7724 = vrot.lane.b32.xlu0 %v7641, 5
  %v7725 = vpop.permute.xlu0 %7724
  %7726 = vrot.lane.b32.xlu0 %v7642, 5
  %v7727 = vpop.permute.xlu0 %7726
  %7728 = vrot.lane.b32.xlu0 %v7643, 5
  %v7729 = vpop.permute.xlu0 %7728
  %7730 = vrot.lane.b32.xlu0 %v7644, 5
  %v7731 = vpop.permute.xlu0 %7730
  %7732 = vrot.lane.b32.xlu0 %v7645, 5
  %v7733 = vpop.permute.xlu0 %7732
  %7734 = vrot.lane.b32.xlu0 %v7646, 5
  %v7735 = vpop.permute.xlu0 %7734
  %7736 = vrot.lane.b32.xlu0 %v7647, 5
  %v7737 = vpop.permute.xlu0 %7736
  %7738 = vrot.lane.b32.xlu0 %v7648, 5
  %v7739 = vpop.permute.xlu0 %7738
  %7740 = vrot.lane.b32.xlu0 %v7649, 5
  %v7741 = vpop.permute.xlu0 %7740
  %7742 = vrot.lane.b32.xlu0 %v7650, 5
  %v7743 = vpop.permute.xlu0 %7742
  %7744 = vrot.lane.b32.xlu0 %v7651, 5
  %v7745 = vpop.permute.xlu0 %7744
  %7746 = vrot.lane.b32.xlu0 %v7652, 5
  %v7747 = vpop.permute.xlu0 %7746
  %7748 = vrot.lane.b32.xlu0 %v7653, 5
  %v7749 = vpop.permute.xlu0 %7748
  %7750 = vrot.lane.b32.xlu0 %v7654, 5
  %v7751 = vpop.permute.xlu0 %7750
  %7752 = vrot.lane.b32.xlu0 %v7655, 5
  %v7753 = vpop.permute.xlu0 %7752
  %7754 = vrot.lane.b32.xlu0 %v7656, 5
  %v7755 = vpop.permute.xlu0 %7754
  %7756 = vrot.lane.b32.xlu0 %v7657, 5
  %v7757 = vpop.permute.xlu0 %7756
  %7758 = vrot.lane.b32.xlu0 %v7658, 5
  %v7759 = vpop.permute.xlu0 %7758
  %7760 = vrot.lane.b32.xlu0 %v7659, 5
  %v7761 = vpop.permute.xlu0 %7760
  %7762 = vrot.lane.b32.xlu0 %v7660, 5
  %v7763 = vpop.permute.xlu0 %7762
  %7764 = vrot.lane.b32.xlu0 %v7661, 5
  %v7765 = vpop.permute.xlu0 %7764
  %7766 = vrot.lane.b32.xlu0 %v7662, 5
  %v7767 = vpop.permute.xlu0 %7766
  %7768 = vrot.lane.b32.xlu0 %v7663, 5
  %v7769 = vpop.permute.xlu0 %7768
  %7770 = vrot.lane.b32.xlu0 %v7664, 5
  %v7771 = vpop.permute.xlu0 %7770
  %7772 = vrot.lane.b32.xlu0 %v7665, 5
  %v7773 = vpop.permute.xlu0 %7772
  %vm7774 = vcmask 39936
  %v7775 = vsel %vm7774, %v7703, %v7705
  %v7776 = vsel %vm7774, %v7705, %v7707
  %v7777 = vsel %vm7774, %v7707, %v7709
  %v7778 = vsel %vm7774, %v7709, %v7711
  %v7779 = vsel %vm7774, %v7711, %v7713
  %v7780 = vsel %vm7774, %v7713, %v7715
  %v7781 = vsel %vm7774, %v7715, %v7717
  %v7782 = vsel %vm7774, %v7717, %v7719
  %v7783 = vsel %vm7774, %v7721, %v7723
  %v7784 = vsel %vm7774, %v7723, %v7725
  %v7785 = vsel %vm7774, %v7725, %v7727
  %v7786 = vsel %vm7774, %v7727, %v7729
  %v7787 = vsel %vm7774, %v7729, %v7731
  %v7788 = vsel %vm7774, %v7731, %v7733
  %v7789 = vsel %vm7774, %v7733, %v7735
  %v7790 = vsel %vm7774, %v7735, %v7737
  %v7791 = vsel %vm7774, %v7739, %v7741
  %v7792 = vsel %vm7774, %v7741, %v7743
  %v7793 = vsel %vm7774, %v7743, %v7745
  %v7794 = vsel %vm7774, %v7745, %v7747
  %v7795 = vsel %vm7774, %v7747, %v7749
  %v7796 = vsel %vm7774, %v7749, %v7751
  %v7797 = vsel %vm7774, %v7751, %v7753
  %v7798 = vsel %vm7774, %v7753, %v7755
  %v7799 = vsel %vm7774, %v7757, %v7759
  %v7800 = vsel %vm7774, %v7759, %v7761
  %v7801 = vsel %vm7774, %v7761, %v7763
  %v7802 = vsel %vm7774, %v7763, %v7765
  %v7803 = vsel %vm7774, %v7765, %v7767
  %v7804 = vsel %vm7774, %v7767, %v7769
  %v7805 = vsel %vm7774, %v7769, %v7771
  %v7806 = vsel %vm7774, %v7771, %v7773
  %v7840 = vsel %vm231, %v7629, 0
  %7842 = vmatprep.subr.mxu0 %v7776
  %7843 = vmatpush1.msra.mxu0 %v7775
  %7844 = vmatprep.subr.mxu0 %v7784
  %7845 = vmatpush1.msra.mxu0 %v7783
  %7846 = vmatprep.subr.mxu0 %v7792
  %7847 = vmatpush1.msra.mxu0 %v7791
  %7848 = vmatprep.subr.mxu0 %v7800
  %7849 = vmatpush1.msra.mxu0 %v7799
  %7850 = vmatprep.subr.mxu0 0.0
  %7851 = vmatpush1.msra.mxu0 0.0
  %7852 = vmatprep.subr.mxu0 0.0
  %7853 = vmatpush1.msra.mxu0 0.0
  %7854 = vmatprep.subr.mxu0 0.0
  %7855 = vmatpush1.msra.mxu0 0.0
  %7856 = vmatprep.subr.mxu0 0.0
  %7857 = vmatpush1.msra.mxu0 0.0
  %7858 = vmatprep.subr.mxu0 0.0
  %7859 = vmatpush1.msra.mxu0 0.0
  %7860 = vmatprep.subr.mxu0 0.0
  %7861 = vmatpush1.msra.mxu0 0.0
  %7862 = vmatprep.subr.mxu0 0.0
  %7863 = vmatpush1.msra.mxu0 0.0
  %7864 = vmatprep.subr.mxu0 0.0
  %7865 = vmatpush1.msra.mxu0 0.0
  %7866 = vmatprep.subr.mxu0 0.0
  %7867 = vmatpush1.msra.mxu0 0.0
  %7868 = vmatprep.subr.mxu0 0.0
  %7869 = vmatpush1.msra.mxu0 0.0
  %7870 = vmatprep.subr.mxu0 0.0
  %7871 = vmatpush1.msra.mxu0 0.0
  %7872 = vmatprep.subr.mxu0 0.0
  %7873 = vmatpush1.msra.mxu0 0.0
  %7874 = vmatprep.subr.mxu0 0.0
  %7875 = vmatpush1.msra.mxu0 0.0
  %7876 = vmatprep.subr.mxu0 0.0
  %7877 = vmatpush1.msra.mxu0 0.0
  %7878 = vmatprep.subr.mxu0 0.0
  %7879 = vmatpush1.msra.mxu0 0.0
  %7880 = vmatprep.subr.mxu0 0.0
  %7881 = vmatpush1.msra.mxu0 0.0
  %7882 = vmatprep.subr.mxu0 0.0
  %7883 = vmatpush1.msra.mxu0 0.0
  %7884 = vmatprep.subr.mxu0 0.0
  %7885 = vmatpush1.msra.mxu0 0.0
  %7886 = vmatprep.subr.mxu0 0.0
  %7887 = vmatpush1.msra.mxu0 0.0
  %7888 = vmatprep.subr.mxu0 0.0
  %7889 = vmatpush1.msra.mxu0 0.0
  %7890 = vmatprep.subr.mxu0 0.0
  %7891 = vmatpush1.msra.mxu0 0.0
  %7892 = vmatprep.subr.mxu0 0.0
  %7893 = vmatpush1.msra.mxu0 0.0
  %7894 = vmatprep.subr.mxu0 0.0
  %7895 = vmatpush1.msra.mxu0 0.0
  %7896 = vmatprep.subr.mxu0 0.0
  %7897 = vmatpush1.msra.mxu0 0.0
  %7898 = vmatprep.subr.mxu0 0.0
  %7899 = vmatpush1.msra.mxu0 0.0
  %7900 = vmatprep.subr.mxu0 0.0
  %7901 = vmatpush1.msra.mxu0 0.0
  %7902 = vmatprep.subr.mxu0 0.0
  %7903 = vmatpush1.msra.mxu0 0.0
  %7904 = vmatprep.subr.mxu0 0.0
  %7905 = vmatpush1.msra.mxu0 0.0
  %7906 = vmatprep.mubr.f32.mxu0 0.0
  %7907 = vmatmul.mubr.f32.gmra.mrb[0].mxu0 %v7840
  %v7908 = vpop.f32.mrb[0].mxu0
  %v7909 = vadd.f32 0.0, %v7908
  %v7910 = vpop.f32.mrb[0].mxu0
  %v7911 = vadd.f32 0.0, %v7910
  %7912 = vdwg.mxu0
  %7913 = vmatprep.subr.mxu0 %v7778
  %7914 = vmatpush1.msra.mxu0 %v7777
  %7915 = vmatprep.subr.mxu0 %v7786
  %7916 = vmatpush1.msra.mxu0 %v7785
  %7917 = vmatprep.subr.mxu0 %v7794
  %7918 = vmatpush1.msra.mxu0 %v7793
  %7919 = vmatprep.subr.mxu0 %v7802
  %7920 = vmatpush1.msra.mxu0 %v7801
  %7921 = vmatprep.subr.mxu0 0.0
  %7922 = vmatpush1.msra.mxu0 0.0
  %7923 = vmatprep.subr.mxu0 0.0
  %7924 = vmatpush1.msra.mxu0 0.0
  %7925 = vmatprep.subr.mxu0 0.0
  %7926 = vmatpush1.msra.mxu0 0.0
  %7927 = vmatprep.subr.mxu0 0.0
  %7928 = vmatpush1.msra.mxu0 0.0
  %7929 = vmatprep.subr.mxu0 0.0
  %7930 = vmatpush1.msra.mxu0 0.0
  %7931 = vmatprep.subr.mxu0 0.0
  %7932 = vmatpush1.msra.mxu0 0.0
  %7933 = vmatprep.subr.mxu0 0.0
  %7934 = vmatpush1.msra.mxu0 0.0
  %7935 = vmatprep.subr.mxu0 0.0
  %7936 = vmatpush1.msra.mxu0 0.0
  %7937 = vmatprep.subr.mxu0 0.0
  %7938 = vmatpush1.msra.mxu0 0.0
  %7939 = vmatprep.subr.mxu0 0.0
  %7940 = vmatpush1.msra.mxu0 0.0
  %7941 = vmatprep.subr.mxu0 0.0
  %7942 = vmatpush1.msra.mxu0 0.0
  %7943 = vmatprep.subr.mxu0 0.0
  %7944 = vmatpush1.msra.mxu0 0.0
  %7945 = vmatprep.subr.mxu0 0.0
  %7946 = vmatpush1.msra.mxu0 0.0
  %7947 = vmatprep.subr.mxu0 0.0
  %7948 = vmatpush1.msra.mxu0 0.0
  %7949 = vmatprep.subr.mxu0 0.0
  %7950 = vmatpush1.msra.mxu0 0.0
  %7951 = vmatprep.subr.mxu0 0.0
  %7952 = vmatpush1.msra.mxu0 0.0
  %7953 = vmatprep.subr.mxu0 0.0
  %7954 = vmatpush1.msra.mxu0 0.0
  %7955 = vmatprep.subr.mxu0 0.0
  %7956 = vmatpush1.msra.mxu0 0.0
  %7957 = vmatprep.subr.mxu0 0.0
  %7958 = vmatpush1.msra.mxu0 0.0
  %7959 = vmatprep.subr.mxu0 0.0
  %7960 = vmatpush1.msra.mxu0 0.0
  %7961 = vmatprep.subr.mxu0 0.0
  %7962 = vmatpush1.msra.mxu0 0.0
  %7963 = vmatprep.subr.mxu0 0.0
  %7964 = vmatpush1.msra.mxu0 0.0
  %7965 = vmatprep.subr.mxu0 0.0
  %7966 = vmatpush1.msra.mxu0 0.0
  %7967 = vmatprep.subr.mxu0 0.0
  %7968 = vmatpush1.msra.mxu0 0.0
  %7969 = vmatprep.subr.mxu0 0.0
  %7970 = vmatpush1.msra.mxu0 0.0
  %7971 = vmatprep.subr.mxu0 0.0
  %7972 = vmatpush1.msra.mxu0 0.0
  %7973 = vmatprep.subr.mxu0 0.0
  %7974 = vmatpush1.msra.mxu0 0.0
  %7975 = vmatprep.subr.mxu0 0.0
  %7976 = vmatpush1.msra.mxu0 0.0
  %7977 = vmatprep.mubr.f32.mxu0 0.0
  %7978 = vmatmul.mubr.f32.gmra.mrb[0].mxu0 %v7840
  %v7979 = vpop.f32.mrb[0].mxu0
  %v7980 = vadd.f32 0.0, %v7979
  %v7981 = vpop.f32.mrb[0].mxu0
  %7982 = vdwg.mxu0
  %7983 = vmatprep.subr.mxu0 %v7780
  %7984 = vmatpush1.msra.mxu0 %v7779
  %7985 = vmatprep.subr.mxu0 %v7788
  %7986 = vmatpush1.msra.mxu0 %v7787
  %7987 = vmatprep.subr.mxu0 %v7796
  %7988 = vmatpush1.msra.mxu0 %v7795
  %7989 = vmatprep.subr.mxu0 %v7804
  %7990 = vmatpush1.msra.mxu0 %v7803
  %7991 = vmatprep.subr.mxu0 0.0
  %7992 = vmatpush1.msra.mxu0 0.0
  %7993 = vmatprep.subr.mxu0 0.0
  %7994 = vmatpush1.msra.mxu0 0.0
  %7995 = vmatprep.subr.mxu0 0.0
  %7996 = vmatpush1.msra.mxu0 0.0
  %7997 = vmatprep.subr.mxu0 0.0
  %7998 = vmatpush1.msra.mxu0 0.0
  %7999 = vmatprep.subr.mxu0 0.0
  %8000 = vmatpush1.msra.mxu0 0.0
  %8001 = vmatprep.subr.mxu0 0.0
  %8002 = vmatpush1.msra.mxu0 0.0
  %8003 = vmatprep.subr.mxu0 0.0
  %8004 = vmatpush1.msra.mxu0 0.0
  %8005 = vmatprep.subr.mxu0 0.0
  %8006 = vmatpush1.msra.mxu0 0.0
  %8007 = vmatprep.subr.mxu0 0.0
  %8008 = vmatpush1.msra.mxu0 0.0
  %8009 = vmatprep.subr.mxu0 0.0
  %8010 = vmatpush1.msra.mxu0 0.0
  %8011 = vmatprep.subr.mxu0 0.0
  %8012 = vmatpush1.msra.mxu0 0.0
  %8013 = vmatprep.subr.mxu0 0.0
  %8014 = vmatpush1.msra.mxu0 0.0
  %8015 = vmatprep.subr.mxu0 0.0
  %8016 = vmatpush1.msra.mxu0 0.0
  %8017 = vmatprep.subr.mxu0 0.0
  %8018 = vmatpush1.msra.mxu0 0.0
  %8019 = vmatprep.subr.mxu0 0.0
  %8020 = vmatpush1.msra.mxu0 0.0
  %8021 = vmatprep.subr.mxu0 0.0
  %8022 = vmatpush1.msra.mxu0 0.0
  %8023 = vmatprep.subr.mxu0 0.0
  %8024 = vmatpush1.msra.mxu0 0.0
  %8025 = vmatprep.subr.mxu0 0.0
  %8026 = vmatpush1.msra.mxu0 0.0
  %8027 = vmatprep.subr.mxu0 0.0
  %8028 = vmatpush1.msra.mxu0 0.0
  %8029 = vmatprep.subr.mxu0 0.0
  %8030 = vmatpush1.msra.mxu0 0.0
  %8031 = vmatprep.subr.mxu0 0.0
  %8032 = vmatpush1.msra.mxu0 0.0
  %8033 = vmatprep.subr.mxu0 0.0
  %8034 = vmatpush1.msra.mxu0 0.0
  %8035 = vmatprep.subr.mxu0 0.0
  %8036 = vmatpush1.msra.mxu0 0.0
  %8037 = vmatprep.subr.mxu0 0.0
  %8038 = vmatpush1.msra.mxu0 0.0
  %8039 = vmatprep.subr.mxu0 0.0
  %8040 = vmatpush1.msra.mxu0 0.0
  %8041 = vmatprep.subr.mxu0 0.0
  %8042 = vmatpush1.msra.mxu0 0.0
  %8043 = vmatprep.subr.mxu0 0.0
  %8044 = vmatpush1.msra.mxu0 0.0
  %8045 = vmatprep.subr.mxu0 0.0
  %8046 = vmatpush1.msra.mxu0 0.0
  %8047 = vmatprep.mubr.f32.mxu0 0.0
  %8048 = vmatmul.mubr.f32.gmra.mrb[0].mxu0 %v7840
  %v8049 = vpop.f32.mrb[0].mxu0
  %v8050 = vpop.f32.mrb[0].mxu0
  %v8051 = vadd.f32 0.0, %v8050
  %8052 = vdwg.mxu0
  %8053 = vmatprep.subr.mxu0 %v7782
  %8054 = vmatpush1.msra.mxu0 %v7781
  %8055 = vmatprep.subr.mxu0 %v7790
  %8056 = vmatpush1.msra.mxu0 %v7789
  %8057 = vmatprep.subr.mxu0 %v7798
  %8058 = vmatpush1.msra.mxu0 %v7797
  %8059 = vmatprep.subr.mxu0 %v7806
  %8060 = vmatpush1.msra.mxu0 %v7805
  %8061 = vmatprep.subr.mxu0 0.0
  %8062 = vmatpush1.msra.mxu0 0.0
  %8063 = vmatprep.subr.mxu0 0.0
  %8064 = vmatpush1.msra.mxu0 0.0
  %8065 = vmatprep.subr.mxu0 0.0
  %8066 = vmatpush1.msra.mxu0 0.0
  %8067 = vmatprep.subr.mxu0 0.0
  %8068 = vmatpush1.msra.mxu0 0.0
  %8069 = vmatprep.subr.mxu0 0.0
  %8070 = vmatpush1.msra.mxu0 0.0
  %8071 = vmatprep.subr.mxu0 0.0
  %8072 = vmatpush1.msra.mxu0 0.0
  %8073 = vmatprep.subr.mxu0 0.0
  %8074 = vmatpush1.msra.mxu0 0.0
  %8075 = vmatprep.subr.mxu0 0.0
  %8076 = vmatpush1.msra.mxu0 0.0
  %8077 = vmatprep.subr.mxu0 0.0
  %8078 = vmatpush1.msra.mxu0 0.0
  %8079 = vmatprep.subr.mxu0 0.0
  %8080 = vmatpush1.msra.mxu0 0.0
  %8081 = vmatprep.subr.mxu0 0.0
  %8082 = vmatpush1.msra.mxu0 0.0
  %8083 = vmatprep.subr.mxu0 0.0
  %8084 = vmatpush1.msra.mxu0 0.0
  %8085 = vmatprep.subr.mxu0 0.0
  %8086 = vmatpush1.msra.mxu0 0.0
  %8087 = vmatprep.subr.mxu0 0.0
  %8088 = vmatpush1.msra.mxu0 0.0
  %8089 = vmatprep.subr.mxu0 0.0
  %8090 = vmatpush1.msra.mxu0 0.0
  %8091 = vmatprep.subr.mxu0 0.0
  %8092 = vmatpush1.msra.mxu0 0.0
  %8093 = vmatprep.subr.mxu0 0.0
  %8094 = vmatpush1.msra.mxu0 0.0
  %8095 = vmatprep.subr.mxu0 0.0
  %8096 = vmatpush1.msra.mxu0 0.0
  %8097 = vmatprep.subr.mxu0 0.0
  %8098 = vmatpush1.msra.mxu0 0.0
  %8099 = vmatprep.subr.mxu0 0.0
  %8100 = vmatpush1.msra.mxu0 0.0
  %8101 = vmatprep.subr.mxu0 0.0
  %8102 = vmatpush1.msra.mxu0 0.0
  %8103 = vmatprep.subr.mxu0 0.0
  %8104 = vmatpush1.msra.mxu0 0.0
  %8105 = vmatprep.subr.mxu0 0.0
  %8106 = vmatpush1.msra.mxu0 0.0
  %8107 = vmatprep.subr.mxu0 0.0
  %8108 = vmatpush1.msra.mxu0 0.0
  %8109 = vmatprep.subr.mxu0 0.0
  %8110 = vmatpush1.msra.mxu0 0.0
  %8111 = vmatprep.subr.mxu0 0.0
  %8112 = vmatpush1.msra.mxu0 0.0
  %8113 = vmatprep.subr.mxu0 0.0
  %8114 = vmatpush1.msra.mxu0 0.0
  %8115 = vmatprep.subr.mxu0 0.0
  %8116 = vmatpush1.msra.mxu0 0.0
  %8117 = vmatprep.mubr.f32.mxu0 0.0
  %8118 = vmatmul.mubr.f32.gmra.mrb[0].mxu0 %v7840
  %v8119 = vpop.f32.mrb[0].mxu0
  %v8120 = vadd.f32 0.0, %v8119
  %v8121 = vpop.f32.mrb[0].mxu0
  %v8122 = vadd.f32 0.0, %v8121
  %8123 = vdwg.mxu0
  %v8124 = vadd.f32 %v7623, %v7909
  %v8125 = vadd.f32 %v7624, %v7911
  %v8126 = vadd.f32 %v7625, %v7980
  %v8127 = vadd.f32 %v7626, %v8051
  %v8128 = vadd.f32 %v7627, %v8120
  %v8129 = vadd.f32 %v7628, %v8122
  %8130 = vrot.lane.b32.xlu0 %v7629, 96
  %v8131 = vpop.permute.xlu0 %8130
  %8132 = vrot.lane.b32.xlu0 %v7630, 3
  %v8133 = vpop.permute.xlu0 %8132
  %8134 = vrot.lane.b32.xlu0 %v7631, 3
  %v8135 = vpop.permute.xlu0 %8134
  %8136 = vrot.lane.b32.xlu0 %v7632, 3
  %v8137 = vpop.permute.xlu0 %8136
  %8138 = vrot.lane.b32.xlu0 %v7633, 3
  %v8139 = vpop.permute.xlu0 %8138
  %8140 = vrot.lane.b32.xlu0 %v7634, 3
  %v8141 = vpop.permute.xlu0 %8140
  %8142 = vrot.lane.b32.xlu0 %v7635, 3
  %v8143 = vpop.permute.xlu0 %8142
  %8144 = vrot.lane.b32.xlu0 %v7636, 3
  %v8145 = vpop.permute.xlu0 %8144
  %8146 = vrot.lane.b32.xlu0 %v7637, 3
  %v8147 = vpop.permute.xlu0 %8146
  %8148 = vrot.lane.b32.xlu0 %v7638, 3
  %v8149 = vpop.permute.xlu0 %8148
  %8150 = vrot.lane.b32.xlu0 %v7639, 3
  %v8151 = vpop.permute.xlu0 %8150
  %8152 = vrot.lane.b32.xlu0 %v7640, 3
  %v8153 = vpop.permute.xlu0 %8152
  %8154 = vrot.lane.b32.xlu0 %v7641, 3
  %v8155 = vpop.permute.xlu0 %8154
  %8156 = vrot.lane.b32.xlu0 %v7642, 3
  %v8157 = vpop.permute.xlu0 %8156
  %8158 = vrot.lane.b32.xlu0 %v7643, 3
  %v8159 = vpop.permute.xlu0 %8158
  %8160 = vrot.lane.b32.xlu0 %v7644, 3
  %v8161 = vpop.permute.xlu0 %8160
  %8162 = vrot.lane.b32.xlu0 %v7645, 3
  %v8163 = vpop.permute.xlu0 %8162
  %8164 = vrot.lane.b32.xlu0 %v7646, 3
  %v8165 = vpop.permute.xlu0 %8164
  %8166 = vrot.lane.b32.xlu0 %v7647, 3
  %v8167 = vpop.permute.xlu0 %8166
  %8168 = vrot.lane.b32.xlu0 %v7648, 3
  %v8169 = vpop.permute.xlu0 %8168
  %8170 = vrot.lane.b32.xlu0 %v7649, 3
  %v8171 = vpop.permute.xlu0 %8170
  %8172 = vrot.lane.b32.xlu0 %v7650, 3
  %v8173 = vpop.permute.xlu0 %8172
  %8174 = vrot.lane.b32.xlu0 %v7651, 3
  %v8175 = vpop.permute.xlu0 %8174
  %8176 = vrot.lane.b32.xlu0 %v7652, 3
  %v8177 = vpop.permute.xlu0 %8176
  %8178 = vrot.lane.b32.xlu0 %v7653, 3
  %v8179 = vpop.permute.xlu0 %8178
  %8180 = vrot.lane.b32.xlu0 %v7654, 3
  %v8181 = vpop.permute.xlu0 %8180
  %8182 = vrot.lane.b32.xlu0 %v7655, 3
  %v8183 = vpop.permute.xlu0 %8182
  %8184 = vrot.lane.b32.xlu0 %v7656, 3
  %v8185 = vpop.permute.xlu0 %8184
  %8186 = vrot.lane.b32.xlu0 %v7657, 3
  %v8187 = vpop.permute.xlu0 %8186
  %8188 = vrot.lane.b32.xlu0 %v7658, 3
  %v8189 = vpop.permute.xlu0 %8188
  %8190 = vrot.lane.b32.xlu0 %v7659, 3
  %v8191 = vpop.permute.xlu0 %8190
  %8192 = vrot.lane.b32.xlu0 %v7660, 3
  %v8193 = vpop.permute.xlu0 %8192
  %8194 = vrot.lane.b32.xlu0 %v7661, 3
  %v8195 = vpop.permute.xlu0 %8194
  %8196 = vrot.lane.b32.xlu0 %v7662, 3
  %v8197 = vpop.permute.xlu0 %8196
  %8198 = vrot.lane.b32.xlu0 %v7663, 3
  %v8199 = vpop.permute.xlu0 %8198
  %8200 = vrot.lane.b32.xlu0 %v7664, 3
  %v8201 = vpop.permute.xlu0 %8200
  %8202 = vrot.lane.b32.xlu0 %v7665, 3
  %v8203 = vpop.permute.xlu0 %8202
  %vm8204 = vcmask 23552
  %v8205 = vsel %vm8204, %v8133, %v8135
  %v8206 = vsel %vm8204, %v8135, %v8137
  %v8207 = vsel %vm8204, %v8137, %v8139
  %v8208 = vsel %vm8204, %v8139, %v8141
  %v8209 = vsel %vm8204, %v8141, %v8143
  %v8210 = vsel %vm8204, %v8143, %v8145
  %v8211 = vsel %vm8204, %v8145, %v8147
  %v8212 = vsel %vm8204, %v8147, %v8149
  %v8213 = vsel %vm8204, %v8151, %v8153
  %v8214 = vsel %vm8204, %v8153, %v8155
  %v8215 = vsel %vm8204, %v8155, %v8157
  %v8216 = vsel %vm8204, %v8157, %v8159
  %v8217 = vsel %vm8204, %v8159, %v8161
  %v8218 = vsel %vm8204, %v8161, %v8163
  %v8219 = vsel %vm8204, %v8163, %v8165
  %v8220 = vsel %vm8204, %v8165, %v8167
  %v8221 = vsel %vm8204, %v8169, %v8171
  %v8222 = vsel %vm8204, %v8171, %v8173
  %v8223 = vsel %vm8204, %v8173, %v8175
  %v8224 = vsel %vm8204, %v8175, %v8177
  %v8225 = vsel %vm8204, %v8177, %v8179
  %v8226 = vsel %vm8204, %v8179, %v8181
  %v8227 = vsel %vm8204, %v8181, %v8183
  %v8228 = vsel %vm8204, %v8183, %v8185
  %v8229 = vsel %vm8204, %v8187, %v8189
  %v8230 = vsel %vm8204, %v8189, %v8191
  %v8231 = vsel %vm8204, %v8191, %v8193
  %v8232 = vsel %vm8204, %v8193, %v8195
  %v8233 = vsel %vm8204, %v8195, %v8197
  %v8234 = vsel %vm8204, %v8197, %v8199
  %v8235 = vsel %vm8204, %v8199, %v8201
  %v8236 = vsel %vm8204, %v8201, %v8203
  %v8269 = vsel %vm231, %v8131, 0
  %8271 = vmatprep.subr.mxu0 %v8206
  %8272 = vmatpush1.msra.mxu0 %v8205
  %8273 = vmatprep.subr.mxu0 %v8214
  %8274 = vmatpush1.msra.mxu0 %v8213
  %8275 = vmatprep.subr.mxu0 %v8222
  %8276 = vmatpush1.msra.mxu0 %v8221
  %8277 = vmatprep.subr.mxu0 %v8230
  %8278 = vmatpush1.msra.mxu0 %v8229
  %8279 = vmatprep.subr.mxu0 0.0
  %8280 = vmatpush1.msra.mxu0 0.0
  %8281 = vmatprep.subr.mxu0 0.0
  %8282 = vmatpush1.msra.mxu0 0.0
  %8283 = vmatprep.subr.mxu0 0.0
  %8284 = vmatpush1.msra.mxu0 0.0
  %8285 = vmatprep.subr.mxu0 0.0
  %8286 = vmatpush1.msra.mxu0 0.0
  %8287 = vmatprep.subr.mxu0 0.0
  %8288 = vmatpush1.msra.mxu0 0.0
  %8289 = vmatprep.subr.mxu0 0.0
  %8290 = vmatpush1.msra.mxu0 0.0
  %8291 = vmatprep.subr.mxu0 0.0
  %8292 = vmatpush1.msra.mxu0 0.0
  %8293 = vmatprep.subr.mxu0 0.0
  %8294 = vmatpush1.msra.mxu0 0.0
  %8295 = vmatprep.subr.mxu0 0.0
  %8296 = vmatpush1.msra.mxu0 0.0
  %8297 = vmatprep.subr.mxu0 0.0
  %8298 = vmatpush1.msra.mxu0 0.0
  %8299 = vmatprep.subr.mxu0 0.0
  %8300 = vmatpush1.msra.mxu0 0.0
  %8301 = vmatprep.subr.mxu0 0.0
  %8302 = vmatpush1.msra.mxu0 0.0
  %8303 = vmatprep.subr.mxu0 0.0
  %8304 = vmatpush1.msra.mxu0 0.0
  %8305 = vmatprep.subr.mxu0 0.0
  %8306 = vmatpush1.msra.mxu0 0.0
  %8307 = vmatprep.subr.mxu0 0.0
  %8308 = vmatpush1.msra.mxu0 0.0
  %8309 = vmatprep.subr.mxu0 0.0
  %8310 = vmatpush1.msra.mxu0 0.0
  %8311 = vmatprep.subr.mxu0 0.0
  %8312 = vmatpush1.msra.mxu0 0.0
  %8313 = vmatprep.subr.mxu0 0.0
  %8314 = vmatpush1.msra.mxu0 0.0
  %8315 = vmatprep.subr.mxu0 0.0
  %8316 = vmatpush1.msra.mxu0 0.0
  %8317 = vmatprep.subr.mxu0 0.0
  %8318 = vmatpush1.msra.mxu0 0.0
  %8319 = vmatprep.subr.mxu0 0.0
  %8320 = vmatpush1.msra.mxu0 0.0
  %8321 = vmatprep.subr.mxu0 0.0
  %8322 = vmatpush1.msra.mxu0 0.0
  %8323 = vmatprep.subr.mxu0 0.0
  %8324 = vmatpush1.msra.mxu0 0.0
  %8325 = vmatprep.subr.mxu0 0.0
  %8326 = vmatpush1.msra.mxu0 0.0
  %8327 = vmatprep.subr.mxu0 0.0
  %8328 = vmatpush1.msra.mxu0 0.0
  %8329 = vmatprep.subr.mxu0 0.0
  %8330 = vmatpush1.msra.mxu0 0.0
  %8331 = vmatprep.subr.mxu0 0.0
  %8332 = vmatpush1.msra.mxu0 0.0
  %8333 = vmatprep.subr.mxu0 0.0
  %8334 = vmatpush1.msra.mxu0 0.0
  %8335 = vmatprep.mubr.f32.mxu0 0.0
  %8336 = vmatmul.mubr.f32.gmra.mrb[0].mxu0 %v8269
  %v8337 = vpop.f32.mrb[0].mxu0
  %v8338 = vadd.f32 0.0, %v8337
  %v8339 = vpop.f32.mrb[0].mxu0
  %v8340 = vadd.f32 0.0, %v8339
  %8341 = vdwg.mxu0
  %8342 = vmatprep.subr.mxu0 %v8208
  %8343 = vmatpush1.msra.mxu0 %v8207
  %8344 = vmatprep.subr.mxu0 %v8216
  %8345 = vmatpush1.msra.mxu0 %v8215
  %8346 = vmatprep.subr.mxu0 %v8224
  %8347 = vmatpush1.msra.mxu0 %v8223
  %8348 = vmatprep.subr.mxu0 %v8232
  %8349 = vmatpush1.msra.mxu0 %v8231
  %8350 = vmatprep.subr.mxu0 0.0
  %8351 = vmatpush1.msra.mxu0 0.0
  %8352 = vmatprep.subr.mxu0 0.0
  %8353 = vmatpush1.msra.mxu0 0.0
  %8354 = vmatprep.subr.mxu0 0.0
  %8355 = vmatpush1.msra.mxu0 0.0
  %8356 = vmatprep.subr.mxu0 0.0
  %8357 = vmatpush1.msra.mxu0 0.0
  %8358 = vmatprep.subr.mxu0 0.0
  %8359 = vmatpush1.msra.mxu0 0.0
  %8360 = vmatprep.subr.mxu0 0.0
  %8361 = vmatpush1.msra.mxu0 0.0
  %8362 = vmatprep.subr.mxu0 0.0
  %8363 = vmatpush1.msra.mxu0 0.0
  %8364 = vmatprep.subr.mxu0 0.0
  %8365 = vmatpush1.msra.mxu0 0.0
  %8366 = vmatprep.subr.mxu0 0.0
  %8367 = vmatpush1.msra.mxu0 0.0
  %8368 = vmatprep.subr.mxu0 0.0
  %8369 = vmatpush1.msra.mxu0 0.0
  %8370 = vmatprep.subr.mxu0 0.0
  %8371 = vmatpush1.msra.mxu0 0.0
  %8372 = vmatprep.subr.mxu0 0.0
  %8373 = vmatpush1.msra.mxu0 0.0
  %8374 = vmatprep.subr.mxu0 0.0
  %8375 = vmatpush1.msra.mxu0 0.0
  %8376 = vmatprep.subr.mxu0 0.0
  %8377 = vmatpush1.msra.mxu0 0.0
  %8378 = vmatprep.subr.mxu0 0.0
  %8379 = vmatpush1.msra.mxu0 0.0
  %8380 = vmatprep.subr.mxu0 0.0
  %8381 = vmatpush1.msra.mxu0 0.0
  %8382 = vmatprep.subr.mxu0 0.0
  %8383 = vmatpush1.msra.mxu0 0.0
  %8384 = vmatprep.subr.mxu0 0.0
  %8385 = vmatpush1.msra.mxu0 0.0
  %8386 = vmatprep.subr.mxu0 0.0
  %8387 = vmatpush1.msra.mxu0 0.0
  %8388 = vmatprep.subr.mxu0 0.0
  %8389 = vmatpush1.msra.mxu0 0.0
  %8390 = vmatprep.subr.mxu0 0.0
  %8391 = vmatpush1.msra.mxu0 0.0
  %8392 = vmatprep.subr.mxu0 0.0
  %8393 = vmatpush1.msra.mxu0 0.0
  %8394 = vmatprep.subr.mxu0 0.0
  %8395 = vmatpush1.msra.mxu0 0.0
  %8396 = vmatprep.subr.mxu0 0.0
  %8397 = vmatpush1.msra.mxu0 0.0
  %8398 = vmatprep.subr.mxu0 0.0
  %8399 = vmatpush1.msra.mxu0 0.0
  %8400 = vmatprep.subr.mxu0 0.0
  %8401 = vmatpush1.msra.mxu0 0.0
  %8402 = vmatprep.subr.mxu0 0.0
  %8403 = vmatpush1.msra.mxu0 0.0
  %8404 = vmatprep.subr.mxu0 0.0
  %8405 = vmatpush1.msra.mxu0 0.0
  %8406 = vmatprep.mubr.f32.mxu0 0.0
  %8407 = vmatmul.mubr.f32.gmra.mrb[0].mxu0 %v8269
  %v8408 = vpop.f32.mrb[0].mxu0
  %v8409 = vadd.f32 0.0, %v8408
  %v8410 = vpop.f32.mrb[0].mxu0
  %8411 = vdwg.mxu0
  %8412 = vmatprep.subr.mxu0 %v8210
  %8413 = vmatpush1.msra.mxu0 %v8209
  %8414 = vmatprep.subr.mxu0 %v8218
  %8415 = vmatpush1.msra.mxu0 %v8217
  %8416 = vmatprep.subr.mxu0 %v8226
  %8417 = vmatpush1.msra.mxu0 %v8225
  %8418 = vmatprep.subr.mxu0 %v8234
  %8419 = vmatpush1.msra.mxu0 %v8233
  %8420 = vmatprep.subr.mxu0 0.0
  %8421 = vmatpush1.msra.mxu0 0.0
  %8422 = vmatprep.subr.mxu0 0.0
  %8423 = vmatpush1.msra.mxu0 0.0
  %8424 = vmatprep.subr.mxu0 0.0
  %8425 = vmatpush1.msra.mxu0 0.0
  %8426 = vmatprep.subr.mxu0 0.0
  %8427 = vmatpush1.msra.mxu0 0.0
  %8428 = vmatprep.subr.mxu0 0.0
  %8429 = vmatpush1.msra.mxu0 0.0
  %8430 = vmatprep.subr.mxu0 0.0
  %8431 = vmatpush1.msra.mxu0 0.0
  %8432 = vmatprep.subr.mxu0 0.0
  %8433 = vmatpush1.msra.mxu0 0.0
  %8434 = vmatprep.subr.mxu0 0.0
  %8435 = vmatpush1.msra.mxu0 0.0
  %8436 = vmatprep.subr.mxu0 0.0
  %8437 = vmatpush1.msra.mxu0 0.0
  %8438 = vmatprep.subr.mxu0 0.0
  %8439 = vmatpush1.msra.mxu0 0.0
  %8440 = vmatprep.subr.mxu0 0.0
  %8441 = vmatpush1.msra.mxu0 0.0
  %8442 = vmatprep.subr.mxu0 0.0
  %8443 = vmatpush1.msra.mxu0 0.0
  %8444 = vmatprep.subr.mxu0 0.0
  %8445 = vmatpush1.msra.mxu0 0.0
  %8446 = vmatprep.subr.mxu0 0.0
  %8447 = vmatpush1.msra.mxu0 0.0
  %8448 = vmatprep.subr.mxu0 0.0
  %8449 = vmatpush1.msra.mxu0 0.0
  %8450 = vmatprep.subr.mxu0 0.0
  %8451 = vmatpush1.msra.mxu0 0.0
  %8452 = vmatprep.subr.mxu0 0.0
  %8453 = vmatpush1.msra.mxu0 0.0
  %8454 = vmatprep.subr.mxu0 0.0
  %8455 = vmatpush1.msra.mxu0 0.0
  %8456 = vmatprep.subr.mxu0 0.0
  %8457 = vmatpush1.msra.mxu0 0.0
  %8458 = vmatprep.subr.mxu0 0.0
  %8459 = vmatpush1.msra.mxu0 0.0
  %8460 = vmatprep.subr.mxu0 0.0
  %8461 = vmatpush1.msra.mxu0 0.0
  %8462 = vmatprep.subr.mxu0 0.0
  %8463 = vmatpush1.msra.mxu0 0.0
  %8464 = vmatprep.subr.mxu0 0.0
  %8465 = vmatpush1.msra.mxu0 0.0
  %8466 = vmatprep.subr.mxu0 0.0
  %8467 = vmatpush1.msra.mxu0 0.0
  %8468 = vmatprep.subr.mxu0 0.0
  %8469 = vmatpush1.msra.mxu0 0.0
  %8470 = vmatprep.subr.mxu0 0.0
  %8471 = vmatpush1.msra.mxu0 0.0
  %8472 = vmatprep.subr.mxu0 0.0
  %8473 = vmatpush1.msra.mxu0 0.0
  %8474 = vmatprep.subr.mxu0 0.0
  %8475 = vmatpush1.msra.mxu0 0.0
  %8476 = vmatprep.mubr.f32.mxu0 0.0
  %8477 = vmatmul.mubr.f32.gmra.mrb[0].mxu0 %v8269
  %v8478 = vpop.f32.mrb[0].mxu0
  %v8479 = vpop.f32.mrb[0].mxu0
  %v8480 = vadd.f32 0.0, %v8479
  %8481 = vdwg.mxu0
  %8482 = vmatprep.subr.mxu0 %v8212
  %8483 = vmatpush1.msra.mxu0 %v8211
  %8484 = vmatprep.subr.mxu0 %v8220
  %8485 = vmatpush1.msra.mxu0 %v8219
  %8486 = vmatprep.subr.mxu0 %v8228
  %8487 = vmatpush1.msra.mxu0 %v8227
  %8488 = vmatprep.subr.mxu0 %v8236
  %8489 = vmatpush1.msra.mxu0 %v8235
  %8490 = vmatprep.subr.mxu0 0.0
  %8491 = vmatpush1.msra.mxu0 0.0
  %8492 = vmatprep.subr.mxu0 0.0
  %8493 = vmatpush1.msra.mxu0 0.0
  %8494 = vmatprep.subr.mxu0 0.0
  %8495 = vmatpush1.msra.mxu0 0.0
  %8496 = vmatprep.subr.mxu0 0.0
  %8497 = vmatpush1.msra.mxu0 0.0
  %8498 = vmatprep.subr.mxu0 0.0
  %8499 = vmatpush1.msra.mxu0 0.0
  %8500 = vmatprep.subr.mxu0 0.0
  %8501 = vmatpush1.msra.mxu0 0.0
  %8502 = vmatprep.subr.mxu0 0.0
  %8503 = vmatpush1.msra.mxu0 0.0
  %8504 = vmatprep.subr.mxu0 0.0
  %8505 = vmatpush1.msra.mxu0 0.0
  %8506 = vmatprep.subr.mxu0 0.0
  %8507 = vmatpush1.msra.mxu0 0.0
  %8508 = vmatprep.subr.mxu0 0.0
  %8509 = vmatpush1.msra.mxu0 0.0
  %8510 = vmatprep.subr.mxu0 0.0
  %8511 = vmatpush1.msra.mxu0 0.0
  %8512 = vmatprep.subr.mxu0 0.0
  %8513 = vmatpush1.msra.mxu0 0.0
  %8514 = vmatprep.subr.mxu0 0.0
  %8515 = vmatpush1.msra.mxu0 0.0
  %8516 = vmatprep.subr.mxu0 0.0
  %8517 = vmatpush1.msra.mxu0 0.0
  %8518 = vmatprep.subr.mxu0 0.0
  %8519 = vmatpush1.msra.mxu0 0.0
  %8520 = vmatprep.subr.mxu0 0.0
  %8521 = vmatpush1.msra.mxu0 0.0
  %8522 = vmatprep.subr.mxu0 0.0
  %8523 = vmatpush1.msra.mxu0 0.0
  %8524 = vmatprep.subr.mxu0 0.0
  %8525 = vmatpush1.msra.mxu0 0.0
  %8526 = vmatprep.subr.mxu0 0.0
  %8527 = vmatpush1.msra.mxu0 0.0
  %8528 = vmatprep.subr.mxu0 0.0
  %8529 = vmatpush1.msra.mxu0 0.0
  %8530 = vmatprep.subr.mxu0 0.0
  %8531 = vmatpush1.msra.mxu0 0.0
  %8532 = vmatprep.subr.mxu0 0.0
  %8533 = vmatpush1.msra.mxu0 0.0
  %8534 = vmatprep.subr.mxu0 0.0
  %8535 = vmatpush1.msra.mxu0 0.0
  %8536 = vmatprep.subr.mxu0 0.0
  %8537 = vmatpush1.msra.mxu0 0.0
  %8538 = vmatprep.subr.mxu0 0.0
  %8539 = vmatpush1.msra.mxu0 0.0
  %8540 = vmatprep.subr.mxu0 0.0
  %8541 = vmatpush1.msra.mxu0 0.0
  %8542 = vmatprep.subr.mxu0 0.0
  %8543 = vmatpush1.msra.mxu0 0.0
  %8544 = vmatprep.subr.mxu0 0.0
  %8545 = vmatpush1.msra.mxu0 0.0
  %8546 = vmatprep.mubr.f32.mxu0 0.0
  %8547 = vmatmul.mubr.f32.gmra.mrb[0].mxu0 %v8269
  %v8548 = vpop.f32.mrb[0].mxu0
  %v8549 = vadd.f32 0.0, %v8548
  %v8550 = vpop.f32.mrb[0].mxu0
  %v8551 = vadd.f32 0.0, %v8550
  %8552 = vdwg.mxu0
  %v8553 = vadd.f32 %v8124, %v8338
  %v8554 = vadd.f32 %v8125, %v8340
  %v8555 = vadd.f32 %v8126, %v8409
  %v8556 = vadd.f32 %v8127, %v8480
  %v8557 = vadd.f32 %v8128, %v8549
  %v8558 = vadd.f32 %v8129, %v8551
  %v8559 = vld [vmem:[%s1 + $0x10] sm:$0xf]
  %v8560 = vld [vmem:[%s0] sm:$0xff]
  %v8561 = vld [vmem:[%s0 + $0x8] sm:$0xff]
  %v8562 = vld [vmem:[%s0 + $0x10] sm:$0xff]
  %v8563 = vld [vmem:[%s0 + $0x18] sm:$0xff]
  %v8564 = vld [vmem:[%s0 + $0x20] sm:$0xff]
  %v8565 = vld [vmem:[%s0 + $0x28] sm:$0xff]
  %v8566 = vld [vmem:[%s0 + $0x30] sm:$0xff]
  %v8567 = vld [vmem:[%s0 + $0x38] sm:$0xff]
  %v8568 = vld [vmem:[%s0 + $0x50] sm:$0xff]
  %v8569 = vld [vmem:[%s0 + $0x58] sm:$0xff]
  %v8570 = vld [vmem:[%s0 + $0x60] sm:$0xff]
  %v8571 = vld [vmem:[%s0 + $0x68] sm:$0xff]
  %v8572 = vld [vmem:[%s0 + $0x70] sm:$0xff]
  %v8573 = vld [vmem:[%s0 + $0x78] sm:$0xff]
  %v8574 = vld [vmem:[%s0 + $0x80] sm:$0xff]
  %v8575 = vld [vmem:[%s0 + $0x88] sm:$0xff]
  %v8576 = vld [vmem:[%s0 + $0xa0] sm:$0xff]
  %v8577 = vld [vmem:[%s0 + $0xa8] sm:$0xff]
  %v8578 = vld [vmem:[%s0 + $0xb0] sm:$0xff]
  %v8579 = vld [vmem:[%s0 + $0xb8] sm:$0xff]
  %v8580 = vld [vmem:[%s0 + $0xc0] sm:$0xff]
  %v8581 = vld [vmem:[%s0 + $0xc8] sm:$0xff]
  %v8582 = vld [vmem:[%s0 + $0xd0] sm:$0xff]
  %v8583 = vld [vmem:[%s0 + $0xd8] sm:$0xff]
  %v8584 = vld [vmem:[%s0 + $0xf0] sm:$0xff]
  %v8585 = vld [vmem:[%s0 + $0xf8] sm:$0xff]
  %v8586 = vld [vmem:[%s0 + $0x100] sm:$0xff]
  %v8587 = vld [vmem:[%s0 + $0x108] sm:$0xff]
  %v8588 = vld [vmem:[%s0 + $0x110] sm:$0xff]
  %v8589 = vld [vmem:[%s0 + $0x118] sm:$0xff]
  %v8590 = vld [vmem:[%s0 + $0x120] sm:$0xff]
  %v8591 = vld [vmem:[%s0 + $0x128] sm:$0xff]
  %8593 = vrot.lane.b32.xlu0 %v8559, 64
  %v8594 = vpop.permute.xlu0 %8593
  %v8595 = vsel %vm231, %v8594, 0
  %8597 = vmatprep.subr.mxu0 %v8561
  %8598 = vmatpush1.msra.mxu0 %v8560
  %8599 = vmatprep.subr.mxu0 %v8569
  %8600 = vmatpush1.msra.mxu0 %v8568
  %8601 = vmatprep.subr.mxu0 %v8577
  %8602 = vmatpush1.msra.mxu0 %v8576
  %8603 = vmatprep.subr.mxu0 %v8585
  %8604 = vmatpush1.msra.mxu0 %v8584
  %8605 = vmatprep.subr.mxu0 0.0
  %8606 = vmatpush1.msra.mxu0 0.0
  %8607 = vmatprep.subr.mxu0 0.0
  %8608 = vmatpush1.msra.mxu0 0.0
  %8609 = vmatprep.subr.mxu0 0.0
  %8610 = vmatpush1.msra.mxu0 0.0
  %8611 = vmatprep.subr.mxu0 0.0
  %8612 = vmatpush1.msra.mxu0 0.0
  %8613 = vmatprep.subr.mxu0 0.0
  %8614 = vmatpush1.msra.mxu0 0.0
  %8615 = vmatprep.subr.mxu0 0.0
  %8616 = vmatpush1.msra.mxu0 0.0
  %8617 = vmatprep.subr.mxu0 0.0
  %8618 = vmatpush1.msra.mxu0 0.0
  %8619 = vmatprep.subr.mxu0 0.0
  %8620 = vmatpush1.msra.mxu0 0.0
  %8621 = vmatprep.subr.mxu0 0.0
  %8622 = vmatpush1.msra.mxu0 0.0
  %8623 = vmatprep.subr.mxu0 0.0
  %8624 = vmatpush1.msra.mxu0 0.0
  %8625 = vmatprep.subr.mxu0 0.0
  %8626 = vmatpush1.msra.mxu0 0.0
  %8627 = vmatprep.subr.mxu0 0.0
  %8628 = vmatpush1.msra.mxu0 0.0
  %8629 = vmatprep.subr.mxu0 0.0
  %8630 = vmatpush1.msra.mxu0 0.0
  %8631 = vmatprep.subr.mxu0 0.0
  %8632 = vmatpush1.msra.mxu0 0.0
  %8633 = vmatprep.subr.mxu0 0.0
  %8634 = vmatpush1.msra.mxu0 0.0
  %8635 = vmatprep.subr.mxu0 0.0
  %8636 = vmatpush1.msra.mxu0 0.0
  %8637 = vmatprep.subr.mxu0 0.0
  %8638 = vmatpush1.msra.mxu0 0.0
  %8639 = vmatprep.subr.mxu0 0.0
  %8640 = vmatpush1.msra.mxu0 0.0
  %8641 = vmatprep.subr.mxu0 0.0
  %8642 = vmatpush1.msra.mxu0 0.0
  %8643 = vmatprep.subr.mxu0 0.0
  %8644 = vmatpush1.msra.mxu0 0.0
  %8645 = vmatprep.subr.mxu0 0.0
  %8646 = vmatpush1.msra.mxu0 0.0
  %8647 = vmatprep.subr.mxu0 0.0
  %8648 = vmatpush1.msra.mxu0 0.0
  %8649 = vmatprep.subr.mxu0 0.0
  %8650 = vmatpush1.msra.mxu0 0.0
  %8651 = vmatprep.subr.mxu0 0.0
  %8652 = vmatpush1.msra.mxu0 0.0
  %8653 = vmatprep.subr.mxu0 0.0
  %8654 = vmatpush1.msra.mxu0 0.0
  %8655 = vmatprep.subr.mxu0 0.0
  %8656 = vmatpush1.msra.mxu0 0.0
  %8657 = vmatprep.subr.mxu0 0.0
  %8658 = vmatpush1.msra.mxu0 0.0
  %8659 = vmatprep.subr.mxu0 0.0
  %8660 = vmatpush1.msra.mxu0 0.0
  %8661 = vmatprep.mubr.f32.mxu0 0.0
  %8662 = vmatmul.mubr.f32.gmra.mrb[0].mxu0 %v8595
  %v8663 = vpop.f32.mrb[0].mxu0
  %v8664 = vadd.f32 0.0, %v8663
  %v8665 = vpop.f32.mrb[0].mxu0
  %v8666 = vadd.f32 0.0, %v8665
  %8667 = vdwg.mxu0
  %8668 = vmatprep.subr.mxu0 %v8563
  %8669 = vmatpush1.msra.mxu0 %v8562
  %8670 = vmatprep.subr.mxu0 %v8571
  %8671 = vmatpush1.msra.mxu0 %v8570
  %8672 = vmatprep.subr.mxu0 %v8579
  %8673 = vmatpush1.msra.mxu0 %v8578
  %8674 = vmatprep.subr.mxu0 %v8587
  %8675 = vmatpush1.msra.mxu0 %v8586
  %8676 = vmatprep.subr.mxu0 0.0
  %8677 = vmatpush1.msra.mxu0 0.0
  %8678 = vmatprep.subr.mxu0 0.0
  %8679 = vmatpush1.msra.mxu0 0.0
  %8680 = vmatprep.subr.mxu0 0.0
  %8681 = vmatpush1.msra.mxu0 0.0
  %8682 = vmatprep.subr.mxu0 0.0
  %8683 = vmatpush1.msra.mxu0 0.0
  %8684 = vmatprep.subr.mxu0 0.0
  %8685 = vmatpush1.msra.mxu0 0.0
  %8686 = vmatprep.subr.mxu0 0.0
  %8687 = vmatpush1.msra.mxu0 0.0
  %8688 = vmatprep.subr.mxu0 0.0
  %8689 = vmatpush1.msra.mxu0 0.0
  %8690 = vmatprep.subr.mxu0 0.0
  %8691 = vmatpush1.msra.mxu0 0.0
  %8692 = vmatprep.subr.mxu0 0.0
  %8693 = vmatpush1.msra.mxu0 0.0
  %8694 = vmatprep.subr.mxu0 0.0
  %8695 = vmatpush1.msra.mxu0 0.0
  %8696 = vmatprep.subr.mxu0 0.0
  %8697 = vmatpush1.msra.mxu0 0.0
  %8698 = vmatprep.subr.mxu0 0.0
  %8699 = vmatpush1.msra.mxu0 0.0
  %8700 = vmatprep.subr.mxu0 0.0
  %8701 = vmatpush1.msra.mxu0 0.0
  %8702 = vmatprep.subr.mxu0 0.0
  %8703 = vmatpush1.msra.mxu0 0.0
  %8704 = vmatprep.subr.mxu0 0.0
  %8705 = vmatpush1.msra.mxu0 0.0
  %8706 = vmatprep.subr.mxu0 0.0
  %8707 = vmatpush1.msra.mxu0 0.0
  %8708 = vmatprep.subr.mxu0 0.0
  %8709 = vmatpush1.msra.mxu0 0.0
  %8710 = vmatprep.subr.mxu0 0.0
  %8711 = vmatpush1.msra.mxu0 0.0
  %8712 = vmatprep.subr.mxu0 0.0
  %8713 = vmatpush1.msra.mxu0 0.0
  %8714 = vmatprep.subr.mxu0 0.0
  %8715 = vmatpush1.msra.mxu0 0.0
  %8716 = vmatprep.subr.mxu0 0.0
  %8717 = vmatpush1.msra.mxu0 0.0
  %8718 = vmatprep.subr.mxu0 0.0
  %8719 = vmatpush1.msra.mxu0 0.0
  %8720 = vmatprep.subr.mxu0 0.0
  %8721 = vmatpush1.msra.mxu0 0.0
  %8722 = vmatprep.subr.mxu0 0.0
  %8723 = vmatpush1.msra.mxu0 0.0
  %8724 = vmatprep.subr.mxu0 0.0
  %8725 = vmatpush1.msra.mxu0 0.0
  %8726 = vmatprep.subr.mxu0 0.0
  %8727 = vmatpush1.msra.mxu0 0.0
  %8728 = vmatprep.subr.mxu0 0.0
  %8729 = vmatpush1.msra.mxu0 0.0
  %8730 = vmatprep.subr.mxu0 0.0
  %8731 = vmatpush1.msra.mxu0 0.0
  %8732 = vmatprep.mubr.f32.mxu0 0.0
  %8733 = vmatmul.mubr.f32.gmra.mrb[0].mxu0 %v8595
  %v8734 = vpop.f32.mrb[0].mxu0
  %v8735 = vadd.f32 0.0, %v8734
  %v8736 = vpop.f32.mrb[0].mxu0
  %8737 = vdwg.mxu0
  %8738 = vmatprep.subr.mxu0 %v8565
  %8739 = vmatpush1.msra.mxu0 %v8564
  %8740 = vmatprep.subr.mxu0 %v8573
  %8741 = vmatpush1.msra.mxu0 %v8572
  %8742 = vmatprep.subr.mxu0 %v8581
  %8743 = vmatpush1.msra.mxu0 %v8580
  %8744 = vmatprep.subr.mxu0 %v8589
  %8745 = vmatpush1.msra.mxu0 %v8588
  %8746 = vmatprep.subr.mxu0 0.0
  %8747 = vmatpush1.msra.mxu0 0.0
  %8748 = vmatprep.subr.mxu0 0.0
  %8749 = vmatpush1.msra.mxu0 0.0
  %8750 = vmatprep.subr.mxu0 0.0
  %8751 = vmatpush1.msra.mxu0 0.0
  %8752 = vmatprep.subr.mxu0 0.0
  %8753 = vmatpush1.msra.mxu0 0.0
  %8754 = vmatprep.subr.mxu0 0.0
  %8755 = vmatpush1.msra.mxu0 0.0
  %8756 = vmatprep.subr.mxu0 0.0
  %8757 = vmatpush1.msra.mxu0 0.0
  %8758 = vmatprep.subr.mxu0 0.0
  %8759 = vmatpush1.msra.mxu0 0.0
  %8760 = vmatprep.subr.mxu0 0.0
  %8761 = vmatpush1.msra.mxu0 0.0
  %8762 = vmatprep.subr.mxu0 0.0
  %8763 = vmatpush1.msra.mxu0 0.0
  %8764 = vmatprep.subr.mxu0 0.0
  %8765 = vmatpush1.msra.mxu0 0.0
  %8766 = vmatprep.subr.mxu0 0.0
  %8767 = vmatpush1.msra.mxu0 0.0
  %8768 = vmatprep.subr.mxu0 0.0
  %8769 = vmatpush1.msra.mxu0 0.0
  %8770 = vmatprep.subr.mxu0 0.0
  %8771 = vmatpush1.msra.mxu0 0.0
  %8772 = vmatprep.subr.mxu0 0.0
  %8773 = vmatpush1.msra.mxu0 0.0
  %8774 = vmatprep.subr.mxu0 0.0
  %8775 = vmatpush1.msra.mxu0 0.0
  %8776 = vmatprep.subr.mxu0 0.0
  %8777 = vmatpush1.msra.mxu0 0.0
  %8778 = vmatprep.subr.mxu0 0.0
  %8779 = vmatpush1.msra.mxu0 0.0
  %8780 = vmatprep.subr.mxu0 0.0
  %8781 = vmatpush1.msra.mxu0 0.0
  %8782 = vmatprep.subr.mxu0 0.0
  %8783 = vmatpush1.msra.mxu0 0.0
  %8784 = vmatprep.subr.mxu0 0.0
  %8785 = vmatpush1.msra.mxu0 0.0
  %8786 = vmatprep.subr.mxu0 0.0
  %8787 = vmatpush1.msra.mxu0 0.0
  %8788 = vmatprep.subr.mxu0 0.0
  %8789 = vmatpush1.msra.mxu0 0.0
  %8790 = vmatprep.subr.mxu0 0.0
  %8791 = vmatpush1.msra.mxu0 0.0
  %8792 = vmatprep.subr.mxu0 0.0
  %8793 = vmatpush1.msra.mxu0 0.0
  %8794 = vmatprep.subr.mxu0 0.0
  %8795 = vmatpush1.msra.mxu0 0.0
  %8796 = vmatprep.subr.mxu0 0.0
  %8797 = vmatpush1.msra.mxu0 0.0
  %8798 = vmatprep.subr.mxu0 0.0
  %8799 = vmatpush1.msra.mxu0 0.0
  %8800 = vmatprep.subr.mxu0 0.0
  %8801 = vmatpush1.msra.mxu0 0.0
  %8802 = vmatprep.mubr.f32.mxu0 0.0
  %8803 = vmatmul.mubr.f32.gmra.mrb[0].mxu0 %v8595
  %v8804 = vpop.f32.mrb[0].mxu0
  %v8805 = vpop.f32.mrb[0].mxu0
  %v8806 = vadd.f32 0.0, %v8805
  %8807 = vdwg.mxu0
  %8808 = vmatprep.subr.mxu0 %v8567
  %8809 = vmatpush1.msra.mxu0 %v8566
  %8810 = vmatprep.subr.mxu0 %v8575
  %8811 = vmatpush1.msra.mxu0 %v8574
  %8812 = vmatprep.subr.mxu0 %v8583
  %8813 = vmatpush1.msra.mxu0 %v8582
  %8814 = vmatprep.subr.mxu0 %v8591
  %8815 = vmatpush1.msra.mxu0 %v8590
  %8816 = vmatprep.subr.mxu0 0.0
  %8817 = vmatpush1.msra.mxu0 0.0
  %8818 = vmatprep.subr.mxu0 0.0
  %8819 = vmatpush1.msra.mxu0 0.0
  %8820 = vmatprep.subr.mxu0 0.0
  %8821 = vmatpush1.msra.mxu0 0.0
  %8822 = vmatprep.subr.mxu0 0.0
  %8823 = vmatpush1.msra.mxu0 0.0
  %8824 = vmatprep.subr.mxu0 0.0
  %8825 = vmatpush1.msra.mxu0 0.0
  %8826 = vmatprep.subr.mxu0 0.0
  %8827 = vmatpush1.msra.mxu0 0.0
  %8828 = vmatprep.subr.mxu0 0.0
  %8829 = vmatpush1.msra.mxu0 0.0
  %8830 = vmatprep.subr.mxu0 0.0
  %8831 = vmatpush1.msra.mxu0 0.0
  %8832 = vmatprep.subr.mxu0 0.0
  %8833 = vmatpush1.msra.mxu0 0.0
  %8834 = vmatprep.subr.mxu0 0.0
  %8835 = vmatpush1.msra.mxu0 0.0
  %8836 = vmatprep.subr.mxu0 0.0
  %8837 = vmatpush1.msra.mxu0 0.0
  %8838 = vmatprep.subr.mxu0 0.0
  %8839 = vmatpush1.msra.mxu0 0.0
  %8840 = vmatprep.subr.mxu0 0.0
  %8841 = vmatpush1.msra.mxu0 0.0
  %8842 = vmatprep.subr.mxu0 0.0
  %8843 = vmatpush1.msra.mxu0 0.0
  %8844 = vmatprep.subr.mxu0 0.0
  %8845 = vmatpush1.msra.mxu0 0.0
  %8846 = vmatprep.subr.mxu0 0.0
  %8847 = vmatpush1.msra.mxu0 0.0
  %8848 = vmatprep.subr.mxu0 0.0
  %8849 = vmatpush1.msra.mxu0 0.0
  %8850 = vmatprep.subr.mxu0 0.0
  %8851 = vmatpush1.msra.mxu0 0.0
  %8852 = vmatprep.subr.mxu0 0.0
  %8853 = vmatpush1.msra.mxu0 0.0
  %8854 = vmatprep.subr.mxu0 0.0
  %8855 = vmatpush1.msra.mxu0 0.0
  %8856 = vmatprep.subr.mxu0 0.0
  %8857 = vmatpush1.msra.mxu0 0.0
  %8858 = vmatprep.subr.mxu0 0.0
  %8859 = vmatpush1.msra.mxu0 0.0
  %8860 = vmatprep.subr.mxu0 0.0
  %8861 = vmatpush1.msra.mxu0 0.0
  %8862 = vmatprep.subr.mxu0 0.0
  %8863 = vmatpush1.msra.mxu0 0.0
  %8864 = vmatprep.subr.mxu0 0.0
  %8865 = vmatpush1.msra.mxu0 0.0
  %8866 = vmatprep.subr.mxu0 0.0
  %8867 = vmatpush1.msra.mxu0 0.0
  %8868 = vmatprep.subr.mxu0 0.0
  %8869 = vmatpush1.msra.mxu0 0.0
  %8870 = vmatprep.subr.mxu0 0.0
  %8871 = vmatpush1.msra.mxu0 0.0
  %8872 = vmatprep.mubr.f32.mxu0 0.0
  %8873 = vmatmul.mubr.f32.gmra.mrb[0].mxu0 %v8595
  %v8874 = vpop.f32.mrb[0].mxu0
  %v8875 = vadd.f32 0.0, %v8874
  %v8876 = vpop.f32.mrb[0].mxu0
  %v8877 = vadd.f32 0.0, %v8876
  %8878 = vdwg.mxu0
  %v8879 = vadd.f32 %v8553, %v8664
  %v8880 = vadd.f32 %v8554, %v8666
  %v8881 = vadd.f32 %v8555, %v8735
  %v8882 = vadd.f32 %v8556, %v8806
  %v8883 = vadd.f32 %v8557, %v8875
  %v8884 = vadd.f32 %v8558, %v8877
  %v8885 = vld [vmem:[%s1 + $0x10] sm:$0xf]
  %v8886 = vld [vmem:[%s0] sm:$0xff]
  %v8887 = vld [vmem:[%s0 + $0x8] sm:$0xff]
  %v8888 = vld [vmem:[%s0 + $0x10] sm:$0xff]
  %v8889 = vld [vmem:[%s0 + $0x18] sm:$0xff]
  %v8890 = vld [vmem:[%s0 + $0x20] sm:$0xff]
  %v8891 = vld [vmem:[%s0 + $0x28] sm:$0xff]
  %v8892 = vld [vmem:[%s0 + $0x30] sm:$0xff]
  %v8893 = vld [vmem:[%s0 + $0x38] sm:$0xff]
  %v8894 = vld [vmem:[%s0 + $0x40] sm:$0xff]
  %v8895 = vld [vmem:[%s0 + $0x50] sm:$0xff]
  %v8896 = vld [vmem:[%s0 + $0x58] sm:$0xff]
  %v8897 = vld [vmem:[%s0 + $0x60] sm:$0xff]
  %v8898 = vld [vmem:[%s0 + $0x68] sm:$0xff]
  %v8899 = vld [vmem:[%s0 + $0x70] sm:$0xff]
  %v8900 = vld [vmem:[%s0 + $0x78] sm:$0xff]
  %v8901 = vld [vmem:[%s0 + $0x80] sm:$0xff]
  %v8902 = vld [vmem:[%s0 + $0x88] sm:$0xff]
  %v8903 = vld [vmem:[%s0 + $0x90] sm:$0xff]
  %v8904 = vld [vmem:[%s0 + $0xa0] sm:$0xff]
  %v8905 = vld [vmem:[%s0 + $0xa8] sm:$0xff]
  %v8906 = vld [vmem:[%s0 + $0xb0] sm:$0xff]
  %v8907 = vld [vmem:[%s0 + $0xb8] sm:$0xff]
  %v8908 = vld [vmem:[%s0 + $0xc0] sm:$0xff]
  %v8909 = vld [vmem:[%s0 + $0xc8] sm:$0xff]
  %v8910 = vld [vmem:[%s0 + $0xd0] sm:$0xff]
  %v8911 = vld [vmem:[%s0 + $0xd8] sm:$0xff]
  %v8912 = vld [vmem:[%s0 + $0xe0] sm:$0xff]
  %v8913 = vld [vmem:[%s0 + $0xf0] sm:$0xff]
  %v8914 = vld [vmem:[%s0 + $0xf8] sm:$0xff]
  %v8915 = vld [vmem:[%s0 + $0x100] sm:$0xff]
  %v8916 = vld [vmem:[%s0 + $0x108] sm:$0xff]
  %v8917 = vld [vmem:[%s0 + $0x110] sm:$0xff]
  %v8918 = vld [vmem:[%s0 + $0x118] sm:$0xff]
  %v8919 = vld [vmem:[%s0 + $0x120] sm:$0xff]
  %v8920 = vld [vmem:[%s0 + $0x128] sm:$0xff]
  %v8921 = vld [vmem:[%s0 + $0x130] sm:$0xff]
  %8923 = vrot.lane.b32.xlu0 %v8885, 32
  %v8924 = vpop.permute.xlu0 %8923
  %8961 = vrot.lane.b32.xlu0 %v8886, 125
  %v8962 = vpop.permute.xlu0 %8961
  %8963 = vrot.lane.b32.xlu0 %v8887, 125
  %v8964 = vpop.permute.xlu0 %8963
  %8965 = vrot.lane.b32.xlu0 %v8888, 125
  %v8966 = vpop.permute.xlu0 %8965
  %8967 = vrot.lane.b32.xlu0 %v8889, 125
  %v8968 = vpop.permute.xlu0 %8967
  %8969 = vrot.lane.b32.xlu0 %v8890, 125
  %v8970 = vpop.permute.xlu0 %8969
  %8971 = vrot.lane.b32.xlu0 %v8891, 125
  %v8972 = vpop.permute.xlu0 %8971
  %8973 = vrot.lane.b32.xlu0 %v8892, 125
  %v8974 = vpop.permute.xlu0 %8973
  %8975 = vrot.lane.b32.xlu0 %v8893, 125
  %v8976 = vpop.permute.xlu0 %8975
  %8977 = vrot.lane.b32.xlu0 %v8894, 125
  %v8978 = vpop.permute.xlu0 %8977
  %8979 = vrot.lane.b32.xlu0 %v8895, 125
  %v8980 = vpop.permute.xlu0 %8979
  %8981 = vrot.lane.b32.xlu0 %v8896, 125
  %v8982 = vpop.permute.xlu0 %8981
  %8983 = vrot.lane.b32.xlu0 %v8897, 125
  %v8984 = vpop.permute.xlu0 %8983
  %8985 = vrot.lane.b32.xlu0 %v8898, 125
  %v8986 = vpop.permute.xlu0 %8985
  %8987 = vrot.lane.b32.xlu0 %v8899, 125
  %v8988 = vpop.permute.xlu0 %8987
  %8989 = vrot.lane.b32.xlu0 %v8900, 125
  %v8990 = vpop.permute.xlu0 %8989
  %8991 = vrot.lane.b32.xlu0 %v8901, 125
  %v8992 = vpop.permute.xlu0 %8991
  %8993 = vrot.lane.b32.xlu0 %v8902, 125
  %v8994 = vpop.permute.xlu0 %8993
  %8995 = vrot.lane.b32.xlu0 %v8903, 125
  %v8996 = vpop.permute.xlu0 %8995
  %8997 = vrot.lane.b32.xlu0 %v8904, 125
  %v8998 = vpop.permute.xlu0 %8997
  %8999 = vrot.lane.b32.xlu0 %v8905, 125
  %v9000 = vpop.permute.xlu0 %8999
  %9001 = vrot.lane.b32.xlu0 %v8906, 125
  %v9002 = vpop.permute.xlu0 %9001
  %9003 = vrot.lane.b32.xlu0 %v8907, 125
  %v9004 = vpop.permute.xlu0 %9003
  %9005 = vrot.lane.b32.xlu0 %v8908, 125
  %v9006 = vpop.permute.xlu0 %9005
  %9007 = vrot.lane.b32.xlu0 %v8909, 125
  %v9008 = vpop.permute.xlu0 %9007
  %9009 = vrot.lane.b32.xlu0 %v8910, 125
  %v9010 = vpop.permute.xlu0 %9009
  %9011 = vrot.lane.b32.xlu0 %v8911, 125
  %v9012 = vpop.permute.xlu0 %9011
  %9013 = vrot.lane.b32.xlu0 %v8912, 125
  %v9014 = vpop.permute.xlu0 %9013
  %9015 = vrot.lane.b32.xlu0 %v8913, 125
  %v9016 = vpop.permute.xlu0 %9015
  %9017 = vrot.lane.b32.xlu0 %v8914, 125
  %v9018 = vpop.permute.xlu0 %9017
  %9019 = vrot.lane.b32.xlu0 %v8915, 125
  %v9020 = vpop.permute.xlu0 %9019
  %9021 = vrot.lane.b32.xlu0 %v8916, 125
  %v9022 = vpop.permute.xlu0 %9021
  %9023 = vrot.lane.b32.xlu0 %v8917, 125
  %v9024 = vpop.permute.xlu0 %9023
  %9025 = vrot.lane.b32.xlu0 %v8918, 125
  %v9026 = vpop.permute.xlu0 %9025
  %9027 = vrot.lane.b32.xlu0 %v8919, 125
  %v9028 = vpop.permute.xlu0 %9027
  %9029 = vrot.lane.b32.xlu0 %v8920, 125
  %v9030 = vpop.permute.xlu0 %9029
  %9031 = vrot.lane.b32.xlu0 %v8921, 125
  %v9032 = vpop.permute.xlu0 %9031
  %vm9033 = vcmask 1022976
  %v9034 = vsel %vm9033, %v8962, %v8964
  %v9035 = vsel %vm9033, %v8964, %v8966
  %v9036 = vsel %vm9033, %v8966, %v8968
  %v9037 = vsel %vm9033, %v8968, %v8970
  %v9038 = vsel %vm9033, %v8970, %v8972
  %v9039 = vsel %vm9033, %v8972, %v8974
  %v9040 = vsel %vm9033, %v8974, %v8976
  %v9041 = vsel %vm9033, %v8976, %v8978
  %v9042 = vsel %vm9033, %v8980, %v8982
  %v9043 = vsel %vm9033, %v8982, %v8984
  %v9044 = vsel %vm9033, %v8984, %v8986
  %v9045 = vsel %vm9033, %v8986, %v8988
  %v9046 = vsel %vm9033, %v8988, %v8990
  %v9047 = vsel %vm9033, %v8990, %v8992
  %v9048 = vsel %vm9033, %v8992, %v8994
  %v9049 = vsel %vm9033, %v8994, %v8996
  %v9050 = vsel %vm9033, %v8998, %v9000
  %v9051 = vsel %vm9033, %v9000, %v9002
  %v9052 = vsel %vm9033, %v9002, %v9004
  %v9053 = vsel %vm9033, %v9004, %v9006
  %v9054 = vsel %vm9033, %v9006, %v9008
  %v9055 = vsel %vm9033, %v9008, %v9010
  %v9056 = vsel %vm9033, %v9010, %v9012
  %v9057 = vsel %vm9033, %v9012, %v9014
  %v9058 = vsel %vm9033, %v9016, %v9018
  %v9059 = vsel %vm9033, %v9018, %v9020
  %v9060 = vsel %vm9033, %v9020, %v9022
  %v9061 = vsel %vm9033, %v9022, %v9024
  %v9062 = vsel %vm9033, %v9024, %v9026
  %v9063 = vsel %vm9033, %v9026, %v9028
  %v9064 = vsel %vm9033, %v9028, %v9030
  %v9065 = vsel %vm9033, %v9030, %v9032
  %v9098 = vsel %vm231, %v8924, 0
  %9100 = vmatprep.subr.mxu0 %v9035
  %9101 = vmatpush1.msra.mxu0 %v9034
  %9102 = vmatprep.subr.mxu0 %v9043
  %9103 = vmatpush1.msra.mxu0 %v9042
  %9104 = vmatprep.subr.mxu0 %v9051
  %9105 = vmatpush1.msra.mxu0 %v9050
  %9106 = vmatprep.subr.mxu0 %v9059
  %9107 = vmatpush1.msra.mxu0 %v9058
  %9108 = vmatprep.subr.mxu0 0.0
  %9109 = vmatpush1.msra.mxu0 0.0
  %9110 = vmatprep.subr.mxu0 0.0
  %9111 = vmatpush1.msra.mxu0 0.0
  %9112 = vmatprep.subr.mxu0 0.0
  %9113 = vmatpush1.msra.mxu0 0.0
  %9114 = vmatprep.subr.mxu0 0.0
  %9115 = vmatpush1.msra.mxu0 0.0
  %9116 = vmatprep.subr.mxu0 0.0
  %9117 = vmatpush1.msra.mxu0 0.0
  %9118 = vmatprep.subr.mxu0 0.0
  %9119 = vmatpush1.msra.mxu0 0.0
  %9120 = vmatprep.subr.mxu0 0.0
  %9121 = vmatpush1.msra.mxu0 0.0
  %9122 = vmatprep.subr.mxu0 0.0
  %9123 = vmatpush1.msra.mxu0 0.0
  %9124 = vmatprep.subr.mxu0 0.0
  %9125 = vmatpush1.msra.mxu0 0.0
  %9126 = vmatprep.subr.mxu0 0.0
  %9127 = vmatpush1.msra.mxu0 0.0
  %9128 = vmatprep.subr.mxu0 0.0
  %9129 = vmatpush1.msra.mxu0 0.0
  %9130 = vmatprep.subr.mxu0 0.0
  %9131 = vmatpush1.msra.mxu0 0.0
  %9132 = vmatprep.subr.mxu0 0.0
  %9133 = vmatpush1.msra.mxu0 0.0
  %9134 = vmatprep.subr.mxu0 0.0
  %9135 = vmatpush1.msra.mxu0 0.0
  %9136 = vmatprep.subr.mxu0 0.0
  %9137 = vmatpush1.msra.mxu0 0.0
  %9138 = vmatprep.subr.mxu0 0.0
  %9139 = vmatpush1.msra.mxu0 0.0
  %9140 = vmatprep.subr.mxu0 0.0
  %9141 = vmatpush1.msra.mxu0 0.0
  %9142 = vmatprep.subr.mxu0 0.0
  %9143 = vmatpush1.msra.mxu0 0.0
  %9144 = vmatprep.subr.mxu0 0.0
  %9145 = vmatpush1.msra.mxu0 0.0
  %9146 = vmatprep.subr.mxu0 0.0
  %9147 = vmatpush1.msra.mxu0 0.0
  %9148 = vmatprep.subr.mxu0 0.0
  %9149 = vmatpush1.msra.mxu0 0.0
  %9150 = vmatprep.subr.mxu0 0.0
  %9151 = vmatpush1.msra.mxu0 0.0
  %9152 = vmatprep.subr.mxu0 0.0
  %9153 = vmatpush1.msra.mxu0 0.0
  %9154 = vmatprep.subr.mxu0 0.0
  %9155 = vmatpush1.msra.mxu0 0.0
  %9156 = vmatprep.subr.mxu0 0.0
  %9157 = vmatpush1.msra.mxu0 0.0
  %9158 = vmatprep.subr.mxu0 0.0
  %9159 = vmatpush1.msra.mxu0 0.0
  %9160 = vmatprep.subr.mxu0 0.0
  %9161 = vmatpush1.msra.mxu0 0.0
  %9162 = vmatprep.subr.mxu0 0.0
  %9163 = vmatpush1.msra.mxu0 0.0
  %9164 = vmatprep.mubr.f32.mxu0 0.0
  %9165 = vmatmul.mubr.f32.gmra.mrb[0].mxu0 %v9098
  %v9166 = vpop.f32.mrb[0].mxu0
  %v9167 = vadd.f32 0.0, %v9166
  %v9168 = vpop.f32.mrb[0].mxu0
  %v9169 = vadd.f32 0.0, %v9168
  %9170 = vdwg.mxu0
  %9171 = vmatprep.subr.mxu0 %v9037
  %9172 = vmatpush1.msra.mxu0 %v9036
  %9173 = vmatprep.subr.mxu0 %v9045
  %9174 = vmatpush1.msra.mxu0 %v9044
  %9175 = vmatprep.subr.mxu0 %v9053
  %9176 = vmatpush1.msra.mxu0 %v9052
  %9177 = vmatprep.subr.mxu0 %v9061
  %9178 = vmatpush1.msra.mxu0 %v9060
  %9179 = vmatprep.subr.mxu0 0.0
  %9180 = vmatpush1.msra.mxu0 0.0
  %9181 = vmatprep.subr.mxu0 0.0
  %9182 = vmatpush1.msra.mxu0 0.0
  %9183 = vmatprep.subr.mxu0 0.0
  %9184 = vmatpush1.msra.mxu0 0.0
  %9185 = vmatprep.subr.mxu0 0.0
  %9186 = vmatpush1.msra.mxu0 0.0
  %9187 = vmatprep.subr.mxu0 0.0
  %9188 = vmatpush1.msra.mxu0 0.0
  %9189 = vmatprep.subr.mxu0 0.0
  %9190 = vmatpush1.msra.mxu0 0.0
  %9191 = vmatprep.subr.mxu0 0.0
  %9192 = vmatpush1.msra.mxu0 0.0
  %9193 = vmatprep.subr.mxu0 0.0
  %9194 = vmatpush1.msra.mxu0 0.0
  %9195 = vmatprep.subr.mxu0 0.0
  %9196 = vmatpush1.msra.mxu0 0.0
  %9197 = vmatprep.subr.mxu0 0.0
  %9198 = vmatpush1.msra.mxu0 0.0
  %9199 = vmatprep.subr.mxu0 0.0
  %9200 = vmatpush1.msra.mxu0 0.0
  %9201 = vmatprep.subr.mxu0 0.0
  %9202 = vmatpush1.msra.mxu0 0.0
  %9203 = vmatprep.subr.mxu0 0.0
  %9204 = vmatpush1.msra.mxu0 0.0
  %9205 = vmatprep.subr.mxu0 0.0
  %9206 = vmatpush1.msra.mxu0 0.0
  %9207 = vmatprep.subr.mxu0 0.0
  %9208 = vmatpush1.msra.mxu0 0.0
  %9209 = vmatprep.subr.mxu0 0.0
  %9210 = vmatpush1.msra.mxu0 0.0
  %9211 = vmatprep.subr.mxu0 0.0
  %9212 = vmatpush1.msra.mxu0 0.0
  %9213 = vmatprep.subr.mxu0 0.0
  %9214 = vmatpush1.msra.mxu0 0.0
  %9215 = vmatprep.subr.mxu0 0.0
  %9216 = vmatpush1.msra.mxu0 0.0
  %9217 = vmatprep.subr.mxu0 0.0
  %9218 = vmatpush1.msra.mxu0 0.0
  %9219 = vmatprep.subr.mxu0 0.0
  %9220 = vmatpush1.msra.mxu0 0.0
  %9221 = vmatprep.subr.mxu0 0.0
  %9222 = vmatpush1.msra.mxu0 0.0
  %9223 = vmatprep.subr.mxu0 0.0
  %9224 = vmatpush1.msra.mxu0 0.0
  %9225 = vmatprep.subr.mxu0 0.0
  %9226 = vmatpush1.msra.mxu0 0.0
  %9227 = vmatprep.subr.mxu0 0.0
  %9228 = vmatpush1.msra.mxu0 0.0
  %9229 = vmatprep.subr.mxu0 0.0
  %9230 = vmatpush1.msra.mxu0 0.0
  %9231 = vmatprep.subr.mxu0 0.0
  %9232 = vmatpush1.msra.mxu0 0.0
  %9233 = vmatprep.subr.mxu0 0.0
  %9234 = vmatpush1.msra.mxu0 0.0
  %9235 = vmatprep.mubr.f32.mxu0 0.0
  %9236 = vmatmul.mubr.f32.gmra.mrb[0].mxu0 %v9098
  %v9237 = vpop.f32.mrb[0].mxu0
  %v9238 = vadd.f32 0.0, %v9237
  %v9239 = vpop.f32.mrb[0].mxu0
  %9240 = vdwg.mxu0
  %9241 = vmatprep.subr.mxu0 %v9039
  %9242 = vmatpush1.msra.mxu0 %v9038
  %9243 = vmatprep.subr.mxu0 %v9047
  %9244 = vmatpush1.msra.mxu0 %v9046
  %9245 = vmatprep.subr.mxu0 %v9055
  %9246 = vmatpush1.msra.mxu0 %v9054
  %9247 = vmatprep.subr.mxu0 %v9063
  %9248 = vmatpush1.msra.mxu0 %v9062
  %9249 = vmatprep.subr.mxu0 0.0
  %9250 = vmatpush1.msra.mxu0 0.0
  %9251 = vmatprep.subr.mxu0 0.0
  %9252 = vmatpush1.msra.mxu0 0.0
  %9253 = vmatprep.subr.mxu0 0.0
  %9254 = vmatpush1.msra.mxu0 0.0
  %9255 = vmatprep.subr.mxu0 0.0
  %9256 = vmatpush1.msra.mxu0 0.0
  %9257 = vmatprep.subr.mxu0 0.0
  %9258 = vmatpush1.msra.mxu0 0.0
  %9259 = vmatprep.subr.mxu0 0.0
  %9260 = vmatpush1.msra.mxu0 0.0
  %9261 = vmatprep.subr.mxu0 0.0
  %9262 = vmatpush1.msra.mxu0 0.0
  %9263 = vmatprep.subr.mxu0 0.0
  %9264 = vmatpush1.msra.mxu0 0.0
  %9265 = vmatprep.subr.mxu0 0.0
  %9266 = vmatpush1.msra.mxu0 0.0
  %9267 = vmatprep.subr.mxu0 0.0
  %9268 = vmatpush1.msra.mxu0 0.0
  %9269 = vmatprep.subr.mxu0 0.0
  %9270 = vmatpush1.msra.mxu0 0.0
  %9271 = vmatprep.subr.mxu0 0.0
  %9272 = vmatpush1.msra.mxu0 0.0
  %9273 = vmatprep.subr.mxu0 0.0
  %9274 = vmatpush1.msra.mxu0 0.0
  %9275 = vmatprep.subr.mxu0 0.0
  %9276 = vmatpush1.msra.mxu0 0.0
  %9277 = vmatprep.subr.mxu0 0.0
  %9278 = vmatpush1.msra.mxu0 0.0
  %9279 = vmatprep.subr.mxu0 0.0
  %9280 = vmatpush1.msra.mxu0 0.0
  %9281 = vmatprep.subr.mxu0 0.0
  %9282 = vmatpush1.msra.mxu0 0.0
  %9283 = vmatprep.subr.mxu0 0.0
  %9284 = vmatpush1.msra.mxu0 0.0
  %9285 = vmatprep.subr.mxu0 0.0
  %9286 = vmatpush1.msra.mxu0 0.0
  %9287 = vmatprep.subr.mxu0 0.0
  %9288 = vmatpush1.msra.mxu0 0.0
  %9289 = vmatprep.subr.mxu0 0.0
  %9290 = vmatpush1.msra.mxu0 0.0
  %9291 = vmatprep.subr.mxu0 0.0
  %9292 = vmatpush1.msra.mxu0 0.0
  %9293 = vmatprep.subr.mxu0 0.0
  %9294 = vmatpush1.msra.mxu0 0.0
  %9295 = vmatprep.subr.mxu0 0.0
  %9296 = vmatpush1.msra.mxu0 0.0
  %9297 = vmatprep.subr.mxu0 0.0
  %9298 = vmatpush1.msra.mxu0 0.0
  %9299 = vmatprep.subr.mxu0 0.0
  %9300 = vmatpush1.msra.mxu0 0.0
  %9301 = vmatprep.subr.mxu0 0.0
  %9302 = vmatpush1.msra.mxu0 0.0
  %9303 = vmatprep.subr.mxu0 0.0
  %9304 = vmatpush1.msra.mxu0 0.0
  %9305 = vmatprep.mubr.f32.mxu0 0.0
  %9306 = vmatmul.mubr.f32.gmra.mrb[0].mxu0 %v9098
  %v9307 = vpop.f32.mrb[0].mxu0
  %v9308 = vpop.f32.mrb[0].mxu0
  %v9309 = vadd.f32 0.0, %v9308
  %9310 = vdwg.mxu0
  %9311 = vmatprep.subr.mxu0 %v9041
  %9312 = vmatpush1.msra.mxu0 %v9040
  %9313 = vmatprep.subr.mxu0 %v9049
  %9314 = vmatpush1.msra.mxu0 %v9048
  %9315 = vmatprep.subr.mxu0 %v9057
  %9316 = vmatpush1.msra.mxu0 %v9056
  %9317 = vmatprep.subr.mxu0 %v9065
  %9318 = vmatpush1.msra.mxu0 %v9064
  %9319 = vmatprep.subr.mxu0 0.0
  %9320 = vmatpush1.msra.mxu0 0.0
  %9321 = vmatprep.subr.mxu0 0.0
  %9322 = vmatpush1.msra.mxu0 0.0
  %9323 = vmatprep.subr.mxu0 0.0
  %9324 = vmatpush1.msra.mxu0 0.0
  %9325 = vmatprep.subr.mxu0 0.0
  %9326 = vmatpush1.msra.mxu0 0.0
  %9327 = vmatprep.subr.mxu0 0.0
  %9328 = vmatpush1.msra.mxu0 0.0
  %9329 = vmatprep.subr.mxu0 0.0
  %9330 = vmatpush1.msra.mxu0 0.0
  %9331 = vmatprep.subr.mxu0 0.0
  %9332 = vmatpush1.msra.mxu0 0.0
  %9333 = vmatprep.subr.mxu0 0.0
  %9334 = vmatpush1.msra.mxu0 0.0
  %9335 = vmatprep.subr.mxu0 0.0
  %9336 = vmatpush1.msra.mxu0 0.0
  %9337 = vmatprep.subr.mxu0 0.0
  %9338 = vmatpush1.msra.mxu0 0.0
  %9339 = vmatprep.subr.mxu0 0.0
  %9340 = vmatpush1.msra.mxu0 0.0
  %9341 = vmatprep.subr.mxu0 0.0
  %9342 = vmatpush1.msra.mxu0 0.0
  %9343 = vmatprep.subr.mxu0 0.0
  %9344 = vmatpush1.msra.mxu0 0.0
  %9345 = vmatprep.subr.mxu0 0.0
  %9346 = vmatpush1.msra.mxu0 0.0
  %9347 = vmatprep.subr.mxu0 0.0
  %9348 = vmatpush1.msra.mxu0 0.0
  %9349 = vmatprep.subr.mxu0 0.0
  %9350 = vmatpush1.msra.mxu0 0.0
  %9351 = vmatprep.subr.mxu0 0.0
  %9352 = vmatpush1.msra.mxu0 0.0
  %9353 = vmatprep.subr.mxu0 0.0
  %9354 = vmatpush1.msra.mxu0 0.0
  %9355 = vmatprep.subr.mxu0 0.0
  %9356 = vmatpush1.msra.mxu0 0.0
  %9357 = vmatprep.subr.mxu0 0.0
  %9358 = vmatpush1.msra.mxu0 0.0
  %9359 = vmatprep.subr.mxu0 0.0
  %9360 = vmatpush1.msra.mxu0 0.0
  %9361 = vmatprep.subr.mxu0 0.0
  %9362 = vmatpush1.msra.mxu0 0.0
  %9363 = vmatprep.subr.mxu0 0.0
  %9364 = vmatpush1.msra.mxu0 0.0
  %9365 = vmatprep.subr.mxu0 0.0
  %9366 = vmatpush1.msra.mxu0 0.0
  %9367 = vmatprep.subr.mxu0 0.0
  %9368 = vmatpush1.msra.mxu0 0.0
  %9369 = vmatprep.subr.mxu0 0.0
  %9370 = vmatpush1.msra.mxu0 0.0
  %9371 = vmatprep.subr.mxu0 0.0
  %9372 = vmatpush1.msra.mxu0 0.0
  %9373 = vmatprep.subr.mxu0 0.0
  %9374 = vmatpush1.msra.mxu0 0.0
  %9375 = vmatprep.mubr.f32.mxu0 0.0
  %9376 = vmatmul.mubr.f32.gmra.mrb[0].mxu0 %v9098
  %v9377 = vpop.f32.mrb[0].mxu0
  %v9378 = vadd.f32 0.0, %v9377
  %v9379 = vpop.f32.mrb[0].mxu0
  %v9380 = vadd.f32 0.0, %v9379
  %9381 = vdwg.mxu0
  %v9382 = vadd.f32 %v8879, %v9167
  %v9383 = vadd.f32 %v8880, %v9169
  %v9384 = vadd.f32 %v8881, %v9238
  %v9385 = vadd.f32 %v8882, %v9309
  %v9386 = vadd.f32 %v8883, %v9378
  %v9387 = vadd.f32 %v8884, %v9380
  %v9388 = vld [vmem:[%s1 + $0x14] sm:$0xf]
  %v9389 = vld [vmem:[%s0] sm:$0xff]
  %v9390 = vld [vmem:[%s0 + $0x8] sm:$0xff]
  %v9391 = vld [vmem:[%s0 + $0x10] sm:$0xff]
  %v9392 = vld [vmem:[%s0 + $0x18] sm:$0xff]
  %v9393 = vld [vmem:[%s0 + $0x20] sm:$0xff]
  %v9394 = vld [vmem:[%s0 + $0x28] sm:$0xff]
  %v9395 = vld [vmem:[%s0 + $0x30] sm:$0xff]
  %v9396 = vld [vmem:[%s0 + $0x38] sm:$0xff]
  %v9397 = vld [vmem:[%s0 + $0x40] sm:$0xff]
  %v9398 = vld [vmem:[%s0 + $0x50] sm:$0xff]
  %v9399 = vld [vmem:[%s0 + $0x58] sm:$0xff]
  %v9400 = vld [vmem:[%s0 + $0x60] sm:$0xff]
  %v9401 = vld [vmem:[%s0 + $0x68] sm:$0xff]
  %v9402 = vld [vmem:[%s0 + $0x70] sm:$0xff]
  %v9403 = vld [vmem:[%s0 + $0x78] sm:$0xff]
  %v9404 = vld [vmem:[%s0 + $0x80] sm:$0xff]
  %v9405 = vld [vmem:[%s0 + $0x88] sm:$0xff]
  %v9406 = vld [vmem:[%s0 + $0x90] sm:$0xff]
  %v9407 = vld [vmem:[%s0 + $0xa0] sm:$0xff]
  %v9408 = vld [vmem:[%s0 + $0xa8] sm:$0xff]
  %v9409 = vld [vmem:[%s0 + $0xb0] sm:$0xff]
  %v9410 = vld [vmem:[%s0 + $0xb8] sm:$0xff]
  %v9411 = vld [vmem:[%s0 + $0xc0] sm:$0xff]
  %v9412 = vld [vmem:[%s0 + $0xc8] sm:$0xff]
  %v9413 = vld [vmem:[%s0 + $0xd0] sm:$0xff]
  %v9414 = vld [vmem:[%s0 + $0xd8] sm:$0xff]
  %v9415 = vld [vmem:[%s0 + $0xe0] sm:$0xff]
  %v9416 = vld [vmem:[%s0 + $0xf0] sm:$0xff]
  %v9417 = vld [vmem:[%s0 + $0xf8] sm:$0xff]
  %v9418 = vld [vmem:[%s0 + $0x100] sm:$0xff]
  %v9419 = vld [vmem:[%s0 + $0x108] sm:$0xff]
  %v9420 = vld [vmem:[%s0 + $0x110] sm:$0xff]
  %v9421 = vld [vmem:[%s0 + $0x118] sm:$0xff]
  %v9422 = vld [vmem:[%s0 + $0x120] sm:$0xff]
  %v9423 = vld [vmem:[%s0 + $0x128] sm:$0xff]
  %v9424 = vld [vmem:[%s0 + $0x130] sm:$0xff]
  %9461 = vrot.lane.b32.xlu0 %v9389, 122
  %v9462 = vpop.permute.xlu0 %9461
  %9463 = vrot.lane.b32.xlu0 %v9390, 122
  %v9464 = vpop.permute.xlu0 %9463
  %9465 = vrot.lane.b32.xlu0 %v9391, 122
  %v9466 = vpop.permute.xlu0 %9465
  %9467 = vrot.lane.b32.xlu0 %v9392, 122
  %v9468 = vpop.permute.xlu0 %9467
  %9469 = vrot.lane.b32.xlu0 %v9393, 122
  %v9470 = vpop.permute.xlu0 %9469
  %9471 = vrot.lane.b32.xlu0 %v9394, 122
  %v9472 = vpop.permute.xlu0 %9471
  %9473 = vrot.lane.b32.xlu0 %v9395, 122
  %v9474 = vpop.permute.xlu0 %9473
  %9475 = vrot.lane.b32.xlu0 %v9396, 122
  %v9476 = vpop.permute.xlu0 %9475
  %9477 = vrot.lane.b32.xlu0 %v9397, 122
  %v9478 = vpop.permute.xlu0 %9477
  %9479 = vrot.lane.b32.xlu0 %v9398, 122
  %v9480 = vpop.permute.xlu0 %9479
  %9481 = vrot.lane.b32.xlu0 %v9399, 122
  %v9482 = vpop.permute.xlu0 %9481
  %9483 = vrot.lane.b32.xlu0 %v9400, 122
  %v9484 = vpop.permute.xlu0 %9483
  %9485 = vrot.lane.b32.xlu0 %v9401, 122
  %v9486 = vpop.permute.xlu0 %9485
  %9487 = vrot.lane.b32.xlu0 %v9402, 122
  %v9488 = vpop.permute.xlu0 %9487
  %9489 = vrot.lane.b32.xlu0 %v9403, 122
  %v9490 = vpop.permute.xlu0 %9489
  %9491 = vrot.lane.b32.xlu0 %v9404, 122
  %v9492 = vpop.permute.xlu0 %9491
  %9493 = vrot.lane.b32.xlu0 %v9405, 122
  %v9494 = vpop.permute.xlu0 %9493
  %9495 = vrot.lane.b32.xlu0 %v9406, 122
  %v9496 = vpop.permute.xlu0 %9495
  %9497 = vrot.lane.b32.xlu0 %v9407, 122
  %v9498 = vpop.permute.xlu0 %9497
  %9499 = vrot.lane.b32.xlu0 %v9408, 122
  %v9500 = vpop.permute.xlu0 %9499
  %9501 = vrot.lane.b32.xlu0 %v9409, 122
  %v9502 = vpop.permute.xlu0 %9501
  %9503 = vrot.lane.b32.xlu0 %v9410, 122
  %v9504 = vpop.permute.xlu0 %9503
  %9505 = vrot.lane.b32.xlu0 %v9411, 122
  %v9506 = vpop.permute.xlu0 %9505
  %9507 = vrot.lane.b32.xlu0 %v9412, 122
  %v9508 = vpop.permute.xlu0 %9507
  %9509 = vrot.lane.b32.xlu0 %v9413, 122
  %v9510 = vpop.permute.xlu0 %9509
  %9511 = vrot.lane.b32.xlu0 %v9414, 122
  %v9512 = vpop.permute.xlu0 %9511
  %9513 = vrot.lane.b32.xlu0 %v9415, 122
  %v9514 = vpop.permute.xlu0 %9513
  %9515 = vrot.lane.b32.xlu0 %v9416, 122
  %v9516 = vpop.permute.xlu0 %9515
  %9517 = vrot.lane.b32.xlu0 %v9417, 122
  %v9518 = vpop.permute.xlu0 %9517
  %9519 = vrot.lane.b32.xlu0 %v9418, 122
  %v9520 = vpop.permute.xlu0 %9519
  %9521 = vrot.lane.b32.xlu0 %v9419, 122
  %v9522 = vpop.permute.xlu0 %9521
  %9523 = vrot.lane.b32.xlu0 %v9420, 122
  %v9524 = vpop.permute.xlu0 %9523
  %9525 = vrot.lane.b32.xlu0 %v9421, 122
  %v9526 = vpop.permute.xlu0 %9525
  %9527 = vrot.lane.b32.xlu0 %v9422, 122
  %v9528 = vpop.permute.xlu0 %9527
  %9529 = vrot.lane.b32.xlu0 %v9423, 122
  %v9530 = vpop.permute.xlu0 %9529
  %9531 = vrot.lane.b32.xlu0 %v9424, 122
  %v9532 = vpop.permute.xlu0 %9531
  %vm9533 = vcmask 998400
  %v9534 = vsel %vm9533, %v9462, %v9464
  %v9535 = vsel %vm9533, %v9464, %v9466
  %v9536 = vsel %vm9533, %v9466, %v9468
  %v9537 = vsel %vm9533, %v9468, %v9470
  %v9538 = vsel %vm9533, %v9470, %v9472
  %v9539 = vsel %vm9533, %v9472, %v9474
  %v9540 = vsel %vm9533, %v9474, %v9476
  %v9541 = vsel %vm9533, %v9476, %v9478
  %v9542 = vsel %vm9533, %v9480, %v9482
  %v9543 = vsel %vm9533, %v9482, %v9484
  %v9544 = vsel %vm9533, %v9484, %v9486
  %v9545 = vsel %vm9533, %v9486, %v9488
  %v9546 = vsel %vm9533, %v9488, %v9490
  %v9547 = vsel %vm9533, %v9490, %v9492
  %v9548 = vsel %vm9533, %v9492, %v9494
  %v9549 = vsel %vm9533, %v9494, %v9496
  %v9550 = vsel %vm9533, %v9498, %v9500
  %v9551 = vsel %vm9533, %v9500, %v9502
  %v9552 = vsel %vm9533, %v9502, %v9504
  %v9553 = vsel %vm9533, %v9504, %v9506
  %v9554 = vsel %vm9533, %v9506, %v9508
  %v9555 = vsel %vm9533, %v9508, %v9510
  %v9556 = vsel %vm9533, %v9510, %v9512
  %v9557 = vsel %vm9533, %v9512, %v9514
  %v9558 = vsel %vm9533, %v9516, %v9518
  %v9559 = vsel %vm9533, %v9518, %v9520
  %v9560 = vsel %vm9533, %v9520, %v9522
  %v9561 = vsel %vm9533, %v9522, %v9524
  %v9562 = vsel %vm9533, %v9524, %v9526
  %v9563 = vsel %vm9533, %v9526, %v9528
  %v9564 = vsel %vm9533, %v9528, %v9530
  %v9565 = vsel %vm9533, %v9530, %v9532
  %v9599 = vsel %vm231, %v9388, 0
  %9601 = vmatprep.subr.mxu0 %v9535
  %9602 = vmatpush1.msra.mxu0 %v9534
  %9603 = vmatprep.subr.mxu0 %v9543
  %9604 = vmatpush1.msra.mxu0 %v9542
  %9605 = vmatprep.subr.mxu0 %v9551
  %9606 = vmatpush1.msra.mxu0 %v9550
  %9607 = vmatprep.subr.mxu0 %v9559
  %9608 = vmatpush1.msra.mxu0 %v9558
  %9609 = vmatprep.subr.mxu0 0.0
  %9610 = vmatpush1.msra.mxu0 0.0
  %9611 = vmatprep.subr.mxu0 0.0
  %9612 = vmatpush1.msra.mxu0 0.0
  %9613 = vmatprep.subr.mxu0 0.0
  %9614 = vmatpush1.msra.mxu0 0.0
  %9615 = vmatprep.subr.mxu0 0.0
  %9616 = vmatpush1.msra.mxu0 0.0
  %9617 = vmatprep.subr.mxu0 0.0
  %9618 = vmatpush1.msra.mxu0 0.0
  %9619 = vmatprep.subr.mxu0 0.0
  %9620 = vmatpush1.msra.mxu0 0.0
  %9621 = vmatprep.subr.mxu0 0.0
  %9622 = vmatpush1.msra.mxu0 0.0
  %9623 = vmatprep.subr.mxu0 0.0
  %9624 = vmatpush1.msra.mxu0 0.0
  %9625 = vmatprep.subr.mxu0 0.0
  %9626 = vmatpush1.msra.mxu0 0.0
  %9627 = vmatprep.subr.mxu0 0.0
  %9628 = vmatpush1.msra.mxu0 0.0
  %9629 = vmatprep.subr.mxu0 0.0
  %9630 = vmatpush1.msra.mxu0 0.0
  %9631 = vmatprep.subr.mxu0 0.0
  %9632 = vmatpush1.msra.mxu0 0.0
  %9633 = vmatprep.subr.mxu0 0.0
  %9634 = vmatpush1.msra.mxu0 0.0
  %9635 = vmatprep.subr.mxu0 0.0
  %9636 = vmatpush1.msra.mxu0 0.0
  %9637 = vmatprep.subr.mxu0 0.0
  %9638 = vmatpush1.msra.mxu0 0.0
  %9639 = vmatprep.subr.mxu0 0.0
  %9640 = vmatpush1.msra.mxu0 0.0
  %9641 = vmatprep.subr.mxu0 0.0
  %9642 = vmatpush1.msra.mxu0 0.0
  %9643 = vmatprep.subr.mxu0 0.0
  %9644 = vmatpush1.msra.mxu0 0.0
  %9645 = vmatprep.subr.mxu0 0.0
  %9646 = vmatpush1.msra.mxu0 0.0
  %9647 = vmatprep.subr.mxu0 0.0
  %9648 = vmatpush1.msra.mxu0 0.0
  %9649 = vmatprep.subr.mxu0 0.0
  %9650 = vmatpush1.msra.mxu0 0.0
  %9651 = vmatprep.subr.mxu0 0.0
  %9652 = vmatpush1.msra.mxu0 0.0
  %9653 = vmatprep.subr.mxu0 0.0
  %9654 = vmatpush1.msra.mxu0 0.0
  %9655 = vmatprep.subr.mxu0 0.0
  %9656 = vmatpush1.msra.mxu0 0.0
  %9657 = vmatprep.subr.mxu0 0.0
  %9658 = vmatpush1.msra.mxu0 0.0
  %9659 = vmatprep.subr.mxu0 0.0
  %9660 = vmatpush1.msra.mxu0 0.0
  %9661 = vmatprep.subr.mxu0 0.0
  %9662 = vmatpush1.msra.mxu0 0.0
  %9663 = vmatprep.subr.mxu0 0.0
  %9664 = vmatpush1.msra.mxu0 0.0
  %9665 = vmatprep.mubr.f32.mxu0 0.0
  %9666 = vmatmul.mubr.f32.gmra.mrb[0].mxu0 %v9599
  %v9667 = vpop.f32.mrb[0].mxu0
  %v9668 = vadd.f32 0.0, %v9667
  %v9669 = vpop.f32.mrb[0].mxu0
  %v9670 = vadd.f32 0.0, %v9669
  %9671 = vdwg.mxu0
  %9672 = vmatprep.subr.mxu0 %v9537
  %9673 = vmatpush1.msra.mxu0 %v9536
  %9674 = vmatprep.subr.mxu0 %v9545
  %9675 = vmatpush1.msra.mxu0 %v9544
  %9676 = vmatprep.subr.mxu0 %v9553
  %9677 = vmatpush1.msra.mxu0 %v9552
  %9678 = vmatprep.subr.mxu0 %v9561
  %9679 = vmatpush1.msra.mxu0 %v9560
  %9680 = vmatprep.subr.mxu0 0.0
  %9681 = vmatpush1.msra.mxu0 0.0
  %9682 = vmatprep.subr.mxu0 0.0
  %9683 = vmatpush1.msra.mxu0 0.0
  %9684 = vmatprep.subr.mxu0 0.0
  %9685 = vmatpush1.msra.mxu0 0.0
  %9686 = vmatprep.subr.mxu0 0.0
  %9687 = vmatpush1.msra.mxu0 0.0
  %9688 = vmatprep.subr.mxu0 0.0
  %9689 = vmatpush1.msra.mxu0 0.0
  %9690 = vmatprep.subr.mxu0 0.0
  %9691 = vmatpush1.msra.mxu0 0.0
  %9692 = vmatprep.subr.mxu0 0.0
  %9693 = vmatpush1.msra.mxu0 0.0
  %9694 = vmatprep.subr.mxu0 0.0
  %9695 = vmatpush1.msra.mxu0 0.0
  %9696 = vmatprep.subr.mxu0 0.0
  %9697 = vmatpush1.msra.mxu0 0.0
  %9698 = vmatprep.subr.mxu0 0.0
  %9699 = vmatpush1.msra.mxu0 0.0
  %9700 = vmatprep.subr.mxu0 0.0
  %9701 = vmatpush1.msra.mxu0 0.0
  %9702 = vmatprep.subr.mxu0 0.0
  %9703 = vmatpush1.msra.mxu0 0.0
  %9704 = vmatprep.subr.mxu0 0.0
  %9705 = vmatpush1.msra.mxu0 0.0
  %9706 = vmatprep.subr.mxu0 0.0
  %9707 = vmatpush1.msra.mxu0 0.0
  %9708 = vmatprep.subr.mxu0 0.0
  %9709 = vmatpush1.msra.mxu0 0.0
  %9710 = vmatprep.subr.mxu0 0.0
  %9711 = vmatpush1.msra.mxu0 0.0
  %9712 = vmatprep.subr.mxu0 0.0
  %9713 = vmatpush1.msra.mxu0 0.0
  %9714 = vmatprep.subr.mxu0 0.0
  %9715 = vmatpush1.msra.mxu0 0.0
  %9716 = vmatprep.subr.mxu0 0.0
  %9717 = vmatpush1.msra.mxu0 0.0
  %9718 = vmatprep.subr.mxu0 0.0
  %9719 = vmatpush1.msra.mxu0 0.0
  %9720 = vmatprep.subr.mxu0 0.0
  %9721 = vmatpush1.msra.mxu0 0.0
  %9722 = vmatprep.subr.mxu0 0.0
  %9723 = vmatpush1.msra.mxu0 0.0
  %9724 = vmatprep.subr.mxu0 0.0
  %9725 = vmatpush1.msra.mxu0 0.0
  %9726 = vmatprep.subr.mxu0 0.0
  %9727 = vmatpush1.msra.mxu0 0.0
  %9728 = vmatprep.subr.mxu0 0.0
  %9729 = vmatpush1.msra.mxu0 0.0
  %9730 = vmatprep.subr.mxu0 0.0
  %9731 = vmatpush1.msra.mxu0 0.0
  %9732 = vmatprep.subr.mxu0 0.0
  %9733 = vmatpush1.msra.mxu0 0.0
  %9734 = vmatprep.subr.mxu0 0.0
  %9735 = vmatpush1.msra.mxu0 0.0
  %9736 = vmatprep.mubr.f32.mxu0 0.0
  %9737 = vmatmul.mubr.f32.gmra.mrb[0].mxu0 %v9599
  %v9738 = vpop.f32.mrb[0].mxu0
  %v9739 = vadd.f32 0.0, %v9738
  %v9740 = vpop.f32.mrb[0].mxu0
  %9741 = vdwg.mxu0
  %9742 = vmatprep.subr.mxu0 %v9539
  %9743 = vmatpush1.msra.mxu0 %v9538
  %9744 = vmatprep.subr.mxu0 %v9547
  %9745 = vmatpush1.msra.mxu0 %v9546
  %9746 = vmatprep.subr.mxu0 %v9555
  %9747 = vmatpush1.msra.mxu0 %v9554
  %9748 = vmatprep.subr.mxu0 %v9563
  %9749 = vmatpush1.msra.mxu0 %v9562
  %9750 = vmatprep.subr.mxu0 0.0
  %9751 = vmatpush1.msra.mxu0 0.0
  %9752 = vmatprep.subr.mxu0 0.0
  %9753 = vmatpush1.msra.mxu0 0.0
  %9754 = vmatprep.subr.mxu0 0.0
  %9755 = vmatpush1.msra.mxu0 0.0
  %9756 = vmatprep.subr.mxu0 0.0
  %9757 = vmatpush1.msra.mxu0 0.0
  %9758 = vmatprep.subr.mxu0 0.0
  %9759 = vmatpush1.msra.mxu0 0.0
  %9760 = vmatprep.subr.mxu0 0.0
  %9761 = vmatpush1.msra.mxu0 0.0
  %9762 = vmatprep.subr.mxu0 0.0
  %9763 = vmatpush1.msra.mxu0 0.0
  %9764 = vmatprep.subr.mxu0 0.0
  %9765 = vmatpush1.msra.mxu0 0.0
  %9766 = vmatprep.subr.mxu0 0.0
  %9767 = vmatpush1.msra.mxu0 0.0
  %9768 = vmatprep.subr.mxu0 0.0
  %9769 = vmatpush1.msra.mxu0 0.0
  %9770 = vmatprep.subr.mxu0 0.0
  %9771 = vmatpush1.msra.mxu0 0.0
  %9772 = vmatprep.subr.mxu0 0.0
  %9773 = vmatpush1.msra.mxu0 0.0
  %9774 = vmatprep.subr.mxu0 0.0
  %9775 = vmatpush1.msra.mxu0 0.0
  %9776 = vmatprep.subr.mxu0 0.0
  %9777 = vmatpush1.msra.mxu0 0.0
  %9778 = vmatprep.subr.mxu0 0.0
  %9779 = vmatpush1.msra.mxu0 0.0
  %9780 = vmatprep.subr.mxu0 0.0
  %9781 = vmatpush1.msra.mxu0 0.0
  %9782 = vmatprep.subr.mxu0 0.0
  %9783 = vmatpush1.msra.mxu0 0.0
  %9784 = vmatprep.subr.mxu0 0.0
  %9785 = vmatpush1.msra.mxu0 0.0
  %9786 = vmatprep.subr.mxu0 0.0
  %9787 = vmatpush1.msra.mxu0 0.0
  %9788 = vmatprep.subr.mxu0 0.0
  %9789 = vmatpush1.msra.mxu0 0.0
  %9790 = vmatprep.subr.mxu0 0.0
  %9791 = vmatpush1.msra.mxu0 0.0
  %9792 = vmatprep.subr.mxu0 0.0
  %9793 = vmatpush1.msra.mxu0 0.0
  %9794 = vmatprep.subr.mxu0 0.0
  %9795 = vmatpush1.msra.mxu0 0.0
  %9796 = vmatprep.subr.mxu0 0.0
  %9797 = vmatpush1.msra.mxu0 0.0
  %9798 = vmatprep.subr.mxu0 0.0
  %9799 = vmatpush1.msra.mxu0 0.0
  %9800 = vmatprep.subr.mxu0 0.0
  %9801 = vmatpush1.msra.mxu0 0.0
  %9802 = vmatprep.subr.mxu0 0.0
  %9803 = vmatpush1.msra.mxu0 0.0
  %9804 = vmatprep.subr.mxu0 0.0
  %9805 = vmatpush1.msra.mxu0 0.0
  %9806 = vmatprep.mubr.f32.mxu0 0.0
  %9807 = vmatmul.mubr.f32.gmra.mrb[0].mxu0 %v9599
  %v9808 = vpop.f32.mrb[0].mxu0
  %v9809 = vpop.f32.mrb[0].mxu0
  %v9810 = vadd.f32 0.0, %v9809
  %9811 = vdwg.mxu0
  %9812 = vmatprep.subr.mxu0 %v9541
  %9813 = vmatpush1.msra.mxu0 %v9540
  %9814 = vmatprep.subr.mxu0 %v9549
  %9815 = vmatpush1.msra.mxu0 %v9548
  %9816 = vmatprep.subr.mxu0 %v9557
  %9817 = vmatpush1.msra.mxu0 %v9556
  %9818 = vmatprep.subr.mxu0 %v9565
  %9819 = vmatpush1.msra.mxu0 %v9564
  %9820 = vmatprep.subr.mxu0 0.0
  %9821 = vmatpush1.msra.mxu0 0.0
  %9822 = vmatprep.subr.mxu0 0.0
  %9823 = vmatpush1.msra.mxu0 0.0
  %9824 = vmatprep.subr.mxu0 0.0
  %9825 = vmatpush1.msra.mxu0 0.0
  %9826 = vmatprep.subr.mxu0 0.0
  %9827 = vmatpush1.msra.mxu0 0.0
  %9828 = vmatprep.subr.mxu0 0.0
  %9829 = vmatpush1.msra.mxu0 0.0
  %9830 = vmatprep.subr.mxu0 0.0
  %9831 = vmatpush1.msra.mxu0 0.0
  %9832 = vmatprep.subr.mxu0 0.0
  %9833 = vmatpush1.msra.mxu0 0.0
  %9834 = vmatprep.subr.mxu0 0.0
  %9835 = vmatpush1.msra.mxu0 0.0
  %9836 = vmatprep.subr.mxu0 0.0
  %9837 = vmatpush1.msra.mxu0 0.0
  %9838 = vmatprep.subr.mxu0 0.0
  %9839 = vmatpush1.msra.mxu0 0.0
  %9840 = vmatprep.subr.mxu0 0.0
  %9841 = vmatpush1.msra.mxu0 0.0
  %9842 = vmatprep.subr.mxu0 0.0
  %9843 = vmatpush1.msra.mxu0 0.0
  %9844 = vmatprep.subr.mxu0 0.0
  %9845 = vmatpush1.msra.mxu0 0.0
  %9846 = vmatprep.subr.mxu0 0.0
  %9847 = vmatpush1.msra.mxu0 0.0
  %9848 = vmatprep.subr.mxu0 0.0
  %9849 = vmatpush1.msra.mxu0 0.0
  %9850 = vmatprep.subr.mxu0 0.0
  %9851 = vmatpush1.msra.mxu0 0.0
  %9852 = vmatprep.subr.mxu0 0.0
  %9853 = vmatpush1.msra.mxu0 0.0
  %9854 = vmatprep.subr.mxu0 0.0
  %9855 = vmatpush1.msra.mxu0 0.0
  %9856 = vmatprep.subr.mxu0 0.0
  %9857 = vmatpush1.msra.mxu0 0.0
  %9858 = vmatprep.subr.mxu0 0.0
  %9859 = vmatpush1.msra.mxu0 0.0
  %9860 = vmatprep.subr.mxu0 0.0
  %9861 = vmatpush1.msra.mxu0 0.0
  %9862 = vmatprep.subr.mxu0 0.0
  %9863 = vmatpush1.msra.mxu0 0.0
  %9864 = vmatprep.subr.mxu0 0.0
  %9865 = vmatpush1.msra.mxu0 0.0
  %9866 = vmatprep.subr.mxu0 0.0
  %9867 = vmatpush1.msra.mxu0 0.0
  %9868 = vmatprep.subr.mxu0 0.0
  %9869 = vmatpush1.msra.mxu0 0.0
  %9870 = vmatprep.subr.mxu0 0.0
  %9871 = vmatpush1.msra.mxu0 0.0
  %9872 = vmatprep.subr.mxu0 0.0
  %9873 = vmatpush1.msra.mxu0 0.0
  %9874 = vmatprep.subr.mxu0 0.0
  %9875 = vmatpush1.msra.mxu0 0.0
  %9876 = vmatprep.mubr.f32.mxu0 0.0
  %9877 = vmatmul.mubr.f32.gmra.mrb[0].mxu0 %v9599
  %v9878 = vpop.f32.mrb[0].mxu0
  %v9879 = vadd.f32 0.0, %v9878
  %v9880 = vpop.f32.mrb[0].mxu0
  %v9881 = vadd.f32 0.0, %v9880
  %9882 = vdwg.mxu0
  %v9883 = vadd.f32 %v9382, %v9668
  %v9884 = vadd.f32 %v9383, %v9670
  %v9885 = vadd.f32 %v9384, %v9739
  %v9886 = vadd.f32 %v9385, %v9810
  %v9887 = vadd.f32 %v9386, %v9879
  %v9888 = vadd.f32 %v9387, %v9881
  %9889 = vrot.lane.b32.xlu0 %v9388, 96
  %v9890 = vpop.permute.xlu0 %9889
  %9891 = vrot.lane.b32.xlu0 %v9389, 56
  %v9892 = vpop.permute.xlu0 %9891
  %9893 = vrot.lane.b32.xlu0 %v9390, 56
  %v9894 = vpop.permute.xlu0 %9893
  %9895 = vrot.lane.b32.xlu0 %v9391, 56
  %v9896 = vpop.permute.xlu0 %9895
  %9897 = vrot.lane.b32.xlu0 %v9392, 56
  %v9898 = vpop.permute.xlu0 %9897
  %9899 = vrot.lane.b32.xlu0 %v9393, 56
  %v9900 = vpop.permute.xlu0 %9899
  %9901 = vrot.lane.b32.xlu0 %v9394, 56
  %v9902 = vpop.permute.xlu0 %9901
  %9903 = vrot.lane.b32.xlu0 %v9395, 56
  %v9904 = vpop.permute.xlu0 %9903
  %9905 = vrot.lane.b32.xlu0 %v9396, 56
  %v9906 = vpop.permute.xlu0 %9905
  %9907 = vrot.lane.b32.xlu0 %v9397, 56
  %v9908 = vpop.permute.xlu0 %9907
  %9909 = vrot.lane.b32.xlu0 %v9398, 56
  %v9910 = vpop.permute.xlu0 %9909
  %9911 = vrot.lane.b32.xlu0 %v9399, 56
  %v9912 = vpop.permute.xlu0 %9911
  %9913 = vrot.lane.b32.xlu0 %v9400, 56
  %v9914 = vpop.permute.xlu0 %9913
  %9915 = vrot.lane.b32.xlu0 %v9401, 56
  %v9916 = vpop.permute.xlu0 %9915
  %9917 = vrot.lane.b32.xlu0 %v9402, 56
  %v9918 = vpop.permute.xlu0 %9917
  %9919 = vrot.lane.b32.xlu0 %v9403, 56
  %v9920 = vpop.permute.xlu0 %9919
  %9921 = vrot.lane.b32.xlu0 %v9404, 56
  %v9922 = vpop.permute.xlu0 %9921
  %9923 = vrot.lane.b32.xlu0 %v9405, 56
  %v9924 = vpop.permute.xlu0 %9923
  %9925 = vrot.lane.b32.xlu0 %v9406, 56
  %v9926 = vpop.permute.xlu0 %9925
  %9927 = vrot.lane.b32.xlu0 %v9407, 56
  %v9928 = vpop.permute.xlu0 %9927
  %9929 = vrot.lane.b32.xlu0 %v9408, 56
  %v9930 = vpop.permute.xlu0 %9929
  %9931 = vrot.lane.b32.xlu0 %v9409, 56
  %v9932 = vpop.permute.xlu0 %9931
  %9933 = vrot.lane.b32.xlu0 %v9410, 56
  %v9934 = vpop.permute.xlu0 %9933
  %9935 = vrot.lane.b32.xlu0 %v9411, 56
  %v9936 = vpop.permute.xlu0 %9935
  %9937 = vrot.lane.b32.xlu0 %v9412, 56
  %v9938 = vpop.permute.xlu0 %9937
  %9939 = vrot.lane.b32.xlu0 %v9413, 56
  %v9940 = vpop.permute.xlu0 %9939
  %9941 = vrot.lane.b32.xlu0 %v9414, 56
  %v9942 = vpop.permute.xlu0 %9941
  %9943 = vrot.lane.b32.xlu0 %v9415, 56
  %v9944 = vpop.permute.xlu0 %9943
  %9945 = vrot.lane.b32.xlu0 %v9416, 56
  %v9946 = vpop.permute.xlu0 %9945
  %9947 = vrot.lane.b32.xlu0 %v9417, 56
  %v9948 = vpop.permute.xlu0 %9947
  %9949 = vrot.lane.b32.xlu0 %v9418, 56
  %v9950 = vpop.permute.xlu0 %9949
  %9951 = vrot.lane.b32.xlu0 %v9419, 56
  %v9952 = vpop.permute.xlu0 %9951
  %9953 = vrot.lane.b32.xlu0 %v9420, 56
  %v9954 = vpop.permute.xlu0 %9953
  %9955 = vrot.lane.b32.xlu0 %v9421, 56
  %v9956 = vpop.permute.xlu0 %9955
  %9957 = vrot.lane.b32.xlu0 %v9422, 56
  %v9958 = vpop.permute.xlu0 %9957
  %9959 = vrot.lane.b32.xlu0 %v9423, 56
  %v9960 = vpop.permute.xlu0 %9959
  %9961 = vrot.lane.b32.xlu0 %v9424, 56
  %v9962 = vpop.permute.xlu0 %9961
  %vm9963 = vcmask 457728
  %v9964 = vsel %vm9963, %v9892, %v9894
  %v9965 = vsel %vm9963, %v9894, %v9896
  %v9966 = vsel %vm9963, %v9896, %v9898
  %v9967 = vsel %vm9963, %v9898, %v9900
  %v9968 = vsel %vm9963, %v9900, %v9902
  %v9969 = vsel %vm9963, %v9902, %v9904
  %v9970 = vsel %vm9963, %v9904, %v9906
  %v9971 = vsel %vm9963, %v9906, %v9908
  %v9972 = vsel %vm9963, %v9910, %v9912
  %v9973 = vsel %vm9963, %v9912, %v9914
  %v9974 = vsel %vm9963, %v9914, %v9916
  %v9975 = vsel %vm9963, %v9916, %v9918
  %v9976 = vsel %vm9963, %v9918, %v9920
  %v9977 = vsel %vm9963, %v9920, %v9922
  %v9978 = vsel %vm9963, %v9922, %v9924
  %v9979 = vsel %vm9963, %v9924, %v9926
  %v9980 = vsel %vm9963, %v9928, %v9930
  %v9981 = vsel %vm9963, %v9930, %v9932
  %v9982 = vsel %vm9963, %v9932, %v9934
  %v9983 = vsel %vm9963, %v9934, %v9936
  %v9984 = vsel %vm9963, %v9936, %v9938
  %v9985 = vsel %vm9963, %v9938, %v9940
  %v9986 = vsel %vm9963, %v9940, %v9942
  %v9987 = vsel %vm9963, %v9942, %v9944
  %v9988 = vsel %vm9963, %v9946, %v9948
  %v9989 = vsel %vm9963, %v9948, %v9950
  %v9990 = vsel %vm9963, %v9950, %v9952
  %v9991 = vsel %vm9963, %v9952, %v9954
  %v9992 = vsel %vm9963, %v9954, %v9956
  %v9993 = vsel %vm9963, %v9956, %v9958
  %v9994 = vsel %vm9963, %v9958, %v9960
  %v9995 = vsel %vm9963, %v9960, %v9962
  %v10028 = vsel %vm231, %v9890, 0
  %10030 = vmatprep.subr.mxu0 %v9965
  %10031 = vmatpush1.msra.mxu0 %v9964
  %10032 = vmatprep.subr.mxu0 %v9973
  %10033 = vmatpush1.msra.mxu0 %v9972
  %10034 = vmatprep.subr.mxu0 %v9981
  %10035 = vmatpush1.msra.mxu0 %v9980
  %10036 = vmatprep.subr.mxu0 %v9989
  %10037 = vmatpush1.msra.mxu0 %v9988
  %10038 = vmatprep.subr.mxu0 0.0
  %10039 = vmatpush1.msra.mxu0 0.0
  %10040 = vmatprep.subr.mxu0 0.0
  %10041 = vmatpush1.msra.mxu0 0.0
  %10042 = vmatprep.subr.mxu0 0.0
  %10043 = vmatpush1.msra.mxu0 0.0
  %10044 = vmatprep.subr.mxu0 0.0
  %10045 = vmatpush1.msra.mxu0 0.0
  %10046 = vmatprep.subr.mxu0 0.0
  %10047 = vmatpush1.msra.mxu0 0.0
  %10048 = vmatprep.subr.mxu0 0.0
  %10049 = vmatpush1.msra.mxu0 0.0
  %10050 = vmatprep.subr.mxu0 0.0
  %10051 = vmatpush1.msra.mxu0 0.0
  %10052 = vmatprep.subr.mxu0 0.0
  %10053 = vmatpush1.msra.mxu0 0.0
  %10054 = vmatprep.subr.mxu0 0.0
  %10055 = vmatpush1.msra.mxu0 0.0
  %10056 = vmatprep.subr.mxu0 0.0
  %10057 = vmatpush1.msra.mxu0 0.0
  %10058 = vmatprep.subr.mxu0 0.0
  %10059 = vmatpush1.msra.mxu0 0.0
  %10060 = vmatprep.subr.mxu0 0.0
  %10061 = vmatpush1.msra.mxu0 0.0
  %10062 = vmatprep.subr.mxu0 0.0
  %10063 = vmatpush1.msra.mxu0 0.0
  %10064 = vmatprep.subr.mxu0 0.0
  %10065 = vmatpush1.msra.mxu0 0.0
  %10066 = vmatprep.subr.mxu0 0.0
  %10067 = vmatpush1.msra.mxu0 0.0
  %10068 = vmatprep.subr.mxu0 0.0
  %10069 = vmatpush1.msra.mxu0 0.0
  %10070 = vmatprep.subr.mxu0 0.0
  %10071 = vmatpush1.msra.mxu0 0.0
  %10072 = vmatprep.subr.mxu0 0.0
  %10073 = vmatpush1.msra.mxu0 0.0
  %10074 = vmatprep.subr.mxu0 0.0
  %10075 = vmatpush1.msra.mxu0 0.0
  %10076 = vmatprep.subr.mxu0 0.0
  %10077 = vmatpush1.msra.mxu0 0.0
  %10078 = vmatprep.subr.mxu0 0.0
  %10079 = vmatpush1.msra.mxu0 0.0
  %10080 = vmatprep.subr.mxu0 0.0
  %10081 = vmatpush1.msra.mxu0 0.0
  %10082 = vmatprep.subr.mxu0 0.0
  %10083 = vmatpush1.msra.mxu0 0.0
  %10084 = vmatprep.subr.mxu0 0.0
  %10085 = vmatpush1.msra.mxu0 0.0
  %10086 = vmatprep.subr.mxu0 0.0
  %10087 = vmatpush1.msra.mxu0 0.0
  %10088 = vmatprep.subr.mxu0 0.0
  %10089 = vmatpush1.msra.mxu0 0.0
  %10090 = vmatprep.subr.mxu0 0.0
  %10091 = vmatpush1.msra.mxu0 0.0
  %10092 = vmatprep.subr.mxu0 0.0
  %10093 = vmatpush1.msra.mxu0 0.0
  %10094 = vmatprep.mubr.f32.mxu0 0.0
  %10095 = vmatmul.mubr.f32.gmra.mrb[0].mxu0 %v10028
  %v10096 = vpop.f32.mrb[0].mxu0
  %v10097 = vadd.f32 0.0, %v10096
  %v10098 = vpop.f32.mrb[0].mxu0
  %v10099 = vadd.f32 0.0, %v10098
  %10100 = vdwg.mxu0
  %10101 = vmatprep.subr.mxu0 %v9967
  %10102 = vmatpush1.msra.mxu0 %v9966
  %10103 = vmatprep.subr.mxu0 %v9975
  %10104 = vmatpush1.msra.mxu0 %v9974
  %10105 = vmatprep.subr.mxu0 %v9983
  %10106 = vmatpush1.msra.mxu0 %v9982
  %10107 = vmatprep.subr.mxu0 %v9991
  %10108 = vmatpush1.msra.mxu0 %v9990
  %10109 = vmatprep.subr.mxu0 0.0
  %10110 = vmatpush1.msra.mxu0 0.0
  %10111 = vmatprep.subr.mxu0 0.0
  %10112 = vmatpush1.msra.mxu0 0.0
  %10113 = vmatprep.subr.mxu0 0.0
  %10114 = vmatpush1.msra.mxu0 0.0
  %10115 = vmatprep.subr.mxu0 0.0
  %10116 = vmatpush1.msra.mxu0 0.0
  %10117 = vmatprep.subr.mxu0 0.0
  %10118 = vmatpush1.msra.mxu0 0.0
  %10119 = vmatprep.subr.mxu0 0.0
  %10120 = vmatpush1.msra.mxu0 0.0
  %10121 = vmatprep.subr.mxu0 0.0
  %10122 = vmatpush1.msra.mxu0 0.0
  %10123 = vmatprep.subr.mxu0 0.0
  %10124 = vmatpush1.msra.mxu0 0.0
  %10125 = vmatprep.subr.mxu0 0.0
  %10126 = vmatpush1.msra.mxu0 0.0
  %10127 = vmatprep.subr.mxu0 0.0
  %10128 = vmatpush1.msra.mxu0 0.0
  %10129 = vmatprep.subr.mxu0 0.0
  %10130 = vmatpush1.msra.mxu0 0.0
  %10131 = vmatprep.subr.mxu0 0.0
  %10132 = vmatpush1.msra.mxu0 0.0
  %10133 = vmatprep.subr.mxu0 0.0
  %10134 = vmatpush1.msra.mxu0 0.0
  %10135 = vmatprep.subr.mxu0 0.0
  %10136 = vmatpush1.msra.mxu0 0.0
  %10137 = vmatprep.subr.mxu0 0.0
  %10138 = vmatpush1.msra.mxu0 0.0
  %10139 = vmatprep.subr.mxu0 0.0
  %10140 = vmatpush1.msra.mxu0 0.0
  %10141 = vmatprep.subr.mxu0 0.0
  %10142 = vmatpush1.msra.mxu0 0.0
  %10143 = vmatprep.subr.mxu0 0.0
  %10144 = vmatpush1.msra.mxu0 0.0
  %10145 = vmatprep.subr.mxu0 0.0
  %10146 = vmatpush1.msra.mxu0 0.0
  %10147 = vmatprep.subr.mxu0 0.0
  %10148 = vmatpush1.msra.mxu0 0.0
  %10149 = vmatprep.subr.mxu0 0.0
  %10150 = vmatpush1.msra.mxu0 0.0
  %10151 = vmatprep.subr.mxu0 0.0
  %10152 = vmatpush1.msra.mxu0 0.0
  %10153 = vmatprep.subr.mxu0 0.0
  %10154 = vmatpush1.msra.mxu0 0.0
  %10155 = vmatprep.subr.mxu0 0.0
  %10156 = vmatpush1.msra.mxu0 0.0
  %10157 = vmatprep.subr.mxu0 0.0
  %10158 = vmatpush1.msra.mxu0 0.0
  %10159 = vmatprep.subr.mxu0 0.0
  %10160 = vmatpush1.msra.mxu0 0.0
  %10161 = vmatprep.subr.mxu0 0.0
  %10162 = vmatpush1.msra.mxu0 0.0
  %10163 = vmatprep.subr.mxu0 0.0
  %10164 = vmatpush1.msra.mxu0 0.0
  %10165 = vmatprep.mubr.f32.mxu0 0.0
  %10166 = vmatmul.mubr.f32.gmra.mrb[0].mxu0 %v10028
  %v10167 = vpop.f32.mrb[0].mxu0
  %v10168 = vadd.f32 0.0, %v10167
  %v10169 = vpop.f32.mrb[0].mxu0
  %10170 = vdwg.mxu0
  %10171 = vmatprep.subr.mxu0 %v9969
  %10172 = vmatpush1.msra.mxu0 %v9968
  %10173 = vmatprep.subr.mxu0 %v9977
  %10174 = vmatpush1.msra.mxu0 %v9976
  %10175 = vmatprep.subr.mxu0 %v9985
  %10176 = vmatpush1.msra.mxu0 %v9984
  %10177 = vmatprep.subr.mxu0 %v9993
  %10178 = vmatpush1.msra.mxu0 %v9992
  %10179 = vmatprep.subr.mxu0 0.0
  %10180 = vmatpush1.msra.mxu0 0.0
  %10181 = vmatprep.subr.mxu0 0.0
  %10182 = vmatpush1.msra.mxu0 0.0
  %10183 = vmatprep.subr.mxu0 0.0
  %10184 = vmatpush1.msra.mxu0 0.0
  %10185 = vmatprep.subr.mxu0 0.0
  %10186 = vmatpush1.msra.mxu0 0.0
  %10187 = vmatprep.subr.mxu0 0.0
  %10188 = vmatpush1.msra.mxu0 0.0
  %10189 = vmatprep.subr.mxu0 0.0
  %10190 = vmatpush1.msra.mxu0 0.0
  %10191 = vmatprep.subr.mxu0 0.0
  %10192 = vmatpush1.msra.mxu0 0.0
  %10193 = vmatprep.subr.mxu0 0.0
  %10194 = vmatpush1.msra.mxu0 0.0
  %10195 = vmatprep.subr.mxu0 0.0
  %10196 = vmatpush1.msra.mxu0 0.0
  %10197 = vmatprep.subr.mxu0 0.0
  %10198 = vmatpush1.msra.mxu0 0.0
  %10199 = vmatprep.subr.mxu0 0.0
  %10200 = vmatpush1.msra.mxu0 0.0
  %10201 = vmatprep.subr.mxu0 0.0
  %10202 = vmatpush1.msra.mxu0 0.0
  %10203 = vmatprep.subr.mxu0 0.0
  %10204 = vmatpush1.msra.mxu0 0.0
  %10205 = vmatprep.subr.mxu0 0.0
  %10206 = vmatpush1.msra.mxu0 0.0
  %10207 = vmatprep.subr.mxu0 0.0
  %10208 = vmatpush1.msra.mxu0 0.0
  %10209 = vmatprep.subr.mxu0 0.0
  %10210 = vmatpush1.msra.mxu0 0.0
  %10211 = vmatprep.subr.mxu0 0.0
  %10212 = vmatpush1.msra.mxu0 0.0
  %10213 = vmatprep.subr.mxu0 0.0
  %10214 = vmatpush1.msra.mxu0 0.0
  %10215 = vmatprep.subr.mxu0 0.0
  %10216 = vmatpush1.msra.mxu0 0.0
  %10217 = vmatprep.subr.mxu0 0.0
  %10218 = vmatpush1.msra.mxu0 0.0
  %10219 = vmatprep.subr.mxu0 0.0
  %10220 = vmatpush1.msra.mxu0 0.0
  %10221 = vmatprep.subr.mxu0 0.0
  %10222 = vmatpush1.msra.mxu0 0.0
  %10223 = vmatprep.subr.mxu0 0.0
  %10224 = vmatpush1.msra.mxu0 0.0
  %10225 = vmatprep.subr.mxu0 0.0
  %10226 = vmatpush1.msra.mxu0 0.0
  %10227 = vmatprep.subr.mxu0 0.0
  %10228 = vmatpush1.msra.mxu0 0.0
  %10229 = vmatprep.subr.mxu0 0.0
  %10230 = vmatpush1.msra.mxu0 0.0
  %10231 = vmatprep.subr.mxu0 0.0
  %10232 = vmatpush1.msra.mxu0 0.0
  %10233 = vmatprep.subr.mxu0 0.0
  %10234 = vmatpush1.msra.mxu0 0.0
  %10235 = vmatprep.mubr.f32.mxu0 0.0
  %10236 = vmatmul.mubr.f32.gmra.mrb[0].mxu0 %v10028
  %v10237 = vpop.f32.mrb[0].mxu0
  %v10238 = vpop.f32.mrb[0].mxu0
  %v10239 = vadd.f32 0.0, %v10238
  %10240 = vdwg.mxu0
  %10241 = vmatprep.subr.mxu0 %v9971
  %10242 = vmatpush1.msra.mxu0 %v9970
  %10243 = vmatprep.subr.mxu0 %v9979
  %10244 = vmatpush1.msra.mxu0 %v9978
  %10245 = vmatprep.subr.mxu0 %v9987
  %10246 = vmatpush1.msra.mxu0 %v9986
  %10247 = vmatprep.subr.mxu0 %v9995
  %10248 = vmatpush1.msra.mxu0 %v9994
  %10249 = vmatprep.subr.mxu0 0.0
  %10250 = vmatpush1.msra.mxu0 0.0
  %10251 = vmatprep.subr.mxu0 0.0
  %10252 = vmatpush1.msra.mxu0 0.0
  %10253 = vmatprep.subr.mxu0 0.0
  %10254 = vmatpush1.msra.mxu0 0.0
  %10255 = vmatprep.subr.mxu0 0.0
  %10256 = vmatpush1.msra.mxu0 0.0
  %10257 = vmatprep.subr.mxu0 0.0
  %10258 = vmatpush1.msra.mxu0 0.0
  %10259 = vmatprep.subr.mxu0 0.0
  %10260 = vmatpush1.msra.mxu0 0.0
  %10261 = vmatprep.subr.mxu0 0.0
  %10262 = vmatpush1.msra.mxu0 0.0
  %10263 = vmatprep.subr.mxu0 0.0
  %10264 = vmatpush1.msra.mxu0 0.0
  %10265 = vmatprep.subr.mxu0 0.0
  %10266 = vmatpush1.msra.mxu0 0.0
  %10267 = vmatprep.subr.mxu0 0.0
  %10268 = vmatpush1.msra.mxu0 0.0
  %10269 = vmatprep.subr.mxu0 0.0
  %10270 = vmatpush1.msra.mxu0 0.0
  %10271 = vmatprep.subr.mxu0 0.0
  %10272 = vmatpush1.msra.mxu0 0.0
  %10273 = vmatprep.subr.mxu0 0.0
  %10274 = vmatpush1.msra.mxu0 0.0
  %10275 = vmatprep.subr.mxu0 0.0
  %10276 = vmatpush1.msra.mxu0 0.0
  %10277 = vmatprep.subr.mxu0 0.0
  %10278 = vmatpush1.msra.mxu0 0.0
  %10279 = vmatprep.subr.mxu0 0.0
  %10280 = vmatpush1.msra.mxu0 0.0
  %10281 = vmatprep.subr.mxu0 0.0
  %10282 = vmatpush1.msra.mxu0 0.0
  %10283 = vmatprep.subr.mxu0 0.0
  %10284 = vmatpush1.msra.mxu0 0.0
  %10285 = vmatprep.subr.mxu0 0.0
  %10286 = vmatpush1.msra.mxu0 0.0
  %10287 = vmatprep.subr.mxu0 0.0
  %10288 = vmatpush1.msra.mxu0 0.0
  %10289 = vmatprep.subr.mxu0 0.0
  %10290 = vmatpush1.msra.mxu0 0.0
  %10291 = vmatprep.subr.mxu0 0.0
  %10292 = vmatpush1.msra.mxu0 0.0
  %10293 = vmatprep.subr.mxu0 0.0
  %10294 = vmatpush1.msra.mxu0 0.0
  %10295 = vmatprep.subr.mxu0 0.0
  %10296 = vmatpush1.msra.mxu0 0.0
  %10297 = vmatprep.subr.mxu0 0.0
  %10298 = vmatpush1.msra.mxu0 0.0
  %10299 = vmatprep.subr.mxu0 0.0
  %10300 = vmatpush1.msra.mxu0 0.0
  %10301 = vmatprep.subr.mxu0 0.0
  %10302 = vmatpush1.msra.mxu0 0.0
  %10303 = vmatprep.subr.mxu0 0.0
  %10304 = vmatpush1.msra.mxu0 0.0
  %10305 = vmatprep.mubr.f32.mxu0 0.0
  %10306 = vmatmul.mubr.f32.gmra.mrb[0].mxu0 %v10028
  %v10307 = vpop.f32.mrb[0].mxu0
  %v10308 = vadd.f32 0.0, %v10307
  %v10309 = vpop.f32.mrb[0].mxu0
  %v10310 = vadd.f32 0.0, %v10309
  %10311 = vdwg.mxu0
  %v10312 = vadd.f32 %v9883, %v10097
  %v10313 = vadd.f32 %v9884, %v10099
  %v10314 = vadd.f32 %v9885, %v10168
  %v10315 = vadd.f32 %v9886, %v10239
  %v10316 = vadd.f32 %v9887, %v10308
  %v10317 = vadd.f32 %v9888, %v10310
  %v10318 = vld [vmem:[%s1 + $0x14] sm:$0xf]
  %10320 = vrot.lane.b32.xlu0 %v10318, 64
  %v10321 = vpop.permute.xlu0 %10320
  %v10322 = vsel %vm231, %v10321, 0
  %10324 = vmatprep.subr.mxu0 %v2105
  %10325 = vmatpush1.msra.mxu0 %v2104
  %10326 = vmatprep.subr.mxu0 %v2113
  %10327 = vmatpush1.msra.mxu0 %v2112
  %10328 = vmatprep.subr.mxu0 %v2121
  %10329 = vmatpush1.msra.mxu0 %v2120
  %10330 = vmatprep.subr.mxu0 %v2129
  %10331 = vmatpush1.msra.mxu0 %v2128
  %10332 = vmatprep.subr.mxu0 0.0
  %10333 = vmatpush1.msra.mxu0 0.0
  %10334 = vmatprep.subr.mxu0 0.0
  %10335 = vmatpush1.msra.mxu0 0.0
  %10336 = vmatprep.subr.mxu0 0.0
  %10337 = vmatpush1.msra.mxu0 0.0
  %10338 = vmatprep.subr.mxu0 0.0
  %10339 = vmatpush1.msra.mxu0 0.0
  %10340 = vmatprep.subr.mxu0 0.0
  %10341 = vmatpush1.msra.mxu0 0.0
  %10342 = vmatprep.subr.mxu0 0.0
  %10343 = vmatpush1.msra.mxu0 0.0
  %10344 = vmatprep.subr.mxu0 0.0
  %10345 = vmatpush1.msra.mxu0 0.0
  %10346 = vmatprep.subr.mxu0 0.0
  %10347 = vmatpush1.msra.mxu0 0.0
  %10348 = vmatprep.subr.mxu0 0.0
  %10349 = vmatpush1.msra.mxu0 0.0
  %10350 = vmatprep.subr.mxu0 0.0
  %10351 = vmatpush1.msra.mxu0 0.0
  %10352 = vmatprep.subr.mxu0 0.0
  %10353 = vmatpush1.msra.mxu0 0.0
  %10354 = vmatprep.subr.mxu0 0.0
  %10355 = vmatpush1.msra.mxu0 0.0
  %10356 = vmatprep.subr.mxu0 0.0
  %10357 = vmatpush1.msra.mxu0 0.0
  %10358 = vmatprep.subr.mxu0 0.0
  %10359 = vmatpush1.msra.mxu0 0.0
  %10360 = vmatprep.subr.mxu0 0.0
  %10361 = vmatpush1.msra.mxu0 0.0
  %10362 = vmatprep.subr.mxu0 0.0
  %10363 = vmatpush1.msra.mxu0 0.0
  %10364 = vmatprep.subr.mxu0 0.0
  %10365 = vmatpush1.msra.mxu0 0.0
  %10366 = vmatprep.subr.mxu0 0.0
  %10367 = vmatpush1.msra.mxu0 0.0
  %10368 = vmatprep.subr.mxu0 0.0
  %10369 = vmatpush1.msra.mxu0 0.0
  %10370 = vmatprep.subr.mxu0 0.0
  %10371 = vmatpush1.msra.mxu0 0.0
  %10372 = vmatprep.subr.mxu0 0.0
  %10373 = vmatpush1.msra.mxu0 0.0
  %10374 = vmatprep.subr.mxu0 0.0
  %10375 = vmatpush1.msra.mxu0 0.0
  %10376 = vmatprep.subr.mxu0 0.0
  %10377 = vmatpush1.msra.mxu0 0.0
  %10378 = vmatprep.subr.mxu0 0.0
  %10379 = vmatpush1.msra.mxu0 0.0
  %10380 = vmatprep.subr.mxu0 0.0
  %10381 = vmatpush1.msra.mxu0 0.0
  %10382 = vmatprep.subr.mxu0 0.0
  %10383 = vmatpush1.msra.mxu0 0.0
  %10384 = vmatprep.subr.mxu0 0.0
  %10385 = vmatpush1.msra.mxu0 0.0
  %10386 = vmatprep.subr.mxu0 0.0
  %10387 = vmatpush1.msra.mxu0 0.0
  %10388 = vmatprep.mubr.f32.mxu0 0.0
  %10389 = vmatmul.mubr.f32.gmra.mrb[0].mxu0 %v10322
  %v10390 = vpop.f32.mrb[0].mxu0
  %v10391 = vadd.f32 0.0, %v10390
  %v10392 = vpop.f32.mrb[0].mxu0
  %v10393 = vadd.f32 0.0, %v10392
  %10394 = vdwg.mxu0
  %10395 = vmatprep.subr.mxu0 %v2107
  %10396 = vmatpush1.msra.mxu0 %v2106
  %10397 = vmatprep.subr.mxu0 %v2115
  %10398 = vmatpush1.msra.mxu0 %v2114
  %10399 = vmatprep.subr.mxu0 %v2123
  %10400 = vmatpush1.msra.mxu0 %v2122
  %10401 = vmatprep.subr.mxu0 %v2131
  %10402 = vmatpush1.msra.mxu0 %v2130
  %10403 = vmatprep.subr.mxu0 0.0
  %10404 = vmatpush1.msra.mxu0 0.0
  %10405 = vmatprep.subr.mxu0 0.0
  %10406 = vmatpush1.msra.mxu0 0.0
  %10407 = vmatprep.subr.mxu0 0.0
  %10408 = vmatpush1.msra.mxu0 0.0
  %10409 = vmatprep.subr.mxu0 0.0
  %10410 = vmatpush1.msra.mxu0 0.0
  %10411 = vmatprep.subr.mxu0 0.0
  %10412 = vmatpush1.msra.mxu0 0.0
  %10413 = vmatprep.subr.mxu0 0.0
  %10414 = vmatpush1.msra.mxu0 0.0
  %10415 = vmatprep.subr.mxu0 0.0
  %10416 = vmatpush1.msra.mxu0 0.0
  %10417 = vmatprep.subr.mxu0 0.0
  %10418 = vmatpush1.msra.mxu0 0.0
  %10419 = vmatprep.subr.mxu0 0.0
  %10420 = vmatpush1.msra.mxu0 0.0
  %10421 = vmatprep.subr.mxu0 0.0
  %10422 = vmatpush1.msra.mxu0 0.0
  %10423 = vmatprep.subr.mxu0 0.0
  %10424 = vmatpush1.msra.mxu0 0.0
  %10425 = vmatprep.subr.mxu0 0.0
  %10426 = vmatpush1.msra.mxu0 0.0
  %10427 = vmatprep.subr.mxu0 0.0
  %10428 = vmatpush1.msra.mxu0 0.0
  %10429 = vmatprep.subr.mxu0 0.0
  %10430 = vmatpush1.msra.mxu0 0.0
  %10431 = vmatprep.subr.mxu0 0.0
  %10432 = vmatpush1.msra.mxu0 0.0
  %10433 = vmatprep.subr.mxu0 0.0
  %10434 = vmatpush1.msra.mxu0 0.0
  %10435 = vmatprep.subr.mxu0 0.0
  %10436 = vmatpush1.msra.mxu0 0.0
  %10437 = vmatprep.subr.mxu0 0.0
  %10438 = vmatpush1.msra.mxu0 0.0
  %10439 = vmatprep.subr.mxu0 0.0
  %10440 = vmatpush1.msra.mxu0 0.0
  %10441 = vmatprep.subr.mxu0 0.0
  %10442 = vmatpush1.msra.mxu0 0.0
  %10443 = vmatprep.subr.mxu0 0.0
  %10444 = vmatpush1.msra.mxu0 0.0
  %10445 = vmatprep.subr.mxu0 0.0
  %10446 = vmatpush1.msra.mxu0 0.0
  %10447 = vmatprep.subr.mxu0 0.0
  %10448 = vmatpush1.msra.mxu0 0.0
  %10449 = vmatprep.subr.mxu0 0.0
  %10450 = vmatpush1.msra.mxu0 0.0
  %10451 = vmatprep.subr.mxu0 0.0
  %10452 = vmatpush1.msra.mxu0 0.0
  %10453 = vmatprep.subr.mxu0 0.0
  %10454 = vmatpush1.msra.mxu0 0.0
  %10455 = vmatprep.subr.mxu0 0.0
  %10456 = vmatpush1.msra.mxu0 0.0
  %10457 = vmatprep.subr.mxu0 0.0
  %10458 = vmatpush1.msra.mxu0 0.0
  %10459 = vmatprep.mubr.f32.mxu0 0.0
  %10460 = vmatmul.mubr.f32.gmra.mrb[0].mxu0 %v10322
  %v10461 = vpop.f32.mrb[0].mxu0
  %v10462 = vadd.f32 0.0, %v10461
  %v10463 = vpop.f32.mrb[0].mxu0
  %10464 = vdwg.mxu0
  %10465 = vmatprep.subr.mxu0 %v2109
  %10466 = vmatpush1.msra.mxu0 %v2108
  %10467 = vmatprep.subr.mxu0 %v2117
  %10468 = vmatpush1.msra.mxu0 %v2116
  %10469 = vmatprep.subr.mxu0 %v2125
  %10470 = vmatpush1.msra.mxu0 %v2124
  %10471 = vmatprep.subr.mxu0 %v2133
  %10472 = vmatpush1.msra.mxu0 %v2132
  %10473 = vmatprep.subr.mxu0 0.0
  %10474 = vmatpush1.msra.mxu0 0.0
  %10475 = vmatprep.subr.mxu0 0.0
  %10476 = vmatpush1.msra.mxu0 0.0
  %10477 = vmatprep.subr.mxu0 0.0
  %10478 = vmatpush1.msra.mxu0 0.0
  %10479 = vmatprep.subr.mxu0 0.0
  %10480 = vmatpush1.msra.mxu0 0.0
  %10481 = vmatprep.subr.mxu0 0.0
  %10482 = vmatpush1.msra.mxu0 0.0
  %10483 = vmatprep.subr.mxu0 0.0
  %10484 = vmatpush1.msra.mxu0 0.0
  %10485 = vmatprep.subr.mxu0 0.0
  %10486 = vmatpush1.msra.mxu0 0.0
  %10487 = vmatprep.subr.mxu0 0.0
  %10488 = vmatpush1.msra.mxu0 0.0
  %10489 = vmatprep.subr.mxu0 0.0
  %10490 = vmatpush1.msra.mxu0 0.0
  %10491 = vmatprep.subr.mxu0 0.0
  %10492 = vmatpush1.msra.mxu0 0.0
  %10493 = vmatprep.subr.mxu0 0.0
  %10494 = vmatpush1.msra.mxu0 0.0
  %10495 = vmatprep.subr.mxu0 0.0
  %10496 = vmatpush1.msra.mxu0 0.0
  %10497 = vmatprep.subr.mxu0 0.0
  %10498 = vmatpush1.msra.mxu0 0.0
  %10499 = vmatprep.subr.mxu0 0.0
  %10500 = vmatpush1.msra.mxu0 0.0
  %10501 = vmatprep.subr.mxu0 0.0
  %10502 = vmatpush1.msra.mxu0 0.0
  %10503 = vmatprep.subr.mxu0 0.0
  %10504 = vmatpush1.msra.mxu0 0.0
  %10505 = vmatprep.subr.mxu0 0.0
  %10506 = vmatpush1.msra.mxu0 0.0
  %10507 = vmatprep.subr.mxu0 0.0
  %10508 = vmatpush1.msra.mxu0 0.0
  %10509 = vmatprep.subr.mxu0 0.0
  %10510 = vmatpush1.msra.mxu0 0.0
  %10511 = vmatprep.subr.mxu0 0.0
  %10512 = vmatpush1.msra.mxu0 0.0
  %10513 = vmatprep.subr.mxu0 0.0
  %10514 = vmatpush1.msra.mxu0 0.0
  %10515 = vmatprep.subr.mxu0 0.0
  %10516 = vmatpush1.msra.mxu0 0.0
  %10517 = vmatprep.subr.mxu0 0.0
  %10518 = vmatpush1.msra.mxu0 0.0
  %10519 = vmatprep.subr.mxu0 0.0
  %10520 = vmatpush1.msra.mxu0 0.0
  %10521 = vmatprep.subr.mxu0 0.0
  %10522 = vmatpush1.msra.mxu0 0.0
  %10523 = vmatprep.subr.mxu0 0.0
  %10524 = vmatpush1.msra.mxu0 0.0
  %10525 = vmatprep.subr.mxu0 0.0
  %10526 = vmatpush1.msra.mxu0 0.0
  %10527 = vmatprep.subr.mxu0 0.0
  %10528 = vmatpush1.msra.mxu0 0.0
  %10529 = vmatprep.mubr.f32.mxu0 0.0
  %10530 = vmatmul.mubr.f32.gmra.mrb[0].mxu0 %v10322
  %v10531 = vpop.f32.mrb[0].mxu0
  %v10532 = vpop.f32.mrb[0].mxu0
  %v10533 = vadd.f32 0.0, %v10532
  %10534 = vdwg.mxu0
  %10535 = vmatprep.subr.mxu0 %v2111
  %10536 = vmatpush1.msra.mxu0 %v2110
  %10537 = vmatprep.subr.mxu0 %v2119
  %10538 = vmatpush1.msra.mxu0 %v2118
  %10539 = vmatprep.subr.mxu0 %v2127
  %10540 = vmatpush1.msra.mxu0 %v2126
  %10541 = vmatprep.subr.mxu0 %v2135
  %10542 = vmatpush1.msra.mxu0 %v2134
  %10543 = vmatprep.subr.mxu0 0.0
  %10544 = vmatpush1.msra.mxu0 0.0
  %10545 = vmatprep.subr.mxu0 0.0
  %10546 = vmatpush1.msra.mxu0 0.0
  %10547 = vmatprep.subr.mxu0 0.0
  %10548 = vmatpush1.msra.mxu0 0.0
  %10549 = vmatprep.subr.mxu0 0.0
  %10550 = vmatpush1.msra.mxu0 0.0
  %10551 = vmatprep.subr.mxu0 0.0
  %10552 = vmatpush1.msra.mxu0 0.0
  %10553 = vmatprep.subr.mxu0 0.0
  %10554 = vmatpush1.msra.mxu0 0.0
  %10555 = vmatprep.subr.mxu0 0.0
  %10556 = vmatpush1.msra.mxu0 0.0
  %10557 = vmatprep.subr.mxu0 0.0
  %10558 = vmatpush1.msra.mxu0 0.0
  %10559 = vmatprep.subr.mxu0 0.0
  %10560 = vmatpush1.msra.mxu0 0.0
  %10561 = vmatprep.subr.mxu0 0.0
  %10562 = vmatpush1.msra.mxu0 0.0
  %10563 = vmatprep.subr.mxu0 0.0
  %10564 = vmatpush1.msra.mxu0 0.0
  %10565 = vmatprep.subr.mxu0 0.0
  %10566 = vmatpush1.msra.mxu0 0.0
  %10567 = vmatprep.subr.mxu0 0.0
  %10568 = vmatpush1.msra.mxu0 0.0
  %10569 = vmatprep.subr.mxu0 0.0
  %10570 = vmatpush1.msra.mxu0 0.0
  %10571 = vmatprep.subr.mxu0 0.0
  %10572 = vmatpush1.msra.mxu0 0.0
  %10573 = vmatprep.subr.mxu0 0.0
  %10574 = vmatpush1.msra.mxu0 0.0
  %10575 = vmatprep.subr.mxu0 0.0
  %10576 = vmatpush1.msra.mxu0 0.0
  %10577 = vmatprep.subr.mxu0 0.0
  %10578 = vmatpush1.msra.mxu0 0.0
  %10579 = vmatprep.subr.mxu0 0.0
  %10580 = vmatpush1.msra.mxu0 0.0
  %10581 = vmatprep.subr.mxu0 0.0
  %10582 = vmatpush1.msra.mxu0 0.0
  %10583 = vmatprep.subr.mxu0 0.0
  %10584 = vmatpush1.msra.mxu0 0.0
  %10585 = vmatprep.subr.mxu0 0.0
  %10586 = vmatpush1.msra.mxu0 0.0
  %10587 = vmatprep.subr.mxu0 0.0
  %10588 = vmatpush1.msra.mxu0 0.0
  %10589 = vmatprep.subr.mxu0 0.0
  %10590 = vmatpush1.msra.mxu0 0.0
  %10591 = vmatprep.subr.mxu0 0.0
  %10592 = vmatpush1.msra.mxu0 0.0
  %10593 = vmatprep.subr.mxu0 0.0
  %10594 = vmatpush1.msra.mxu0 0.0
  %10595 = vmatprep.subr.mxu0 0.0
  %10596 = vmatpush1.msra.mxu0 0.0
  %10597 = vmatprep.subr.mxu0 0.0
  %10598 = vmatpush1.msra.mxu0 0.0
  %10599 = vmatprep.mubr.f32.mxu0 0.0
  %10600 = vmatmul.mubr.f32.gmra.mrb[0].mxu0 %v10322
  %v10601 = vpop.f32.mrb[0].mxu0
  %v10602 = vadd.f32 0.0, %v10601
  %v10603 = vpop.f32.mrb[0].mxu0
  %v10604 = vadd.f32 0.0, %v10603
  %10605 = vdwg.mxu0
  %v10606 = vadd.f32 %v10312, %v10391
  %v10607 = vadd.f32 %v10313, %v10393
  %v10608 = vadd.f32 %v10314, %v10462
  %v10609 = vadd.f32 %v10315, %v10533
  %v10610 = vadd.f32 %v10316, %v10602
  %v10611 = vadd.f32 %v10317, %v10604
  %v10612 = vld [vmem:[%s1 + $0x14] sm:$0xf]
  %v10613 = vld [vmem:[%s0] sm:$0xff]
  %v10614 = vld [vmem:[%s0 + $0x8] sm:$0xff]
  %v10615 = vld [vmem:[%s0 + $0x10] sm:$0xff]
  %v10616 = vld [vmem:[%s0 + $0x18] sm:$0xff]
  %v10617 = vld [vmem:[%s0 + $0x20] sm:$0xff]
  %v10618 = vld [vmem:[%s0 + $0x28] sm:$0xff]
  %v10619 = vld [vmem:[%s0 + $0x30] sm:$0xff]
  %v10620 = vld [vmem:[%s0 + $0x38] sm:$0xff]
  %v10621 = vld [vmem:[%s0 + $0x40] sm:$0xff]
  %v10622 = vld [vmem:[%s0 + $0x50] sm:$0xff]
  %v10623 = vld [vmem:[%s0 + $0x58] sm:$0xff]
  %v10624 = vld [vmem:[%s0 + $0x60] sm:$0xff]
  %v10625 = vld [vmem:[%s0 + $0x68] sm:$0xff]
  %v10626 = vld [vmem:[%s0 + $0x70] sm:$0xff]
  %v10627 = vld [vmem:[%s0 + $0x78] sm:$0xff]
  %v10628 = vld [vmem:[%s0 + $0x80] sm:$0xff]
  %v10629 = vld [vmem:[%s0 + $0x88] sm:$0xff]
  %v10630 = vld [vmem:[%s0 + $0x90] sm:$0xff]
  %v10631 = vld [vmem:[%s0 + $0xa0] sm:$0xff]
  %v10632 = vld [vmem:[%s0 + $0xa8] sm:$0xff]
  %v10633 = vld [vmem:[%s0 + $0xb0] sm:$0xff]
  %v10634 = vld [vmem:[%s0 + $0xb8] sm:$0xff]
  %v10635 = vld [vmem:[%s0 + $0xc0] sm:$0xff]
  %v10636 = vld [vmem:[%s0 + $0xc8] sm:$0xff]
  %v10637 = vld [vmem:[%s0 + $0xd0] sm:$0xff]
  %v10638 = vld [vmem:[%s0 + $0xd8] sm:$0xff]
  %v10639 = vld [vmem:[%s0 + $0xe0] sm:$0xff]
  %v10640 = vld [vmem:[%s0 + $0xf0] sm:$0xff]
  %v10641 = vld [vmem:[%s0 + $0xf8] sm:$0xff]
  %v10642 = vld [vmem:[%s0 + $0x100] sm:$0xff]
  %v10643 = vld [vmem:[%s0 + $0x108] sm:$0xff]
  %v10644 = vld [vmem:[%s0 + $0x110] sm:$0xff]
  %v10645 = vld [vmem:[%s0 + $0x118] sm:$0xff]
  %v10646 = vld [vmem:[%s0 + $0x120] sm:$0xff]
  %v10647 = vld [vmem:[%s0 + $0x128] sm:$0xff]
  %v10648 = vld [vmem:[%s0 + $0x130] sm:$0xff]
  %10650 = vrot.lane.b32.xlu0 %v10612, 32
  %v10651 = vpop.permute.xlu0 %10650
  %10688 = vrot.lane.b32.xlu0 %v10613, 50
  %v10689 = vpop.permute.xlu0 %10688
  %10690 = vrot.lane.b32.xlu0 %v10614, 50
  %v10691 = vpop.permute.xlu0 %10690
  %10692 = vrot.lane.b32.xlu0 %v10615, 50
  %v10693 = vpop.permute.xlu0 %10692
  %10694 = vrot.lane.b32.xlu0 %v10616, 50
  %v10695 = vpop.permute.xlu0 %10694
  %10696 = vrot.lane.b32.xlu0 %v10617, 50
  %v10697 = vpop.permute.xlu0 %10696
  %10698 = vrot.lane.b32.xlu0 %v10618, 50
  %v10699 = vpop.permute.xlu0 %10698
  %10700 = vrot.lane.b32.xlu0 %v10619, 50
  %v10701 = vpop.permute.xlu0 %10700
  %10702 = vrot.lane.b32.xlu0 %v10620, 50
  %v10703 = vpop.permute.xlu0 %10702
  %10704 = vrot.lane.b32.xlu0 %v10621, 50
  %v10705 = vpop.permute.xlu0 %10704
  %10706 = vrot.lane.b32.xlu0 %v10622, 50
  %v10707 = vpop.permute.xlu0 %10706
  %10708 = vrot.lane.b32.xlu0 %v10623, 50
  %v10709 = vpop.permute.xlu0 %10708
  %10710 = vrot.lane.b32.xlu0 %v10624, 50
  %v10711 = vpop.permute.xlu0 %10710
  %10712 = vrot.lane.b32.xlu0 %v10625, 50
  %v10713 = vpop.permute.xlu0 %10712
  %10714 = vrot.lane.b32.xlu0 %v10626, 50
  %v10715 = vpop.permute.xlu0 %10714
  %10716 = vrot.lane.b32.xlu0 %v10627, 50
  %v10717 = vpop.permute.xlu0 %10716
  %10718 = vrot.lane.b32.xlu0 %v10628, 50
  %v10719 = vpop.permute.xlu0 %10718
  %10720 = vrot.lane.b32.xlu0 %v10629, 50
  %v10721 = vpop.permute.xlu0 %10720
  %10722 = vrot.lane.b32.xlu0 %v10630, 50
  %v10723 = vpop.permute.xlu0 %10722
  %10724 = vrot.lane.b32.xlu0 %v10631, 50
  %v10725 = vpop.permute.xlu0 %10724
  %10726 = vrot.lane.b32.xlu0 %v10632, 50
  %v10727 = vpop.permute.xlu0 %10726
  %10728 = vrot.lane.b32.xlu0 %v10633, 50
  %v10729 = vpop.permute.xlu0 %10728
  %10730 = vrot.lane.b32.xlu0 %v10634, 50
  %v10731 = vpop.permute.xlu0 %10730
  %10732 = vrot.lane.b32.xlu0 %v10635, 50
  %v10733 = vpop.permute.xlu0 %10732
  %10734 = vrot.lane.b32.xlu0 %v10636, 50
  %v10735 = vpop.permute.xlu0 %10734
  %10736 = vrot.lane.b32.xlu0 %v10637, 50
  %v10737 = vpop.permute.xlu0 %10736
  %10738 = vrot.lane.b32.xlu0 %v10638, 50
  %v10739 = vpop.permute.xlu0 %10738
  %10740 = vrot.lane.b32.xlu0 %v10639, 50
  %v10741 = vpop.permute.xlu0 %10740
  %10742 = vrot.lane.b32.xlu0 %v10640, 50
  %v10743 = vpop.permute.xlu0 %10742
  %10744 = vrot.lane.b32.xlu0 %v10641, 50
  %v10745 = vpop.permute.xlu0 %10744
  %10746 = vrot.lane.b32.xlu0 %v10642, 50
  %v10747 = vpop.permute.xlu0 %10746
  %10748 = vrot.lane.b32.xlu0 %v10643, 50
  %v10749 = vpop.permute.xlu0 %10748
  %10750 = vrot.lane.b32.xlu0 %v10644, 50
  %v10751 = vpop.permute.xlu0 %10750
  %10752 = vrot.lane.b32.xlu0 %v10645, 50
  %v10753 = vpop.permute.xlu0 %10752
  %10754 = vrot.lane.b32.xlu0 %v10646, 50
  %v10755 = vpop.permute.xlu0 %10754
  %10756 = vrot.lane.b32.xlu0 %v10647, 50
  %v10757 = vpop.permute.xlu0 %10756
  %10758 = vrot.lane.b32.xlu0 %v10648, 50
  %v10759 = vpop.permute.xlu0 %10758
  %vm10760 = vcmask 408576
  %v10761 = vsel %vm10760, %v10689, %v10691
  %v10762 = vsel %vm10760, %v10691, %v10693
  %v10763 = vsel %vm10760, %v10693, %v10695
  %v10764 = vsel %vm10760, %v10695, %v10697
  %v10765 = vsel %vm10760, %v10697, %v10699
  %v10766 = vsel %vm10760, %v10699, %v10701
  %v10767 = vsel %vm10760, %v10701, %v10703
  %v10768 = vsel %vm10760, %v10703, %v10705
  %v10769 = vsel %vm10760, %v10707, %v10709
  %v10770 = vsel %vm10760, %v10709, %v10711
  %v10771 = vsel %vm10760, %v10711, %v10713
  %v10772 = vsel %vm10760, %v10713, %v10715
  %v10773 = vsel %vm10760, %v10715, %v10717
  %v10774 = vsel %vm10760, %v10717, %v10719
  %v10775 = vsel %vm10760, %v10719, %v10721
  %v10776 = vsel %vm10760, %v10721, %v10723
  %v10777 = vsel %vm10760, %v10725, %v10727
  %v10778 = vsel %vm10760, %v10727, %v10729
  %v10779 = vsel %vm10760, %v10729, %v10731
  %v10780 = vsel %vm10760, %v10731, %v10733
  %v10781 = vsel %vm10760, %v10733, %v10735
  %v10782 = vsel %vm10760, %v10735, %v10737
  %v10783 = vsel %vm10760, %v10737, %v10739
  %v10784 = vsel %vm10760, %v10739, %v10741
  %v10785 = vsel %vm10760, %v10743, %v10745
  %v10786 = vsel %vm10760, %v10745, %v10747
  %v10787 = vsel %vm10760, %v10747, %v10749
  %v10788 = vsel %vm10760, %v10749, %v10751
  %v10789 = vsel %vm10760, %v10751, %v10753
  %v10790 = vsel %vm10760, %v10753, %v10755
  %v10791 = vsel %vm10760, %v10755, %v10757
  %v10792 = vsel %vm10760, %v10757, %v10759
  %v10825 = vsel %vm231, %v10651, 0
  %10827 = vmatprep.subr.mxu0 %v10762
  %10828 = vmatpush1.msra.mxu0 %v10761
  %10829 = vmatprep.subr.mxu0 %v10770
  %10830 = vmatpush1.msra.mxu0 %v10769
  %10831 = vmatprep.subr.mxu0 %v10778
  %10832 = vmatpush1.msra.mxu0 %v10777
  %10833 = vmatprep.subr.mxu0 %v10786
  %10834 = vmatpush1.msra.mxu0 %v10785
  %10835 = vmatprep.subr.mxu0 0.0
  %10836 = vmatpush1.msra.mxu0 0.0
  %10837 = vmatprep.subr.mxu0 0.0
  %10838 = vmatpush1.msra.mxu0 0.0
  %10839 = vmatprep.subr.mxu0 0.0
  %10840 = vmatpush1.msra.mxu0 0.0
  %10841 = vmatprep.subr.mxu0 0.0
  %10842 = vmatpush1.msra.mxu0 0.0
  %10843 = vmatprep.subr.mxu0 0.0
  %10844 = vmatpush1.msra.mxu0 0.0
  %10845 = vmatprep.subr.mxu0 0.0
  %10846 = vmatpush1.msra.mxu0 0.0
  %10847 = vmatprep.subr.mxu0 0.0
  %10848 = vmatpush1.msra.mxu0 0.0
  %10849 = vmatprep.subr.mxu0 0.0
  %10850 = vmatpush1.msra.mxu0 0.0
  %10851 = vmatprep.subr.mxu0 0.0
  %10852 = vmatpush1.msra.mxu0 0.0
  %10853 = vmatprep.subr.mxu0 0.0
  %10854 = vmatpush1.msra.mxu0 0.0
  %10855 = vmatprep.subr.mxu0 0.0
  %10856 = vmatpush1.msra.mxu0 0.0
  %10857 = vmatprep.subr.mxu0 0.0
  %10858 = vmatpush1.msra.mxu0 0.0
  %10859 = vmatprep.subr.mxu0 0.0
  %10860 = vmatpush1.msra.mxu0 0.0
  %10861 = vmatprep.subr.mxu0 0.0
  %10862 = vmatpush1.msra.mxu0 0.0
  %10863 = vmatprep.subr.mxu0 0.0
  %10864 = vmatpush1.msra.mxu0 0.0
  %10865 = vmatprep.subr.mxu0 0.0
  %10866 = vmatpush1.msra.mxu0 0.0
  %10867 = vmatprep.subr.mxu0 0.0
  %10868 = vmatpush1.msra.mxu0 0.0
  %10869 = vmatprep.subr.mxu0 0.0
  %10870 = vmatpush1.msra.mxu0 0.0
  %10871 = vmatprep.subr.mxu0 0.0
  %10872 = vmatpush1.msra.mxu0 0.0
  %10873 = vmatprep.subr.mxu0 0.0
  %10874 = vmatpush1.msra.mxu0 0.0
  %10875 = vmatprep.subr.mxu0 0.0
  %10876 = vmatpush1.msra.mxu0 0.0
  %10877 = vmatprep.subr.mxu0 0.0
  %10878 = vmatpush1.msra.mxu0 0.0
  %10879 = vmatprep.subr.mxu0 0.0
  %10880 = vmatpush1.msra.mxu0 0.0
  %10881 = vmatprep.subr.mxu0 0.0
  %10882 = vmatpush1.msra.mxu0 0.0
  %10883 = vmatprep.subr.mxu0 0.0
  %10884 = vmatpush1.msra.mxu0 0.0
  %10885 = vmatprep.subr.mxu0 0.0
  %10886 = vmatpush1.msra.mxu0 0.0
  %10887 = vmatprep.subr.mxu0 0.0
  %10888 = vmatpush1.msra.mxu0 0.0
  %10889 = vmatprep.subr.mxu0 0.0
  %10890 = vmatpush1.msra.mxu0 0.0
  %10891 = vmatprep.mubr.f32.mxu0 0.0
  %10892 = vmatmul.mubr.f32.gmra.mrb[0].mxu0 %v10825
  %v10893 = vpop.f32.mrb[0].mxu0
  %v10894 = vadd.f32 0.0, %v10893
  %v10895 = vpop.f32.mrb[0].mxu0
  %v10896 = vadd.f32 0.0, %v10895
  %10897 = vdwg.mxu0
  %10898 = vmatprep.subr.mxu0 %v10764
  %10899 = vmatpush1.msra.mxu0 %v10763
  %10900 = vmatprep.subr.mxu0 %v10772
  %10901 = vmatpush1.msra.mxu0 %v10771
  %10902 = vmatprep.subr.mxu0 %v10780
  %10903 = vmatpush1.msra.mxu0 %v10779
  %10904 = vmatprep.subr.mxu0 %v10788
  %10905 = vmatpush1.msra.mxu0 %v10787
  %10906 = vmatprep.subr.mxu0 0.0
  %10907 = vmatpush1.msra.mxu0 0.0
  %10908 = vmatprep.subr.mxu0 0.0
  %10909 = vmatpush1.msra.mxu0 0.0
  %10910 = vmatprep.subr.mxu0 0.0
  %10911 = vmatpush1.msra.mxu0 0.0
  %10912 = vmatprep.subr.mxu0 0.0
  %10913 = vmatpush1.msra.mxu0 0.0
  %10914 = vmatprep.subr.mxu0 0.0
  %10915 = vmatpush1.msra.mxu0 0.0
  %10916 = vmatprep.subr.mxu0 0.0
  %10917 = vmatpush1.msra.mxu0 0.0
  %10918 = vmatprep.subr.mxu0 0.0
  %10919 = vmatpush1.msra.mxu0 0.0
  %10920 = vmatprep.subr.mxu0 0.0
  %10921 = vmatpush1.msra.mxu0 0.0
  %10922 = vmatprep.subr.mxu0 0.0
  %10923 = vmatpush1.msra.mxu0 0.0
  %10924 = vmatprep.subr.mxu0 0.0
  %10925 = vmatpush1.msra.mxu0 0.0
  %10926 = vmatprep.subr.mxu0 0.0
  %10927 = vmatpush1.msra.mxu0 0.0
  %10928 = vmatprep.subr.mxu0 0.0
  %10929 = vmatpush1.msra.mxu0 0.0
  %10930 = vmatprep.subr.mxu0 0.0
  %10931 = vmatpush1.msra.mxu0 0.0
  %10932 = vmatprep.subr.mxu0 0.0
  %10933 = vmatpush1.msra.mxu0 0.0
  %10934 = vmatprep.subr.mxu0 0.0
  %10935 = vmatpush1.msra.mxu0 0.0
  %10936 = vmatprep.subr.mxu0 0.0
  %10937 = vmatpush1.msra.mxu0 0.0
  %10938 = vmatprep.subr.mxu0 0.0
  %10939 = vmatpush1.msra.mxu0 0.0
  %10940 = vmatprep.subr.mxu0 0.0
  %10941 = vmatpush1.msra.mxu0 0.0
  %10942 = vmatprep.subr.mxu0 0.0
  %10943 = vmatpush1.msra.mxu0 0.0
  %10944 = vmatprep.subr.mxu0 0.0
  %10945 = vmatpush1.msra.mxu0 0.0
  %10946 = vmatprep.subr.mxu0 0.0
  %10947 = vmatpush1.msra.mxu0 0.0
  %10948 = vmatprep.subr.mxu0 0.0
  %10949 = vmatpush1.msra.mxu0 0.0
  %10950 = vmatprep.subr.mxu0 0.0
  %10951 = vmatpush1.msra.mxu0 0.0
  %10952 = vmatprep.subr.mxu0 0.0
  %10953 = vmatpush1.msra.mxu0 0.0
  %10954 = vmatprep.subr.mxu0 0.0
  %10955 = vmatpush1.msra.mxu0 0.0
  %10956 = vmatprep.subr.mxu0 0.0
  %10957 = vmatpush1.msra.mxu0 0.0
  %10958 = vmatprep.subr.mxu0 0.0
  %10959 = vmatpush1.msra.mxu0 0.0
  %10960 = vmatprep.subr.mxu0 0.0
  %10961 = vmatpush1.msra.mxu0 0.0
  %10962 = vmatprep.mubr.f32.mxu0 0.0
  %10963 = vmatmul.mubr.f32.gmra.mrb[0].mxu0 %v10825
  %v10964 = vpop.f32.mrb[0].mxu0
  %v10965 = vadd.f32 0.0, %v10964
  %v10966 = vpop.f32.mrb[0].mxu0
  %10967 = vdwg.mxu0
  %10968 = vmatprep.subr.mxu0 %v10766
  %10969 = vmatpush1.msra.mxu0 %v10765
  %10970 = vmatprep.subr.mxu0 %v10774
  %10971 = vmatpush1.msra.mxu0 %v10773
  %10972 = vmatprep.subr.mxu0 %v10782
  %10973 = vmatpush1.msra.mxu0 %v10781
  %10974 = vmatprep.subr.mxu0 %v10790
  %10975 = vmatpush1.msra.mxu0 %v10789
  %10976 = vmatprep.subr.mxu0 0.0
  %10977 = vmatpush1.msra.mxu0 0.0
  %10978 = vmatprep.subr.mxu0 0.0
  %10979 = vmatpush1.msra.mxu0 0.0
  %10980 = vmatprep.subr.mxu0 0.0
  %10981 = vmatpush1.msra.mxu0 0.0
  %10982 = vmatprep.subr.mxu0 0.0
  %10983 = vmatpush1.msra.mxu0 0.0
  %10984 = vmatprep.subr.mxu0 0.0
  %10985 = vmatpush1.msra.mxu0 0.0
  %10986 = vmatprep.subr.mxu0 0.0
  %10987 = vmatpush1.msra.mxu0 0.0
  %10988 = vmatprep.subr.mxu0 0.0
  %10989 = vmatpush1.msra.mxu0 0.0
  %10990 = vmatprep.subr.mxu0 0.0
  %10991 = vmatpush1.msra.mxu0 0.0
  %10992 = vmatprep.subr.mxu0 0.0
  %10993 = vmatpush1.msra.mxu0 0.0
  %10994 = vmatprep.subr.mxu0 0.0
  %10995 = vmatpush1.msra.mxu0 0.0
  %10996 = vmatprep.subr.mxu0 0.0
  %10997 = vmatpush1.msra.mxu0 0.0
  %10998 = vmatprep.subr.mxu0 0.0
  %10999 = vmatpush1.msra.mxu0 0.0
  %11000 = vmatprep.subr.mxu0 0.0
  %11001 = vmatpush1.msra.mxu0 0.0
  %11002 = vmatprep.subr.mxu0 0.0
  %11003 = vmatpush1.msra.mxu0 0.0
  %11004 = vmatprep.subr.mxu0 0.0
  %11005 = vmatpush1.msra.mxu0 0.0
  %11006 = vmatprep.subr.mxu0 0.0
  %11007 = vmatpush1.msra.mxu0 0.0
  %11008 = vmatprep.subr.mxu0 0.0
  %11009 = vmatpush1.msra.mxu0 0.0
  %11010 = vmatprep.subr.mxu0 0.0
  %11011 = vmatpush1.msra.mxu0 0.0
  %11012 = vmatprep.subr.mxu0 0.0
  %11013 = vmatpush1.msra.mxu0 0.0
  %11014 = vmatprep.subr.mxu0 0.0
  %11015 = vmatpush1.msra.mxu0 0.0
  %11016 = vmatprep.subr.mxu0 0.0
  %11017 = vmatpush1.msra.mxu0 0.0
  %11018 = vmatprep.subr.mxu0 0.0
  %11019 = vmatpush1.msra.mxu0 0.0
  %11020 = vmatprep.subr.mxu0 0.0
  %11021 = vmatpush1.msra.mxu0 0.0
  %11022 = vmatprep.subr.mxu0 0.0
  %11023 = vmatpush1.msra.mxu0 0.0
  %11024 = vmatprep.subr.mxu0 0.0
  %11025 = vmatpush1.msra.mxu0 0.0
  %11026 = vmatprep.subr.mxu0 0.0
  %11027 = vmatpush1.msra.mxu0 0.0
  %11028 = vmatprep.subr.mxu0 0.0
  %11029 = vmatpush1.msra.mxu0 0.0
  %11030 = vmatprep.subr.mxu0 0.0
  %11031 = vmatpush1.msra.mxu0 0.0
  %11032 = vmatprep.mubr.f32.mxu0 0.0
  %11033 = vmatmul.mubr.f32.gmra.mrb[0].mxu0 %v10825
  %v11034 = vpop.f32.mrb[0].mxu0
  %v11035 = vpop.f32.mrb[0].mxu0
  %v11036 = vadd.f32 0.0, %v11035
  %11037 = vdwg.mxu0
  %11038 = vmatprep.subr.mxu0 %v10768
  %11039 = vmatpush1.msra.mxu0 %v10767
  %11040 = vmatprep.subr.mxu0 %v10776
  %11041 = vmatpush1.msra.mxu0 %v10775
  %11042 = vmatprep.subr.mxu0 %v10784
  %11043 = vmatpush1.msra.mxu0 %v10783
  %11044 = vmatprep.subr.mxu0 %v10792
  %11045 = vmatpush1.msra.mxu0 %v10791
  %11046 = vmatprep.subr.mxu0 0.0
  %11047 = vmatpush1.msra.mxu0 0.0
  %11048 = vmatprep.subr.mxu0 0.0
  %11049 = vmatpush1.msra.mxu0 0.0
  %11050 = vmatprep.subr.mxu0 0.0
  %11051 = vmatpush1.msra.mxu0 0.0
  %11052 = vmatprep.subr.mxu0 0.0
  %11053 = vmatpush1.msra.mxu0 0.0
  %11054 = vmatprep.subr.mxu0 0.0
  %11055 = vmatpush1.msra.mxu0 0.0
  %11056 = vmatprep.subr.mxu0 0.0
  %11057 = vmatpush1.msra.mxu0 0.0
  %11058 = vmatprep.subr.mxu0 0.0
  %11059 = vmatpush1.msra.mxu0 0.0
  %11060 = vmatprep.subr.mxu0 0.0
  %11061 = vmatpush1.msra.mxu0 0.0
  %11062 = vmatprep.subr.mxu0 0.0
  %11063 = vmatpush1.msra.mxu0 0.0
  %11064 = vmatprep.subr.mxu0 0.0
  %11065 = vmatpush1.msra.mxu0 0.0
  %11066 = vmatprep.subr.mxu0 0.0
  %11067 = vmatpush1.msra.mxu0 0.0
  %11068 = vmatprep.subr.mxu0 0.0
  %11069 = vmatpush1.msra.mxu0 0.0
  %11070 = vmatprep.subr.mxu0 0.0
  %11071 = vmatpush1.msra.mxu0 0.0
  %11072 = vmatprep.subr.mxu0 0.0
  %11073 = vmatpush1.msra.mxu0 0.0
  %11074 = vmatprep.subr.mxu0 0.0
  %11075 = vmatpush1.msra.mxu0 0.0
  %11076 = vmatprep.subr.mxu0 0.0
  %11077 = vmatpush1.msra.mxu0 0.0
  %11078 = vmatprep.subr.mxu0 0.0
  %11079 = vmatpush1.msra.mxu0 0.0
  %11080 = vmatprep.subr.mxu0 0.0
  %11081 = vmatpush1.msra.mxu0 0.0
  %11082 = vmatprep.subr.mxu0 0.0
  %11083 = vmatpush1.msra.mxu0 0.0
  %11084 = vmatprep.subr.mxu0 0.0
  %11085 = vmatpush1.msra.mxu0 0.0
  %11086 = vmatprep.subr.mxu0 0.0
  %11087 = vmatpush1.msra.mxu0 0.0
  %11088 = vmatprep.subr.mxu0 0.0
  %11089 = vmatpush1.msra.mxu0 0.0
  %11090 = vmatprep.subr.mxu0 0.0
  %11091 = vmatpush1.msra.mxu0 0.0
  %11092 = vmatprep.subr.mxu0 0.0
  %11093 = vmatpush1.msra.mxu0 0.0
  %11094 = vmatprep.subr.mxu0 0.0
  %11095 = vmatpush1.msra.mxu0 0.0
  %11096 = vmatprep.subr.mxu0 0.0
  %11097 = vmatpush1.msra.mxu0 0.0
  %11098 = vmatprep.subr.mxu0 0.0
  %11099 = vmatpush1.msra.mxu0 0.0
  %11100 = vmatprep.subr.mxu0 0.0
  %11101 = vmatpush1.msra.mxu0 0.0
  %11102 = vmatprep.mubr.f32.mxu0 0.0
  %11103 = vmatmul.mubr.f32.gmra.mrb[0].mxu0 %v10825
  %v11104 = vpop.f32.mrb[0].mxu0
  %v11105 = vadd.f32 0.0, %v11104
  %v11106 = vpop.f32.mrb[0].mxu0
  %v11107 = vadd.f32 0.0, %v11106
  %11108 = vdwg.mxu0
  %v11109 = vadd.f32 %v10606, %v10894
  %v11110 = vadd.f32 %v10607, %v10896
  %v11111 = vadd.f32 %v10608, %v10965
  %v11112 = vadd.f32 %v10609, %v11036
  %v11113 = vadd.f32 %v10610, %v11105
  %v11114 = vadd.f32 %v10611, %v11107
  %v11115 = vld [vmem:[%s1 + $0x18] sm:$0xf]
  %v11116 = vld [vmem:[%s0 + $0x8] sm:$0xff]
  %v11117 = vld [vmem:[%s0 + $0x10] sm:$0xff]
  %v11118 = vld [vmem:[%s0 + $0x18] sm:$0xff]
  %v11119 = vld [vmem:[%s0 + $0x20] sm:$0xff]
  %v11120 = vld [vmem:[%s0 + $0x28] sm:$0xff]
  %v11121 = vld [vmem:[%s0 + $0x30] sm:$0xff]
  %v11122 = vld [vmem:[%s0 + $0x38] sm:$0xff]
  %v11123 = vld [vmem:[%s0 + $0x40] sm:$0xff]
  %v11124 = vld [vmem:[%s0 + $0x48] sm:$0xff]
  %v11125 = vld [vmem:[%s0 + $0x58] sm:$0xff]
  %v11126 = vld [vmem:[%s0 + $0x60] sm:$0xff]
  %v11127 = vld [vmem:[%s0 + $0x68] sm:$0xff]
  %v11128 = vld [vmem:[%s0 + $0x70] sm:$0xff]
  %v11129 = vld [vmem:[%s0 + $0x78] sm:$0xff]
  %v11130 = vld [vmem:[%s0 + $0x80] sm:$0xff]
  %v11131 = vld [vmem:[%s0 + $0x88] sm:$0xff]
  %v11132 = vld [vmem:[%s0 + $0x90] sm:$0xff]
  %v11133 = vld [vmem:[%s0 + $0x98] sm:$0xff]
  %v11134 = vld [vmem:[%s0 + $0xa8] sm:$0xff]
  %v11135 = vld [vmem:[%s0 + $0xb0] sm:$0xff]
  %v11136 = vld [vmem:[%s0 + $0xb8] sm:$0xff]
  %v11137 = vld [vmem:[%s0 + $0xc0] sm:$0xff]
  %v11138 = vld [vmem:[%s0 + $0xc8] sm:$0xff]
  %v11139 = vld [vmem:[%s0 + $0xd0] sm:$0xff]
  %v11140 = vld [vmem:[%s0 + $0xd8] sm:$0xff]
  %v11141 = vld [vmem:[%s0 + $0xe0] sm:$0xff]
  %v11142 = vld [vmem:[%s0 + $0xe8] sm:$0xff]
  %v11143 = vld [vmem:[%s0 + $0xf8] sm:$0xff]
  %v11144 = vld [vmem:[%s0 + $0x100] sm:$0xff]
  %v11145 = vld [vmem:[%s0 + $0x108] sm:$0xff]
  %v11146 = vld [vmem:[%s0 + $0x110] sm:$0xff]
  %v11147 = vld [vmem:[%s0 + $0x118] sm:$0xff]
  %v11148 = vld [vmem:[%s0 + $0x120] sm:$0xff]
  %v11149 = vld [vmem:[%s0 + $0x128] sm:$0xff]
  %v11150 = vld [vmem:[%s0 + $0x130] sm:$0xff]
  %v11151 = vld [vmem:[%s0 + $0x138] sm:$0xff]
  %11188 = vrot.lane.b32.xlu0 %v11116, 112
  %v11189 = vpop.permute.xlu0 %11188
  %11190 = vrot.lane.b32.xlu0 %v11117, 112
  %v11191 = vpop.permute.xlu0 %11190
  %11192 = vrot.lane.b32.xlu0 %v11118, 112
  %v11193 = vpop.permute.xlu0 %11192
  %11194 = vrot.lane.b32.xlu0 %v11119, 112
  %v11195 = vpop.permute.xlu0 %11194
  %11196 = vrot.lane.b32.xlu0 %v11120, 112
  %v11197 = vpop.permute.xlu0 %11196
  %11198 = vrot.lane.b32.xlu0 %v11121, 112
  %v11199 = vpop.permute.xlu0 %11198
  %11200 = vrot.lane.b32.xlu0 %v11122, 112
  %v11201 = vpop.permute.xlu0 %11200
  %11202 = vrot.lane.b32.xlu0 %v11123, 112
  %v11203 = vpop.permute.xlu0 %11202
  %11204 = vrot.lane.b32.xlu0 %v11124, 112
  %v11205 = vpop.permute.xlu0 %11204
  %11206 = vrot.lane.b32.xlu0 %v11125, 112
  %v11207 = vpop.permute.xlu0 %11206
  %11208 = vrot.lane.b32.xlu0 %v11126, 112
  %v11209 = vpop.permute.xlu0 %11208
  %11210 = vrot.lane.b32.xlu0 %v11127, 112
  %v11211 = vpop.permute.xlu0 %11210
  %11212 = vrot.lane.b32.xlu0 %v11128, 112
  %v11213 = vpop.permute.xlu0 %11212
  %11214 = vrot.lane.b32.xlu0 %v11129, 112
  %v11215 = vpop.permute.xlu0 %11214
  %11216 = vrot.lane.b32.xlu0 %v11130, 112
  %v11217 = vpop.permute.xlu0 %11216
  %11218 = vrot.lane.b32.xlu0 %v11131, 112
  %v11219 = vpop.permute.xlu0 %11218
  %11220 = vrot.lane.b32.xlu0 %v11132, 112
  %v11221 = vpop.permute.xlu0 %11220
  %11222 = vrot.lane.b32.xlu0 %v11133, 112
  %v11223 = vpop.permute.xlu0 %11222
  %11224 = vrot.lane.b32.xlu0 %v11134, 112
  %v11225 = vpop.permute.xlu0 %11224
  %11226 = vrot.lane.b32.xlu0 %v11135, 112
  %v11227 = vpop.permute.xlu0 %11226
  %11228 = vrot.lane.b32.xlu0 %v11136, 112
  %v11229 = vpop.permute.xlu0 %11228
  %11230 = vrot.lane.b32.xlu0 %v11137, 112
  %v11231 = vpop.permute.xlu0 %11230
  %11232 = vrot.lane.b32.xlu0 %v11138, 112
  %v11233 = vpop.permute.xlu0 %11232
  %11234 = vrot.lane.b32.xlu0 %v11139, 112
  %v11235 = vpop.permute.xlu0 %11234
  %11236 = vrot.lane.b32.xlu0 %v11140, 112
  %v11237 = vpop.permute.xlu0 %11236
  %11238 = vrot.lane.b32.xlu0 %v11141, 112
  %v11239 = vpop.permute.xlu0 %11238
  %11240 = vrot.lane.b32.xlu0 %v11142, 112
  %v11241 = vpop.permute.xlu0 %11240
  %11242 = vrot.lane.b32.xlu0 %v11143, 112
  %v11243 = vpop.permute.xlu0 %11242
  %11244 = vrot.lane.b32.xlu0 %v11144, 112
  %v11245 = vpop.permute.xlu0 %11244
  %11246 = vrot.lane.b32.xlu0 %v11145, 112
  %v11247 = vpop.permute.xlu0 %11246
  %11248 = vrot.lane.b32.xlu0 %v11146, 112
  %v11249 = vpop.permute.xlu0 %11248
  %11250 = vrot.lane.b32.xlu0 %v11147, 112
  %v11251 = vpop.permute.xlu0 %11250
  %11252 = vrot.lane.b32.xlu0 %v11148, 112
  %v11253 = vpop.permute.xlu0 %11252
  %11254 = vrot.lane.b32.xlu0 %v11149, 112
  %v11255 = vpop.permute.xlu0 %11254
  %11256 = vrot.lane.b32.xlu0 %v11150, 112
  %v11257 = vpop.permute.xlu0 %11256
  %11258 = vrot.lane.b32.xlu0 %v11151, 112
  %v11259 = vpop.permute.xlu0 %11258
  %vm11260 = vcmask 916480
  %v11261 = vsel %vm11260, %v11189, %v11191
  %v11262 = vsel %vm11260, %v11191, %v11193
  %v11263 = vsel %vm11260, %v11193, %v11195
  %v11264 = vsel %vm11260, %v11195, %v11197
  %v11265 = vsel %vm11260, %v11197, %v11199
  %v11266 = vsel %vm11260, %v11199, %v11201
  %v11267 = vsel %vm11260, %v11201, %v11203
  %v11268 = vsel %vm11260, %v11203, %v11205
  %v11269 = vsel %vm11260, %v11207, %v11209
  %v11270 = vsel %vm11260, %v11209, %v11211
  %v11271 = vsel %vm11260, %v11211, %v11213
  %v11272 = vsel %vm11260, %v11213, %v11215
  %v11273 = vsel %vm11260, %v11215, %v11217
  %v11274 = vsel %vm11260, %v11217, %v11219
  %v11275 = vsel %vm11260, %v11219, %v11221
  %v11276 = vsel %vm11260, %v11221, %v11223
  %v11277 = vsel %vm11260, %v11225, %v11227
  %v11278 = vsel %vm11260, %v11227, %v11229
  %v11279 = vsel %vm11260, %v11229, %v11231
  %v11280 = vsel %vm11260, %v11231, %v11233
  %v11281 = vsel %vm11260, %v11233, %v11235
  %v11282 = vsel %vm11260, %v11235, %v11237
  %v11283 = vsel %vm11260, %v11237, %v11239
  %v11284 = vsel %vm11260, %v11239, %v11241
  %v11285 = vsel %vm11260, %v11243, %v11245
  %v11286 = vsel %vm11260, %v11245, %v11247
  %v11287 = vsel %vm11260, %v11247, %v11249
  %v11288 = vsel %vm11260, %v11249, %v11251
  %v11289 = vsel %vm11260, %v11251, %v11253
  %v11290 = vsel %vm11260, %v11253, %v11255
  %v11291 = vsel %vm11260, %v11255, %v11257
  %v11292 = vsel %vm11260, %v11257, %v11259
  %v11326 = vsel %vm231, %v11115, 0
  %11328 = vmatprep.subr.mxu0 %v11262
  %11329 = vmatpush1.msra.mxu0 %v11261
  %11330 = vmatprep.subr.mxu0 %v11270
  %11331 = vmatpush1.msra.mxu0 %v11269
  %11332 = vmatprep.subr.mxu0 %v11278
  %11333 = vmatpush1.msra.mxu0 %v11277
  %11334 = vmatprep.subr.mxu0 %v11286
  %11335 = vmatpush1.msra.mxu0 %v11285
  %11336 = vmatprep.subr.mxu0 0.0
  %11337 = vmatpush1.msra.mxu0 0.0
  %11338 = vmatprep.subr.mxu0 0.0
  %11339 = vmatpush1.msra.mxu0 0.0
  %11340 = vmatprep.subr.mxu0 0.0
  %11341 = vmatpush1.msra.mxu0 0.0
  %11342 = vmatprep.subr.mxu0 0.0
  %11343 = vmatpush1.msra.mxu0 0.0
  %11344 = vmatprep.subr.mxu0 0.0
  %11345 = vmatpush1.msra.mxu0 0.0
  %11346 = vmatprep.subr.mxu0 0.0
  %11347 = vmatpush1.msra.mxu0 0.0
  %11348 = vmatprep.subr.mxu0 0.0
  %11349 = vmatpush1.msra.mxu0 0.0
  %11350 = vmatprep.subr.mxu0 0.0
  %11351 = vmatpush1.msra.mxu0 0.0
  %11352 = vmatprep.subr.mxu0 0.0
  %11353 = vmatpush1.msra.mxu0 0.0
  %11354 = vmatprep.subr.mxu0 0.0
  %11355 = vmatpush1.msra.mxu0 0.0
  %11356 = vmatprep.subr.mxu0 0.0
  %11357 = vmatpush1.msra.mxu0 0.0
  %11358 = vmatprep.subr.mxu0 0.0
  %11359 = vmatpush1.msra.mxu0 0.0
  %11360 = vmatprep.subr.mxu0 0.0
  %11361 = vmatpush1.msra.mxu0 0.0
  %11362 = vmatprep.subr.mxu0 0.0
  %11363 = vmatpush1.msra.mxu0 0.0
  %11364 = vmatprep.subr.mxu0 0.0
  %11365 = vmatpush1.msra.mxu0 0.0
  %11366 = vmatprep.subr.mxu0 0.0
  %11367 = vmatpush1.msra.mxu0 0.0
  %11368 = vmatprep.subr.mxu0 0.0
  %11369 = vmatpush1.msra.mxu0 0.0
  %11370 = vmatprep.subr.mxu0 0.0
  %11371 = vmatpush1.msra.mxu0 0.0
  %11372 = vmatprep.subr.mxu0 0.0
  %11373 = vmatpush1.msra.mxu0 0.0
  %11374 = vmatprep.subr.mxu0 0.0
  %11375 = vmatpush1.msra.mxu0 0.0
  %11376 = vmatprep.subr.mxu0 0.0
  %11377 = vmatpush1.msra.mxu0 0.0
  %11378 = vmatprep.subr.mxu0 0.0
  %11379 = vmatpush1.msra.mxu0 0.0
  %11380 = vmatprep.subr.mxu0 0.0
  %11381 = vmatpush1.msra.mxu0 0.0
  %11382 = vmatprep.subr.mxu0 0.0
  %11383 = vmatpush1.msra.mxu0 0.0
  %11384 = vmatprep.subr.mxu0 0.0
  %11385 = vmatpush1.msra.mxu0 0.0
  %11386 = vmatprep.subr.mxu0 0.0
  %11387 = vmatpush1.msra.mxu0 0.0
  %11388 = vmatprep.subr.mxu0 0.0
  %11389 = vmatpush1.msra.mxu0 0.0
  %11390 = vmatprep.subr.mxu0 0.0
  %11391 = vmatpush1.msra.mxu0 0.0
  %11392 = vmatprep.mubr.f32.mxu0 0.0
  %11393 = vmatmul.mubr.f32.gmra.mrb[0].mxu0 %v11326
  %v11394 = vpop.f32.mrb[0].mxu0
  %v11395 = vadd.f32 0.0, %v11394
  %v11396 = vpop.f32.mrb[0].mxu0
  %v11397 = vadd.f32 0.0, %v11396
  %11398 = vdwg.mxu0
  %11399 = vmatprep.subr.mxu0 %v11264
  %11400 = vmatpush1.msra.mxu0 %v11263
  %11401 = vmatprep.subr.mxu0 %v11272
  %11402 = vmatpush1.msra.mxu0 %v11271
  %11403 = vmatprep.subr.mxu0 %v11280
  %11404 = vmatpush1.msra.mxu0 %v11279
  %11405 = vmatprep.subr.mxu0 %v11288
  %11406 = vmatpush1.msra.mxu0 %v11287
  %11407 = vmatprep.subr.mxu0 0.0
  %11408 = vmatpush1.msra.mxu0 0.0
  %11409 = vmatprep.subr.mxu0 0.0
  %11410 = vmatpush1.msra.mxu0 0.0
  %11411 = vmatprep.subr.mxu0 0.0
  %11412 = vmatpush1.msra.mxu0 0.0
  %11413 = vmatprep.subr.mxu0 0.0
  %11414 = vmatpush1.msra.mxu0 0.0
  %11415 = vmatprep.subr.mxu0 0.0
  %11416 = vmatpush1.msra.mxu0 0.0
  %11417 = vmatprep.subr.mxu0 0.0
  %11418 = vmatpush1.msra.mxu0 0.0
  %11419 = vmatprep.subr.mxu0 0.0
  %11420 = vmatpush1.msra.mxu0 0.0
  %11421 = vmatprep.subr.mxu0 0.0
  %11422 = vmatpush1.msra.mxu0 0.0
  %11423 = vmatprep.subr.mxu0 0.0
  %11424 = vmatpush1.msra.mxu0 0.0
  %11425 = vmatprep.subr.mxu0 0.0
  %11426 = vmatpush1.msra.mxu0 0.0
  %11427 = vmatprep.subr.mxu0 0.0
  %11428 = vmatpush1.msra.mxu0 0.0
  %11429 = vmatprep.subr.mxu0 0.0
  %11430 = vmatpush1.msra.mxu0 0.0
  %11431 = vmatprep.subr.mxu0 0.0
  %11432 = vmatpush1.msra.mxu0 0.0
  %11433 = vmatprep.subr.mxu0 0.0
  %11434 = vmatpush1.msra.mxu0 0.0
  %11435 = vmatprep.subr.mxu0 0.0
  %11436 = vmatpush1.msra.mxu0 0.0
  %11437 = vmatprep.subr.mxu0 0.0
  %11438 = vmatpush1.msra.mxu0 0.0
  %11439 = vmatprep.subr.mxu0 0.0
  %11440 = vmatpush1.msra.mxu0 0.0
  %11441 = vmatprep.subr.mxu0 0.0
  %11442 = vmatpush1.msra.mxu0 0.0
  %11443 = vmatprep.subr.mxu0 0.0
  %11444 = vmatpush1.msra.mxu0 0.0
  %11445 = vmatprep.subr.mxu0 0.0
  %11446 = vmatpush1.msra.mxu0 0.0
  %11447 = vmatprep.subr.mxu0 0.0
  %11448 = vmatpush1.msra.mxu0 0.0
  %11449 = vmatprep.subr.mxu0 0.0
  %11450 = vmatpush1.msra.mxu0 0.0
  %11451 = vmatprep.subr.mxu0 0.0
  %11452 = vmatpush1.msra.mxu0 0.0
  %11453 = vmatprep.subr.mxu0 0.0
  %11454 = vmatpush1.msra.mxu0 0.0
  %11455 = vmatprep.subr.mxu0 0.0
  %11456 = vmatpush1.msra.mxu0 0.0
  %11457 = vmatprep.subr.mxu0 0.0
  %11458 = vmatpush1.msra.mxu0 0.0
  %11459 = vmatprep.subr.mxu0 0.0
  %11460 = vmatpush1.msra.mxu0 0.0
  %11461 = vmatprep.subr.mxu0 0.0
  %11462 = vmatpush1.msra.mxu0 0.0
  %11463 = vmatprep.mubr.f32.mxu0 0.0
  %11464 = vmatmul.mubr.f32.gmra.mrb[0].mxu0 %v11326
  %v11465 = vpop.f32.mrb[0].mxu0
  %v11466 = vadd.f32 0.0, %v11465
  %v11467 = vpop.f32.mrb[0].mxu0
  %11468 = vdwg.mxu0
  %11469 = vmatprep.subr.mxu0 %v11266
  %11470 = vmatpush1.msra.mxu0 %v11265
  %11471 = vmatprep.subr.mxu0 %v11274
  %11472 = vmatpush1.msra.mxu0 %v11273
  %11473 = vmatprep.subr.mxu0 %v11282
  %11474 = vmatpush1.msra.mxu0 %v11281
  %11475 = vmatprep.subr.mxu0 %v11290
  %11476 = vmatpush1.msra.mxu0 %v11289
  %11477 = vmatprep.subr.mxu0 0.0
  %11478 = vmatpush1.msra.mxu0 0.0
  %11479 = vmatprep.subr.mxu0 0.0
  %11480 = vmatpush1.msra.mxu0 0.0
  %11481 = vmatprep.subr.mxu0 0.0
  %11482 = vmatpush1.msra.mxu0 0.0
  %11483 = vmatprep.subr.mxu0 0.0
  %11484 = vmatpush1.msra.mxu0 0.0
  %11485 = vmatprep.subr.mxu0 0.0
  %11486 = vmatpush1.msra.mxu0 0.0
  %11487 = vmatprep.subr.mxu0 0.0
  %11488 = vmatpush1.msra.mxu0 0.0
  %11489 = vmatprep.subr.mxu0 0.0
  %11490 = vmatpush1.msra.mxu0 0.0
  %11491 = vmatprep.subr.mxu0 0.0
  %11492 = vmatpush1.msra.mxu0 0.0
  %11493 = vmatprep.subr.mxu0 0.0
  %11494 = vmatpush1.msra.mxu0 0.0
  %11495 = vmatprep.subr.mxu0 0.0
  %11496 = vmatpush1.msra.mxu0 0.0
  %11497 = vmatprep.subr.mxu0 0.0
  %11498 = vmatpush1.msra.mxu0 0.0
  %11499 = vmatprep.subr.mxu0 0.0
  %11500 = vmatpush1.msra.mxu0 0.0
  %11501 = vmatprep.subr.mxu0 0.0
  %11502 = vmatpush1.msra.mxu0 0.0
  %11503 = vmatprep.subr.mxu0 0.0
  %11504 = vmatpush1.msra.mxu0 0.0
  %11505 = vmatprep.subr.mxu0 0.0
  %11506 = vmatpush1.msra.mxu0 0.0
  %11507 = vmatprep.subr.mxu0 0.0
  %11508 = vmatpush1.msra.mxu0 0.0
  %11509 = vmatprep.subr.mxu0 0.0
  %11510 = vmatpush1.msra.mxu0 0.0
  %11511 = vmatprep.subr.mxu0 0.0
  %11512 = vmatpush1.msra.mxu0 0.0
  %11513 = vmatprep.subr.mxu0 0.0
  %11514 = vmatpush1.msra.mxu0 0.0
  %11515 = vmatprep.subr.mxu0 0.0
  %11516 = vmatpush1.msra.mxu0 0.0
  %11517 = vmatprep.subr.mxu0 0.0
  %11518 = vmatpush1.msra.mxu0 0.0
  %11519 = vmatprep.subr.mxu0 0.0
  %11520 = vmatpush1.msra.mxu0 0.0
  %11521 = vmatprep.subr.mxu0 0.0
  %11522 = vmatpush1.msra.mxu0 0.0
  %11523 = vmatprep.subr.mxu0 0.0
  %11524 = vmatpush1.msra.mxu0 0.0
  %11525 = vmatprep.subr.mxu0 0.0
  %11526 = vmatpush1.msra.mxu0 0.0
  %11527 = vmatprep.subr.mxu0 0.0
  %11528 = vmatpush1.msra.mxu0 0.0
  %11529 = vmatprep.subr.mxu0 0.0
  %11530 = vmatpush1.msra.mxu0 0.0
  %11531 = vmatprep.subr.mxu0 0.0
  %11532 = vmatpush1.msra.mxu0 0.0
  %11533 = vmatprep.mubr.f32.mxu0 0.0
  %11534 = vmatmul.mubr.f32.gmra.mrb[0].mxu0 %v11326
  %v11535 = vpop.f32.mrb[0].mxu0
  %v11536 = vpop.f32.mrb[0].mxu0
  %v11537 = vadd.f32 0.0, %v11536
  %11538 = vdwg.mxu0
  %11539 = vmatprep.subr.mxu0 %v11268
  %11540 = vmatpush1.msra.mxu0 %v11267
  %11541 = vmatprep.subr.mxu0 %v11276
  %11542 = vmatpush1.msra.mxu0 %v11275
  %11543 = vmatprep.subr.mxu0 %v11284
  %11544 = vmatpush1.msra.mxu0 %v11283
  %11545 = vmatprep.subr.mxu0 %v11292
  %11546 = vmatpush1.msra.mxu0 %v11291
  %11547 = vmatprep.subr.mxu0 0.0
  %11548 = vmatpush1.msra.mxu0 0.0
  %11549 = vmatprep.subr.mxu0 0.0
  %11550 = vmatpush1.msra.mxu0 0.0
  %11551 = vmatprep.subr.mxu0 0.0
  %11552 = vmatpush1.msra.mxu0 0.0
  %11553 = vmatprep.subr.mxu0 0.0
  %11554 = vmatpush1.msra.mxu0 0.0
  %11555 = vmatprep.subr.mxu0 0.0
  %11556 = vmatpush1.msra.mxu0 0.0
  %11557 = vmatprep.subr.mxu0 0.0
  %11558 = vmatpush1.msra.mxu0 0.0
  %11559 = vmatprep.subr.mxu0 0.0
  %11560 = vmatpush1.msra.mxu0 0.0
  %11561 = vmatprep.subr.mxu0 0.0
  %11562 = vmatpush1.msra.mxu0 0.0
  %11563 = vmatprep.subr.mxu0 0.0
  %11564 = vmatpush1.msra.mxu0 0.0
  %11565 = vmatprep.subr.mxu0 0.0
  %11566 = vmatpush1.msra.mxu0 0.0
  %11567 = vmatprep.subr.mxu0 0.0
  %11568 = vmatpush1.msra.mxu0 0.0
  %11569 = vmatprep.subr.mxu0 0.0
  %11570 = vmatpush1.msra.mxu0 0.0
  %11571 = vmatprep.subr.mxu0 0.0
  %11572 = vmatpush1.msra.mxu0 0.0
  %11573 = vmatprep.subr.mxu0 0.0
  %11574 = vmatpush1.msra.mxu0 0.0
  %11575 = vmatprep.subr.mxu0 0.0
  %11576 = vmatpush1.msra.mxu0 0.0
  %11577 = vmatprep.subr.mxu0 0.0
  %11578 = vmatpush1.msra.mxu0 0.0
  %11579 = vmatprep.subr.mxu0 0.0
  %11580 = vmatpush1.msra.mxu0 0.0
  %11581 = vmatprep.subr.mxu0 0.0
  %11582 = vmatpush1.msra.mxu0 0.0
  %11583 = vmatprep.subr.mxu0 0.0
  %11584 = vmatpush1.msra.mxu0 0.0
  %11585 = vmatprep.subr.mxu0 0.0
  %11586 = vmatpush1.msra.mxu0 0.0
  %11587 = vmatprep.subr.mxu0 0.0
  %11588 = vmatpush1.msra.mxu0 0.0
  %11589 = vmatprep.subr.mxu0 0.0
  %11590 = vmatpush1.msra.mxu0 0.0
  %11591 = vmatprep.subr.mxu0 0.0
  %11592 = vmatpush1.msra.mxu0 0.0
  %11593 = vmatprep.subr.mxu0 0.0
  %11594 = vmatpush1.msra.mxu0 0.0
  %11595 = vmatprep.subr.mxu0 0.0
  %11596 = vmatpush1.msra.mxu0 0.0
  %11597 = vmatprep.subr.mxu0 0.0
  %11598 = vmatpush1.msra.mxu0 0.0
  %11599 = vmatprep.subr.mxu0 0.0
  %11600 = vmatpush1.msra.mxu0 0.0
  %11601 = vmatprep.subr.mxu0 0.0
  %11602 = vmatpush1.msra.mxu0 0.0
  %11603 = vmatprep.mubr.f32.mxu0 0.0
  %11604 = vmatmul.mubr.f32.gmra.mrb[0].mxu0 %v11326
  %v11605 = vpop.f32.mrb[0].mxu0
  %v11606 = vadd.f32 0.0, %v11605
  %v11607 = vpop.f32.mrb[0].mxu0
  %v11608 = vadd.f32 0.0, %v11607
  %11609 = vdwg.mxu0
  %v11610 = vadd.f32 %v11109, %v11395
  %v11611 = vadd.f32 %v11110, %v11397
  %v11612 = vadd.f32 %v11111, %v11466
  %v11613 = vadd.f32 %v11112, %v11537
  %v11614 = vadd.f32 %v11113, %v11606
  %v11615 = vadd.f32 %v11114, %v11608
  %11616 = vrot.lane.b32.xlu0 %v11115, 96
  %v11617 = vpop.permute.xlu0 %11616
  %11618 = vrot.lane.b32.xlu0 %v11116, 109
  %v11619 = vpop.permute.xlu0 %11618
  %11620 = vrot.lane.b32.xlu0 %v11117, 109
  %v11621 = vpop.permute.xlu0 %11620
  %11622 = vrot.lane.b32.xlu0 %v11118, 109
  %v11623 = vpop.permute.xlu0 %11622
  %11624 = vrot.lane.b32.xlu0 %v11119, 109
  %v11625 = vpop.permute.xlu0 %11624
  %11626 = vrot.lane.b32.xlu0 %v11120, 109
  %v11627 = vpop.permute.xlu0 %11626
  %11628 = vrot.lane.b32.xlu0 %v11121, 109
  %v11629 = vpop.permute.xlu0 %11628
  %11630 = vrot.lane.b32.xlu0 %v11122, 109
  %v11631 = vpop.permute.xlu0 %11630
  %11632 = vrot.lane.b32.xlu0 %v11123, 109
  %v11633 = vpop.permute.xlu0 %11632
  %11634 = vrot.lane.b32.xlu0 %v11124, 109
  %v11635 = vpop.permute.xlu0 %11634
  %11636 = vrot.lane.b32.xlu0 %v11125, 109
  %v11637 = vpop.permute.xlu0 %11636
  %11638 = vrot.lane.b32.xlu0 %v11126, 109
  %v11639 = vpop.permute.xlu0 %11638
  %11640 = vrot.lane.b32.xlu0 %v11127, 109
  %v11641 = vpop.permute.xlu0 %11640
  %11642 = vrot.lane.b32.xlu0 %v11128, 109
  %v11643 = vpop.permute.xlu0 %11642
  %11644 = vrot.lane.b32.xlu0 %v11129, 109
  %v11645 = vpop.permute.xlu0 %11644
  %11646 = vrot.lane.b32.xlu0 %v11130, 109
  %v11647 = vpop.permute.xlu0 %11646
  %11648 = vrot.lane.b32.xlu0 %v11131, 109
  %v11649 = vpop.permute.xlu0 %11648
  %11650 = vrot.lane.b32.xlu0 %v11132, 109
  %v11651 = vpop.permute.xlu0 %11650
  %11652 = vrot.lane.b32.xlu0 %v11133, 109
  %v11653 = vpop.permute.xlu0 %11652
  %11654 = vrot.lane.b32.xlu0 %v11134, 109
  %v11655 = vpop.permute.xlu0 %11654
  %11656 = vrot.lane.b32.xlu0 %v11135, 109
  %v11657 = vpop.permute.xlu0 %11656
  %11658 = vrot.lane.b32.xlu0 %v11136, 109
  %v11659 = vpop.permute.xlu0 %11658
  %11660 = vrot.lane.b32.xlu0 %v11137, 109
  %v11661 = vpop.permute.xlu0 %11660
  %11662 = vrot.lane.b32.xlu0 %v11138, 109
  %v11663 = vpop.permute.xlu0 %11662
  %11664 = vrot.lane.b32.xlu0 %v11139, 109
  %v11665 = vpop.permute.xlu0 %11664
  %11666 = vrot.lane.b32.xlu0 %v11140, 109
  %v11667 = vpop.permute.xlu0 %11666
  %11668 = vrot.lane.b32.xlu0 %v11141, 109
  %v11669 = vpop.permute.xlu0 %11668
  %11670 = vrot.lane.b32.xlu0 %v11142, 109
  %v11671 = vpop.permute.xlu0 %11670
  %11672 = vrot.lane.b32.xlu0 %v11143, 109
  %v11673 = vpop.permute.xlu0 %11672
  %11674 = vrot.lane.b32.xlu0 %v11144, 109
  %v11675 = vpop.permute.xlu0 %11674
  %11676 = vrot.lane.b32.xlu0 %v11145, 109
  %v11677 = vpop.permute.xlu0 %11676
  %11678 = vrot.lane.b32.xlu0 %v11146, 109
  %v11679 = vpop.permute.xlu0 %11678
  %11680 = vrot.lane.b32.xlu0 %v11147, 109
  %v11681 = vpop.permute.xlu0 %11680
  %11682 = vrot.lane.b32.xlu0 %v11148, 109
  %v11683 = vpop.permute.xlu0 %11682
  %11684 = vrot.lane.b32.xlu0 %v11149, 109
  %v11685 = vpop.permute.xlu0 %11684
  %11686 = vrot.lane.b32.xlu0 %v11150, 109
  %v11687 = vpop.permute.xlu0 %11686
  %11688 = vrot.lane.b32.xlu0 %v11151, 109
  %v11689 = vpop.permute.xlu0 %11688
  %vm11690 = vcmask 891904
  %v11691 = vsel %vm11690, %v11619, %v11621
  %v11692 = vsel %vm11690, %v11621, %v11623
  %v11693 = vsel %vm11690, %v11623, %v11625
  %v11694 = vsel %vm11690, %v11625, %v11627
  %v11695 = vsel %vm11690, %v11627, %v11629
  %v11696 = vsel %vm11690, %v11629, %v11631
  %v11697 = vsel %vm11690, %v11631, %v11633
  %v11698 = vsel %vm11690, %v11633, %v11635
  %v11699 = vsel %vm11690, %v11637, %v11639
  %v11700 = vsel %vm11690, %v11639, %v11641
  %v11701 = vsel %vm11690, %v11641, %v11643
  %v11702 = vsel %vm11690, %v11643, %v11645
  %v11703 = vsel %vm11690, %v11645, %v11647
  %v11704 = vsel %vm11690, %v11647, %v11649
  %v11705 = vsel %vm11690, %v11649, %v11651
  %v11706 = vsel %vm11690, %v11651, %v11653
  %v11707 = vsel %vm11690, %v11655, %v11657
  %v11708 = vsel %vm11690, %v11657, %v11659
  %v11709 = vsel %vm11690, %v11659, %v11661
  %v11710 = vsel %vm11690, %v11661, %v11663
  %v11711 = vsel %vm11690, %v11663, %v11665
  %v11712 = vsel %vm11690, %v11665, %v11667
  %v11713 = vsel %vm11690, %v11667, %v11669
  %v11714 = vsel %vm11690, %v11669, %v11671
  %v11715 = vsel %vm11690, %v11673, %v11675
  %v11716 = vsel %vm11690, %v11675, %v11677
  %v11717 = vsel %vm11690, %v11677, %v11679
  %v11718 = vsel %vm11690, %v11679, %v11681
  %v11719 = vsel %vm11690, %v11681, %v11683
  %v11720 = vsel %vm11690, %v11683, %v11685
  %v11721 = vsel %vm11690, %v11685, %v11687
  %v11722 = vsel %vm11690, %v11687, %v11689
  %v11755 = vsel %vm231, %v11617, 0
  %11757 = vmatprep.subr.mxu0 %v11692
  %11758 = vmatpush1.msra.mxu0 %v11691
  %11759 = vmatprep.subr.mxu0 %v11700
  %11760 = vmatpush1.msra.mxu0 %v11699
  %11761 = vmatprep.subr.mxu0 %v11708
  %11762 = vmatpush1.msra.mxu0 %v11707
  %11763 = vmatprep.subr.mxu0 %v11716
  %11764 = vmatpush1.msra.mxu0 %v11715
  %11765 = vmatprep.subr.mxu0 0.0
  %11766 = vmatpush1.msra.mxu0 0.0
  %11767 = vmatprep.subr.mxu0 0.0
  %11768 = vmatpush1.msra.mxu0 0.0
  %11769 = vmatprep.subr.mxu0 0.0
  %11770 = vmatpush1.msra.mxu0 0.0
  %11771 = vmatprep.subr.mxu0 0.0
  %11772 = vmatpush1.msra.mxu0 0.0
  %11773 = vmatprep.subr.mxu0 0.0
  %11774 = vmatpush1.msra.mxu0 0.0
  %11775 = vmatprep.subr.mxu0 0.0
  %11776 = vmatpush1.msra.mxu0 0.0
  %11777 = vmatprep.subr.mxu0 0.0
  %11778 = vmatpush1.msra.mxu0 0.0
  %11779 = vmatprep.subr.mxu0 0.0
  %11780 = vmatpush1.msra.mxu0 0.0
  %11781 = vmatprep.subr.mxu0 0.0
  %11782 = vmatpush1.msra.mxu0 0.0
  %11783 = vmatprep.subr.mxu0 0.0
  %11784 = vmatpush1.msra.mxu0 0.0
  %11785 = vmatprep.subr.mxu0 0.0
  %11786 = vmatpush1.msra.mxu0 0.0
  %11787 = vmatprep.subr.mxu0 0.0
  %11788 = vmatpush1.msra.mxu0 0.0
  %11789 = vmatprep.subr.mxu0 0.0
  %11790 = vmatpush1.msra.mxu0 0.0
  %11791 = vmatprep.subr.mxu0 0.0
  %11792 = vmatpush1.msra.mxu0 0.0
  %11793 = vmatprep.subr.mxu0 0.0
  %11794 = vmatpush1.msra.mxu0 0.0
  %11795 = vmatprep.subr.mxu0 0.0
  %11796 = vmatpush1.msra.mxu0 0.0
  %11797 = vmatprep.subr.mxu0 0.0
  %11798 = vmatpush1.msra.mxu0 0.0
  %11799 = vmatprep.subr.mxu0 0.0
  %11800 = vmatpush1.msra.mxu0 0.0
  %11801 = vmatprep.subr.mxu0 0.0
  %11802 = vmatpush1.msra.mxu0 0.0
  %11803 = vmatprep.subr.mxu0 0.0
  %11804 = vmatpush1.msra.mxu0 0.0
  %11805 = vmatprep.subr.mxu0 0.0
  %11806 = vmatpush1.msra.mxu0 0.0
  %11807 = vmatprep.subr.mxu0 0.0
  %11808 = vmatpush1.msra.mxu0 0.0
  %11809 = vmatprep.subr.mxu0 0.0
  %11810 = vmatpush1.msra.mxu0 0.0
  %11811 = vmatprep.subr.mxu0 0.0
  %11812 = vmatpush1.msra.mxu0 0.0
  %11813 = vmatprep.subr.mxu0 0.0
  %11814 = vmatpush1.msra.mxu0 0.0
  %11815 = vmatprep.subr.mxu0 0.0
  %11816 = vmatpush1.msra.mxu0 0.0
  %11817 = vmatprep.subr.mxu0 0.0
  %11818 = vmatpush1.msra.mxu0 0.0
  %11819 = vmatprep.subr.mxu0 0.0
  %11820 = vmatpush1.msra.mxu0 0.0
  %11821 = vmatprep.mubr.f32.mxu0 0.0
  %11822 = vmatmul.mubr.f32.gmra.mrb[0].mxu0 %v11755
  %v11823 = vpop.f32.mrb[0].mxu0
  %v11824 = vadd.f32 0.0, %v11823
  %v11825 = vpop.f32.mrb[0].mxu0
  %v11826 = vadd.f32 0.0, %v11825
  %11827 = vdwg.mxu0
  %11828 = vmatprep.subr.mxu0 %v11694
  %11829 = vmatpush1.msra.mxu0 %v11693
  %11830 = vmatprep.subr.mxu0 %v11702
  %11831 = vmatpush1.msra.mxu0 %v11701
  %11832 = vmatprep.subr.mxu0 %v11710
  %11833 = vmatpush1.msra.mxu0 %v11709
  %11834 = vmatprep.subr.mxu0 %v11718
  %11835 = vmatpush1.msra.mxu0 %v11717
  %11836 = vmatprep.subr.mxu0 0.0
  %11837 = vmatpush1.msra.mxu0 0.0
  %11838 = vmatprep.subr.mxu0 0.0
  %11839 = vmatpush1.msra.mxu0 0.0
  %11840 = vmatprep.subr.mxu0 0.0
  %11841 = vmatpush1.msra.mxu0 0.0
  %11842 = vmatprep.subr.mxu0 0.0
  %11843 = vmatpush1.msra.mxu0 0.0
  %11844 = vmatprep.subr.mxu0 0.0
  %11845 = vmatpush1.msra.mxu0 0.0
  %11846 = vmatprep.subr.mxu0 0.0
  %11847 = vmatpush1.msra.mxu0 0.0
  %11848 = vmatprep.subr.mxu0 0.0
  %11849 = vmatpush1.msra.mxu0 0.0
  %11850 = vmatprep.subr.mxu0 0.0
  %11851 = vmatpush1.msra.mxu0 0.0
  %11852 = vmatprep.subr.mxu0 0.0
  %11853 = vmatpush1.msra.mxu0 0.0
  %11854 = vmatprep.subr.mxu0 0.0
  %11855 = vmatpush1.msra.mxu0 0.0
  %11856 = vmatprep.subr.mxu0 0.0
  %11857 = vmatpush1.msra.mxu0 0.0
  %11858 = vmatprep.subr.mxu0 0.0
  %11859 = vmatpush1.msra.mxu0 0.0
  %11860 = vmatprep.subr.mxu0 0.0
  %11861 = vmatpush1.msra.mxu0 0.0
  %11862 = vmatprep.subr.mxu0 0.0
  %11863 = vmatpush1.msra.mxu0 0.0
  %11864 = vmatprep.subr.mxu0 0.0
  %11865 = vmatpush1.msra.mxu0 0.0
  %11866 = vmatprep.subr.mxu0 0.0
  %11867 = vmatpush1.msra.mxu0 0.0
  %11868 = vmatprep.subr.mxu0 0.0
  %11869 = vmatpush1.msra.mxu0 0.0
  %11870 = vmatprep.subr.mxu0 0.0
  %11871 = vmatpush1.msra.mxu0 0.0
  %11872 = vmatprep.subr.mxu0 0.0
  %11873 = vmatpush1.msra.mxu0 0.0
  %11874 = vmatprep.subr.mxu0 0.0
  %11875 = vmatpush1.msra.mxu0 0.0
  %11876 = vmatprep.subr.mxu0 0.0
  %11877 = vmatpush1.msra.mxu0 0.0
  %11878 = vmatprep.subr.mxu0 0.0
  %11879 = vmatpush1.msra.mxu0 0.0
  %11880 = vmatprep.subr.mxu0 0.0
  %11881 = vmatpush1.msra.mxu0 0.0
  %11882 = vmatprep.subr.mxu0 0.0
  %11883 = vmatpush1.msra.mxu0 0.0
  %11884 = vmatprep.subr.mxu0 0.0
  %11885 = vmatpush1.msra.mxu0 0.0
  %11886 = vmatprep.subr.mxu0 0.0
  %11887 = vmatpush1.msra.mxu0 0.0
  %11888 = vmatprep.subr.mxu0 0.0
  %11889 = vmatpush1.msra.mxu0 0.0
  %11890 = vmatprep.subr.mxu0 0.0
  %11891 = vmatpush1.msra.mxu0 0.0
  %11892 = vmatprep.mubr.f32.mxu0 0.0
  %11893 = vmatmul.mubr.f32.gmra.mrb[0].mxu0 %v11755
  %v11894 = vpop.f32.mrb[0].mxu0
  %v11895 = vadd.f32 0.0, %v11894
  %v11896 = vpop.f32.mrb[0].mxu0
  %11897 = vdwg.mxu0
  %11898 = vmatprep.subr.mxu0 %v11696
  %11899 = vmatpush1.msra.mxu0 %v11695
  %11900 = vmatprep.subr.mxu0 %v11704
  %11901 = vmatpush1.msra.mxu0 %v11703
  %11902 = vmatprep.subr.mxu0 %v11712
  %11903 = vmatpush1.msra.mxu0 %v11711
  %11904 = vmatprep.subr.mxu0 %v11720
  %11905 = vmatpush1.msra.mxu0 %v11719
  %11906 = vmatprep.subr.mxu0 0.0
  %11907 = vmatpush1.msra.mxu0 0.0
  %11908 = vmatprep.subr.mxu0 0.0
  %11909 = vmatpush1.msra.mxu0 0.0
  %11910 = vmatprep.subr.mxu0 0.0
  %11911 = vmatpush1.msra.mxu0 0.0
  %11912 = vmatprep.subr.mxu0 0.0
  %11913 = vmatpush1.msra.mxu0 0.0
  %11914 = vmatprep.subr.mxu0 0.0
  %11915 = vmatpush1.msra.mxu0 0.0
  %11916 = vmatprep.subr.mxu0 0.0
  %11917 = vmatpush1.msra.mxu0 0.0
  %11918 = vmatprep.subr.mxu0 0.0
  %11919 = vmatpush1.msra.mxu0 0.0
  %11920 = vmatprep.subr.mxu0 0.0
  %11921 = vmatpush1.msra.mxu0 0.0
  %11922 = vmatprep.subr.mxu0 0.0
  %11923 = vmatpush1.msra.mxu0 0.0
  %11924 = vmatprep.subr.mxu0 0.0
  %11925 = vmatpush1.msra.mxu0 0.0
  %11926 = vmatprep.subr.mxu0 0.0
  %11927 = vmatpush1.msra.mxu0 0.0
  %11928 = vmatprep.subr.mxu0 0.0
  %11929 = vmatpush1.msra.mxu0 0.0
  %11930 = vmatprep.subr.mxu0 0.0
  %11931 = vmatpush1.msra.mxu0 0.0
  %11932 = vmatprep.subr.mxu0 0.0
  %11933 = vmatpush1.msra.mxu0 0.0
  %11934 = vmatprep.subr.mxu0 0.0
  %11935 = vmatpush1.msra.mxu0 0.0
  %11936 = vmatprep.subr.mxu0 0.0
  %11937 = vmatpush1.msra.mxu0 0.0
  %11938 = vmatprep.subr.mxu0 0.0
  %11939 = vmatpush1.msra.mxu0 0.0
  %11940 = vmatprep.subr.mxu0 0.0
  %11941 = vmatpush1.msra.mxu0 0.0
  %11942 = vmatprep.subr.mxu0 0.0
  %11943 = vmatpush1.msra.mxu0 0.0
  %11944 = vmatprep.subr.mxu0 0.0
  %11945 = vmatpush1.msra.mxu0 0.0
  %11946 = vmatprep.subr.mxu0 0.0
  %11947 = vmatpush1.msra.mxu0 0.0
  %11948 = vmatprep.subr.mxu0 0.0
  %11949 = vmatpush1.msra.mxu0 0.0
  %11950 = vmatprep.subr.mxu0 0.0
  %11951 = vmatpush1.msra.mxu0 0.0
  %11952 = vmatprep.subr.mxu0 0.0
  %11953 = vmatpush1.msra.mxu0 0.0
  %11954 = vmatprep.subr.mxu0 0.0
  %11955 = vmatpush1.msra.mxu0 0.0
  %11956 = vmatprep.subr.mxu0 0.0
  %11957 = vmatpush1.msra.mxu0 0.0
  %11958 = vmatprep.subr.mxu0 0.0
  %11959 = vmatpush1.msra.mxu0 0.0
  %11960 = vmatprep.subr.mxu0 0.0
  %11961 = vmatpush1.msra.mxu0 0.0
  %11962 = vmatprep.mubr.f32.mxu0 0.0
  %11963 = vmatmul.mubr.f32.gmra.mrb[0].mxu0 %v11755
  %v11964 = vpop.f32.mrb[0].mxu0
  %v11965 = vpop.f32.mrb[0].mxu0
  %v11966 = vadd.f32 0.0, %v11965
  %11967 = vdwg.mxu0
  %11968 = vmatprep.subr.mxu0 %v11698
  %11969 = vmatpush1.msra.mxu0 %v11697
  %11970 = vmatprep.subr.mxu0 %v11706
  %11971 = vmatpush1.msra.mxu0 %v11705
  %11972 = vmatprep.subr.mxu0 %v11714
  %11973 = vmatpush1.msra.mxu0 %v11713
  %11974 = vmatprep.subr.mxu0 %v11722
  %11975 = vmatpush1.msra.mxu0 %v11721
  %11976 = vmatprep.subr.mxu0 0.0
  %11977 = vmatpush1.msra.mxu0 0.0
  %11978 = vmatprep.subr.mxu0 0.0
  %11979 = vmatpush1.msra.mxu0 0.0
  %11980 = vmatprep.subr.mxu0 0.0
  %11981 = vmatpush1.msra.mxu0 0.0
  %11982 = vmatprep.subr.mxu0 0.0
  %11983 = vmatpush1.msra.mxu0 0.0
  %11984 = vmatprep.subr.mxu0 0.0
  %11985 = vmatpush1.msra.mxu0 0.0
  %11986 = vmatprep.subr.mxu0 0.0
  %11987 = vmatpush1.msra.mxu0 0.0
  %11988 = vmatprep.subr.mxu0 0.0
  %11989 = vmatpush1.msra.mxu0 0.0
  %11990 = vmatprep.subr.mxu0 0.0
  %11991 = vmatpush1.msra.mxu0 0.0
  %11992 = vmatprep.subr.mxu0 0.0
  %11993 = vmatpush1.msra.mxu0 0.0
  %11994 = vmatprep.subr.mxu0 0.0
  %11995 = vmatpush1.msra.mxu0 0.0
  %11996 = vmatprep.subr.mxu0 0.0
  %11997 = vmatpush1.msra.mxu0 0.0
  %11998 = vmatprep.subr.mxu0 0.0
  %11999 = vmatpush1.msra.mxu0 0.0
  %12000 = vmatprep.subr.mxu0 0.0
  %12001 = vmatpush1.msra.mxu0 0.0
  %12002 = vmatprep.subr.mxu0 0.0
  %12003 = vmatpush1.msra.mxu0 0.0
  %12004 = vmatprep.subr.mxu0 0.0
  %12005 = vmatpush1.msra.mxu0 0.0
  %12006 = vmatprep.subr.mxu0 0.0
  %12007 = vmatpush1.msra.mxu0 0.0
  %12008 = vmatprep.subr.mxu0 0.0
  %12009 = vmatpush1.msra.mxu0 0.0
  %12010 = vmatprep.subr.mxu0 0.0
  %12011 = vmatpush1.msra.mxu0 0.0
  %12012 = vmatprep.subr.mxu0 0.0
  %12013 = vmatpush1.msra.mxu0 0.0
  %12014 = vmatprep.subr.mxu0 0.0
  %12015 = vmatpush1.msra.mxu0 0.0
  %12016 = vmatprep.subr.mxu0 0.0
  %12017 = vmatpush1.msra.mxu0 0.0
  %12018 = vmatprep.subr.mxu0 0.0
  %12019 = vmatpush1.msra.mxu0 0.0
  %12020 = vmatprep.subr.mxu0 0.0
  %12021 = vmatpush1.msra.mxu0 0.0
  %12022 = vmatprep.subr.mxu0 0.0
  %12023 = vmatpush1.msra.mxu0 0.0
  %12024 = vmatprep.subr.mxu0 0.0
  %12025 = vmatpush1.msra.mxu0 0.0
  %12026 = vmatprep.subr.mxu0 0.0
  %12027 = vmatpush1.msra.mxu0 0.0
  %12028 = vmatprep.subr.mxu0 0.0
  %12029 = vmatpush1.msra.mxu0 0.0
  %12030 = vmatprep.subr.mxu0 0.0
  %12031 = vmatpush1.msra.mxu0 0.0
  %12032 = vmatprep.mubr.f32.mxu0 0.0
  %12033 = vmatmul.mubr.f32.gmra.mrb[0].mxu0 %v11755
  %v12034 = vpop.f32.mrb[0].mxu0
  %v12035 = vadd.f32 0.0, %v12034
  %v12036 = vpop.f32.mrb[0].mxu0
  %v12037 = vadd.f32 0.0, %v12036
  %12038 = vdwg.mxu0
  %v12039 = vadd.f32 %v11610, %v11824
  %v12040 = vadd.f32 %v11611, %v11826
  %v12041 = vadd.f32 %v11612, %v11895
  %v12042 = vadd.f32 %v11613, %v11966
  %v12043 = vadd.f32 %v11614, %v12035
  %v12044 = vadd.f32 %v11615, %v12037
  %v12045 = vld [vmem:[%s1 + $0x18] sm:$0xf]
  %v12046 = vld [vmem:[%s0 + $0x8] sm:$0xff]
  %v12047 = vld [vmem:[%s0 + $0x10] sm:$0xff]
  %v12048 = vld [vmem:[%s0 + $0x18] sm:$0xff]
  %v12049 = vld [vmem:[%s0 + $0x20] sm:$0xff]
  %v12050 = vld [vmem:[%s0 + $0x28] sm:$0xff]
  %v12051 = vld [vmem:[%s0 + $0x30] sm:$0xff]
  %v12052 = vld [vmem:[%s0 + $0x38] sm:$0xff]
  %v12053 = vld [vmem:[%s0 + $0x40] sm:$0xff]
  %v12054 = vld [vmem:[%s0 + $0x48] sm:$0xff]
  %v12055 = vld [vmem:[%s0 + $0x58] sm:$0xff]
  %v12056 = vld [vmem:[%s0 + $0x60] sm:$0xff]
  %v12057 = vld [vmem:[%s0 + $0x68] sm:$0xff]
  %v12058 = vld [vmem:[%s0 + $0x70] sm:$0xff]
  %v12059 = vld [vmem:[%s0 + $0x78] sm:$0xff]
  %v12060 = vld [vmem:[%s0 + $0x80] sm:$0xff]
  %v12061 = vld [vmem:[%s0 + $0x88] sm:$0xff]
  %v12062 = vld [vmem:[%s0 + $0x90] sm:$0xff]
  %v12063 = vld [vmem:[%s0 + $0x98] sm:$0xff]
  %v12064 = vld [vmem:[%s0 + $0xa8] sm:$0xff]
  %v12065 = vld [vmem:[%s0 + $0xb0] sm:$0xff]
  %v12066 = vld [vmem:[%s0 + $0xb8] sm:$0xff]
  %v12067 = vld [vmem:[%s0 + $0xc0] sm:$0xff]
  %v12068 = vld [vmem:[%s0 + $0xc8] sm:$0xff]
  %v12069 = vld [vmem:[%s0 + $0xd0] sm:$0xff]
  %v12070 = vld [vmem:[%s0 + $0xd8] sm:$0xff]
  %v12071 = vld [vmem:[%s0 + $0xe0] sm:$0xff]
  %v12072 = vld [vmem:[%s0 + $0xe8] sm:$0xff]
  %v12073 = vld [vmem:[%s0 + $0xf8] sm:$0xff]
  %v12074 = vld [vmem:[%s0 + $0x100] sm:$0xff]
  %v12075 = vld [vmem:[%s0 + $0x108] sm:$0xff]
  %v12076 = vld [vmem:[%s0 + $0x110] sm:$0xff]
  %v12077 = vld [vmem:[%s0 + $0x118] sm:$0xff]
  %v12078 = vld [vmem:[%s0 + $0x120] sm:$0xff]
  %v12079 = vld [vmem:[%s0 + $0x128] sm:$0xff]
  %v12080 = vld [vmem:[%s0 + $0x130] sm:$0xff]
  %v12081 = vld [vmem:[%s0 + $0x138] sm:$0xff]
  %12083 = vrot.lane.b32.xlu0 %v12045, 64
  %v12084 = vpop.permute.xlu0 %12083
  %12121 = vrot.lane.b32.xlu0 %v12046, 106
  %v12122 = vpop.permute.xlu0 %12121
  %12123 = vrot.lane.b32.xlu0 %v12047, 106
  %v12124 = vpop.permute.xlu0 %12123
  %12125 = vrot.lane.b32.xlu0 %v12048, 106
  %v12126 = vpop.permute.xlu0 %12125
  %12127 = vrot.lane.b32.xlu0 %v12049, 106
  %v12128 = vpop.permute.xlu0 %12127
  %12129 = vrot.lane.b32.xlu0 %v12050, 106
  %v12130 = vpop.permute.xlu0 %12129
  %12131 = vrot.lane.b32.xlu0 %v12051, 106
  %v12132 = vpop.permute.xlu0 %12131
  %12133 = vrot.lane.b32.xlu0 %v12052, 106
  %v12134 = vpop.permute.xlu0 %12133
  %12135 = vrot.lane.b32.xlu0 %v12053, 106
  %v12136 = vpop.permute.xlu0 %12135
  %12137 = vrot.lane.b32.xlu0 %v12054, 106
  %v12138 = vpop.permute.xlu0 %12137
  %12139 = vrot.lane.b32.xlu0 %v12055, 106
  %v12140 = vpop.permute.xlu0 %12139
  %12141 = vrot.lane.b32.xlu0 %v12056, 106
  %v12142 = vpop.permute.xlu0 %12141
  %12143 = vrot.lane.b32.xlu0 %v12057, 106
  %v12144 = vpop.permute.xlu0 %12143
  %12145 = vrot.lane.b32.xlu0 %v12058, 106
  %v12146 = vpop.permute.xlu0 %12145
  %12147 = vrot.lane.b32.xlu0 %v12059, 106
  %v12148 = vpop.permute.xlu0 %12147
  %12149 = vrot.lane.b32.xlu0 %v12060, 106
  %v12150 = vpop.permute.xlu0 %12149
  %12151 = vrot.lane.b32.xlu0 %v12061, 106
  %v12152 = vpop.permute.xlu0 %12151
  %12153 = vrot.lane.b32.xlu0 %v12062, 106
  %v12154 = vpop.permute.xlu0 %12153
  %12155 = vrot.lane.b32.xlu0 %v12063, 106
  %v12156 = vpop.permute.xlu0 %12155
  %12157 = vrot.lane.b32.xlu0 %v12064, 106
  %v12158 = vpop.permute.xlu0 %12157
  %12159 = vrot.lane.b32.xlu0 %v12065, 106
  %v12160 = vpop.permute.xlu0 %12159
  %12161 = vrot.lane.b32.xlu0 %v12066, 106
  %v12162 = vpop.permute.xlu0 %12161
  %12163 = vrot.lane.b32.xlu0 %v12067, 106
  %v12164 = vpop.permute.xlu0 %12163
  %12165 = vrot.lane.b32.xlu0 %v12068, 106
  %v12166 = vpop.permute.xlu0 %12165
  %12167 = vrot.lane.b32.xlu0 %v12069, 106
  %v12168 = vpop.permute.xlu0 %12167
  %12169 = vrot.lane.b32.xlu0 %v12070, 106
  %v12170 = vpop.permute.xlu0 %12169
  %12171 = vrot.lane.b32.xlu0 %v12071, 106
  %v12172 = vpop.permute.xlu0 %12171
  %12173 = vrot.lane.b32.xlu0 %v12072, 106
  %v12174 = vpop.permute.xlu0 %12173
  %12175 = vrot.lane.b32.xlu0 %v12073, 106
  %v12176 = vpop.permute.xlu0 %12175
  %12177 = vrot.lane.b32.xlu0 %v12074, 106
  %v12178 = vpop.permute.xlu0 %12177
  %12179 = vrot.lane.b32.xlu0 %v12075, 106
  %v12180 = vpop.permute.xlu0 %12179
  %12181 = vrot.lane.b32.xlu0 %v12076, 106
  %v12182 = vpop.permute.xlu0 %12181
  %12183 = vrot.lane.b32.xlu0 %v12077, 106
  %v12184 = vpop.permute.xlu0 %12183
  %12185 = vrot.lane.b32.xlu0 %v12078, 106
  %v12186 = vpop.permute.xlu0 %12185
  %12187 = vrot.lane.b32.xlu0 %v12079, 106
  %v12188 = vpop.permute.xlu0 %12187
  %12189 = vrot.lane.b32.xlu0 %v12080, 106
  %v12190 = vpop.permute.xlu0 %12189
  %12191 = vrot.lane.b32.xlu0 %v12081, 106
  %v12192 = vpop.permute.xlu0 %12191
  %vm12193 = vcmask 867328
  %v12194 = vsel %vm12193, %v12122, %v12124
  %v12195 = vsel %vm12193, %v12124, %v12126
  %v12196 = vsel %vm12193, %v12126, %v12128
  %v12197 = vsel %vm12193, %v12128, %v12130
  %v12198 = vsel %vm12193, %v12130, %v12132
  %v12199 = vsel %vm12193, %v12132, %v12134
  %v12200 = vsel %vm12193, %v12134, %v12136
  %v12201 = vsel %vm12193, %v12136, %v12138
  %v12202 = vsel %vm12193, %v12140, %v12142
  %v12203 = vsel %vm12193, %v12142, %v12144
  %v12204 = vsel %vm12193, %v12144, %v12146
  %v12205 = vsel %vm12193, %v12146, %v12148
  %v12206 = vsel %vm12193, %v12148, %v12150
  %v12207 = vsel %vm12193, %v12150, %v12152
  %v12208 = vsel %vm12193, %v12152, %v12154
  %v12209 = vsel %vm12193, %v12154, %v12156
  %v12210 = vsel %vm12193, %v12158, %v12160
  %v12211 = vsel %vm12193, %v12160, %v12162
  %v12212 = vsel %vm12193, %v12162, %v12164
  %v12213 = vsel %vm12193, %v12164, %v12166
  %v12214 = vsel %vm12193, %v12166, %v12168
  %v12215 = vsel %vm12193, %v12168, %v12170
  %v12216 = vsel %vm12193, %v12170, %v12172
  %v12217 = vsel %vm12193, %v12172, %v12174
  %v12218 = vsel %vm12193, %v12176, %v12178
  %v12219 = vsel %vm12193, %v12178, %v12180
  %v12220 = vsel %vm12193, %v12180, %v12182
  %v12221 = vsel %vm12193, %v12182, %v12184
  %v12222 = vsel %vm12193, %v12184, %v12186
  %v12223 = vsel %vm12193, %v12186, %v12188
  %v12224 = vsel %vm12193, %v12188, %v12190
  %v12225 = vsel %vm12193, %v12190, %v12192
  %v12258 = vsel %vm231, %v12084, 0
  %12260 = vmatprep.subr.mxu0 %v12195
  %12261 = vmatpush1.msra.mxu0 %v12194
  %12262 = vmatprep.subr.mxu0 %v12203
  %12263 = vmatpush1.msra.mxu0 %v12202
  %12264 = vmatprep.subr.mxu0 %v12211
  %12265 = vmatpush1.msra.mxu0 %v12210
  %12266 = vmatprep.subr.mxu0 %v12219
  %12267 = vmatpush1.msra.mxu0 %v12218
  %12268 = vmatprep.subr.mxu0 0.0
  %12269 = vmatpush1.msra.mxu0 0.0
  %12270 = vmatprep.subr.mxu0 0.0
  %12271 = vmatpush1.msra.mxu0 0.0
  %12272 = vmatprep.subr.mxu0 0.0
  %12273 = vmatpush1.msra.mxu0 0.0
  %12274 = vmatprep.subr.mxu0 0.0
  %12275 = vmatpush1.msra.mxu0 0.0
  %12276 = vmatprep.subr.mxu0 0.0
  %12277 = vmatpush1.msra.mxu0 0.0
  %12278 = vmatprep.subr.mxu0 0.0
  %12279 = vmatpush1.msra.mxu0 0.0
  %12280 = vmatprep.subr.mxu0 0.0
  %12281 = vmatpush1.msra.mxu0 0.0
  %12282 = vmatprep.subr.mxu0 0.0
  %12283 = vmatpush1.msra.mxu0 0.0
  %12284 = vmatprep.subr.mxu0 0.0
  %12285 = vmatpush1.msra.mxu0 0.0
  %12286 = vmatprep.subr.mxu0 0.0
  %12287 = vmatpush1.msra.mxu0 0.0
  %12288 = vmatprep.subr.mxu0 0.0
  %12289 = vmatpush1.msra.mxu0 0.0
  %12290 = vmatprep.subr.mxu0 0.0
  %12291 = vmatpush1.msra.mxu0 0.0
  %12292 = vmatprep.subr.mxu0 0.0
  %12293 = vmatpush1.msra.mxu0 0.0
  %12294 = vmatprep.subr.mxu0 0.0
  %12295 = vmatpush1.msra.mxu0 0.0
  %12296 = vmatprep.subr.mxu0 0.0
  %12297 = vmatpush1.msra.mxu0 0.0
  %12298 = vmatprep.subr.mxu0 0.0
  %12299 = vmatpush1.msra.mxu0 0.0
  %12300 = vmatprep.subr.mxu0 0.0
  %12301 = vmatpush1.msra.mxu0 0.0
  %12302 = vmatprep.subr.mxu0 0.0
  %12303 = vmatpush1.msra.mxu0 0.0
  %12304 = vmatprep.subr.mxu0 0.0
  %12305 = vmatpush1.msra.mxu0 0.0
  %12306 = vmatprep.subr.mxu0 0.0
  %12307 = vmatpush1.msra.mxu0 0.0
  %12308 = vmatprep.subr.mxu0 0.0
  %12309 = vmatpush1.msra.mxu0 0.0
  %12310 = vmatprep.subr.mxu0 0.0
  %12311 = vmatpush1.msra.mxu0 0.0
  %12312 = vmatprep.subr.mxu0 0.0
  %12313 = vmatpush1.msra.mxu0 0.0
  %12314 = vmatprep.subr.mxu0 0.0
  %12315 = vmatpush1.msra.mxu0 0.0
  %12316 = vmatprep.subr.mxu0 0.0
  %12317 = vmatpush1.msra.mxu0 0.0
  %12318 = vmatprep.subr.mxu0 0.0
  %12319 = vmatpush1.msra.mxu0 0.0
  %12320 = vmatprep.subr.mxu0 0.0
  %12321 = vmatpush1.msra.mxu0 0.0
  %12322 = vmatprep.subr.mxu0 0.0
  %12323 = vmatpush1.msra.mxu0 0.0
  %12324 = vmatprep.mubr.f32.mxu0 0.0
  %12325 = vmatmul.mubr.f32.gmra.mrb[0].mxu0 %v12258
  %v12326 = vpop.f32.mrb[0].mxu0
  %v12327 = vadd.f32 0.0, %v12326
  %v12328 = vpop.f32.mrb[0].mxu0
  %v12329 = vadd.f32 0.0, %v12328
  %12330 = vdwg.mxu0
  %12331 = vmatprep.subr.mxu0 %v12197
  %12332 = vmatpush1.msra.mxu0 %v12196
  %12333 = vmatprep.subr.mxu0 %v12205
  %12334 = vmatpush1.msra.mxu0 %v12204
  %12335 = vmatprep.subr.mxu0 %v12213
  %12336 = vmatpush1.msra.mxu0 %v12212
  %12337 = vmatprep.subr.mxu0 %v12221
  %12338 = vmatpush1.msra.mxu0 %v12220
  %12339 = vmatprep.subr.mxu0 0.0
  %12340 = vmatpush1.msra.mxu0 0.0
  %12341 = vmatprep.subr.mxu0 0.0
  %12342 = vmatpush1.msra.mxu0 0.0
  %12343 = vmatprep.subr.mxu0 0.0
  %12344 = vmatpush1.msra.mxu0 0.0
  %12345 = vmatprep.subr.mxu0 0.0
  %12346 = vmatpush1.msra.mxu0 0.0
  %12347 = vmatprep.subr.mxu0 0.0
  %12348 = vmatpush1.msra.mxu0 0.0
  %12349 = vmatprep.subr.mxu0 0.0
  %12350 = vmatpush1.msra.mxu0 0.0
  %12351 = vmatprep.subr.mxu0 0.0
  %12352 = vmatpush1.msra.mxu0 0.0
  %12353 = vmatprep.subr.mxu0 0.0
  %12354 = vmatpush1.msra.mxu0 0.0
  %12355 = vmatprep.subr.mxu0 0.0
  %12356 = vmatpush1.msra.mxu0 0.0
  %12357 = vmatprep.subr.mxu0 0.0
  %12358 = vmatpush1.msra.mxu0 0.0
  %12359 = vmatprep.subr.mxu0 0.0
  %12360 = vmatpush1.msra.mxu0 0.0
  %12361 = vmatprep.subr.mxu0 0.0
  %12362 = vmatpush1.msra.mxu0 0.0
  %12363 = vmatprep.subr.mxu0 0.0
  %12364 = vmatpush1.msra.mxu0 0.0
  %12365 = vmatprep.subr.mxu0 0.0
  %12366 = vmatpush1.msra.mxu0 0.0
  %12367 = vmatprep.subr.mxu0 0.0
  %12368 = vmatpush1.msra.mxu0 0.0
  %12369 = vmatprep.subr.mxu0 0.0
  %12370 = vmatpush1.msra.mxu0 0.0
  %12371 = vmatprep.subr.mxu0 0.0
  %12372 = vmatpush1.msra.mxu0 0.0
  %12373 = vmatprep.subr.mxu0 0.0
  %12374 = vmatpush1.msra.mxu0 0.0
  %12375 = vmatprep.subr.mxu0 0.0
  %12376 = vmatpush1.msra.mxu0 0.0
  %12377 = vmatprep.subr.mxu0 0.0
  %12378 = vmatpush1.msra.mxu0 0.0
  %12379 = vmatprep.subr.mxu0 0.0
  %12380 = vmatpush1.msra.mxu0 0.0
  %12381 = vmatprep.subr.mxu0 0.0
  %12382 = vmatpush1.msra.mxu0 0.0
  %12383 = vmatprep.subr.mxu0 0.0
  %12384 = vmatpush1.msra.mxu0 0.0
  %12385 = vmatprep.subr.mxu0 0.0
  %12386 = vmatpush1.msra.mxu0 0.0
  %12387 = vmatprep.subr.mxu0 0.0
  %12388 = vmatpush1.msra.mxu0 0.0
  %12389 = vmatprep.subr.mxu0 0.0
  %12390 = vmatpush1.msra.mxu0 0.0
  %12391 = vmatprep.subr.mxu0 0.0
  %12392 = vmatpush1.msra.mxu0 0.0
  %12393 = vmatprep.subr.mxu0 0.0
  %12394 = vmatpush1.msra.mxu0 0.0
  %12395 = vmatprep.mubr.f32.mxu0 0.0
  %12396 = vmatmul.mubr.f32.gmra.mrb[0].mxu0 %v12258
  %v12397 = vpop.f32.mrb[0].mxu0
  %v12398 = vadd.f32 0.0, %v12397
  %v12399 = vpop.f32.mrb[0].mxu0
  %12400 = vdwg.mxu0
  %12401 = vmatprep.subr.mxu0 %v12199
  %12402 = vmatpush1.msra.mxu0 %v12198
  %12403 = vmatprep.subr.mxu0 %v12207
  %12404 = vmatpush1.msra.mxu0 %v12206
  %12405 = vmatprep.subr.mxu0 %v12215
  %12406 = vmatpush1.msra.mxu0 %v12214
  %12407 = vmatprep.subr.mxu0 %v12223
  %12408 = vmatpush1.msra.mxu0 %v12222
  %12409 = vmatprep.subr.mxu0 0.0
  %12410 = vmatpush1.msra.mxu0 0.0
  %12411 = vmatprep.subr.mxu0 0.0
  %12412 = vmatpush1.msra.mxu0 0.0
  %12413 = vmatprep.subr.mxu0 0.0
  %12414 = vmatpush1.msra.mxu0 0.0
  %12415 = vmatprep.subr.mxu0 0.0
  %12416 = vmatpush1.msra.mxu0 0.0
  %12417 = vmatprep.subr.mxu0 0.0
  %12418 = vmatpush1.msra.mxu0 0.0
  %12419 = vmatprep.subr.mxu0 0.0
  %12420 = vmatpush1.msra.mxu0 0.0
  %12421 = vmatprep.subr.mxu0 0.0
  %12422 = vmatpush1.msra.mxu0 0.0
  %12423 = vmatprep.subr.mxu0 0.0
  %12424 = vmatpush1.msra.mxu0 0.0
  %12425 = vmatprep.subr.mxu0 0.0
  %12426 = vmatpush1.msra.mxu0 0.0
  %12427 = vmatprep.subr.mxu0 0.0
  %12428 = vmatpush1.msra.mxu0 0.0
  %12429 = vmatprep.subr.mxu0 0.0
  %12430 = vmatpush1.msra.mxu0 0.0
  %12431 = vmatprep.subr.mxu0 0.0
  %12432 = vmatpush1.msra.mxu0 0.0
  %12433 = vmatprep.subr.mxu0 0.0
  %12434 = vmatpush1.msra.mxu0 0.0
  %12435 = vmatprep.subr.mxu0 0.0
  %12436 = vmatpush1.msra.mxu0 0.0
  %12437 = vmatprep.subr.mxu0 0.0
  %12438 = vmatpush1.msra.mxu0 0.0
  %12439 = vmatprep.subr.mxu0 0.0
  %12440 = vmatpush1.msra.mxu0 0.0
  %12441 = vmatprep.subr.mxu0 0.0
  %12442 = vmatpush1.msra.mxu0 0.0
  %12443 = vmatprep.subr.mxu0 0.0
  %12444 = vmatpush1.msra.mxu0 0.0
  %12445 = vmatprep.subr.mxu0 0.0
  %12446 = vmatpush1.msra.mxu0 0.0
  %12447 = vmatprep.subr.mxu0 0.0
  %12448 = vmatpush1.msra.mxu0 0.0
  %12449 = vmatprep.subr.mxu0 0.0
  %12450 = vmatpush1.msra.mxu0 0.0
  %12451 = vmatprep.subr.mxu0 0.0
  %12452 = vmatpush1.msra.mxu0 0.0
  %12453 = vmatprep.subr.mxu0 0.0
  %12454 = vmatpush1.msra.mxu0 0.0
  %12455 = vmatprep.subr.mxu0 0.0
  %12456 = vmatpush1.msra.mxu0 0.0
  %12457 = vmatprep.subr.mxu0 0.0
  %12458 = vmatpush1.msra.mxu0 0.0
  %12459 = vmatprep.subr.mxu0 0.0
  %12460 = vmatpush1.msra.mxu0 0.0
  %12461 = vmatprep.subr.mxu0 0.0
  %12462 = vmatpush1.msra.mxu0 0.0
  %12463 = vmatprep.subr.mxu0 0.0
  %12464 = vmatpush1.msra.mxu0 0.0
  %12465 = vmatprep.mubr.f32.mxu0 0.0
  %12466 = vmatmul.mubr.f32.gmra.mrb[0].mxu0 %v12258
  %v12467 = vpop.f32.mrb[0].mxu0
  %v12468 = vpop.f32.mrb[0].mxu0
  %v12469 = vadd.f32 0.0, %v12468
  %12470 = vdwg.mxu0
  %12471 = vmatprep.subr.mxu0 %v12201
  %12472 = vmatpush1.msra.mxu0 %v12200
  %12473 = vmatprep.subr.mxu0 %v12209
  %12474 = vmatpush1.msra.mxu0 %v12208
  %12475 = vmatprep.subr.mxu0 %v12217
  %12476 = vmatpush1.msra.mxu0 %v12216
  %12477 = vmatprep.subr.mxu0 %v12225
  %12478 = vmatpush1.msra.mxu0 %v12224
  %12479 = vmatprep.subr.mxu0 0.0
  %12480 = vmatpush1.msra.mxu0 0.0
  %12481 = vmatprep.subr.mxu0 0.0
  %12482 = vmatpush1.msra.mxu0 0.0
  %12483 = vmatprep.subr.mxu0 0.0
  %12484 = vmatpush1.msra.mxu0 0.0
  %12485 = vmatprep.subr.mxu0 0.0
  %12486 = vmatpush1.msra.mxu0 0.0
  %12487 = vmatprep.subr.mxu0 0.0
  %12488 = vmatpush1.msra.mxu0 0.0
  %12489 = vmatprep.subr.mxu0 0.0
  %12490 = vmatpush1.msra.mxu0 0.0
  %12491 = vmatprep.subr.mxu0 0.0
  %12492 = vmatpush1.msra.mxu0 0.0
  %12493 = vmatprep.subr.mxu0 0.0
  %12494 = vmatpush1.msra.mxu0 0.0
  %12495 = vmatprep.subr.mxu0 0.0
  %12496 = vmatpush1.msra.mxu0 0.0
  %12497 = vmatprep.subr.mxu0 0.0
  %12498 = vmatpush1.msra.mxu0 0.0
  %12499 = vmatprep.subr.mxu0 0.0
  %12500 = vmatpush1.msra.mxu0 0.0
  %12501 = vmatprep.subr.mxu0 0.0
  %12502 = vmatpush1.msra.mxu0 0.0
  %12503 = vmatprep.subr.mxu0 0.0
  %12504 = vmatpush1.msra.mxu0 0.0
  %12505 = vmatprep.subr.mxu0 0.0
  %12506 = vmatpush1.msra.mxu0 0.0
  %12507 = vmatprep.subr.mxu0 0.0
  %12508 = vmatpush1.msra.mxu0 0.0
  %12509 = vmatprep.subr.mxu0 0.0
  %12510 = vmatpush1.msra.mxu0 0.0
  %12511 = vmatprep.subr.mxu0 0.0
  %12512 = vmatpush1.msra.mxu0 0.0
  %12513 = vmatprep.subr.mxu0 0.0
  %12514 = vmatpush1.msra.mxu0 0.0
  %12515 = vmatprep.subr.mxu0 0.0
  %12516 = vmatpush1.msra.mxu0 0.0
  %12517 = vmatprep.subr.mxu0 0.0
  %12518 = vmatpush1.msra.mxu0 0.0
  %12519 = vmatprep.subr.mxu0 0.0
  %12520 = vmatpush1.msra.mxu0 0.0
  %12521 = vmatprep.subr.mxu0 0.0
  %12522 = vmatpush1.msra.mxu0 0.0
  %12523 = vmatprep.subr.mxu0 0.0
  %12524 = vmatpush1.msra.mxu0 0.0
  %12525 = vmatprep.subr.mxu0 0.0
  %12526 = vmatpush1.msra.mxu0 0.0
  %12527 = vmatprep.subr.mxu0 0.0
  %12528 = vmatpush1.msra.mxu0 0.0
  %12529 = vmatprep.subr.mxu0 0.0
  %12530 = vmatpush1.msra.mxu0 0.0
  %12531 = vmatprep.subr.mxu0 0.0
  %12532 = vmatpush1.msra.mxu0 0.0
  %12533 = vmatprep.subr.mxu0 0.0
  %12534 = vmatpush1.msra.mxu0 0.0
  %12535 = vmatprep.mubr.f32.mxu0 0.0
  %12536 = vmatmul.mubr.f32.gmra.mrb[0].mxu0 %v12258
  %v12537 = vpop.f32.mrb[0].mxu0
  %v12538 = vadd.f32 0.0, %v12537
  %v12539 = vpop.f32.mrb[0].mxu0
  %v12540 = vadd.f32 0.0, %v12539
  %12541 = vdwg.mxu0
  %v12542 = vadd.f32 %v12039, %v12327
  %v12543 = vadd.f32 %v12040, %v12329
  %v12544 = vadd.f32 %v12041, %v12398
  %v12545 = vadd.f32 %v12042, %v12469
  %v12546 = vadd.f32 %v12043, %v12538
  %v12547 = vadd.f32 %v12044, %v12540
  %12548 = vst [vmem:[%s3] sm:$0xf] %v12542
  %12549 = vst [vmem:[%s3 + $0x8] sm:$0xf] %v12543
  %12550 = vst [vmem:[%s3 + $0x10] sm:$0xf] %v12544
  %v12554 = vrot.slane %v12545, 4
  %v12555 = vrot.slane %v12546, 4
  %v12556 = vrot.slane %v12547, 4
  %12560 = vst [vmem:[%s3] sm:$0xf0] %v12554
  %12561 = vst [vmem:[%s3 + $0x8] sm:$0xf0] %v12555
  %12562 = vst [vmem:[%s3 + $0x10] sm:$0xf0] %v12556
  // Predicated region
  $region14: #{classifier_module_forward.1} parent=0 // pred_check
    _
  $region15: #{classifier_module_forward.1} parent=0 // pred_check_branch
    %12564 = sbr.rel (0) target = $region17
  $region16: #{classifier_module_forward.1} parent=0 // pred_region
    _
  $region17: #{classifier_module_forward.1} parent=0 // pred_fallthru
    _
  // Predicated region
  $region18: #{classifier_module_forward.1} parent=0 // pred_check
    _
  $region19: #{classifier_module_forward.1} parent=0 // pred_check_branch
    %12566 = sbr.rel (0) target = $region21
  $region20: #{classifier_module_forward.1} parent=0 // pred_region
    _
  $region21: #{classifier_module_forward.1} parent=0 // pred_fallthru
    _

</llo_original>
